<compile_context>
chip_gen: v7x
topology: tpu7x:2x2x1
jax: 0.10.0
libtpu: 0.0.40
codegen_flags: <defaults>
</compile_context>

<pallas_src>
import jax
import jax.numpy as jnp
from jax.experimental import pallas as pl
from jax.experimental.pallas import tpu as pltpu

# ----------------------- LeNet-style fixed geometry ------------------------
KSIZE = 5
H0 = W0 = 32                      # input spatial (fc1 expects 32*5*5 features)
C0 = 3                            # input channels
C1 = 16                           # conv1 output channels (kept REAL, no pad)
C2 = 32                           # conv2 output channels
H1 = W1 = H0 - KSIZE + 1          # 28 : conv1 output spatial
P1 = H1 // 2                      # 14 : pool1 output spatial
H2 = W2 = P1 - KSIZE + 1          # 10 : conv2 output spatial
P2 = H2 // 2                      # 5  : pool2 output spatial
K1 = KSIZE * KSIZE * C0           # 75 : conv1 im2col features (real)
K1P = 128                         # conv1 im2col features, lane-padded
K2 = KSIZE * KSIZE * C1           # 400: conv2 im2col features (real, no pad)
L2 = (H2 - 1) * P1 + W2           # 136: row-flattened conv2 rows (junk if x>=10)
KFC = P2 * P2 * C2                # 800: fc1 real contraction
NFC = 128                         # lane-padded fc width (120 / 84 / 10 real)

# Junk rows produced by the row-flattened conv2 trick are never read by the
# 2x2/stride-2 pool (review correctness note).
assert 2 * P2 - 1 < W2 and 2 * P2 - 1 < H2
# Packed-im2col source reads stay inside the (P1*P1, C1) pooled activation.
assert (L2 - 1) + (KSIZE - 1) * P1 + (KSIZE - 1) < P1 * P1


# ------------------ fused conv1 + pool + conv2 + pool kernel ----------------

def conv_stack_kernel(p1_ref, w1_ref, b1_ref, w2_ref, b2_ref, o_ref,
                      h1_ref, a1_ref, col_ref, h2_ref):
    """One image per grid step.

    p1_ref : (1, 784, 128) bf16  conv1 im2col (75 real features, lane-padded)
    w1_ref : (128, 16)     bf16  conv1 weight, rows ordered (kh, kw, cin)
    b1_ref : (1, 16)       f32
    w2_ref : (400, 32)     bf16  conv2 weight, rows ordered (kh, kw, cin)
    b2_ref : (1, 32)       f32
    o_ref  : (1, 25, 32)   bf16  pooled conv2 activation, row = py*5 + px
    h1_ref : (784, 16)  f32 scratch  conv1 pre-pool
    a1_ref : (196, 16)  f32 scratch  pool1 output (bias+ReLU applied)
    col_ref: (136, 400) bf16 scratch packed conv2 im2col
    h2_ref : (136, 32)  f32 scratch  conv2 pre-pool (row-flattened, W=14)
    """
    # ---- conv1: one packed-K matmul (K=128, 75 real), f32 accumulation ----
    h1_ref[...] = jnp.dot(p1_ref[0], w1_ref[...],
                          preferred_element_type=jnp.float32)

    # ---- pool1 (2x2/2) + bias + ReLU (commute with max: per-channel const
    # bias, monotone ReLU).  Stride-2 sublane reads from the h1 scratch. ----
    b1 = b1_ref[...]
    for py in range(P1):
        r0 = 2 * py * W1
        p00 = h1_ref[pl.ds(r0,          P1, stride=2), :]
        p01 = h1_ref[pl.ds(r0 + 1,      P1, stride=2), :]
        p10 = h1_ref[pl.ds(r0 + W1,     P1, stride=2), :]
        p11 = h1_ref[pl.ds(r0 + W1 + 1, P1, stride=2), :]
        m = jnp.maximum(jnp.maximum(p00, p01), jnp.maximum(p10, p11))
        a1_ref[py * P1:(py + 1) * P1, :] = jnp.maximum(m + b1, 0.0)

    # ---- conv2 im2col: pack all 25 taps x 16 real channels into a single
    # (136, 400) bf16 tile (25 contiguous sublane slices of a1, each placed at
    # a static 16-lane column offset). ----
    for i in range(KSIZE):
        for j in range(KSIZE):
            t = i * KSIZE + j
            col_ref[:, t * C1:(t + 1) * C1] = (
                a1_ref[pl.ds(i * P1 + j, L2), :].astype(jnp.bfloat16))

    # ---- conv2: one packed-K matmul (K=400 real); Mosaic splits K into
    # MXU-native passes per generation (128 on v5e, 256 on v6e/v7x). ----
    h2_ref[...] = jnp.dot(col_ref[...], w2_ref[...],
                          preferred_element_type=jnp.float32)

    # ---- pool2 + bias + ReLU; assemble the whole (25, 32) tile, store once.
    b2 = b2_ref[...]
    rows = []
    for py in range(P2):
        r0 = 2 * py * P1
        p00 = h2_ref[pl.ds(r0,          P2, stride=2), :]
        p01 = h2_ref[pl.ds(r0 + 1,      P2, stride=2), :]
        p10 = h2_ref[pl.ds(r0 + P1,     P2, stride=2), :]
        p11 = h2_ref[pl.ds(r0 + P1 + 1, P2, stride=2), :]
        rows.append(jnp.maximum(jnp.maximum(p00, p01), jnp.maximum(p10, p11)))
    pooled = jnp.concatenate(rows, axis=0)                       # (25, 32)
    o_ref[0] = jnp.maximum(pooled + b2, 0.0).astype(o_ref.dtype)


def conv_stack(p1, w1, b1, w2, b2):
    """p1: (B, 784, 128) bf16 -> (B, 25, 32) bf16 pooled conv2 activation."""
    B = p1.shape[0]
    flops = 2 * B * (H1 * W1 * K1P * C1 + L2 * K2 * C2)
    bytes_accessed = (2 * B * H1 * W1 * K1P            # im2col input (bf16)
                      + 2 * (K1P * C1 + K2 * C2)        # weights (bf16)
                      + 4 * (C1 + C2)                   # biases (f32)
                      + 2 * B * P2 * P2 * C2)           # output (bf16)
    return pl.pallas_call(
        conv_stack_kernel,
        grid=(B,),
        in_specs=[
            pl.BlockSpec((1, H1 * W1, K1P), lambda b: (b, 0, 0)),
            pl.BlockSpec((K1P, C1), lambda b: (0, 0)),     # resident weights
            pl.BlockSpec((1, C1), lambda b: (0, 0)),
            pl.BlockSpec((K2, C2), lambda b: (0, 0)),
            pl.BlockSpec((1, C2), lambda b: (0, 0)),
        ],
        out_specs=pl.BlockSpec((1, P2 * P2, C2), lambda b: (b, 0, 0)),
        out_shape=jax.ShapeDtypeStruct((B, P2 * P2, C2), jnp.bfloat16),
        scratch_shapes=[
            pltpu.VMEM((H1 * W1, C1), jnp.float32),    # conv1 pre-pool
            pltpu.VMEM((P1 * P1, C1), jnp.float32),    # pool1 activation
            pltpu.VMEM((L2, K2), jnp.bfloat16),        # packed conv2 im2col
            pltpu.VMEM((L2, C2), jnp.float32),         # conv2 pre-pool
        ],
        compiler_params=pltpu.CompilerParams(
            dimension_semantics=("parallel",),
            vmem_limit_bytes=8 * 1024 * 1024,          # actual use ~1.6 MiB
        ),
        cost_estimate=pl.CostEstimate(flops=flops, transcendentals=0,
                                      bytes_accessed=int(bytes_accessed)),
    )(p1, w1, b1, w2, b2)


# ------------------------------ fused fc stack ------------------------------

def fc_stack_kernel(x_ref, w1_ref, b1_ref, w2_ref, b2_ref, w3_ref, b3_ref,
                    o_ref):
    h = jnp.dot(x_ref[...], w1_ref[...], preferred_element_type=jnp.float32)
    h = jnp.maximum(h + b1_ref[...], 0.0)
    h = jnp.dot(h.astype(jnp.bfloat16), w2_ref[...],
                preferred_element_type=jnp.float32)
    h = jnp.maximum(h + b2_ref[...], 0.0)
    h = jnp.dot(h.astype(jnp.bfloat16), w3_ref[...],
                preferred_element_type=jnp.float32)
    o_ref[...] = h + b3_ref[...]


def fc_stack(x, w1, b1, w2, b2, w3, b3):
    """x: (B, 800) bf16 -> (B, 128) f32; fc1+fc2+fc3 fused, K=800 real."""
    B, K = x.shape
    # TODO(synk): tile the batch dimension for large B; single block is fine
    # for the small batches exercised here.
    flops = 2 * B * (K * NFC + NFC * NFC + NFC * NFC)
    bytes_accessed = (2 * (B * K + K * NFC + 2 * NFC * NFC)
                      + 4 * (3 * NFC + B * NFC))
    return pl.pallas_call(
        fc_stack_kernel,
        grid=(1,),
        in_specs=[
            pl.BlockSpec((B, K), lambda i: (0, 0)),
            pl.BlockSpec((K, NFC), lambda i: (0, 0)),
            pl.BlockSpec((1, NFC), lambda i: (0, 0)),
            pl.BlockSpec((NFC, NFC), lambda i: (0, 0)),
            pl.BlockSpec((1, NFC), lambda i: (0, 0)),
            pl.BlockSpec((NFC, NFC), lambda i: (0, 0)),
            pl.BlockSpec((1, NFC), lambda i: (0, 0)),
        ],
        out_specs=pl.BlockSpec((B, NFC), lambda i: (0, 0)),
        out_shape=jax.ShapeDtypeStruct((B, NFC), jnp.float32),
        compiler_params=pltpu.CompilerParams(
            dimension_semantics=("arbitrary",),
            vmem_limit_bytes=4 * 1024 * 1024,          # actual use ~0.7 MiB
        ),
        cost_estimate=pl.CostEstimate(flops=flops, transcendentals=0,
                                      bytes_accessed=int(bytes_accessed)),
    )(x, w1, b1, w2, b2, w3, b3)


# ------------------------------- forward pass -------------------------------

def conv1_im2col(x):
    """(B, 3, 32, 32) f32 -> (B, 784, 128) bf16 conv1 im2col.

    Feature order (kh, kw, cin), lane-padded 75 -> 128; ~200 KB/img in bf16
    (reviewer-endorsed wrapper-side packing for the 3-channel first layer).
    """
    B = x.shape[0]
    cols = [x[:, :, i:i + H1, j:j + W1]
            for i in range(KSIZE) for j in range(KSIZE)]     # 25 x (B,3,28,28)
    p = jnp.stack(cols, axis=1)                              # (B,25,3,28,28)
    p = jnp.transpose(p, (0, 3, 4, 1, 2))                    # (B,28,28,25,3)
    p = p.reshape(B, H1 * W1, K1)
    p = jnp.pad(p, ((0, 0), (0, 0), (0, K1P - K1)))
    return p.astype(jnp.bfloat16)


def simple_cnn_forward(x_nchw, pp):
    B, C, H, W = x_nchw.shape
    assert (C, H, W) == (C0, H0, W0), "fc1 expects 32*5*5 features (32x32 in)"
    p1 = conv1_im2col(x_nchw)                                 # (B, 784, 128)
    a2 = conv_stack(p1, pp["c1_w"], pp["c1_b"],
                    pp["c2_w"], pp["c2_b"])                   # (B, 25, 32)
    a2 = a2.reshape(B, KFC)                                   # contiguous, free
    out = fc_stack(a2, pp["w1"], pp["b1"], pp["w2"], pp["b2"],
                   pp["w3"], pp["b3"])                        # (B, 128)
    return out[:, :10]


# ----------------------------- parameter handling ---------------------------

def init_params(key):
    """PyTorch-default-style U(-1/sqrt(fan_in), +1/sqrt(fan_in)) init."""
    def uni(k, shape, fan_in):
        bound = 1.0 / jnp.sqrt(jnp.float32(fan_in))
        return jax.random.uniform(k, shape, jnp.float32, -bound, bound)

    ks = jax.random.split(key, 10)
    return {
        "conv1_w": uni(ks[0], (C1, C0, KSIZE, KSIZE), C0 * KSIZE * KSIZE),
        "conv1_b": uni(ks[1], (C1,), C0 * KSIZE * KSIZE),
        "conv2_w": uni(ks[2], (C2, C1, KSIZE, KSIZE), C1 * KSIZE * KSIZE),
        "conv2_b": uni(ks[3], (C2,), C1 * KSIZE * KSIZE),
        "fc1_w":   uni(ks[4], (120, KFC), KFC),
        "fc1_b":   uni(ks[5], (120,), KFC),
        "fc2_w":   uni(ks[6], (84, 120), 120),
        "fc2_b":   uni(ks[7], (84,), 120),
        "fc3_w":   uni(ks[8], (10, 84), 84),
        "fc3_b":   uni(ks[9], (10,), 84),
    }


def prepare_params(p):
    """One-time re-layout: conv weights as (K, Cout) with rows ordered
    (kh, kw, cin) matching the packed im2cols (NO output-channel padding for
    conv1/conv2); fc weights as (K, 128) bf16 with PyTorch's (c,h,w) flatten
    order folded into fc1's row permutation; biases in f32."""
    # conv1: (co,ci,kh,kw) -> (kh,kw,ci,co) -> (75, 16), rows padded to 128.
    w1c = jnp.transpose(p["conv1_w"], (2, 3, 1, 0)).reshape(K1, C1)
    w1c = jnp.pad(w1c, ((0, K1P - K1), (0, 0))).astype(jnp.bfloat16)
    b1c = p["conv1_b"].reshape(1, C1).astype(jnp.float32)

    # conv2: (co,ci,kh,kw) -> (kh,kw,ci,co) -> (400, 32), real K, no padding.
    w2c = (jnp.transpose(p["conv2_w"], (2, 3, 1, 0))
           .reshape(K2, C2).astype(jnp.bfloat16))
    b2c = p["conv2_b"].reshape(1, C2).astype(jnp.float32)

    # fc1: our activation flattens as (h, w, c); PyTorch flattens as (c, h, w).
    w1 = p["fc1_w"].reshape(120, C2, P2, P2)
    w1 = jnp.transpose(w1, (2, 3, 1, 0)).reshape(KFC, 120)
    w1 = jnp.pad(w1, ((0, 0), (0, NFC - 120))).astype(jnp.bfloat16)
    b1 = jnp.pad(p["fc1_b"], (0, NFC - 120)).reshape(1, NFC).astype(jnp.float32)

    w2 = jnp.pad(p["fc2_w"].T, ((0, NFC - 120), (0, NFC - 84))).astype(jnp.bfloat16)
    b2 = jnp.pad(p["fc2_b"], (0, NFC - 84)).reshape(1, NFC).astype(jnp.float32)
    w3 = jnp.pad(p["fc3_w"].T, ((0, NFC - 84), (0, NFC - 10))).astype(jnp.bfloat16)
    b3 = jnp.pad(p["fc3_b"], (0, NFC - 10)).reshape(1, NFC).astype(jnp.float32)

    return {"c1_w": w1c, "c1_b": b1c, "c2_w": w2c, "c2_b": b2c,
            "w1": w1, "b1": b1, "w2": w2, "b2": b2, "w3": w3, "b3": b3}


if __name__ == "__main__":
    key = jax.random.PRNGKey(0)
    k_param, k_x = jax.random.split(key)
    params = prepare_params(init_params(k_param))
    # fc1 expects 32*5*5 features => input spatial must be 32x32 (LeNet-style).
    x = jax.random.normal(k_x, (2, C0, H0, W0), dtype=jnp.float32)

    out = jax.jit(simple_cnn_forward)(x, params)
    out = jax.block_until_ready(out)
    assert out.shape == (2, 10), out.shape
    print("KERNEL_OK")
</pallas_src>

<mosaic_0001>
module attributes {stable_mosaic.version = 11 : i64} {
  func.func @conv_stack_kernel(%arg0: i32, %arg1: memref<1x784x128xbf16, #tpu.memory_space<vmem>>, %arg2: memref<128x16xbf16, #tpu.memory_space<vmem>>, %arg3: memref<1x16xf32, #tpu.memory_space<vmem>>, %arg4: memref<400x32xbf16, #tpu.memory_space<vmem>>, %arg5: memref<1x32xf32, #tpu.memory_space<vmem>>, %arg6: memref<1x25x32xbf16, #tpu.memory_space<vmem>>, %arg7: memref<784x16xf32, #tpu.memory_space<vmem>>, %arg8: memref<196x16xf32, #tpu.memory_space<vmem>>, %arg9: memref<136x400xbf16, #tpu.memory_space<vmem>>, %arg10: memref<136x32xf32, #tpu.memory_space<vmem>>) attributes {dimension_semantics = [#tpu.dimension_semantics<parallel>], iteration_bounds = array<i64: 2>, scalar_prefetch = 0 : i64, scratch_operands = 4 : i64, tpu.core_type = #tpu.core_type<tc>, window_params = [{transform_indices = @transform_0, window_bounds = array<i64: 1, 784, 128>}, {pipeline_mode = #tpu.pipeline_mode<synchronous>, transform_indices = @transform_1, window_bounds = array<i64: 128, 16>}, {pipeline_mode = #tpu.pipeline_mode<synchronous>, transform_indices = @transform_2, window_bounds = array<i64: 1, 16>}, {pipeline_mode = #tpu.pipeline_mode<synchronous>, transform_indices = @transform_3, window_bounds = array<i64: 400, 32>}, {pipeline_mode = #tpu.pipeline_mode<synchronous>, transform_indices = @transform_4, window_bounds = array<i64: 1, 32>}, {transform_indices = @transform_5, window_bounds = array<i64: 1, 25, 32>}]} {
    %c0 = arith.constant 0 : index
    %c0_0 = arith.constant 0 : index
    %c0_1 = arith.constant 0 : index
    %0 = vector.load %arg1[%c0, %c0_0, %c0_1] : memref<1x784x128xbf16, #tpu.memory_space<vmem>>, vector<1x784x128xbf16>
    %1 = vector.shape_cast %0 : vector<1x784x128xbf16> to vector<784x128xbf16>
    %c0_2 = arith.constant 0 : index
    %c0_3 = arith.constant 0 : index
    %2 = vector.load %arg2[%c0_2, %c0_3] : memref<128x16xbf16, #tpu.memory_space<vmem>>, vector<128x16xbf16>
    %cst = arith.constant dense<0.000000e+00> : vector<784x16xf32>
    %3 = tpu.matmul %1, %2, %cst {dimension_numbers = #tpu.dot_dimension_numbers<[1], [0], [0], [1], [0, 0, 1, 1], [], []>} : vector<784x128xbf16>, vector<128x16xbf16>, vector<784x16xf32> -> vector<784x16xf32>
    %c0_4 = arith.constant 0 : index
    %c0_5 = arith.constant 0 : index
    %4 = vector.load %arg7[%c0_4, %c0_5] : memref<784x16xf32, #tpu.memory_space<vmem>>, vector<784x16xf32>
    tpu.vector_store %arg7[%c0_4, %c0_5], %3 {strides = array<i32>} : memref<784x16xf32, #tpu.memory_space<vmem>>, vector<784x16xf32>,
    %c0_6 = arith.constant 0 : index
    %c0_7 = arith.constant 0 : index
    %5 = vector.load %arg3[%c0_6, %c0_7] : memref<1x16xf32, #tpu.memory_space<vmem>>, vector<1x16xf32>
    %c0_8 = arith.constant 0 : index
    %c0_9 = arith.constant 0 : index
    %6 = tpu.strided_load %arg7[%c0_8, %c0_9] {strides = array<i32: 2, 1>} : memref<784x16xf32, #tpu.memory_space<vmem>>, vector<14x16xf32>
    %c1 = arith.constant 1 : index
    %c0_10 = arith.constant 0 : index
    %7 = tpu.strided_load %arg7[%c1, %c0_10] {strides = array<i32: 2, 1>} : memref<784x16xf32, #tpu.memory_space<vmem>>, vector<14x16xf32>
    %c28 = arith.constant 28 : index
    %c0_11 = arith.constant 0 : index
    %8 = tpu.strided_load %arg7[%c28, %c0_11] {strides = array<i32: 2, 1>} : memref<784x16xf32, #tpu.memory_space<vmem>>, vector<14x16xf32>
    %c29 = arith.constant 29 : index
    %c0_12 = arith.constant 0 : index
    %9 = tpu.strided_load %arg7[%c29, %c0_12] {strides = array<i32: 2, 1>} : memref<784x16xf32, #tpu.memory_space<vmem>>, vector<14x16xf32>
    %10 = arith.maximumf %6, %7 : vector<14x16xf32>
    %11 = arith.maximumf %8, %9 : vector<14x16xf32>
    %12 = arith.maximumf %10, %11 : vector<14x16xf32>
    %13 = vector.broadcast %5 : vector<1x16xf32> to vector<14x16xf32>
    %14 = arith.addf %12, %13 : vector<14x16xf32>
    %cst_13 = arith.constant 0.000000e+00 : f32
    %15 = vector.broadcast %cst_13 : f32 to vector<14x16xf32>
    %16 = arith.maximumf %14, %15 : vector<14x16xf32>
    %c0_14 = arith.constant 0 : index
    %c0_15 = arith.constant 0 : index
    %17 = vector.load %arg8[%c0_14, %c0_15] : memref<196x16xf32, #tpu.memory_space<vmem>>, vector<14x16xf32>
    tpu.vector_store %arg8[%c0_14, %c0_15], %16 {strides = array<i32>} : memref<196x16xf32, #tpu.memory_space<vmem>>, vector<14x16xf32>,
    %c56 = arith.constant 56 : index
    %c0_16 = arith.constant 0 : index
    %18 = tpu.strided_load %arg7[%c56, %c0_16] {strides = array<i32: 2, 1>} : memref<784x16xf32, #tpu.memory_space<vmem>>, vector<14x16xf32>
    %c57 = arith.constant 57 : index
    %c0_17 = arith.constant 0 : index
    %19 = tpu.strided_load %arg7[%c57, %c0_17] {strides = array<i32: 2, 1>} : memref<784x16xf32, #tpu.memory_space<vmem>>, vector<14x16xf32>
    %c84 = arith.constant 84 : index
    %c0_18 = arith.constant 0 : index
    %20 = tpu.strided_load %arg7[%c84, %c0_18] {strides = array<i32: 2, 1>} : memref<784x16xf32, #tpu.memory_space<vmem>>, vector<14x16xf32>
    %c85 = arith.constant 85 : index
    %c0_19 = arith.constant 0 : index
    %21 = tpu.strided_load %arg7[%c85, %c0_19] {strides = array<i32: 2, 1>} : memref<784x16xf32, #tpu.memory_space<vmem>>, vector<14x16xf32>
    %22 = arith.maximumf %18, %19 : vector<14x16xf32>
    %23 = arith.maximumf %20, %21 : vector<14x16xf32>
    %24 = arith.maximumf %22, %23 : vector<14x16xf32>
    %25 = vector.broadcast %5 : vector<1x16xf32> to vector<14x16xf32>
    %26 = arith.addf %24, %25 : vector<14x16xf32>
    %cst_20 = arith.constant 0.000000e+00 : f32
    %27 = vector.broadcast %cst_20 : f32 to vector<14x16xf32>
    %28 = arith.maximumf %26, %27 : vector<14x16xf32>
    %c14 = arith.constant 14 : index
    %c0_21 = arith.constant 0 : index
    %29 = vector.load %arg8[%c14, %c0_21] : memref<196x16xf32, #tpu.memory_space<vmem>>, vector<14x16xf32>
    tpu.vector_store %arg8[%c14, %c0_21], %28 {strides = array<i32>} : memref<196x16xf32, #tpu.memory_space<vmem>>, vector<14x16xf32>,
    %c112 = arith.constant 112 : index
    %c0_22 = arith.constant 0 : index
    %30 = tpu.strided_load %arg7[%c112, %c0_22] {strides = array<i32: 2, 1>} : memref<784x16xf32, #tpu.memory_space<vmem>>, vector<14x16xf32>
    %c113 = arith.constant 113 : index
    %c0_23 = arith.constant 0 : index
    %31 = tpu.strided_load %arg7[%c113, %c0_23] {strides = array<i32: 2, 1>} : memref<784x16xf32, #tpu.memory_space<vmem>>, vector<14x16xf32>
    %c140 = arith.constant 140 : index
    %c0_24 = arith.constant 0 : index
    %32 = tpu.strided_load %arg7[%c140, %c0_24] {strides = array<i32: 2, 1>} : memref<784x16xf32, #tpu.memory_space<vmem>>, vector<14x16xf32>
    %c141 = arith.constant 141 : index
    %c0_25 = arith.constant 0 : index
    %33 = tpu.strided_load %arg7[%c141, %c0_25] {strides = array<i32: 2, 1>} : memref<784x16xf32, #tpu.memory_space<vmem>>, vector<14x16xf32>
    %34 = arith.maximumf %30, %31 : vector<14x16xf32>
    %35 = arith.maximumf %32, %33 : vector<14x16xf32>
    %36 = arith.maximumf %34, %35 : vector<14x16xf32>
    %37 = vector.broadcast %5 : vector<1x16xf32> to vector<14x16xf32>
    %38 = arith.addf %36, %37 : vector<14x16xf32>
    %cst_26 = arith.constant 0.000000e+00 : f32
    %39 = vector.broadcast %cst_26 : f32 to vector<14x16xf32>
    %40 = arith.maximumf %38, %39 : vector<14x16xf32>
    %c28_27 = arith.constant 28 : index
    %c0_28 = arith.constant 0 : index
    %41 = vector.load %arg8[%c28_27, %c0_28] : memref<196x16xf32, #tpu.memory_space<vmem>>, vector<14x16xf32>
    tpu.vector_store %arg8[%c28_27, %c0_28], %40 {strides = array<i32>} : memref<196x16xf32, #tpu.memory_space<vmem>>, vector<14x16xf32>,
    %c168 = arith.constant 168 : index
    %c0_29 = arith.constant 0 : index
    %42 = tpu.strided_load %arg7[%c168, %c0_29] {strides = array<i32: 2, 1>} : memref<784x16xf32, #tpu.memory_space<vmem>>, vector<14x16xf32>
    %c169 = arith.constant 169 : index
    %c0_30 = arith.constant 0 : index
    %43 = tpu.strided_load %arg7[%c169, %c0_30] {strides = array<i32: 2, 1>} : memref<784x16xf32, #tpu.memory_space<vmem>>, vector<14x16xf32>
    %c196 = arith.constant 196 : index
    %c0_31 = arith.constant 0 : index
    %44 = tpu.strided_load %arg7[%c196, %c0_31] {strides = array<i32: 2, 1>} : memref<784x16xf32, #tpu.memory_space<vmem>>, vector<14x16xf32>
    %c197 = arith.constant 197 : index
    %c0_32 = arith.constant 0 : index
    %45 = tpu.strided_load %arg7[%c197, %c0_32] {strides = array<i32: 2, 1>} : memref<784x16xf32, #tpu.memory_space<vmem>>, vector<14x16xf32>
    %46 = arith.maximumf %42, %43 : vector<14x16xf32>
    %47 = arith.maximumf %44, %45 : vector<14x16xf32>
    %48 = arith.maximumf %46, %47 : vector<14x16xf32>
    %49 = vector.broadcast %5 : vector<1x16xf32> to vector<14x16xf32>
    %50 = arith.addf %48, %49 : vector<14x16xf32>
    %cst_33 = arith.constant 0.000000e+00 : f32
    %51 = vector.broadcast %cst_33 : f32 to vector<14x16xf32>
    %52 = arith.maximumf %50, %51 : vector<14x16xf32>
    %c42 = arith.constant 42 : index
    %c0_34 = arith.constant 0 : index
    %53 = vector.load %arg8[%c42, %c0_34] : memref<196x16xf32, #tpu.memory_space<vmem>>, vector<14x16xf32>
    tpu.vector_store %arg8[%c42, %c0_34], %52 {strides = array<i32>} : memref<196x16xf32, #tpu.memory_space<vmem>>, vector<14x16xf32>,
    %c224 = arith.constant 224 : index
    %c0_35 = arith.constant 0 : index
    %54 = tpu.strided_load %arg7[%c224, %c0_35] {strides = array<i32: 2, 1>} : memref<784x16xf32, #tpu.memory_space<vmem>>, vector<14x16xf32>
    %c225 = arith.constant 225 : index
    %c0_36 = arith.constant 0 : index
    %55 = tpu.strided_load %arg7[%c225, %c0_36] {strides = array<i32: 2, 1>} : memref<784x16xf32, #tpu.memory_space<vmem>>, vector<14x16xf32>
    %c252 = arith.constant 252 : index
    %c0_37 = arith.constant 0 : index
    %56 = tpu.strided_load %arg7[%c252, %c0_37] {strides = array<i32: 2, 1>} : memref<784x16xf32, #tpu.memory_space<vmem>>, vector<14x16xf32>
    %c253 = arith.constant 253 : index
    %c0_38 = arith.constant 0 : index
    %57 = tpu.strided_load %arg7[%c253, %c0_38] {strides = array<i32: 2, 1>} : memref<784x16xf32, #tpu.memory_space<vmem>>, vector<14x16xf32>
    %58 = arith.maximumf %54, %55 : vector<14x16xf32>
    %59 = arith.maximumf %56, %57 : vector<14x16xf32>
    %60 = arith.maximumf %58, %59 : vector<14x16xf32>
    %61 = vector.broadcast %5 : vector<1x16xf32> to vector<14x16xf32>
    %62 = arith.addf %60, %61 : vector<14x16xf32>
    %cst_39 = arith.constant 0.000000e+00 : f32
    %63 = vector.broadcast %cst_39 : f32 to vector<14x16xf32>
    %64 = arith.maximumf %62, %63 : vector<14x16xf32>
    %c56_40 = arith.constant 56 : index
    %c0_41 = arith.constant 0 : index
    %65 = vector.load %arg8[%c56_40, %c0_41] : memref<196x16xf32, #tpu.memory_space<vmem>>, vector<14x16xf32>
    tpu.vector_store %arg8[%c56_40, %c0_41], %64 {strides = array<i32>} : memref<196x16xf32, #tpu.memory_space<vmem>>, vector<14x16xf32>,
    %c280 = arith.constant 280 : index
    %c0_42 = arith.constant 0 : index
    %66 = tpu.strided_load %arg7[%c280, %c0_42] {strides = array<i32: 2, 1>} : memref<784x16xf32, #tpu.memory_space<vmem>>, vector<14x16xf32>
    %c281 = arith.constant 281 : index
    %c0_43 = arith.constant 0 : index
    %67 = tpu.strided_load %arg7[%c281, %c0_43] {strides = array<i32: 2, 1>} : memref<784x16xf32, #tpu.memory_space<vmem>>, vector<14x16xf32>
    %c308 = arith.constant 308 : index
    %c0_44 = arith.constant 0 : index
    %68 = tpu.strided_load %arg7[%c308, %c0_44] {strides = array<i32: 2, 1>} : memref<784x16xf32, #tpu.memory_space<vmem>>, vector<14x16xf32>
    %c309 = arith.constant 309 : index
    %c0_45 = arith.constant 0 : index
    %69 = tpu.strided_load %arg7[%c309, %c0_45] {strides = array<i32: 2, 1>} : memref<784x16xf32, #tpu.memory_space<vmem>>, vector<14x16xf32>
    %70 = arith.maximumf %66, %67 : vector<14x16xf32>
    %71 = arith.maximumf %68, %69 : vector<14x16xf32>
    %72 = arith.maximumf %70, %71 : vector<14x16xf32>
    %73 = vector.broadcast %5 : vector<1x16xf32> to vector<14x16xf32>
    %74 = arith.addf %72, %73 : vector<14x16xf32>
    %cst_46 = arith.constant 0.000000e+00 : f32
    %75 = vector.broadcast %cst_46 : f32 to vector<14x16xf32>
    %76 = arith.maximumf %74, %75 : vector<14x16xf32>
    %c70 = arith.constant 70 : index
    %c0_47 = arith.constant 0 : index
    %77 = vector.load %arg8[%c70, %c0_47] : memref<196x16xf32, #tpu.memory_space<vmem>>, vector<14x16xf32>
    tpu.vector_store %arg8[%c70, %c0_47], %76 {strides = array<i32>} : memref<196x16xf32, #tpu.memory_space<vmem>>, vector<14x16xf32>,
    %c336 = arith.constant 336 : index
    %c0_48 = arith.constant 0 : index
    %78 = tpu.strided_load %arg7[%c336, %c0_48] {strides = array<i32: 2, 1>} : memref<784x16xf32, #tpu.memory_space<vmem>>, vector<14x16xf32>
    %c337 = arith.constant 337 : index
    %c0_49 = arith.constant 0 : index
    %79 = tpu.strided_load %arg7[%c337, %c0_49] {strides = array<i32: 2, 1>} : memref<784x16xf32, #tpu.memory_space<vmem>>, vector<14x16xf32>
    %c364 = arith.constant 364 : index
    %c0_50 = arith.constant 0 : index
    %80 = tpu.strided_load %arg7[%c364, %c0_50] {strides = array<i32: 2, 1>} : memref<784x16xf32, #tpu.memory_space<vmem>>, vector<14x16xf32>
    %c365 = arith.constant 365 : index
    %c0_51 = arith.constant 0 : index
    %81 = tpu.strided_load %arg7[%c365, %c0_51] {strides = array<i32: 2, 1>} : memref<784x16xf32, #tpu.memory_space<vmem>>, vector<14x16xf32>
    %82 = arith.maximumf %78, %79 : vector<14x16xf32>
    %83 = arith.maximumf %80, %81 : vector<14x16xf32>
    %84 = arith.maximumf %82, %83 : vector<14x16xf32>
    %85 = vector.broadcast %5 : vector<1x16xf32> to vector<14x16xf32>
    %86 = arith.addf %84, %85 : vector<14x16xf32>
    %cst_52 = arith.constant 0.000000e+00 : f32
    %87 = vector.broadcast %cst_52 : f32 to vector<14x16xf32>
    %88 = arith.maximumf %86, %87 : vector<14x16xf32>
    %c84_53 = arith.constant 84 : index
    %c0_54 = arith.constant 0 : index
    %89 = vector.load %arg8[%c84_53, %c0_54] : memref<196x16xf32, #tpu.memory_space<vmem>>, vector<14x16xf32>
    tpu.vector_store %arg8[%c84_53, %c0_54], %88 {strides = array<i32>} : memref<196x16xf32, #tpu.memory_space<vmem>>, vector<14x16xf32>,
    %c392 = arith.constant 392 : index
    %c0_55 = arith.constant 0 : index
    %90 = tpu.strided_load %arg7[%c392, %c0_55] {strides = array<i32: 2, 1>} : memref<784x16xf32, #tpu.memory_space<vmem>>, vector<14x16xf32>
    %c393 = arith.constant 393 : index
    %c0_56 = arith.constant 0 : index
    %91 = tpu.strided_load %arg7[%c393, %c0_56] {strides = array<i32: 2, 1>} : memref<784x16xf32, #tpu.memory_space<vmem>>, vector<14x16xf32>
    %c420 = arith.constant 420 : index
    %c0_57 = arith.constant 0 : index
    %92 = tpu.strided_load %arg7[%c420, %c0_57] {strides = array<i32: 2, 1>} : memref<784x16xf32, #tpu.memory_space<vmem>>, vector<14x16xf32>
    %c421 = arith.constant 421 : index
    %c0_58 = arith.constant 0 : index
    %93 = tpu.strided_load %arg7[%c421, %c0_58] {strides = array<i32: 2, 1>} : memref<784x16xf32, #tpu.memory_space<vmem>>, vector<14x16xf32>
    %94 = arith.maximumf %90, %91 : vector<14x16xf32>
    %95 = arith.maximumf %92, %93 : vector<14x16xf32>
    %96 = arith.maximumf %94, %95 : vector<14x16xf32>
    %97 = vector.broadcast %5 : vector<1x16xf32> to vector<14x16xf32>
    %98 = arith.addf %96, %97 : vector<14x16xf32>
    %cst_59 = arith.constant 0.000000e+00 : f32
    %99 = vector.broadcast %cst_59 : f32 to vector<14x16xf32>
    %100 = arith.maximumf %98, %99 : vector<14x16xf32>
    %c98 = arith.constant 98 : index
    %c0_60 = arith.constant 0 : index
    %101 = vector.load %arg8[%c98, %c0_60] : memref<196x16xf32, #tpu.memory_space<vmem>>, vector<14x16xf32>
    tpu.vector_store %arg8[%c98, %c0_60], %100 {strides = array<i32>} : memref<196x16xf32, #tpu.memory_space<vmem>>, vector<14x16xf32>,
    %c448 = arith.constant 448 : index
    %c0_61 = arith.constant 0 : index
    %102 = tpu.strided_load %arg7[%c448, %c0_61] {strides = array<i32: 2, 1>} : memref<784x16xf32, #tpu.memory_space<vmem>>, vector<14x16xf32>
    %c449 = arith.constant 449 : index
    %c0_62 = arith.constant 0 : index
    %103 = tpu.strided_load %arg7[%c449, %c0_62] {strides = array<i32: 2, 1>} : memref<784x16xf32, #tpu.memory_space<vmem>>, vector<14x16xf32>
    %c476 = arith.constant 476 : index
    %c0_63 = arith.constant 0 : index
    %104 = tpu.strided_load %arg7[%c476, %c0_63] {strides = array<i32: 2, 1>} : memref<784x16xf32, #tpu.memory_space<vmem>>, vector<14x16xf32>
    %c477 = arith.constant 477 : index
    %c0_64 = arith.constant 0 : index
    %105 = tpu.strided_load %arg7[%c477, %c0_64] {strides = array<i32: 2, 1>} : memref<784x16xf32, #tpu.memory_space<vmem>>, vector<14x16xf32>
    %106 = arith.maximumf %102, %103 : vector<14x16xf32>
    %107 = arith.maximumf %104, %105 : vector<14x16xf32>
    %108 = arith.maximumf %106, %107 : vector<14x16xf32>
    %109 = vector.broadcast %5 : vector<1x16xf32> to vector<14x16xf32>
    %110 = arith.addf %108, %109 : vector<14x16xf32>
    %cst_65 = arith.constant 0.000000e+00 : f32
    %111 = vector.broadcast %cst_65 : f32 to vector<14x16xf32>
    %112 = arith.maximumf %110, %111 : vector<14x16xf32>
    %c112_66 = arith.constant 112 : index
    %c0_67 = arith.constant 0 : index
    %113 = vector.load %arg8[%c112_66, %c0_67] : memref<196x16xf32, #tpu.memory_space<vmem>>, vector<14x16xf32>
    tpu.vector_store %arg8[%c112_66, %c0_67], %112 {strides = array<i32>} : memref<196x16xf32, #tpu.memory_space<vmem>>, vector<14x16xf32>,
    %c504 = arith.constant 504 : index
    %c0_68 = arith.constant 0 : index
    %114 = tpu.strided_load %arg7[%c504, %c0_68] {strides = array<i32: 2, 1>} : memref<784x16xf32, #tpu.memory_space<vmem>>, vector<14x16xf32>
    %c505 = arith.constant 505 : index
    %c0_69 = arith.constant 0 : index
    %115 = tpu.strided_load %arg7[%c505, %c0_69] {strides = array<i32: 2, 1>} : memref<784x16xf32, #tpu.memory_space<vmem>>, vector<14x16xf32>
    %c532 = arith.constant 532 : index
    %c0_70 = arith.constant 0 : index
    %116 = tpu.strided_load %arg7[%c532, %c0_70] {strides = array<i32: 2, 1>} : memref<784x16xf32, #tpu.memory_space<vmem>>, vector<14x16xf32>
    %c533 = arith.constant 533 : index
    %c0_71 = arith.constant 0 : index
    %117 = tpu.strided_load %arg7[%c533, %c0_71] {strides = array<i32: 2, 1>} : memref<784x16xf32, #tpu.memory_space<vmem>>, vector<14x16xf32>
    %118 = arith.maximumf %114, %115 : vector<14x16xf32>
    %119 = arith.maximumf %116, %117 : vector<14x16xf32>
    %120 = arith.maximumf %118, %119 : vector<14x16xf32>
    %121 = vector.broadcast %5 : vector<1x16xf32> to vector<14x16xf32>
    %122 = arith.addf %120, %121 : vector<14x16xf32>
    %cst_72 = arith.constant 0.000000e+00 : f32
    %123 = vector.broadcast %cst_72 : f32 to vector<14x16xf32>
    %124 = arith.maximumf %122, %123 : vector<14x16xf32>
    %c126 = arith.constant 126 : index
    %c0_73 = arith.constant 0 : index
    %125 = vector.load %arg8[%c126, %c0_73] : memref<196x16xf32, #tpu.memory_space<vmem>>, vector<14x16xf32>
    tpu.vector_store %arg8[%c126, %c0_73], %124 {strides = array<i32>} : memref<196x16xf32, #tpu.memory_space<vmem>>, vector<14x16xf32>,
    %c560 = arith.constant 560 : index
    %c0_74 = arith.constant 0 : index
    %126 = tpu.strided_load %arg7[%c560, %c0_74] {strides = array<i32: 2, 1>} : memref<784x16xf32, #tpu.memory_space<vmem>>, vector<14x16xf32>
    %c561 = arith.constant 561 : index
    %c0_75 = arith.constant 0 : index
    %127 = tpu.strided_load %arg7[%c561, %c0_75] {strides = array<i32: 2, 1>} : memref<784x16xf32, #tpu.memory_space<vmem>>, vector<14x16xf32>
    %c588 = arith.constant 588 : index
    %c0_76 = arith.constant 0 : index
    %128 = tpu.strided_load %arg7[%c588, %c0_76] {strides = array<i32: 2, 1>} : memref<784x16xf32, #tpu.memory_space<vmem>>, vector<14x16xf32>
    %c589 = arith.constant 589 : index
    %c0_77 = arith.constant 0 : index
    %129 = tpu.strided_load %arg7[%c589, %c0_77] {strides = array<i32: 2, 1>} : memref<784x16xf32, #tpu.memory_space<vmem>>, vector<14x16xf32>
    %130 = arith.maximumf %126, %127 : vector<14x16xf32>
    %131 = arith.maximumf %128, %129 : vector<14x16xf32>
    %132 = arith.maximumf %130, %131 : vector<14x16xf32>
    %133 = vector.broadcast %5 : vector<1x16xf32> to vector<14x16xf32>
    %134 = arith.addf %132, %133 : vector<14x16xf32>
    %cst_78 = arith.constant 0.000000e+00 : f32
    %135 = vector.broadcast %cst_78 : f32 to vector<14x16xf32>
    %136 = arith.maximumf %134, %135 : vector<14x16xf32>
    %c140_79 = arith.constant 140 : index
    %c0_80 = arith.constant 0 : index
    %137 = vector.load %arg8[%c140_79, %c0_80] : memref<196x16xf32, #tpu.memory_space<vmem>>, vector<14x16xf32>
    tpu.vector_store %arg8[%c140_79, %c0_80], %136 {strides = array<i32>} : memref<196x16xf32, #tpu.memory_space<vmem>>, vector<14x16xf32>,
    %c616 = arith.constant 616 : index
    %c0_81 = arith.constant 0 : index
    %138 = tpu.strided_load %arg7[%c616, %c0_81] {strides = array<i32: 2, 1>} : memref<784x16xf32, #tpu.memory_space<vmem>>, vector<14x16xf32>
    %c617 = arith.constant 617 : index
    %c0_82 = arith.constant 0 : index
    %139 = tpu.strided_load %arg7[%c617, %c0_82] {strides = array<i32: 2, 1>} : memref<784x16xf32, #tpu.memory_space<vmem>>, vector<14x16xf32>
    %c644 = arith.constant 644 : index
    %c0_83 = arith.constant 0 : index
    %140 = tpu.strided_load %arg7[%c644, %c0_83] {strides = array<i32: 2, 1>} : memref<784x16xf32, #tpu.memory_space<vmem>>, vector<14x16xf32>
    %c645 = arith.constant 645 : index
    %c0_84 = arith.constant 0 : index
    %141 = tpu.strided_load %arg7[%c645, %c0_84] {strides = array<i32: 2, 1>} : memref<784x16xf32, #tpu.memory_space<vmem>>, vector<14x16xf32>
    %142 = arith.maximumf %138, %139 : vector<14x16xf32>
    %143 = arith.maximumf %140, %141 : vector<14x16xf32>
    %144 = arith.maximumf %142, %143 : vector<14x16xf32>
    %145 = vector.broadcast %5 : vector<1x16xf32> to vector<14x16xf32>
    %146 = arith.addf %144, %145 : vector<14x16xf32>
    %cst_85 = arith.constant 0.000000e+00 : f32
    %147 = vector.broadcast %cst_85 : f32 to vector<14x16xf32>
    %148 = arith.maximumf %146, %147 : vector<14x16xf32>
    %c154 = arith.constant 154 : index
    %c0_86 = arith.constant 0 : index
    %149 = vector.load %arg8[%c154, %c0_86] : memref<196x16xf32, #tpu.memory_space<vmem>>, vector<14x16xf32>
    tpu.vector_store %arg8[%c154, %c0_86], %148 {strides = array<i32>} : memref<196x16xf32, #tpu.memory_space<vmem>>, vector<14x16xf32>,
    %c672 = arith.constant 672 : index
    %c0_87 = arith.constant 0 : index
    %150 = tpu.strided_load %arg7[%c672, %c0_87] {strides = array<i32: 2, 1>} : memref<784x16xf32, #tpu.memory_space<vmem>>, vector<14x16xf32>
    %c673 = arith.constant 673 : index
    %c0_88 = arith.constant 0 : index
    %151 = tpu.strided_load %arg7[%c673, %c0_88] {strides = array<i32: 2, 1>} : memref<784x16xf32, #tpu.memory_space<vmem>>, vector<14x16xf32>
    %c700 = arith.constant 700 : index
    %c0_89 = arith.constant 0 : index
    %152 = tpu.strided_load %arg7[%c700, %c0_89] {strides = array<i32: 2, 1>} : memref<784x16xf32, #tpu.memory_space<vmem>>, vector<14x16xf32>
    %c701 = arith.constant 701 : index
    %c0_90 = arith.constant 0 : index
    %153 = tpu.strided_load %arg7[%c701, %c0_90] {strides = array<i32: 2, 1>} : memref<784x16xf32, #tpu.memory_space<vmem>>, vector<14x16xf32>
    %154 = arith.maximumf %150, %151 : vector<14x16xf32>
    %155 = arith.maximumf %152, %153 : vector<14x16xf32>
    %156 = arith.maximumf %154, %155 : vector<14x16xf32>
    %157 = vector.broadcast %5 : vector<1x16xf32> to vector<14x16xf32>
    %158 = arith.addf %156, %157 : vector<14x16xf32>
    %cst_91 = arith.constant 0.000000e+00 : f32
    %159 = vector.broadcast %cst_91 : f32 to vector<14x16xf32>
    %160 = arith.maximumf %158, %159 : vector<14x16xf32>
    %c168_92 = arith.constant 168 : index
    %c0_93 = arith.constant 0 : index
    %161 = vector.load %arg8[%c168_92, %c0_93] : memref<196x16xf32, #tpu.memory_space<vmem>>, vector<14x16xf32>
    tpu.vector_store %arg8[%c168_92, %c0_93], %160 {strides = array<i32>} : memref<196x16xf32, #tpu.memory_space<vmem>>, vector<14x16xf32>,
    %c728 = arith.constant 728 : index
    %c0_94 = arith.constant 0 : index
    %162 = tpu.strided_load %arg7[%c728, %c0_94] {strides = array<i32: 2, 1>} : memref<784x16xf32, #tpu.memory_space<vmem>>, vector<14x16xf32>
    %c729 = arith.constant 729 : index
    %c0_95 = arith.constant 0 : index
    %163 = tpu.strided_load %arg7[%c729, %c0_95] {strides = array<i32: 2, 1>} : memref<784x16xf32, #tpu.memory_space<vmem>>, vector<14x16xf32>
    %c756 = arith.constant 756 : index
    %c0_96 = arith.constant 0 : index
    %164 = tpu.strided_load %arg7[%c756, %c0_96] {strides = array<i32: 2, 1>} : memref<784x16xf32, #tpu.memory_space<vmem>>, vector<14x16xf32>
    %c757 = arith.constant 757 : index
    %c0_97 = arith.constant 0 : index
    %165 = tpu.strided_load %arg7[%c757, %c0_97] {strides = array<i32: 2, 1>} : memref<784x16xf32, #tpu.memory_space<vmem>>, vector<14x16xf32>
    %166 = arith.maximumf %162, %163 : vector<14x16xf32>
    %167 = arith.maximumf %164, %165 : vector<14x16xf32>
    %168 = arith.maximumf %166, %167 : vector<14x16xf32>
    %169 = vector.broadcast %5 : vector<1x16xf32> to vector<14x16xf32>
    %170 = arith.addf %168, %169 : vector<14x16xf32>
    %cst_98 = arith.constant 0.000000e+00 : f32
    %171 = vector.broadcast %cst_98 : f32 to vector<14x16xf32>
    %172 = arith.maximumf %170, %171 : vector<14x16xf32>
    %c182 = arith.constant 182 : index
    %c0_99 = arith.constant 0 : index
    %173 = vector.load %arg8[%c182, %c0_99] : memref<196x16xf32, #tpu.memory_space<vmem>>, vector<14x16xf32>
    tpu.vector_store %arg8[%c182, %c0_99], %172 {strides = array<i32>} : memref<196x16xf32, #tpu.memory_space<vmem>>, vector<14x16xf32>,
    %c0_100 = arith.constant 0 : index
    %c0_101 = arith.constant 0 : index
    %174 = vector.load %arg8[%c0_100, %c0_101] : memref<196x16xf32, #tpu.memory_space<vmem>>, vector<136x16xf32>
    %175 = arith.truncf %174 : vector<136x16xf32> to vector<136x16xbf16>
    %c0_102 = arith.constant 0 : index
    %c0_103 = arith.constant 0 : index
    %176 = vector.load %arg9[%c0_102, %c0_103] : memref<136x400xbf16, #tpu.memory_space<vmem>>, vector<136x16xbf16>
    tpu.vector_store %arg9[%c0_102, %c0_103], %175 {strides = array<i32>} : memref<136x400xbf16, #tpu.memory_space<vmem>>, vector<136x16xbf16>,
    %c1_104 = arith.constant 1 : index
    %c0_105 = arith.constant 0 : index
    %177 = vector.load %arg8[%c1_104, %c0_105] : memref<196x16xf32, #tpu.memory_space<vmem>>, vector<136x16xf32>
    %178 = arith.truncf %177 : vector<136x16xf32> to vector<136x16xbf16>
    %c0_106 = arith.constant 0 : index
    %c16 = arith.constant 16 : index
    %179 = vector.load %arg9[%c0_106, %c16] : memref<136x400xbf16, #tpu.memory_space<vmem>>, vector<136x16xbf16>
    tpu.vector_store %arg9[%c0_106, %c16], %178 {strides = array<i32>} : memref<136x400xbf16, #tpu.memory_space<vmem>>, vector<136x16xbf16>,
    %c2 = arith.constant 2 : index
    %c0_107 = arith.constant 0 : index
    %180 = vector.load %arg8[%c2, %c0_107] : memref<196x16xf32, #tpu.memory_space<vmem>>, vector<136x16xf32>
    %181 = arith.truncf %180 : vector<136x16xf32> to vector<136x16xbf16>
    %c0_108 = arith.constant 0 : index
    %c32 = arith.constant 32 : index
    %182 = vector.load %arg9[%c0_108, %c32] : memref<136x400xbf16, #tpu.memory_space<vmem>>, vector<136x16xbf16>
    tpu.vector_store %arg9[%c0_108, %c32], %181 {strides = array<i32>} : memref<136x400xbf16, #tpu.memory_space<vmem>>, vector<136x16xbf16>,
    %c3 = arith.constant 3 : index
    %c0_109 = arith.constant 0 : index
    %183 = vector.load %arg8[%c3, %c0_109] : memref<196x16xf32, #tpu.memory_space<vmem>>, vector<136x16xf32>
    %184 = arith.truncf %183 : vector<136x16xf32> to vector<136x16xbf16>
    %c0_110 = arith.constant 0 : index
    %c48 = arith.constant 48 : index
    %185 = vector.load %arg9[%c0_110, %c48] : memref<136x400xbf16, #tpu.memory_space<vmem>>, vector<136x16xbf16>
    tpu.vector_store %arg9[%c0_110, %c48], %184 {strides = array<i32>} : memref<136x400xbf16, #tpu.memory_space<vmem>>, vector<136x16xbf16>,
    %c4 = arith.constant 4 : index
    %c0_111 = arith.constant 0 : index
    %186 = vector.load %arg8[%c4, %c0_111] : memref<196x16xf32, #tpu.memory_space<vmem>>, vector<136x16xf32>
    %187 = arith.truncf %186 : vector<136x16xf32> to vector<136x16xbf16>
    %c0_112 = arith.constant 0 : index
    %c64 = arith.constant 64 : index
    %188 = vector.load %arg9[%c0_112, %c64] : memref<136x400xbf16, #tpu.memory_space<vmem>>, vector<136x16xbf16>
    tpu.vector_store %arg9[%c0_112, %c64], %187 {strides = array<i32>} : memref<136x400xbf16, #tpu.memory_space<vmem>>, vector<136x16xbf16>,
    %c14_113 = arith.constant 14 : index
    %c0_114 = arith.constant 0 : index
    %189 = vector.load %arg8[%c14_113, %c0_114] : memref<196x16xf32, #tpu.memory_space<vmem>>, vector<136x16xf32>
    %190 = arith.truncf %189 : vector<136x16xf32> to vector<136x16xbf16>
    %c0_115 = arith.constant 0 : index
    %c80 = arith.constant 80 : index
    %191 = vector.load %arg9[%c0_115, %c80] : memref<136x400xbf16, #tpu.memory_space<vmem>>, vector<136x16xbf16>
    tpu.vector_store %arg9[%c0_115, %c80], %190 {strides = array<i32>} : memref<136x400xbf16, #tpu.memory_space<vmem>>, vector<136x16xbf16>,
    %c15 = arith.constant 15 : index
    %c0_116 = arith.constant 0 : index
    %192 = vector.load %arg8[%c15, %c0_116] : memref<196x16xf32, #tpu.memory_space<vmem>>, vector<136x16xf32>
    %193 = arith.truncf %192 : vector<136x16xf32> to vector<136x16xbf16>
    %c0_117 = arith.constant 0 : index
    %c96 = arith.constant 96 : index
    %194 = vector.load %arg9[%c0_117, %c96] : memref<136x400xbf16, #tpu.memory_space<vmem>>, vector<136x16xbf16>
    tpu.vector_store %arg9[%c0_117, %c96], %193 {strides = array<i32>} : memref<136x400xbf16, #tpu.memory_space<vmem>>, vector<136x16xbf16>,
    %c16_118 = arith.constant 16 : index
    %c0_119 = arith.constant 0 : index
    %195 = vector.load %arg8[%c16_118, %c0_119] : memref<196x16xf32, #tpu.memory_space<vmem>>, vector<136x16xf32>
    %196 = arith.truncf %195 : vector<136x16xf32> to vector<136x16xbf16>
    %c0_120 = arith.constant 0 : index
    %c112_121 = arith.constant 112 : index
    %197 = vector.load %arg9[%c0_120, %c112_121] : memref<136x400xbf16, #tpu.memory_space<vmem>>, vector<136x16xbf16>
    tpu.vector_store %arg9[%c0_120, %c112_121], %196 {strides = array<i32>} : memref<136x400xbf16, #tpu.memory_space<vmem>>, vector<136x16xbf16>,
    %c17 = arith.constant 17 : index
    %c0_122 = arith.constant 0 : index
    %198 = vector.load %arg8[%c17, %c0_122] : memref<196x16xf32, #tpu.memory_space<vmem>>, vector<136x16xf32>
    %199 = arith.truncf %198 : vector<136x16xf32> to vector<136x16xbf16>
    %c0_123 = arith.constant 0 : index
    %c128 = arith.constant 128 : index
    %200 = vector.load %arg9[%c0_123, %c128] : memref<136x400xbf16, #tpu.memory_space<vmem>>, vector<136x16xbf16>
    tpu.vector_store %arg9[%c0_123, %c128], %199 {strides = array<i32>} : memref<136x400xbf16, #tpu.memory_space<vmem>>, vector<136x16xbf16>,
    %c18 = arith.constant 18 : index
    %c0_124 = arith.constant 0 : index
    %201 = vector.load %arg8[%c18, %c0_124] : memref<196x16xf32, #tpu.memory_space<vmem>>, vector<136x16xf32>
    %202 = arith.truncf %201 : vector<136x16xf32> to vector<136x16xbf16>
    %c0_125 = arith.constant 0 : index
    %c144 = arith.constant 144 : index
    %203 = vector.load %arg9[%c0_125, %c144] : memref<136x400xbf16, #tpu.memory_space<vmem>>, vector<136x16xbf16>
    tpu.vector_store %arg9[%c0_125, %c144], %202 {strides = array<i32>} : memref<136x400xbf16, #tpu.memory_space<vmem>>, vector<136x16xbf16>,
    %c28_126 = arith.constant 28 : index
    %c0_127 = arith.constant 0 : index
    %204 = vector.load %arg8[%c28_126, %c0_127] : memref<196x16xf32, #tpu.memory_space<vmem>>, vector<136x16xf32>
    %205 = arith.truncf %204 : vector<136x16xf32> to vector<136x16xbf16>
    %c0_128 = arith.constant 0 : index
    %c160 = arith.constant 160 : index
    %206 = vector.load %arg9[%c0_128, %c160] : memref<136x400xbf16, #tpu.memory_space<vmem>>, vector<136x16xbf16>
    tpu.vector_store %arg9[%c0_128, %c160], %205 {strides = array<i32>} : memref<136x400xbf16, #tpu.memory_space<vmem>>, vector<136x16xbf16>,
    %c29_129 = arith.constant 29 : index
    %c0_130 = arith.constant 0 : index
    %207 = vector.load %arg8[%c29_129, %c0_130] : memref<196x16xf32, #tpu.memory_space<vmem>>, vector<136x16xf32>
    %208 = arith.truncf %207 : vector<136x16xf32> to vector<136x16xbf16>
    %c0_131 = arith.constant 0 : index
    %c176 = arith.constant 176 : index
    %209 = vector.load %arg9[%c0_131, %c176] : memref<136x400xbf16, #tpu.memory_space<vmem>>, vector<136x16xbf16>
    tpu.vector_store %arg9[%c0_131, %c176], %208 {strides = array<i32>} : memref<136x400xbf16, #tpu.memory_space<vmem>>, vector<136x16xbf16>,
    %c30 = arith.constant 30 : index
    %c0_132 = arith.constant 0 : index
    %210 = vector.load %arg8[%c30, %c0_132] : memref<196x16xf32, #tpu.memory_space<vmem>>, vector<136x16xf32>
    %211 = arith.truncf %210 : vector<136x16xf32> to vector<136x16xbf16>
    %c0_133 = arith.constant 0 : index
    %c192 = arith.constant 192 : index
    %212 = vector.load %arg9[%c0_133, %c192] : memref<136x400xbf16, #tpu.memory_space<vmem>>, vector<136x16xbf16>
    tpu.vector_store %arg9[%c0_133, %c192], %211 {strides = array<i32>} : memref<136x400xbf16, #tpu.memory_space<vmem>>, vector<136x16xbf16>,
    %c31 = arith.constant 31 : index
    %c0_134 = arith.constant 0 : index
    %213 = vector.load %arg8[%c31, %c0_134] : memref<196x16xf32, #tpu.memory_space<vmem>>, vector<136x16xf32>
    %214 = arith.truncf %213 : vector<136x16xf32> to vector<136x16xbf16>
    %c0_135 = arith.constant 0 : index
    %c208 = arith.constant 208 : index
    %215 = vector.load %arg9[%c0_135, %c208] : memref<136x400xbf16, #tpu.memory_space<vmem>>, vector<136x16xbf16>
    tpu.vector_store %arg9[%c0_135, %c208], %214 {strides = array<i32>} : memref<136x400xbf16, #tpu.memory_space<vmem>>, vector<136x16xbf16>,
    %c32_136 = arith.constant 32 : index
    %c0_137 = arith.constant 0 : index
    %216 = vector.load %arg8[%c32_136, %c0_137] : memref<196x16xf32, #tpu.memory_space<vmem>>, vector<136x16xf32>
    %217 = arith.truncf %216 : vector<136x16xf32> to vector<136x16xbf16>
    %c0_138 = arith.constant 0 : index
    %c224_139 = arith.constant 224 : index
    %218 = vector.load %arg9[%c0_138, %c224_139] : memref<136x400xbf16, #tpu.memory_space<vmem>>, vector<136x16xbf16>
    tpu.vector_store %arg9[%c0_138, %c224_139], %217 {strides = array<i32>} : memref<136x400xbf16, #tpu.memory_space<vmem>>, vector<136x16xbf16>,
    %c42_140 = arith.constant 42 : index
    %c0_141 = arith.constant 0 : index
    %219 = vector.load %arg8[%c42_140, %c0_141] : memref<196x16xf32, #tpu.memory_space<vmem>>, vector<136x16xf32>
    %220 = arith.truncf %219 : vector<136x16xf32> to vector<136x16xbf16>
    %c0_142 = arith.constant 0 : index
    %c240 = arith.constant 240 : index
    %221 = vector.load %arg9[%c0_142, %c240] : memref<136x400xbf16, #tpu.memory_space<vmem>>, vector<136x16xbf16>
    tpu.vector_store %arg9[%c0_142, %c240], %220 {strides = array<i32>} : memref<136x400xbf16, #tpu.memory_space<vmem>>, vector<136x16xbf16>,
    %c43 = arith.constant 43 : index
    %c0_143 = arith.constant 0 : index
    %222 = vector.load %arg8[%c43, %c0_143] : memref<196x16xf32, #tpu.memory_space<vmem>>, vector<136x16xf32>
    %223 = arith.truncf %222 : vector<136x16xf32> to vector<136x16xbf16>
    %c0_144 = arith.constant 0 : index
    %c256 = arith.constant 256 : index
    %224 = vector.load %arg9[%c0_144, %c256] : memref<136x400xbf16, #tpu.memory_space<vmem>>, vector<136x16xbf16>
    tpu.vector_store %arg9[%c0_144, %c256], %223 {strides = array<i32>} : memref<136x400xbf16, #tpu.memory_space<vmem>>, vector<136x16xbf16>,
    %c44 = arith.constant 44 : index
    %c0_145 = arith.constant 0 : index
    %225 = vector.load %arg8[%c44, %c0_145] : memref<196x16xf32, #tpu.memory_space<vmem>>, vector<136x16xf32>
    %226 = arith.truncf %225 : vector<136x16xf32> to vector<136x16xbf16>
    %c0_146 = arith.constant 0 : index
    %c272 = arith.constant 272 : index
    %227 = vector.load %arg9[%c0_146, %c272] : memref<136x400xbf16, #tpu.memory_space<vmem>>, vector<136x16xbf16>
    tpu.vector_store %arg9[%c0_146, %c272], %226 {strides = array<i32>} : memref<136x400xbf16, #tpu.memory_space<vmem>>, vector<136x16xbf16>,
    %c45 = arith.constant 45 : index
    %c0_147 = arith.constant 0 : index
    %228 = vector.load %arg8[%c45, %c0_147] : memref<196x16xf32, #tpu.memory_space<vmem>>, vector<136x16xf32>
    %229 = arith.truncf %228 : vector<136x16xf32> to vector<136x16xbf16>
    %c0_148 = arith.constant 0 : index
    %c288 = arith.constant 288 : index
    %230 = vector.load %arg9[%c0_148, %c288] : memref<136x400xbf16, #tpu.memory_space<vmem>>, vector<136x16xbf16>
    tpu.vector_store %arg9[%c0_148, %c288], %229 {strides = array<i32>} : memref<136x400xbf16, #tpu.memory_space<vmem>>, vector<136x16xbf16>,
    %c46 = arith.constant 46 : index
    %c0_149 = arith.constant 0 : index
    %231 = vector.load %arg8[%c46, %c0_149] : memref<196x16xf32, #tpu.memory_space<vmem>>, vector<136x16xf32>
    %232 = arith.truncf %231 : vector<136x16xf32> to vector<136x16xbf16>
    %c0_150 = arith.constant 0 : index
    %c304 = arith.constant 304 : index
    %233 = vector.load %arg9[%c0_150, %c304] : memref<136x400xbf16, #tpu.memory_space<vmem>>, vector<136x16xbf16>
    tpu.vector_store %arg9[%c0_150, %c304], %232 {strides = array<i32>} : memref<136x400xbf16, #tpu.memory_space<vmem>>, vector<136x16xbf16>,
    %c56_151 = arith.constant 56 : index
    %c0_152 = arith.constant 0 : index
    %234 = vector.load %arg8[%c56_151, %c0_152] : memref<196x16xf32, #tpu.memory_space<vmem>>, vector<136x16xf32>
    %235 = arith.truncf %234 : vector<136x16xf32> to vector<136x16xbf16>
    %c0_153 = arith.constant 0 : index
    %c320 = arith.constant 320 : index
    %236 = vector.load %arg9[%c0_153, %c320] : memref<136x400xbf16, #tpu.memory_space<vmem>>, vector<136x16xbf16>
    tpu.vector_store %arg9[%c0_153, %c320], %235 {strides = array<i32>} : memref<136x400xbf16, #tpu.memory_space<vmem>>, vector<136x16xbf16>,
    %c57_154 = arith.constant 57 : index
    %c0_155 = arith.constant 0 : index
    %237 = vector.load %arg8[%c57_154, %c0_155] : memref<196x16xf32, #tpu.memory_space<vmem>>, vector<136x16xf32>
    %238 = arith.truncf %237 : vector<136x16xf32> to vector<136x16xbf16>
    %c0_156 = arith.constant 0 : index
    %c336_157 = arith.constant 336 : index
    %239 = vector.load %arg9[%c0_156, %c336_157] : memref<136x400xbf16, #tpu.memory_space<vmem>>, vector<136x16xbf16>
    tpu.vector_store %arg9[%c0_156, %c336_157], %238 {strides = array<i32>} : memref<136x400xbf16, #tpu.memory_space<vmem>>, vector<136x16xbf16>,
    %c58 = arith.constant 58 : index
    %c0_158 = arith.constant 0 : index
    %240 = vector.load %arg8[%c58, %c0_158] : memref<196x16xf32, #tpu.memory_space<vmem>>, vector<136x16xf32>
    %241 = arith.truncf %240 : vector<136x16xf32> to vector<136x16xbf16>
    %c0_159 = arith.constant 0 : index
    %c352 = arith.constant 352 : index
    %242 = vector.load %arg9[%c0_159, %c352] : memref<136x400xbf16, #tpu.memory_space<vmem>>, vector<136x16xbf16>
    tpu.vector_store %arg9[%c0_159, %c352], %241 {strides = array<i32>} : memref<136x400xbf16, #tpu.memory_space<vmem>>, vector<136x16xbf16>,
    %c59 = arith.constant 59 : index
    %c0_160 = arith.constant 0 : index
    %243 = vector.load %arg8[%c59, %c0_160] : memref<196x16xf32, #tpu.memory_space<vmem>>, vector<136x16xf32>
    %244 = arith.truncf %243 : vector<136x16xf32> to vector<136x16xbf16>
    %c0_161 = arith.constant 0 : index
    %c368 = arith.constant 368 : index
    %245 = vector.load %arg9[%c0_161, %c368] : memref<136x400xbf16, #tpu.memory_space<vmem>>, vector<136x16xbf16>
    tpu.vector_store %arg9[%c0_161, %c368], %244 {strides = array<i32>} : memref<136x400xbf16, #tpu.memory_space<vmem>>, vector<136x16xbf16>,
    %c60 = arith.constant 60 : index
    %c0_162 = arith.constant 0 : index
    %246 = vector.load %arg8[%c60, %c0_162] : memref<196x16xf32, #tpu.memory_space<vmem>>, vector<136x16xf32>
    %247 = arith.truncf %246 : vector<136x16xf32> to vector<136x16xbf16>
    %c0_163 = arith.constant 0 : index
    %c384 = arith.constant 384 : index
    %248 = vector.load %arg9[%c0_163, %c384] : memref<136x400xbf16, #tpu.memory_space<vmem>>, vector<136x16xbf16>
    tpu.vector_store %arg9[%c0_163, %c384], %247 {strides = array<i32>} : memref<136x400xbf16, #tpu.memory_space<vmem>>, vector<136x16xbf16>,
    %c0_164 = arith.constant 0 : index
    %c0_165 = arith.constant 0 : index
    %249 = vector.load %arg9[%c0_164, %c0_165] : memref<136x400xbf16, #tpu.memory_space<vmem>>, vector<136x400xbf16>
    %c0_166 = arith.constant 0 : index
    %c0_167 = arith.constant 0 : index
    %250 = vector.load %arg4[%c0_166, %c0_167] : memref<400x32xbf16, #tpu.memory_space<vmem>>, vector<400x32xbf16>
    %cst_168 = arith.constant dense<0.000000e+00> : vector<136x32xf32>
    %251 = tpu.matmul %249, %250, %cst_168 {dimension_numbers = #tpu.dot_dimension_numbers<[1], [0], [0], [1], [0, 0, 1, 1], [], []>} : vector<136x400xbf16>, vector<400x32xbf16>, vector<136x32xf32> -> vector<136x32xf32>
    %c0_169 = arith.constant 0 : index
    %c0_170 = arith.constant 0 : index
    %252 = vector.load %arg10[%c0_169, %c0_170] : memref<136x32xf32, #tpu.memory_space<vmem>>, vector<136x32xf32>
    tpu.vector_store %arg10[%c0_169, %c0_170], %251 {strides = array<i32>} : memref<136x32xf32, #tpu.memory_space<vmem>>, vector<136x32xf32>,
    %c0_171 = arith.constant 0 : index
    %c0_172 = arith.constant 0 : index
    %253 = vector.load %arg5[%c0_171, %c0_172] : memref<1x32xf32, #tpu.memory_space<vmem>>, vector<1x32xf32>
    %c0_173 = arith.constant 0 : index
    %c0_174 = arith.constant 0 : index
    %254 = tpu.strided_load %arg10[%c0_173, %c0_174] {strides = array<i32: 2, 1>} : memref<136x32xf32, #tpu.memory_space<vmem>>, vector<5x32xf32>
    %c1_175 = arith.constant 1 : index
    %c0_176 = arith.constant 0 : index
    %255 = tpu.strided_load %arg10[%c1_175, %c0_176] {strides = array<i32: 2, 1>} : memref<136x32xf32, #tpu.memory_space<vmem>>, vector<5x32xf32>
    %c14_177 = arith.constant 14 : index
    %c0_178 = arith.constant 0 : index
    %256 = tpu.strided_load %arg10[%c14_177, %c0_178] {strides = array<i32: 2, 1>} : memref<136x32xf32, #tpu.memory_space<vmem>>, vector<5x32xf32>
    %c15_179 = arith.constant 15 : index
    %c0_180 = arith.constant 0 : index
    %257 = tpu.strided_load %arg10[%c15_179, %c0_180] {strides = array<i32: 2, 1>} : memref<136x32xf32, #tpu.memory_space<vmem>>, vector<5x32xf32>
    %258 = arith.maximumf %254, %255 : vector<5x32xf32>
    %259 = arith.maximumf %256, %257 : vector<5x32xf32>
    %260 = arith.maximumf %258, %259 : vector<5x32xf32>
    %c28_181 = arith.constant 28 : index
    %c0_182 = arith.constant 0 : index
    %261 = tpu.strided_load %arg10[%c28_181, %c0_182] {strides = array<i32: 2, 1>} : memref<136x32xf32, #tpu.memory_space<vmem>>, vector<5x32xf32>
    %c29_183 = arith.constant 29 : index
    %c0_184 = arith.constant 0 : index
    %262 = tpu.strided_load %arg10[%c29_183, %c0_184] {strides = array<i32: 2, 1>} : memref<136x32xf32, #tpu.memory_space<vmem>>, vector<5x32xf32>
    %c42_185 = arith.constant 42 : index
    %c0_186 = arith.constant 0 : index
    %263 = tpu.strided_load %arg10[%c42_185, %c0_186] {strides = array<i32: 2, 1>} : memref<136x32xf32, #tpu.memory_space<vmem>>, vector<5x32xf32>
    %c43_187 = arith.constant 43 : index
    %c0_188 = arith.constant 0 : index
    %264 = tpu.strided_load %arg10[%c43_187, %c0_188] {strides = array<i32: 2, 1>} : memref<136x32xf32, #tpu.memory_space<vmem>>, vector<5x32xf32>
    %265 = arith.maximumf %261, %262 : vector<5x32xf32>
    %266 = arith.maximumf %263, %264 : vector<5x32xf32>
    %267 = arith.maximumf %265, %266 : vector<5x32xf32>
    %c56_189 = arith.constant 56 : index
    %c0_190 = arith.constant 0 : index
    %268 = tpu.strided_load %arg10[%c56_189, %c0_190] {strides = array<i32: 2, 1>} : memref<136x32xf32, #tpu.memory_space<vmem>>, vector<5x32xf32>
    %c57_191 = arith.constant 57 : index
    %c0_192 = arith.constant 0 : index
    %269 = tpu.strided_load %arg10[%c57_191, %c0_192] {strides = array<i32: 2, 1>} : memref<136x32xf32, #tpu.memory_space<vmem>>, vector<5x32xf32>
    %c70_193 = arith.constant 70 : index
    %c0_194 = arith.constant 0 : index
    %270 = tpu.strided_load %arg10[%c70_193, %c0_194] {strides = array<i32: 2, 1>} : memref<136x32xf32, #tpu.memory_space<vmem>>, vector<5x32xf32>
    %c71 = arith.constant 71 : index
    %c0_195 = arith.constant 0 : index
    %271 = tpu.strided_load %arg10[%c71, %c0_195] {strides = array<i32: 2, 1>} : memref<136x32xf32, #tpu.memory_space<vmem>>, vector<5x32xf32>
    %272 = arith.maximumf %268, %269 : vector<5x32xf32>
    %273 = arith.maximumf %270, %271 : vector<5x32xf32>
    %274 = arith.maximumf %272, %273 : vector<5x32xf32>
    %c84_196 = arith.constant 84 : index
    %c0_197 = arith.constant 0 : index
    %275 = tpu.strided_load %arg10[%c84_196, %c0_197] {strides = array<i32: 2, 1>} : memref<136x32xf32, #tpu.memory_space<vmem>>, vector<5x32xf32>
    %c85_198 = arith.constant 85 : index
    %c0_199 = arith.constant 0 : index
    %276 = tpu.strided_load %arg10[%c85_198, %c0_199] {strides = array<i32: 2, 1>} : memref<136x32xf32, #tpu.memory_space<vmem>>, vector<5x32xf32>
    %c98_200 = arith.constant 98 : index
    %c0_201 = arith.constant 0 : index
    %277 = tpu.strided_load %arg10[%c98_200, %c0_201] {strides = array<i32: 2, 1>} : memref<136x32xf32, #tpu.memory_space<vmem>>, vector<5x32xf32>
    %c99 = arith.constant 99 : index
    %c0_202 = arith.constant 0 : index
    %278 = tpu.strided_load %arg10[%c99, %c0_202] {strides = array<i32: 2, 1>} : memref<136x32xf32, #tpu.memory_space<vmem>>, vector<5x32xf32>
    %279 = arith.maximumf %275, %276 : vector<5x32xf32>
    %280 = arith.maximumf %277, %278 : vector<5x32xf32>
    %281 = arith.maximumf %279, %280 : vector<5x32xf32>
    %c112_203 = arith.constant 112 : index
    %c0_204 = arith.constant 0 : index
    %282 = tpu.strided_load %arg10[%c112_203, %c0_204] {strides = array<i32: 2, 1>} : memref<136x32xf32, #tpu.memory_space<vmem>>, vector<5x32xf32>
    %c113_205 = arith.constant 113 : index
    %c0_206 = arith.constant 0 : index
    %283 = tpu.strided_load %arg10[%c113_205, %c0_206] {strides = array<i32: 2, 1>} : memref<136x32xf32, #tpu.memory_space<vmem>>, vector<5x32xf32>
    %c126_207 = arith.constant 126 : index
    %c0_208 = arith.constant 0 : index
    %284 = tpu.strided_load %arg10[%c126_207, %c0_208] {strides = array<i32: 2, 1>} : memref<136x32xf32, #tpu.memory_space<vmem>>, vector<5x32xf32>
    %c127 = arith.constant 127 : index
    %c0_209 = arith.constant 0 : index
    %285 = tpu.strided_load %arg10[%c127, %c0_209] {strides = array<i32: 2, 1>} : memref<136x32xf32, #tpu.memory_space<vmem>>, vector<5x32xf32>
    %286 = arith.maximumf %282, %283 : vector<5x32xf32>
    %287 = arith.maximumf %284, %285 : vector<5x32xf32>
    %288 = arith.maximumf %286, %287 : vector<5x32xf32>
    %289 = tpu.concatenate %260, %267, %274, %281, %288 in 0 : vector<5x32xf32>, vector<5x32xf32>, vector<5x32xf32>, vector<5x32xf32>, vector<5x32xf32> -> vector<25x32xf32>
    %290 = vector.broadcast %253 : vector<1x32xf32> to vector<25x32xf32>
    %291 = arith.addf %289, %290 : vector<25x32xf32>
    %cst_210 = arith.constant 0.000000e+00 : f32
    %292 = vector.broadcast %cst_210 : f32 to vector<25x32xf32>
    %293 = arith.maximumf %291, %292 : vector<25x32xf32>
    %294 = arith.truncf %293 : vector<25x32xf32> to vector<25x32xbf16>
    %c0_211 = arith.constant 0 : index
    %c0_212 = arith.constant 0 : index
    %c0_213 = arith.constant 0 : index
    %295 = vector.load %arg6[%c0_211, %c0_212, %c0_213] : memref<1x25x32xbf16, #tpu.memory_space<vmem>>, vector<1x25x32xbf16>
    %296 = vector.shape_cast %295 : vector<1x25x32xbf16> to vector<25x32xbf16>
    %297 = vector.shape_cast %294 : vector<25x32xbf16> to vector<1x25x32xbf16>
    tpu.vector_store %arg6[%c0_211, %c0_212, %c0_213], %297 {strides = array<i32>} : memref<1x25x32xbf16, #tpu.memory_space<vmem>>, vector<1x25x32xbf16>,
    return
  }
  func.func @transform_0(%arg0: i32) -> (i32, i32, i32) {
    %c0_i32 = arith.constant 0 : i32
    %c0_i32_0 = arith.constant 0 : i32
    %c0_i32_1 = arith.constant 0 : i32
    return %arg0, %c0_i32, %c0_i32_0 : i32, i32, i32
  }
  func.func @transform_1(%arg0: i32) -> (i32, i32) {
    %c0_i32 = arith.constant 0 : i32
    %c0_i32_0 = arith.constant 0 : i32
    %c0_i32_1 = arith.constant 0 : i32
    return %c0_i32, %c0_i32_0 : i32, i32
  }
  func.func @transform_2(%arg0: i32) -> (i32, i32) {
    %c0_i32 = arith.constant 0 : i32
    %c0_i32_0 = arith.constant 0 : i32
    %c0_i32_1 = arith.constant 0 : i32
    return %c0_i32, %c0_i32_0 : i32, i32
  }
  func.func @transform_3(%arg0: i32) -> (i32, i32) {
    %c0_i32 = arith.constant 0 : i32
    %c0_i32_0 = arith.constant 0 : i32
    %c0_i32_1 = arith.constant 0 : i32
    return %c0_i32, %c0_i32_0 : i32, i32
  }
  func.func @transform_4(%arg0: i32) -> (i32, i32) {
    %c0_i32 = arith.constant 0 : i32
    %c0_i32_0 = arith.constant 0 : i32
    %c0_i32_1 = arith.constant 0 : i32
    return %c0_i32, %c0_i32_0 : i32, i32
  }
  func.func @transform_5(%arg0: i32) -> (i32, i32, i32) {
    %c0_i32 = arith.constant 0 : i32
    %c0_i32_0 = arith.constant 0 : i32
    %c0_i32_1 = arith.constant 0 : i32
    return %arg0, %c0_i32, %c0_i32_0 : i32, i32, i32
  }
}

module attributes {stable_mosaic.version = 11 : i64} {
  func.func @fc_stack_kernel(%arg0: i32, %arg1: memref<2x800xbf16, #tpu.memory_space<vmem>>, %arg2: memref<800x128xbf16, #tpu.memory_space<vmem>>, %arg3: memref<1x128xf32, #tpu.memory_space<vmem>>, %arg4: memref<128x128xbf16, #tpu.memory_space<vmem>>, %arg5: memref<1x128xf32, #tpu.memory_space<vmem>>, %arg6: memref<128x128xbf16, #tpu.memory_space<vmem>>, %arg7: memref<1x128xf32, #tpu.memory_space<vmem>>, %arg8: memref<2x128xf32, #tpu.memory_space<vmem>>) attributes {dimension_semantics = [#tpu.dimension_semantics<arbitrary>], iteration_bounds = array<i64: 1>, scalar_prefetch = 0 : i64, scratch_operands = 0 : i64, tpu.core_type = #tpu.core_type<tc>, window_params = [{pipeline_mode = #tpu.pipeline_mode<synchronous>, transform_indices = @transform_0, window_bounds = array<i64: 2, 800>}, {pipeline_mode = #tpu.pipeline_mode<synchronous>, transform_indices = @transform_1, window_bounds = array<i64: 800, 128>}, {pipeline_mode = #tpu.pipeline_mode<synchronous>, transform_indices = @transform_2, window_bounds = array<i64: 1, 128>}, {pipeline_mode = #tpu.pipeline_mode<synchronous>, transform_indices = @transform_3, window_bounds = array<i64: 128, 128>}, {pipeline_mode = #tpu.pipeline_mode<synchronous>, transform_indices = @transform_4, window_bounds = array<i64: 1, 128>}, {pipeline_mode = #tpu.pipeline_mode<synchronous>, transform_indices = @transform_5, window_bounds = array<i64: 128, 128>}, {pipeline_mode = #tpu.pipeline_mode<synchronous>, transform_indices = @transform_6, window_bounds = array<i64: 1, 128>}, {pipeline_mode = #tpu.pipeline_mode<synchronous>, transform_indices = @transform_7, window_bounds = array<i64: 2, 128>}]} {
    %c0 = arith.constant 0 : index
    %c0_0 = arith.constant 0 : index
    %0 = vector.load %arg1[%c0, %c0_0] : memref<2x800xbf16, #tpu.memory_space<vmem>>, vector<2x800xbf16>
    %c0_1 = arith.constant 0 : index
    %c0_2 = arith.constant 0 : index
    %1 = vector.load %arg2[%c0_1, %c0_2] : memref<800x128xbf16, #tpu.memory_space<vmem>>, vector<800x128xbf16>
    %cst = arith.constant dense<0.000000e+00> : vector<2x128xf32>
    %2 = tpu.matmul %0, %1, %cst {dimension_numbers = #tpu.dot_dimension_numbers<[1], [0], [0], [1], [0, 0, 1, 1], [], []>} : vector<2x800xbf16>, vector<800x128xbf16>, vector<2x128xf32> -> vector<2x128xf32>
    %c0_3 = arith.constant 0 : index
    %c0_4 = arith.constant 0 : index
    %3 = vector.load %arg3[%c0_3, %c0_4] : memref<1x128xf32, #tpu.memory_space<vmem>>, vector<1x128xf32>
    %4 = vector.broadcast %3 : vector<1x128xf32> to vector<2x128xf32>
    %5 = arith.addf %2, %4 : vector<2x128xf32>
    %cst_5 = arith.constant 0.000000e+00 : f32
    %6 = vector.broadcast %cst_5 : f32 to vector<2x128xf32>
    %7 = arith.maximumf %5, %6 : vector<2x128xf32>
    %8 = arith.truncf %7 : vector<2x128xf32> to vector<2x128xbf16>
    %c0_6 = arith.constant 0 : index
    %c0_7 = arith.constant 0 : index
    %9 = vector.load %arg4[%c0_6, %c0_7] : memref<128x128xbf16, #tpu.memory_space<vmem>>, vector<128x128xbf16>
    %cst_8 = arith.constant dense<0.000000e+00> : vector<2x128xf32>
    %10 = tpu.matmul %8, %9, %cst_8 {dimension_numbers = #tpu.dot_dimension_numbers<[1], [0], [0], [1], [0, 0, 1, 1], [], []>} : vector<2x128xbf16>, vector<128x128xbf16>, vector<2x128xf32> -> vector<2x128xf32>
    %c0_9 = arith.constant 0 : index
    %c0_10 = arith.constant 0 : index
    %11 = vector.load %arg5[%c0_9, %c0_10] : memref<1x128xf32, #tpu.memory_space<vmem>>, vector<1x128xf32>
    %12 = vector.broadcast %11 : vector<1x128xf32> to vector<2x128xf32>
    %13 = arith.addf %10, %12 : vector<2x128xf32>
    %cst_11 = arith.constant 0.000000e+00 : f32
    %14 = vector.broadcast %cst_11 : f32 to vector<2x128xf32>
    %15 = arith.maximumf %13, %14 : vector<2x128xf32>
    %16 = arith.truncf %15 : vector<2x128xf32> to vector<2x128xbf16>
    %c0_12 = arith.constant 0 : index
    %c0_13 = arith.constant 0 : index
    %17 = vector.load %arg6[%c0_12, %c0_13] : memref<128x128xbf16, #tpu.memory_space<vmem>>, vector<128x128xbf16>
    %cst_14 = arith.constant dense<0.000000e+00> : vector<2x128xf32>
    %18 = tpu.matmul %16, %17, %cst_14 {dimension_numbers = #tpu.dot_dimension_numbers<[1], [0], [0], [1], [0, 0, 1, 1], [], []>} : vector<2x128xbf16>, vector<128x128xbf16>, vector<2x128xf32> -> vector<2x128xf32>
    %c0_15 = arith.constant 0 : index
    %c0_16 = arith.constant 0 : index
    %19 = vector.load %arg7[%c0_15, %c0_16] : memref<1x128xf32, #tpu.memory_space<vmem>>, vector<1x128xf32>
    %20 = vector.broadcast %19 : vector<1x128xf32> to vector<2x128xf32>
    %21 = arith.addf %18, %20 : vector<2x128xf32>
    %c0_17 = arith.constant 0 : index
    %c0_18 = arith.constant 0 : index
    %22 = vector.load %arg8[%c0_17, %c0_18] : memref<2x128xf32, #tpu.memory_space<vmem>>, vector<2x128xf32>
    tpu.vector_store %arg8[%c0_17, %c0_18], %21 {strides = array<i32>} : memref<2x128xf32, #tpu.memory_space<vmem>>, vector<2x128xf32>,
    return
  }
  func.func @transform_0(%arg0: i32) -> (i32, i32) {
    %c0_i32 = arith.constant 0 : i32
    %c0_i32_0 = arith.constant 0 : i32
    %c0_i32_1 = arith.constant 0 : i32
    return %c0_i32, %c0_i32_0 : i32, i32
  }
  func.func @transform_1(%arg0: i32) -> (i32, i32) {
    %c0_i32 = arith.constant 0 : i32
    %c0_i32_0 = arith.constant 0 : i32
    %c0_i32_1 = arith.constant 0 : i32
    return %c0_i32, %c0_i32_0 : i32, i32
  }
  func.func @transform_2(%arg0: i32) -> (i32, i32) {
    %c0_i32 = arith.constant 0 : i32
    %c0_i32_0 = arith.constant 0 : i32
    %c0_i32_1 = arith.constant 0 : i32
    return %c0_i32, %c0_i32_0 : i32, i32
  }
  func.func @transform_3(%arg0: i32) -> (i32, i32) {
    %c0_i32 = arith.constant 0 : i32
    %c0_i32_0 = arith.constant 0 : i32
    %c0_i32_1 = arith.constant 0 : i32
    return %c0_i32, %c0_i32_0 : i32, i32
  }
  func.func @transform_4(%arg0: i32) -> (i32, i32) {
    %c0_i32 = arith.constant 0 : i32
    %c0_i32_0 = arith.constant 0 : i32
    %c0_i32_1 = arith.constant 0 : i32
    return %c0_i32, %c0_i32_0 : i32, i32
  }
  func.func @transform_5(%arg0: i32) -> (i32, i32) {
    %c0_i32 = arith.constant 0 : i32
    %c0_i32_0 = arith.constant 0 : i32
    %c0_i32_1 = arith.constant 0 : i32
    return %c0_i32, %c0_i32_0 : i32, i32
  }
  func.func @transform_6(%arg0: i32) -> (i32, i32) {
    %c0_i32 = arith.constant 0 : i32
    %c0_i32_0 = arith.constant 0 : i32
    %c0_i32_1 = arith.constant 0 : i32
    return %c0_i32, %c0_i32_0 : i32, i32
  }
  func.func @transform_7(%arg0: i32) -> (i32, i32) {
    %c0_i32 = arith.constant 0 : i32
    %c0_i32_0 = arith.constant 0 : i32
    %c0_i32_1 = arith.constant 0 : i32
    return %c0_i32, %c0_i32_0 : i32, i32
  }
}

</mosaic_0001>

<llo_original>
// kernel: simple_cnn_forward.3
$region0: #{simple_cnn_forward.3}
  #allocation0 [shape = 'u32[]', space=smem, size = 0x4, offset = 0x4, fixed_abs, tag = 'smem constant byte address 0x4 - core index']
  #allocation1 [shape = 'u32[144,128]{1,0:T(1,128)}', space=vmem, size = 0x12000, scoped, tag = 'internal scratch']
  %s0 = inlined_call_operand.vmem [shape: bf16[2,800], index: 0, kind: input, shape index: {}]
  %s1 = inlined_call_operand.vmem [shape: bf16[800,128], index: 1, kind: input, shape index: {}]
  %s2 = inlined_call_operand.vmem [shape: f32[1,128], index: 2, kind: input, shape index: {}]
  %s3 = inlined_call_operand.vmem [shape: bf16[128,128], index: 3, kind: input, shape index: {}]
  %s4 = inlined_call_operand.vmem [shape: f32[1,128], index: 4, kind: input, shape index: {}]
  %s5 = inlined_call_operand.vmem [shape: bf16[128,128], index: 5, kind: input, shape index: {}]
  %s6 = inlined_call_operand.vmem [shape: f32[1,128], index: 6, kind: input, shape index: {}]
  %s7 = inlined_call_operand.hbm [shape: f32[2,128], index: 7, kind: output, shape index: {}]
  %s8 = sld [smem:[#allocation0]]
  $region38: #{simple_cnn_forward.3} parent=0
    _
  %s10 = ssub.s32 1, %s8
  %s11 = scalar_select 0, %s10, %s8
  $region1: #{simple_cnn_forward.3} parent=0
    #allocation2 [shape = 'u8[1024]{0}', space=vmem, size = 0x400, scoped, tag = 'output window, operand 0, single buffered']
    #allocation3 [shape = 's32[1]{0}', space=sflag, size = 0x4, scoped, tag = 'scoped memory for simple_cnn_forward.3']
    %12 = vsyncpa [#allocation3], 0
    // Predicated region
    $region2: #{simple_cnn_forward.3} parent=1 // pred_check
      _
    $region3: #{simple_cnn_forward.3} parent=1 // pred_check_branch
      %14 = sbr.rel (0) target = $region5
    $region4: #{simple_cnn_forward.3} parent=1 // pred_region
      _
    $region5: #{simple_cnn_forward.3} parent=1 // pred_fallthru
      _
    // Predicated region
    $region6: #{simple_cnn_forward.3} parent=1 // pred_check
      _
    $region7: #{simple_cnn_forward.3} parent=1 // pred_check_branch
      %16 = sbr.rel (0) target = $region9
    $region8: #{simple_cnn_forward.3} parent=1 // pred_region
      _
    $region9: #{simple_cnn_forward.3} parent=1 // pred_fallthru
      _
    // Predicated region
    $region10: #{simple_cnn_forward.3} parent=1 // pred_check
      _
    $region11: #{simple_cnn_forward.3} parent=1 // pred_check_branch
      %18 = sbr.rel (0) target = $region13
    $region12: #{simple_cnn_forward.3} parent=1 // pred_region
      _
    $region13: #{simple_cnn_forward.3} parent=1 // pred_fallthru
      _
    // Predicated region
    $region14: #{simple_cnn_forward.3} parent=1 // pred_check
      _
    $region15: #{simple_cnn_forward.3} parent=1 // pred_check_branch
      %20 = sbr.rel (0) target = $region17
    $region16: #{simple_cnn_forward.3} parent=1 // pred_region
      _
    $region17: #{simple_cnn_forward.3} parent=1 // pred_fallthru
      _
    // Predicated region
    $region18: #{simple_cnn_forward.3} parent=1 // pred_check
      _
    $region19: #{simple_cnn_forward.3} parent=1 // pred_check_branch
      %22 = sbr.rel (0) target = $region21
    $region20: #{simple_cnn_forward.3} parent=1 // pred_region
      _
    $region21: #{simple_cnn_forward.3} parent=1 // pred_fallthru
      _
    // Predicated region
    $region22: #{simple_cnn_forward.3} parent=1 // pred_check
      _
    $region23: #{simple_cnn_forward.3} parent=1 // pred_check_branch
      %24 = sbr.rel (0) target = $region25
    $region24: #{simple_cnn_forward.3} parent=1 // pred_region
      _
    $region25: #{simple_cnn_forward.3} parent=1 // pred_fallthru
      _
    // Predicated region
    $region26: #{simple_cnn_forward.3} parent=1 // pred_check
      _
    $region27: #{simple_cnn_forward.3} parent=1 // pred_check_branch
      %26 = sbr.rel (0) target = $region29
    $region28: #{simple_cnn_forward.3} parent=1 // pred_region
      _
    $region29: #{simple_cnn_forward.3} parent=1 // pred_fallthru
      _
    %v28 = vld [vmem:[%s0] sm:$0x7f]
    %v29 = vld [vmem:[%s1] sm:$0xf]
    %v30 = vld [vmem:[%s1 + $0x4] sm:$0xf]
    %v31 = vld [vmem:[%s1 + $0x8] sm:$0xf]
    %v32 = vld [vmem:[%s1 + $0xc] sm:$0xf]
    %v33 = vld [vmem:[%s1 + $0x10] sm:$0xf]
    %v34 = vld [vmem:[%s1 + $0x14] sm:$0xf]
    %v35 = vld [vmem:[%s1 + $0x18] sm:$0xf]
    %v36 = vld [vmem:[%s1 + $0x1c] sm:$0xf]
    %v37 = vld [vmem:[%s1 + $0x20] sm:$0xf]
    %v38 = vld [vmem:[%s1 + $0x24] sm:$0xf]
    %v39 = vld [vmem:[%s1 + $0x28] sm:$0xf]
    %v40 = vld [vmem:[%s1 + $0x2c] sm:$0xf]
    %v41 = vld [vmem:[%s1 + $0x30] sm:$0xf]
    %v42 = vld [vmem:[%s1 + $0x34] sm:$0xf]
    %v43 = vld [vmem:[%s1 + $0x38] sm:$0xf]
    %v44 = vld [vmem:[%s1 + $0x3c] sm:$0xf]
    %v45 = vld [vmem:[%s1 + $0x40] sm:$0xf]
    %v46 = vld [vmem:[%s1 + $0x44] sm:$0xf]
    %v47 = vld [vmem:[%s1 + $0x48] sm:$0xf]
    %v48 = vld [vmem:[%s1 + $0x4c] sm:$0xf]
    %v49 = vld [vmem:[%s1 + $0x50] sm:$0xf]
    %v50 = vld [vmem:[%s1 + $0x54] sm:$0xf]
    %v51 = vld [vmem:[%s1 + $0x58] sm:$0xf]
    %v52 = vld [vmem:[%s1 + $0x5c] sm:$0xf]
    %v53 = vld [vmem:[%s1 + $0x60] sm:$0xf]
    %v54 = vld [vmem:[%s1 + $0x64] sm:$0xf]
    %v55 = vld [vmem:[%s1 + $0x68] sm:$0xf]
    %v56 = vld [vmem:[%s1 + $0x6c] sm:$0xf]
    %v57 = vld [vmem:[%s1 + $0x70] sm:$0xf]
    %v58 = vld [vmem:[%s1 + $0x74] sm:$0xf]
    %v59 = vld [vmem:[%s1 + $0x78] sm:$0xf]
    %v60 = vld [vmem:[%s1 + $0x7c] sm:$0xf]
    %v61 = vld [vmem:[%s1 + $0x80] sm:$0xf]
    %v62 = vld [vmem:[%s1 + $0x84] sm:$0xf]
    %v63 = vld [vmem:[%s1 + $0x88] sm:$0xf]
    %v64 = vld [vmem:[%s1 + $0x8c] sm:$0xf]
    %v65 = vld [vmem:[%s1 + $0x90] sm:$0xf]
    %v66 = vld [vmem:[%s1 + $0x94] sm:$0xf]
    %v67 = vld [vmem:[%s1 + $0x98] sm:$0xf]
    %v68 = vld [vmem:[%s1 + $0x9c] sm:$0xf]
    %v69 = vld [vmem:[%s1 + $0xa0] sm:$0xf]
    %v70 = vld [vmem:[%s1 + $0xa4] sm:$0xf]
    %v71 = vld [vmem:[%s1 + $0xa8] sm:$0xf]
    %v72 = vld [vmem:[%s1 + $0xac] sm:$0xf]
    %v73 = vld [vmem:[%s1 + $0xb0] sm:$0xf]
    %v74 = vld [vmem:[%s1 + $0xb4] sm:$0xf]
    %v75 = vld [vmem:[%s1 + $0xb8] sm:$0xf]
    %v76 = vld [vmem:[%s1 + $0xbc] sm:$0xf]
    %v77 = vld [vmem:[%s1 + $0xc0] sm:$0xf]
    %v78 = vld [vmem:[%s1 + $0xc4] sm:$0xf]
    %v79 = vld [vmem:[%s1 + $0xc8] sm:$0xf]
    %v80 = vld [vmem:[%s1 + $0xcc] sm:$0xf]
    %v81 = vld [vmem:[%s1 + $0xd0] sm:$0xf]
    %v82 = vld [vmem:[%s1 + $0xd4] sm:$0xf]
    %v83 = vld [vmem:[%s1 + $0xd8] sm:$0xf]
    %v84 = vld [vmem:[%s1 + $0xdc] sm:$0xf]
    %v85 = vld [vmem:[%s1 + $0xe0] sm:$0xf]
    %v86 = vld [vmem:[%s1 + $0xe4] sm:$0xf]
    %v87 = vld [vmem:[%s1 + $0xe8] sm:$0xf]
    %v88 = vld [vmem:[%s1 + $0xec] sm:$0xf]
    %v89 = vld [vmem:[%s1 + $0xf0] sm:$0xf]
    %v90 = vld [vmem:[%s1 + $0xf4] sm:$0xf]
    %v91 = vld [vmem:[%s1 + $0xf8] sm:$0xf]
    %v92 = vld [vmem:[%s1 + $0xfc] sm:$0xf]
    %v93 = vld [vmem:[%s1 + $0x100] sm:$0xf]
    %v94 = vld [vmem:[%s1 + $0x104] sm:$0xf]
    %v95 = vld [vmem:[%s1 + $0x108] sm:$0xf]
    %v96 = vld [vmem:[%s1 + $0x10c] sm:$0xf]
    %v97 = vld [vmem:[%s1 + $0x110] sm:$0xf]
    %v98 = vld [vmem:[%s1 + $0x114] sm:$0xf]
    %v99 = vld [vmem:[%s1 + $0x118] sm:$0xf]
    %v100 = vld [vmem:[%s1 + $0x11c] sm:$0xf]
    %v101 = vld [vmem:[%s1 + $0x120] sm:$0xf]
    %v102 = vld [vmem:[%s1 + $0x124] sm:$0xf]
    %v103 = vld [vmem:[%s1 + $0x128] sm:$0xf]
    %v104 = vld [vmem:[%s1 + $0x12c] sm:$0xf]
    %v105 = vld [vmem:[%s1 + $0x130] sm:$0xf]
    %v106 = vld [vmem:[%s1 + $0x134] sm:$0xf]
    %v107 = vld [vmem:[%s1 + $0x138] sm:$0xf]
    %v108 = vld [vmem:[%s1 + $0x13c] sm:$0xf]
    %v109 = vld [vmem:[%s1 + $0x140] sm:$0xf]
    %v110 = vld [vmem:[%s1 + $0x144] sm:$0xf]
    %v111 = vld [vmem:[%s1 + $0x148] sm:$0xf]
    %v112 = vld [vmem:[%s1 + $0x14c] sm:$0xf]
    %v113 = vld [vmem:[%s1 + $0x150] sm:$0xf]
    %v114 = vld [vmem:[%s1 + $0x154] sm:$0xf]
    %v115 = vld [vmem:[%s1 + $0x158] sm:$0xf]
    %v116 = vld [vmem:[%s1 + $0x15c] sm:$0xf]
    %v117 = vld [vmem:[%s1 + $0x160] sm:$0xf]
    %v118 = vld [vmem:[%s1 + $0x164] sm:$0xf]
    %v119 = vld [vmem:[%s1 + $0x168] sm:$0xf]
    %v120 = vld [vmem:[%s1 + $0x16c] sm:$0xf]
    %v121 = vld [vmem:[%s1 + $0x170] sm:$0xf]
    %v122 = vld [vmem:[%s1 + $0x174] sm:$0xf]
    %v123 = vld [vmem:[%s1 + $0x178] sm:$0xf]
    %v124 = vld [vmem:[%s1 + $0x17c] sm:$0xf]
    %v125 = vld [vmem:[%s1 + $0x180] sm:$0xf]
    %v126 = vld [vmem:[%s1 + $0x184] sm:$0xf]
    %v127 = vld [vmem:[%s1 + $0x188] sm:$0xf]
    %v128 = vld [vmem:[%s1 + $0x18c] sm:$0xf]
    %v129 = vld [vmem:[%s2] sm:$0x1]
    %v131 = vlaneseq
    %v132 = vshrl.u32 %v131, 7
    %v133 = vsub.s32 0, %v132
    %v134 = vrot.slane %v129, %v133
    %v137 = vcombine.high %v28, %v28
    %v139 = vunpack.c.l.s4 1966171168
    %v140 = vunpack.c.0.s8 %v139
    %v141 = vlaneseq
    %v142 = vshrl.u32 %v141, 7
    %v143 = vsub.s32 %v140, %v142
    %v144 = vrot.slane %v28, %v143
    %v146 = vunpack.c.l.s4 1966171168
    %v147 = vunpack.c.0.s8 %v146
    %v148 = vlaneseq
    %v149 = vshrl.u32 %v148, 7
    %v150 = vsub.s32 %v147, %v149
    %v151 = vrot.slane %v137, %v150
    %v152 = vcombine.high %v144, %v144
    %v153 = vcombine.high %v151, %v151
    %v155 = vunpack.c.l.s4 1966171168
    %v156 = vunpack.c.0.s8 %v155
    %v157 = vlaneseq
    %v158 = vshrl.u32 %v157, 7
    %v159 = vsub.s32 %v156, %v158
    %v160 = vrot.slane %v144, %v159
    %v162 = vunpack.c.l.s4 1966171168
    %v163 = vunpack.c.0.s8 %v162
    %v164 = vlaneseq
    %v165 = vshrl.u32 %v164, 7
    %v166 = vsub.s32 %v163, %v165
    %v167 = vrot.slane %v151, %v166
    %v169 = vunpack.c.l.s4 1966171168
    %v170 = vunpack.c.0.s8 %v169
    %v171 = vlaneseq
    %v172 = vshrl.u32 %v171, 7
    %v173 = vsub.s32 %v170, %v172
    %v174 = vrot.slane %v152, %v173
    %v176 = vunpack.c.l.s4 1966171168
    %v177 = vunpack.c.0.s8 %v176
    %v178 = vlaneseq
    %v179 = vshrl.u32 %v178, 7
    %v180 = vsub.s32 %v177, %v179
    %v181 = vrot.slane %v153, %v180
    %v182 = vcombine.high %v160, %v160
    %v183 = vcombine.high %v167, %v167
    %v184 = vcombine.high %v174, %v174
    %v291 = vunpack.c.l.b16 %v29
    %v292 = vunpack.c.l.b16 %v30
    %v293 = vunpack.c.l.b16 %v31
    %v294 = vunpack.c.l.b16 %v32
    %v295 = vunpack.c.l.b16 %v33
    %v296 = vunpack.c.l.b16 %v34
    %v297 = vunpack.c.l.b16 %v35
    %v298 = vunpack.c.l.b16 %v36
    %v299 = vunpack.c.l.b16 %v37
    %v300 = vunpack.c.l.b16 %v38
    %v301 = vunpack.c.l.b16 %v39
    %v302 = vunpack.c.l.b16 %v40
    %v303 = vunpack.c.l.b16 %v41
    %v304 = vunpack.c.l.b16 %v42
    %v305 = vunpack.c.l.b16 %v43
    %v306 = vunpack.c.l.b16 %v44
    %v307 = vunpack.c.l.b16 %v45
    %v308 = vunpack.c.l.b16 %v46
    %v309 = vunpack.c.l.b16 %v47
    %v310 = vunpack.c.l.b16 %v48
    %v311 = vunpack.c.l.b16 %v49
    %v312 = vunpack.c.l.b16 %v50
    %v313 = vunpack.c.l.b16 %v51
    %v314 = vunpack.c.l.b16 %v52
    %v315 = vunpack.c.l.b16 %v53
    %v316 = vunpack.c.l.b16 %v54
    %v317 = vunpack.c.l.b16 %v55
    %v318 = vunpack.c.l.b16 %v56
    %v319 = vunpack.c.l.b16 %v57
    %v320 = vunpack.c.l.b16 %v58
    %v321 = vunpack.c.l.b16 %v59
    %v322 = vunpack.c.l.b16 %v60
    %v323 = vunpack.c.l.b16 %v61
    %v324 = vunpack.c.l.b16 %v62
    %v325 = vunpack.c.l.b16 %v63
    %v326 = vunpack.c.l.b16 %v64
    %v327 = vunpack.c.l.b16 %v65
    %v328 = vunpack.c.l.b16 %v66
    %v329 = vunpack.c.l.b16 %v67
    %v330 = vunpack.c.l.b16 %v68
    %v331 = vunpack.c.l.b16 %v69
    %v332 = vunpack.c.l.b16 %v70
    %v333 = vunpack.c.l.b16 %v71
    %v334 = vunpack.c.l.b16 %v72
    %v335 = vunpack.c.l.b16 %v73
    %v336 = vunpack.c.l.b16 %v74
    %v337 = vunpack.c.l.b16 %v75
    %v338 = vunpack.c.l.b16 %v76
    %v339 = vunpack.c.l.b16 %v77
    %v340 = vunpack.c.l.b16 %v78
    %v341 = vunpack.c.l.b16 %v79
    %v342 = vunpack.c.l.b16 %v80
    %v343 = vunpack.c.l.b16 %v81
    %v344 = vunpack.c.l.b16 %v82
    %v345 = vunpack.c.l.b16 %v83
    %v346 = vunpack.c.l.b16 %v84
    %v347 = vunpack.c.l.b16 %v85
    %v348 = vunpack.c.l.b16 %v86
    %v349 = vunpack.c.l.b16 %v87
    %v350 = vunpack.c.l.b16 %v88
    %v351 = vunpack.c.l.b16 %v89
    %v352 = vunpack.c.l.b16 %v90
    %v353 = vunpack.c.l.b16 %v91
    %v354 = vunpack.c.l.b16 %v92
    %v355 = vunpack.c.l.b16 %v93
    %v356 = vunpack.c.l.b16 %v94
    %v357 = vunpack.c.l.b16 %v95
    %v358 = vunpack.c.l.b16 %v96
    %v359 = vunpack.c.l.b16 %v97
    %v360 = vunpack.c.l.b16 %v98
    %v361 = vunpack.c.l.b16 %v99
    %v362 = vunpack.c.l.b16 %v100
    %v363 = vunpack.c.l.b16 %v101
    %v364 = vunpack.c.l.b16 %v102
    %v365 = vunpack.c.l.b16 %v103
    %v366 = vunpack.c.l.b16 %v104
    %v367 = vunpack.c.l.b16 %v105
    %v368 = vunpack.c.l.b16 %v106
    %v369 = vunpack.c.l.b16 %v107
    %v370 = vunpack.c.l.b16 %v108
    %v371 = vunpack.c.l.b16 %v109
    %v372 = vunpack.c.l.b16 %v110
    %v373 = vunpack.c.l.b16 %v111
    %v374 = vunpack.c.l.b16 %v112
    %v375 = vunpack.c.l.b16 %v113
    %v376 = vunpack.c.l.b16 %v114
    %v377 = vunpack.c.l.b16 %v115
    %v378 = vunpack.c.l.b16 %v116
    %v379 = vunpack.c.l.b16 %v117
    %v380 = vunpack.c.l.b16 %v118
    %v381 = vunpack.c.l.b16 %v119
    %v382 = vunpack.c.l.b16 %v120
    %v383 = vunpack.c.l.b16 %v121
    %v384 = vunpack.c.l.b16 %v122
    %v385 = vunpack.c.l.b16 %v123
    %v386 = vunpack.c.l.b16 %v124
    %v387 = vunpack.c.l.b16 %v125
    %v388 = vunpack.c.l.b16 %v126
    %v389 = vunpack.c.l.b16 %v127
    %v390 = vunpack.c.l.b16 %v128
    %v391 = vpack.c.b16 %v292, %v291
    %v392 = vpack.c.b16 %v294, %v293
    %v393 = vpack.c.b16 %v296, %v295
    %v394 = vpack.c.b16 %v298, %v297
    %v395 = vpack.c.b16 %v300, %v299
    %v396 = vpack.c.b16 %v302, %v301
    %v397 = vpack.c.b16 %v304, %v303
    %v398 = vpack.c.b16 %v306, %v305
    %v399 = vpack.c.b16 %v308, %v307
    %v400 = vpack.c.b16 %v310, %v309
    %v401 = vpack.c.b16 %v312, %v311
    %v402 = vpack.c.b16 %v314, %v313
    %v403 = vpack.c.b16 %v316, %v315
    %v404 = vpack.c.b16 %v318, %v317
    %v405 = vpack.c.b16 %v320, %v319
    %v406 = vpack.c.b16 %v322, %v321
    %v407 = vpack.c.b16 %v324, %v323
    %v408 = vpack.c.b16 %v326, %v325
    %v409 = vpack.c.b16 %v328, %v327
    %v410 = vpack.c.b16 %v330, %v329
    %v411 = vpack.c.b16 %v332, %v331
    %v412 = vpack.c.b16 %v334, %v333
    %v413 = vpack.c.b16 %v336, %v335
    %v414 = vpack.c.b16 %v338, %v337
    %v415 = vpack.c.b16 %v340, %v339
    %v416 = vpack.c.b16 %v342, %v341
    %v417 = vpack.c.b16 %v344, %v343
    %v418 = vpack.c.b16 %v346, %v345
    %v419 = vpack.c.b16 %v348, %v347
    %v420 = vpack.c.b16 %v350, %v349
    %v421 = vpack.c.b16 %v352, %v351
    %v422 = vpack.c.b16 %v354, %v353
    %v423 = vpack.c.b16 %v356, %v355
    %v424 = vpack.c.b16 %v358, %v357
    %v425 = vpack.c.b16 %v360, %v359
    %v426 = vpack.c.b16 %v362, %v361
    %v427 = vpack.c.b16 %v364, %v363
    %v428 = vpack.c.b16 %v366, %v365
    %v429 = vpack.c.b16 %v368, %v367
    %v430 = vpack.c.b16 %v370, %v369
    %v431 = vpack.c.b16 %v372, %v371
    %v432 = vpack.c.b16 %v374, %v373
    %v433 = vpack.c.b16 %v376, %v375
    %v434 = vpack.c.b16 %v378, %v377
    %v435 = vpack.c.b16 %v380, %v379
    %v436 = vpack.c.b16 %v382, %v381
    %v437 = vpack.c.b16 %v384, %v383
    %v438 = vpack.c.b16 %v386, %v385
    %v439 = vpack.c.b16 %v388, %v387
    %v440 = vpack.c.b16 %v390, %v389
    %vm491 = vcmask 261120
    %v493 = vsel %vm491, %v183, 0
    %495 = vmatprep.subr.bf16.mxu0 0
    %496 = vmatpush1.bf16.msra.mxu0 %v391
    %497 = vmatprep.subr.bf16.mxu0 0
    %498 = vmatpush1.bf16.msra.mxu0 %v392
    %499 = vmatprep.subr.bf16.mxu0 0
    %500 = vmatpush1.bf16.msra.mxu0 %v393
    %501 = vmatprep.subr.bf16.mxu0 0
    %502 = vmatpush1.bf16.msra.mxu0 %v394
    %503 = vmatprep.subr.bf16.mxu0 0
    %504 = vmatpush1.bf16.msra.mxu0 %v395
    %505 = vmatprep.subr.bf16.mxu0 0
    %506 = vmatpush1.bf16.msra.mxu0 %v396
    %507 = vmatprep.subr.bf16.mxu0 0
    %508 = vmatpush1.bf16.msra.mxu0 %v397
    %509 = vmatprep.subr.bf16.mxu0 0
    %510 = vmatpush1.bf16.msra.mxu0 %v398
    %511 = vmatprep.subr.bf16.mxu0 0
    %512 = vmatpush1.bf16.msra.mxu0 %v399
    %513 = vmatprep.subr.bf16.mxu0 0
    %514 = vmatpush1.bf16.msra.mxu0 %v400
    %515 = vmatprep.subr.bf16.mxu0 0
    %516 = vmatpush1.bf16.msra.mxu0 %v401
    %517 = vmatprep.subr.bf16.mxu0 0
    %518 = vmatpush1.bf16.msra.mxu0 %v402
    %519 = vmatprep.subr.bf16.mxu0 0
    %520 = vmatpush1.bf16.msra.mxu0 %v403
    %521 = vmatprep.subr.bf16.mxu0 0
    %522 = vmatpush1.bf16.msra.mxu0 %v404
    %523 = vmatprep.subr.bf16.mxu0 0
    %524 = vmatpush1.bf16.msra.mxu0 %v405
    %525 = vmatprep.subr.bf16.mxu0 0
    %526 = vmatpush1.bf16.msra.mxu0 %v406
    %527 = vmatprep.mubr.bf16.mxu0 %v174
    %528 = vmatmul.mubr.bf16.gmra.mrb[0].mxu0 %v160
    %v529 = vpop.f32.mrb[0].mxu0
    %v530 = vadd.f32 %v134, %v529
    %v531 = vpop.f32.mrb[0].mxu0
    %v532 = vpop.f32.mrb[0].mxu0
    %v533 = vpop.f32.mrb[0].mxu0
    %534 = vdwg.mxu0
    %535 = vmatprep.subr.bf16.mxu0 0
    %536 = vmatpush1.bf16.msra.mxu0 %v407
    %537 = vmatprep.subr.bf16.mxu0 0
    %538 = vmatpush1.bf16.msra.mxu0 %v408
    %539 = vmatprep.subr.bf16.mxu0 0
    %540 = vmatpush1.bf16.msra.mxu0 %v409
    %541 = vmatprep.subr.bf16.mxu0 0
    %542 = vmatpush1.bf16.msra.mxu0 %v410
    %543 = vmatprep.subr.bf16.mxu0 0
    %544 = vmatpush1.bf16.msra.mxu0 %v411
    %545 = vmatprep.subr.bf16.mxu0 0
    %546 = vmatpush1.bf16.msra.mxu0 %v412
    %547 = vmatprep.subr.bf16.mxu0 0
    %548 = vmatpush1.bf16.msra.mxu0 %v413
    %549 = vmatprep.subr.bf16.mxu0 0
    %550 = vmatpush1.bf16.msra.mxu0 %v414
    %551 = vmatprep.subr.bf16.mxu0 0
    %552 = vmatpush1.bf16.msra.mxu0 %v415
    %553 = vmatprep.subr.bf16.mxu0 0
    %554 = vmatpush1.bf16.msra.mxu0 %v416
    %555 = vmatprep.subr.bf16.mxu0 0
    %556 = vmatpush1.bf16.msra.mxu0 %v417
    %557 = vmatprep.subr.bf16.mxu0 0
    %558 = vmatpush1.bf16.msra.mxu0 %v418
    %559 = vmatprep.subr.bf16.mxu0 0
    %560 = vmatpush1.bf16.msra.mxu0 %v419
    %561 = vmatprep.subr.bf16.mxu0 0
    %562 = vmatpush1.bf16.msra.mxu0 %v420
    %563 = vmatprep.subr.bf16.mxu0 0
    %564 = vmatpush1.bf16.msra.mxu0 %v421
    %565 = vmatprep.subr.bf16.mxu0 0
    %566 = vmatpush1.bf16.msra.mxu0 %v422
    %567 = vmatprep.mubr.bf16.mxu0 %v184
    %568 = vmatmul.mubr.bf16.gmra.mrb[0].mxu0 %v182
    %v569 = vpop.f32.mrb[0].mxu0
    %v570 = vadd.f32 %v530, %v569
    %v571 = vpop.f32.mrb[0].mxu0
    %v572 = vpop.f32.mrb[0].mxu0
    %v573 = vpop.f32.mrb[0].mxu0
    %574 = vdwg.mxu0
    %575 = vmatprep.subr.bf16.mxu0 0
    %576 = vmatpush1.bf16.msra.mxu0 %v423
    %577 = vmatprep.subr.bf16.mxu0 0
    %578 = vmatpush1.bf16.msra.mxu0 %v424
    %579 = vmatprep.subr.bf16.mxu0 0
    %580 = vmatpush1.bf16.msra.mxu0 %v425
    %581 = vmatprep.subr.bf16.mxu0 0
    %582 = vmatpush1.bf16.msra.mxu0 %v426
    %583 = vmatprep.subr.bf16.mxu0 0
    %584 = vmatpush1.bf16.msra.mxu0 %v427
    %585 = vmatprep.subr.bf16.mxu0 0
    %586 = vmatpush1.bf16.msra.mxu0 %v428
    %587 = vmatprep.subr.bf16.mxu0 0
    %588 = vmatpush1.bf16.msra.mxu0 %v429
    %589 = vmatprep.subr.bf16.mxu0 0
    %590 = vmatpush1.bf16.msra.mxu0 %v430
    %591 = vmatprep.subr.bf16.mxu0 0
    %592 = vmatpush1.bf16.msra.mxu0 %v431
    %593 = vmatprep.subr.bf16.mxu0 0
    %594 = vmatpush1.bf16.msra.mxu0 %v432
    %595 = vmatprep.subr.bf16.mxu0 0
    %596 = vmatpush1.bf16.msra.mxu0 %v433
    %597 = vmatprep.subr.bf16.mxu0 0
    %598 = vmatpush1.bf16.msra.mxu0 %v434
    %599 = vmatprep.subr.bf16.mxu0 0
    %600 = vmatpush1.bf16.msra.mxu0 %v435
    %601 = vmatprep.subr.bf16.mxu0 0
    %602 = vmatpush1.bf16.msra.mxu0 %v436
    %603 = vmatprep.subr.bf16.mxu0 0
    %604 = vmatpush1.bf16.msra.mxu0 %v437
    %605 = vmatprep.subr.bf16.mxu0 0
    %606 = vmatpush1.bf16.msra.mxu0 %v438
    %607 = vmatprep.mubr.bf16.mxu0 %v181
    %608 = vmatmul.mubr.bf16.gmra.mrb[0].mxu0 %v167
    %v609 = vpop.f32.mrb[0].mxu0
    %v610 = vadd.f32 %v570, %v609
    %v611 = vpop.f32.mrb[0].mxu0
    %v612 = vpop.f32.mrb[0].mxu0
    %v613 = vpop.f32.mrb[0].mxu0
    %614 = vdwg.mxu0
    %615 = vmatprep.subr.bf16.mxu0 0
    %616 = vmatpush1.bf16.msra.mxu0 %v439
    %617 = vmatprep.subr.bf16.mxu0 0
    %618 = vmatpush1.bf16.msra.mxu0 %v440
    %619 = vmatprep.subr.bf16.mxu0 0
    %620 = vmatpush1.bf16.msra.mxu0 0
    %621 = vmatprep.subr.bf16.mxu0 0
    %622 = vmatpush1.bf16.msra.mxu0 0
    %623 = vmatprep.subr.bf16.mxu0 0
    %624 = vmatpush1.bf16.msra.mxu0 0
    %625 = vmatprep.subr.bf16.mxu0 0
    %626 = vmatpush1.bf16.msra.mxu0 0
    %627 = vmatprep.subr.bf16.mxu0 0
    %628 = vmatpush1.bf16.msra.mxu0 0
    %629 = vmatprep.subr.bf16.mxu0 0
    %630 = vmatpush1.bf16.msra.mxu0 0
    %631 = vmatprep.subr.bf16.mxu0 0
    %632 = vmatpush1.bf16.msra.mxu0 0
    %633 = vmatprep.subr.bf16.mxu0 0
    %634 = vmatpush1.bf16.msra.mxu0 0
    %635 = vmatprep.subr.bf16.mxu0 0
    %636 = vmatpush1.bf16.msra.mxu0 0
    %637 = vmatprep.subr.bf16.mxu0 0
    %638 = vmatpush1.bf16.msra.mxu0 0
    %639 = vmatprep.subr.bf16.mxu0 0
    %640 = vmatpush1.bf16.msra.mxu0 0
    %641 = vmatprep.subr.bf16.mxu0 0
    %642 = vmatpush1.bf16.msra.mxu0 0
    %643 = vmatprep.subr.bf16.mxu0 0
    %644 = vmatpush1.bf16.msra.mxu0 0
    %645 = vmatprep.subr.bf16.mxu0 0
    %646 = vmatpush1.bf16.msra.mxu0 0
    %647 = vmatprep.mubr.bf16.mxu0 0
    %648 = vmatmul.mubr.bf16.gmra.mrb[0].mxu0 %v493
    %v649 = vpop.f32.mrb[0].mxu0
    %v650 = vadd.f32 %v610, %v649
    %v651 = vpop.f32.mrb[0].mxu0
    %v652 = vpop.f32.mrb[0].mxu0
    %v653 = vpop.f32.mrb[0].mxu0
    %654 = vdwg.mxu0
    %v655 = vmax.f32 %v650, 0.0
    %v656 = vpack.c.bf16 %v655, %v655
    %v657 = vld [vmem:[%s3] sm:$0xf]
    %v658 = vld [vmem:[%s3 + $0x4] sm:$0xf]
    %v659 = vld [vmem:[%s3 + $0x8] sm:$0xf]
    %v660 = vld [vmem:[%s3 + $0xc] sm:$0xf]
    %v661 = vld [vmem:[%s3 + $0x10] sm:$0xf]
    %v662 = vld [vmem:[%s3 + $0x14] sm:$0xf]
    %v663 = vld [vmem:[%s3 + $0x18] sm:$0xf]
    %v664 = vld [vmem:[%s3 + $0x1c] sm:$0xf]
    %v665 = vld [vmem:[%s3 + $0x20] sm:$0xf]
    %v666 = vld [vmem:[%s3 + $0x24] sm:$0xf]
    %v667 = vld [vmem:[%s3 + $0x28] sm:$0xf]
    %v668 = vld [vmem:[%s3 + $0x2c] sm:$0xf]
    %v669 = vld [vmem:[%s3 + $0x30] sm:$0xf]
    %v670 = vld [vmem:[%s3 + $0x34] sm:$0xf]
    %v671 = vld [vmem:[%s3 + $0x38] sm:$0xf]
    %v672 = vld [vmem:[%s3 + $0x3c] sm:$0xf]
    %v673 = vld [vmem:[%s4] sm:$0x1]
    %v675 = vlaneseq
    %v676 = vshrl.u32 %v675, 7
    %v677 = vsub.s32 0, %v676
    %v678 = vrot.slane %v673, %v677
    %v696 = vunpack.c.l.b16 %v657
    %v697 = vunpack.c.l.b16 %v658
    %v698 = vunpack.c.l.b16 %v659
    %v699 = vunpack.c.l.b16 %v660
    %v700 = vunpack.c.l.b16 %v661
    %v701 = vunpack.c.l.b16 %v662
    %v702 = vunpack.c.l.b16 %v663
    %v703 = vunpack.c.l.b16 %v664
    %v704 = vunpack.c.l.b16 %v665
    %v705 = vunpack.c.l.b16 %v666
    %v706 = vunpack.c.l.b16 %v667
    %v707 = vunpack.c.l.b16 %v668
    %v708 = vunpack.c.l.b16 %v669
    %v709 = vunpack.c.l.b16 %v670
    %v710 = vunpack.c.l.b16 %v671
    %v711 = vunpack.c.l.b16 %v672
    %v712 = vpack.c.b16 %v697, %v696
    %v713 = vpack.c.b16 %v699, %v698
    %v714 = vpack.c.b16 %v701, %v700
    %v715 = vpack.c.b16 %v703, %v702
    %v716 = vpack.c.b16 %v705, %v704
    %v717 = vpack.c.b16 %v707, %v706
    %v718 = vpack.c.b16 %v709, %v708
    %v719 = vpack.c.b16 %v711, %v710
    %728 = vmatprep.subr.bf16.mxu0 0
    %729 = vmatpush1.bf16.msra.mxu0 %v712
    %730 = vmatprep.subr.bf16.mxu0 0
    %731 = vmatpush1.bf16.msra.mxu0 %v713
    %732 = vmatprep.subr.bf16.mxu0 0
    %733 = vmatpush1.bf16.msra.mxu0 %v714
    %734 = vmatprep.subr.bf16.mxu0 0
    %735 = vmatpush1.bf16.msra.mxu0 %v715
    %736 = vmatprep.subr.bf16.mxu0 0
    %737 = vmatpush1.bf16.msra.mxu0 %v716
    %738 = vmatprep.subr.bf16.mxu0 0
    %739 = vmatpush1.bf16.msra.mxu0 %v717
    %740 = vmatprep.subr.bf16.mxu0 0
    %741 = vmatpush1.bf16.msra.mxu0 %v718
    %742 = vmatprep.subr.bf16.mxu0 0
    %743 = vmatpush1.bf16.msra.mxu0 %v719
    %744 = vmatprep.subr.bf16.mxu0 0
    %745 = vmatpush1.bf16.msra.mxu0 0
    %746 = vmatprep.subr.bf16.mxu0 0
    %747 = vmatpush1.bf16.msra.mxu0 0
    %748 = vmatprep.subr.bf16.mxu0 0
    %749 = vmatpush1.bf16.msra.mxu0 0
    %750 = vmatprep.subr.bf16.mxu0 0
    %751 = vmatpush1.bf16.msra.mxu0 0
    %752 = vmatprep.subr.bf16.mxu0 0
    %753 = vmatpush1.bf16.msra.mxu0 0
    %754 = vmatprep.subr.bf16.mxu0 0
    %755 = vmatpush1.bf16.msra.mxu0 0
    %756 = vmatprep.subr.bf16.mxu0 0
    %757 = vmatpush1.bf16.msra.mxu0 0
    %758 = vmatprep.subr.bf16.mxu0 0
    %759 = vmatpush1.bf16.msra.mxu0 0
    %760 = vmatprep.mubr.bf16.mxu0 0
    %761 = vmatmul.mubr.bf16.gmra.mrb[0].mxu0 %v656
    %v762 = vpop.f32.mrb[0].mxu0
    %v763 = vadd.f32 %v678, %v762
    %v764 = vpop.f32.mrb[0].mxu0
    %v765 = vpop.f32.mrb[0].mxu0
    %v766 = vpop.f32.mrb[0].mxu0
    %767 = vdwg.mxu0
    %v768 = vmax.f32 %v763, 0.0
    %v769 = vpack.c.bf16 %v768, %v768
    %v770 = vld [vmem:[%s5] sm:$0xf]
    %v771 = vld [vmem:[%s5 + $0x4] sm:$0xf]
    %v772 = vld [vmem:[%s5 + $0x8] sm:$0xf]
    %v773 = vld [vmem:[%s5 + $0xc] sm:$0xf]
    %v774 = vld [vmem:[%s5 + $0x10] sm:$0xf]
    %v775 = vld [vmem:[%s5 + $0x14] sm:$0xf]
    %v776 = vld [vmem:[%s5 + $0x18] sm:$0xf]
    %v777 = vld [vmem:[%s5 + $0x1c] sm:$0xf]
    %v778 = vld [vmem:[%s5 + $0x20] sm:$0xf]
    %v779 = vld [vmem:[%s5 + $0x24] sm:$0xf]
    %v780 = vld [vmem:[%s5 + $0x28] sm:$0xf]
    %v781 = vld [vmem:[%s5 + $0x2c] sm:$0xf]
    %v782 = vld [vmem:[%s5 + $0x30] sm:$0xf]
    %v783 = vld [vmem:[%s5 + $0x34] sm:$0xf]
    %v784 = vld [vmem:[%s5 + $0x38] sm:$0xf]
    %v785 = vld [vmem:[%s5 + $0x3c] sm:$0xf]
    %v786 = vld [vmem:[%s6] sm:$0x1]
    %v788 = vlaneseq
    %v789 = vshrl.u32 %v788, 7
    %v790 = vsub.s32 0, %v789
    %v791 = vrot.slane %v786, %v790
    %v809 = vunpack.c.l.b16 %v770
    %v810 = vunpack.c.l.b16 %v771
    %v811 = vunpack.c.l.b16 %v772
    %v812 = vunpack.c.l.b16 %v773
    %v813 = vunpack.c.l.b16 %v774
    %v814 = vunpack.c.l.b16 %v775
    %v815 = vunpack.c.l.b16 %v776
    %v816 = vunpack.c.l.b16 %v777
    %v817 = vunpack.c.l.b16 %v778
    %v818 = vunpack.c.l.b16 %v779
    %v819 = vunpack.c.l.b16 %v780
    %v820 = vunpack.c.l.b16 %v781
    %v821 = vunpack.c.l.b16 %v782
    %v822 = vunpack.c.l.b16 %v783
    %v823 = vunpack.c.l.b16 %v784
    %v824 = vunpack.c.l.b16 %v785
    %v825 = vpack.c.b16 %v810, %v809
    %v826 = vpack.c.b16 %v812, %v811
    %v827 = vpack.c.b16 %v814, %v813
    %v828 = vpack.c.b16 %v816, %v815
    %v829 = vpack.c.b16 %v818, %v817
    %v830 = vpack.c.b16 %v820, %v819
    %v831 = vpack.c.b16 %v822, %v821
    %v832 = vpack.c.b16 %v824, %v823
    %841 = vmatprep.subr.bf16.mxu0 0
    %842 = vmatpush1.bf16.msra.mxu0 %v825
    %843 = vmatprep.subr.bf16.mxu0 0
    %844 = vmatpush1.bf16.msra.mxu0 %v826
    %845 = vmatprep.subr.bf16.mxu0 0
    %846 = vmatpush1.bf16.msra.mxu0 %v827
    %847 = vmatprep.subr.bf16.mxu0 0
    %848 = vmatpush1.bf16.msra.mxu0 %v828
    %849 = vmatprep.subr.bf16.mxu0 0
    %850 = vmatpush1.bf16.msra.mxu0 %v829
    %851 = vmatprep.subr.bf16.mxu0 0
    %852 = vmatpush1.bf16.msra.mxu0 %v830
    %853 = vmatprep.subr.bf16.mxu0 0
    %854 = vmatpush1.bf16.msra.mxu0 %v831
    %855 = vmatprep.subr.bf16.mxu0 0
    %856 = vmatpush1.bf16.msra.mxu0 %v832
    %857 = vmatprep.subr.bf16.mxu0 0
    %858 = vmatpush1.bf16.msra.mxu0 0
    %859 = vmatprep.subr.bf16.mxu0 0
    %860 = vmatpush1.bf16.msra.mxu0 0
    %861 = vmatprep.subr.bf16.mxu0 0
    %862 = vmatpush1.bf16.msra.mxu0 0
    %863 = vmatprep.subr.bf16.mxu0 0
    %864 = vmatpush1.bf16.msra.mxu0 0
    %865 = vmatprep.subr.bf16.mxu0 0
    %866 = vmatpush1.bf16.msra.mxu0 0
    %867 = vmatprep.subr.bf16.mxu0 0
    %868 = vmatpush1.bf16.msra.mxu0 0
    %869 = vmatprep.subr.bf16.mxu0 0
    %870 = vmatpush1.bf16.msra.mxu0 0
    %871 = vmatprep.subr.bf16.mxu0 0
    %872 = vmatpush1.bf16.msra.mxu0 0
    %873 = vmatprep.mubr.bf16.mxu0 0
    %874 = vmatmul.mubr.bf16.gmra.mrb[0].mxu0 %v769
    %v875 = vpop.f32.mrb[0].mxu0
    %v876 = vadd.f32 %v791, %v875
    %v877 = vpop.f32.mrb[0].mxu0
    %v878 = vpop.f32.mrb[0].mxu0
    %v879 = vpop.f32.mrb[0].mxu0
    %880 = vdwg.mxu0
    %881 = vst [vmem:[#allocation2] sm:$0x3] %v876
    // Predicated region
    $region30: #{simple_cnn_forward.3} parent=1 // pred_check
      _
    $region31: #{simple_cnn_forward.3} parent=1 // pred_check_branch
      %883 = sbr.rel (0) target = $region33
    $region32: #{simple_cnn_forward.3} parent=1 // pred_region
      %s885 = ssub.s32 32, 32
      %886 = vsyncadd [#allocation3], %s885
      %s888 = sshll.u32 [#allocation2], 4
      %s889 = int_to_ptr.vmem [resolvable:$true] %s888
      %891 = dma.vmem_to_hbm [thread:$0]  %s889, 32, %s7, [#allocation3]
    $region33: #{simple_cnn_forward.3} parent=1 // pred_fallthru
      _
    // Predicated region
    $region34: #{simple_cnn_forward.3} parent=1 // pred_check
      _
    $region35: #{simple_cnn_forward.3} parent=1 // pred_check_branch
      %893 = sbr.rel (0) target = $region37
    $region36: #{simple_cnn_forward.3} parent=1 // pred_region
      %894 = dma.done [#allocation3], 32
    $region37: #{simple_cnn_forward.3} parent=1 // pred_fallthru
      _
    %895 = vsyncpa [#allocation3], 1

// kernel: simple_cnn_forward.2
$region0: #{simple_cnn_forward.2}
  #allocation0 [shape = 'u32[]', space=smem, size = 0x4, offset = 0x4, fixed_abs, tag = 'smem constant byte address 0x4 - core index']
  #allocation1 [shape = 'u32[144,128]{1,0:T(1,128)}', space=vmem, size = 0x12000, scoped, tag = 'internal scratch']
  #allocation2 [shape = 'f32[784,16]{1,0:T(8,128)}', space=vmem, size = 0x62000, scoped, tag = 'scratch operand']
  #allocation3 [shape = 'f32[196,16]{1,0:T(8,128)}', space=vmem, size = 0x19000, scoped, tag = 'scratch operand']
  #allocation4 [shape = 'bf16[136,400]{1,0:T(8,128)(2,1)}', space=vmem, size = 0x22000, scoped, tag = 'scratch operand']
  #allocation5 [shape = 'f32[136,32]{1,0:T(8,128)}', space=vmem, size = 0x11000, scoped, tag = 'scratch operand']
  %s0 = inlined_call_operand.vmem [shape: bf16[2,784,128], index: 0, kind: input, shape index: {}]
  %s1 = inlined_call_operand.vmem [shape: bf16[128,16], index: 1, kind: input, shape index: {}]
  %s2 = inlined_call_operand.vmem [shape: f32[1,16], index: 2, kind: input, shape index: {}]
  %s3 = inlined_call_operand.vmem [shape: bf16[400,32], index: 3, kind: input, shape index: {}]
  %s4 = inlined_call_operand.vmem [shape: f32[1,32], index: 4, kind: input, shape index: {}]
  %s5 = inlined_call_operand.vmem [shape: bf16[2,25,32], index: 5, kind: output, shape index: {}]
  %s6 = sld [smem:[#allocation0]]
  $region53: #{simple_cnn_forward.2} parent=0
    _
  %s8 = ssub.s32 1, %s6
  %s9 = scalar_select 0, %s8, %s6
  loop: start=0, step=1, limit=4
  $region2: #{simple_cnn_forward.2} parent=0 // loop_pre_header
    _
  $region3: #{simple_cnn_forward.2} parent=0 // loop_header
    %s11 = sphi 0, %s15
    %p12 = scmp.ge.s32.totalorder %s11, 4
    %s21 = sphi 0, %s23
    %s24 = sphi 0, %s21
    %s25 = sphi 0, %s24
    %s41 = sphi 0, %s25
    %s45 = sphi 0, %s45
    %s47 = sphi 0, %s45
    %s48 = sphi 0, %s47
    %s62 = sphi 0, %s48
    %s66 = sphi 0, %s66
    %s68 = sphi 0, %s66
    %s69 = sphi 0, %s68
    %s83 = sphi 0, %s69
    %s87 = sphi 0, %s87
    %s89 = sphi 0, %s87
    %s90 = sphi 0, %s89
    %s104 = sphi 0, %s90
    %s108 = sphi 0, %s108
    %s110 = sphi 0, %s108
    %s111 = sphi 0, %s110
    %s125 = sphi 0, %s111
    %s131 = sphi 0, %s133
    %s134 = sphi 0, %s131
    %s135 = sphi 0, %s134
    %s151 = sphi 0, %s135
  $region4: #{simple_cnn_forward.2} parent=0 // loop_header_branch
    %14 = sbr.rel (%p12) target = $region8
  $region5: #{simple_cnn_forward.2} parent=0 // loop_body
    %s16 = ssub.s32 %s11, 1
    %s17 = ssub.s32 %s11, 2
    %s18 = sadd.s32 %s11, 1
    %s19 = ssub.s32 %s11, %s18
    %p20 = scmp.eq.s32.totalorder %s19, 0
    %s22 = sadd.s32 %s21, 1
    %s23 = scalar_select %p20, %s21, %s22
    %p26 = pneg %p20
    %p27 = scmp.eq.s32.totalorder %s11, 1
    %p28 = por %p26, %p27
    %p29 = scmp.ne.s32.totalorder %s21, %s24
    %p30 = scmp.eq.s32.totalorder %s11, 0
    %p31 = por %p29, %p30
    %p32 = scmp.ne.s32.totalorder %s21, %s24
    %p33 = scmp.eq.s32.totalorder %s16, 1
    %p34 = por %p32, %p33
    %p35 = scmp.ne.s32.totalorder %s24, %s25
    %p36 = scmp.eq.s32.totalorder %s16, 0
    %p37 = por %p35, %p36
    %p38 = scmp.ne.s32.totalorder %s24, %s25
    %p39 = scmp.eq.s32.totalorder %s17, 1
    %p40 = por %p38, %p39
    %p42 = scmp.ne.s32.totalorder %s25, %s41
    %p43 = scmp.eq.s32.totalorder %s17, 0
    %p44 = por %p42, %p43
    %s46 = sadd.s32 %s45, 1
    %p49 = scmp.eq.s32.totalorder %s11, 1
    %p50 = scmp.ne.s32.totalorder %s45, %s47
    %p51 = scmp.eq.s32.totalorder %s11, 0
    %p52 = por %p50, %p51
    %p53 = scmp.ne.s32.totalorder %s45, %s47
    %p54 = scmp.eq.s32.totalorder %s16, 1
    %p55 = por %p53, %p54
    %p56 = scmp.ne.s32.totalorder %s47, %s48
    %p57 = scmp.eq.s32.totalorder %s16, 0
    %p58 = por %p56, %p57
    %p59 = scmp.ne.s32.totalorder %s47, %s48
    %p60 = scmp.eq.s32.totalorder %s17, 1
    %p61 = por %p59, %p60
    %p63 = scmp.ne.s32.totalorder %s48, %s62
    %p64 = scmp.eq.s32.totalorder %s17, 0
    %p65 = por %p63, %p64
    %s67 = sadd.s32 %s66, 1
    %p70 = scmp.eq.s32.totalorder %s11, 1
    %p71 = scmp.ne.s32.totalorder %s66, %s68
    %p72 = scmp.eq.s32.totalorder %s11, 0
    %p73 = por %p71, %p72
    %p74 = scmp.ne.s32.totalorder %s66, %s68
    %p75 = scmp.eq.s32.totalorder %s16, 1
    %p76 = por %p74, %p75
    %p77 = scmp.ne.s32.totalorder %s68, %s69
    %p78 = scmp.eq.s32.totalorder %s16, 0
    %p79 = por %p77, %p78
    %p80 = scmp.ne.s32.totalorder %s68, %s69
    %p81 = scmp.eq.s32.totalorder %s17, 1
    %p82 = por %p80, %p81
    %p84 = scmp.ne.s32.totalorder %s69, %s83
    %p85 = scmp.eq.s32.totalorder %s17, 0
    %p86 = por %p84, %p85
    %s88 = sadd.s32 %s87, 1
    %p91 = scmp.eq.s32.totalorder %s11, 1
    %p92 = scmp.ne.s32.totalorder %s87, %s89
    %p93 = scmp.eq.s32.totalorder %s11, 0
    %p94 = por %p92, %p93
    %p95 = scmp.ne.s32.totalorder %s87, %s89
    %p96 = scmp.eq.s32.totalorder %s16, 1
    %p97 = por %p95, %p96
    %p98 = scmp.ne.s32.totalorder %s89, %s90
    %p99 = scmp.eq.s32.totalorder %s16, 0
    %p100 = por %p98, %p99
    %p101 = scmp.ne.s32.totalorder %s89, %s90
    %p102 = scmp.eq.s32.totalorder %s17, 1
    %p103 = por %p101, %p102
    %p105 = scmp.ne.s32.totalorder %s90, %s104
    %p106 = scmp.eq.s32.totalorder %s17, 0
    %p107 = por %p105, %p106
    %s109 = sadd.s32 %s108, 1
    %p112 = scmp.eq.s32.totalorder %s11, 1
    %p113 = scmp.ne.s32.totalorder %s108, %s110
    %p114 = scmp.eq.s32.totalorder %s11, 0
    %p115 = por %p113, %p114
    %p116 = scmp.ne.s32.totalorder %s108, %s110
    %p117 = scmp.eq.s32.totalorder %s16, 1
    %p118 = por %p116, %p117
    %p119 = scmp.ne.s32.totalorder %s110, %s111
    %p120 = scmp.eq.s32.totalorder %s16, 0
    %p121 = por %p119, %p120
    %p122 = scmp.ne.s32.totalorder %s110, %s111
    %p123 = scmp.eq.s32.totalorder %s17, 1
    %p124 = por %p122, %p123
    %p126 = scmp.ne.s32.totalorder %s111, %s125
    %p127 = scmp.eq.s32.totalorder %s17, 0
    %p128 = por %p126, %p127
    %s129 = ssub.s32 %s11, %s18
    %p130 = scmp.eq.s32.totalorder %s129, 0
    %s132 = sadd.s32 %s131, 1
    %s133 = scalar_select %p130, %s131, %s132
    %p136 = pneg %p130
    %p137 = scmp.eq.s32.totalorder %s11, 1
    %p138 = por %p136, %p137
    %p139 = scmp.ne.s32.totalorder %s131, %s134
    %p140 = scmp.eq.s32.totalorder %s11, 0
    %p141 = por %p139, %p140
    %p142 = scmp.ne.s32.totalorder %s131, %s134
    %p143 = scmp.eq.s32.totalorder %s16, 1
    %p144 = por %p142, %p143
    %p145 = scmp.ne.s32.totalorder %s134, %s135
    %p146 = scmp.eq.s32.totalorder %s16, 0
    %p147 = por %p145, %p146
    %p148 = scmp.ne.s32.totalorder %s134, %s135
    %p149 = scmp.eq.s32.totalorder %s17, 1
    %p150 = por %p148, %p149
    %p152 = scmp.ne.s32.totalorder %s135, %s151
    %p153 = scmp.eq.s32.totalorder %s17, 0
    %p154 = por %p152, %p153
    %p155 = scmp.le.s32.totalorder 1, %s11
    %p156 = scmp.lt.s32.totalorder %s11, 3
    %p157 = pnand %p155, %p156
    %p158 = pneg %p157
    // Predicated region
    $region9: #{simple_cnn_forward.2} parent=5 // pred_check
      _
    $region10: #{simple_cnn_forward.2} parent=5 // pred_check_branch
      %160 = sbr.rel (%p157) target = $region12
    $region11: #{simple_cnn_forward.2} parent=5 // pred_region
      %s161 = ssub.s32 %s11, 1
      // Predicated region
      $region13: #{simple_cnn_forward.2} parent=11 // pred_check
        %p162 = pneg %p58
      $region14: #{simple_cnn_forward.2} parent=11 // pred_check_branch
        %164 = sbr.rel (%p162) target = $region16
      $region15: #{simple_cnn_forward.2} parent=11 // pred_region
        _
      $region16: #{simple_cnn_forward.2} parent=11 // pred_fallthru
        _
      // Predicated region
      $region17: #{simple_cnn_forward.2} parent=11 // pred_check
        %p165 = pneg %p79
      $region18: #{simple_cnn_forward.2} parent=11 // pred_check_branch
        %167 = sbr.rel (%p165) target = $region20
      $region19: #{simple_cnn_forward.2} parent=11 // pred_region
        _
      $region20: #{simple_cnn_forward.2} parent=11 // pred_fallthru
        _
      // Predicated region
      $region21: #{simple_cnn_forward.2} parent=11 // pred_check
        %p168 = pneg %p100
      $region22: #{simple_cnn_forward.2} parent=11 // pred_check_branch
        %170 = sbr.rel (%p168) target = $region24
      $region23: #{simple_cnn_forward.2} parent=11 // pred_region
        _
      $region24: #{simple_cnn_forward.2} parent=11 // pred_fallthru
        _
      // Predicated region
      $region25: #{simple_cnn_forward.2} parent=11 // pred_check
        %p171 = pneg %p121
      $region26: #{simple_cnn_forward.2} parent=11 // pred_check_branch
        %173 = sbr.rel (%p171) target = $region28
      $region27: #{simple_cnn_forward.2} parent=11 // pred_region
        _
      $region28: #{simple_cnn_forward.2} parent=11 // pred_fallthru
        _
    $region12: #{simple_cnn_forward.2} parent=5 // pred_fallthru
      _
    %p174 = scmp.lt.s32.totalorder %s11, 2
    // Predicated region
    $region29: #{simple_cnn_forward.2} parent=5 // pred_check
      %p175 = pneg %p174
    $region30: #{simple_cnn_forward.2} parent=5 // pred_check_branch
      %177 = sbr.rel (%p175) target = $region32
    $region31: #{simple_cnn_forward.2} parent=5 // pred_region
      // Predicated region
      $region33: #{simple_cnn_forward.2} parent=31 // pred_check
        %p178 = pneg %p31
      $region34: #{simple_cnn_forward.2} parent=31 // pred_check_branch
        %180 = sbr.rel (%p178) target = $region36
      $region35: #{simple_cnn_forward.2} parent=31 // pred_region
        %p181 = scmp.lt.s32.totalorder %s11, 1
        %s182 = scalar_select %p181, %s11, 1
        %s183 = smul.addr %s182, 98
        %s184 = smul.addr %s183, 4
        %s185 = scalar_lea.vmem %s0, %s184
      $region36: #{simple_cnn_forward.2} parent=31 // pred_fallthru
        _
    $region32: #{simple_cnn_forward.2} parent=5 // pred_fallthru
      _
    %p186 = scmp.le.s32.totalorder 1, %s11
    %p187 = scmp.lt.s32.totalorder %s11, 3
    %p188 = pnand %p186, %p187
    %p189 = pneg %p188
    // Predicated region
    $region37: #{simple_cnn_forward.2} parent=5 // pred_check
      _
    $region38: #{simple_cnn_forward.2} parent=5 // pred_check_branch
      %191 = sbr.rel (%p188) target = $region40
    $region39: #{simple_cnn_forward.2} parent=5 // pred_region
      %s192 = ssub.s32 %s11, 1
      %p193 = scmp.lt.s32.totalorder %s16, 1
      %s194 = scalar_select %p193, %s16, 1
      %s195 = smul.addr %s194, 98
      %s196 = smul.addr %s195, 4
      %s197 = scalar_lea.vmem %s0, %s196
      %p198 = pneg %p37
      %p199 = pneg %p34
      %p200 = pneg %p58
      %p201 = pneg %p55
      %p202 = pneg %p79
      %p203 = pneg %p76
      %p204 = pneg %p100
      %p205 = pneg %p97
      %p206 = pneg %p121
      %p207 = pneg %p118
      %p208 = pneg %p147
      %p209 = pneg %p144
      %p210 = scmp.lt.s32.totalorder %s16, 1
      %s211 = scalar_select %p210, %s16, 1
      %s212 = smul.addr %s211, 4
      %s213 = smul.addr %s212, 4
      %s214 = scalar_lea.vmem %s5, %s213
      %p215 = scmp.lt.s32.totalorder %s16, 1
      %s216 = scalar_select %p215, %s16, 1
      %s217 = smul.addr %s216, 98
      %s218 = smul.addr %s217, 4
      %s219 = scalar_lea.vmem %s0, %s218
      %p220 = scmp.lt.s32.totalorder %s16, 1
      %s221 = scalar_select %p220, %s16, 1
      %s222 = smul.addr %s221, 4
      %s223 = smul.addr %s222, 4
      %s224 = scalar_lea.vmem %s5, %s223
      %v226 = vld [vmem:[%s219] sm:$0xf]
      %v227 = vld [vmem:[%s219 + $0x4] sm:$0xf]
      %v228 = vld [vmem:[%s219 + $0x8] sm:$0xf]
      %v229 = vld [vmem:[%s219 + $0xc] sm:$0xf]
      %v230 = vld [vmem:[%s219 + $0x10] sm:$0xf]
      %v231 = vld [vmem:[%s219 + $0x14] sm:$0xf]
      %v232 = vld [vmem:[%s219 + $0x18] sm:$0xf]
      %v233 = vld [vmem:[%s219 + $0x1c] sm:$0xf]
      %v234 = vld [vmem:[%s219 + $0x20] sm:$0xf]
      %v235 = vld [vmem:[%s219 + $0x24] sm:$0xf]
      %v236 = vld [vmem:[%s219 + $0x28] sm:$0xf]
      %v237 = vld [vmem:[%s219 + $0x2c] sm:$0xf]
      %v238 = vld [vmem:[%s219 + $0x30] sm:$0xf]
      %v239 = vld [vmem:[%s219 + $0x34] sm:$0xf]
      %v240 = vld [vmem:[%s219 + $0x38] sm:$0xf]
      %v241 = vld [vmem:[%s219 + $0x3c] sm:$0xf]
      %v242 = vld [vmem:[%s219 + $0x40] sm:$0xf]
      %v243 = vld [vmem:[%s219 + $0x44] sm:$0xf]
      %v244 = vld [vmem:[%s219 + $0x48] sm:$0xf]
      %v245 = vld [vmem:[%s219 + $0x4c] sm:$0xf]
      %v246 = vld [vmem:[%s219 + $0x50] sm:$0xf]
      %v247 = vld [vmem:[%s219 + $0x54] sm:$0xf]
      %v248 = vld [vmem:[%s219 + $0x58] sm:$0xf]
      %v249 = vld [vmem:[%s219 + $0x5c] sm:$0xf]
      %v250 = vld [vmem:[%s219 + $0x60] sm:$0xf]
      %v251 = vld [vmem:[%s219 + $0x64] sm:$0xf]
      %v252 = vld [vmem:[%s219 + $0x68] sm:$0xf]
      %v253 = vld [vmem:[%s219 + $0x6c] sm:$0xf]
      %v254 = vld [vmem:[%s219 + $0x70] sm:$0xf]
      %v255 = vld [vmem:[%s219 + $0x74] sm:$0xf]
      %v256 = vld [vmem:[%s219 + $0x78] sm:$0xf]
      %v257 = vld [vmem:[%s219 + $0x7c] sm:$0xf]
      %v258 = vld [vmem:[%s219 + $0x80] sm:$0xf]
      %v259 = vld [vmem:[%s219 + $0x84] sm:$0xf]
      %v260 = vld [vmem:[%s219 + $0x88] sm:$0xf]
      %v261 = vld [vmem:[%s219 + $0x8c] sm:$0xf]
      %v262 = vld [vmem:[%s219 + $0x90] sm:$0xf]
      %v263 = vld [vmem:[%s219 + $0x94] sm:$0xf]
      %v264 = vld [vmem:[%s219 + $0x98] sm:$0xf]
      %v265 = vld [vmem:[%s219 + $0x9c] sm:$0xf]
      %v266 = vld [vmem:[%s219 + $0xa0] sm:$0xf]
      %v267 = vld [vmem:[%s219 + $0xa4] sm:$0xf]
      %v268 = vld [vmem:[%s219 + $0xa8] sm:$0xf]
      %v269 = vld [vmem:[%s219 + $0xac] sm:$0xf]
      %v270 = vld [vmem:[%s219 + $0xb0] sm:$0xf]
      %v271 = vld [vmem:[%s219 + $0xb4] sm:$0xf]
      %v272 = vld [vmem:[%s219 + $0xb8] sm:$0xf]
      %v273 = vld [vmem:[%s219 + $0xbc] sm:$0xf]
      %v274 = vld [vmem:[%s219 + $0xc0] sm:$0xf]
      %v275 = vld [vmem:[%s219 + $0xc4] sm:$0xf]
      %v276 = vld [vmem:[%s219 + $0xc8] sm:$0xf]
      %v277 = vld [vmem:[%s219 + $0xcc] sm:$0xf]
      %v278 = vld [vmem:[%s219 + $0xd0] sm:$0xf]
      %v279 = vld [vmem:[%s219 + $0xd4] sm:$0xf]
      %v280 = vld [vmem:[%s219 + $0xd8] sm:$0xf]
      %v281 = vld [vmem:[%s219 + $0xdc] sm:$0xf]
      %v282 = vld [vmem:[%s219 + $0xe0] sm:$0xf]
      %v283 = vld [vmem:[%s219 + $0xe4] sm:$0xf]
      %v284 = vld [vmem:[%s219 + $0xe8] sm:$0xf]
      %v285 = vld [vmem:[%s219 + $0xec] sm:$0xf]
      %v286 = vld [vmem:[%s219 + $0xf0] sm:$0xf]
      %v287 = vld [vmem:[%s219 + $0xf4] sm:$0xf]
      %v288 = vld [vmem:[%s219 + $0xf8] sm:$0xf]
      %v289 = vld [vmem:[%s219 + $0xfc] sm:$0xf]
      %v290 = vld [vmem:[%s219 + $0x100] sm:$0xf]
      %v291 = vld [vmem:[%s219 + $0x104] sm:$0xf]
      %v292 = vld [vmem:[%s219 + $0x108] sm:$0xf]
      %v293 = vld [vmem:[%s219 + $0x10c] sm:$0xf]
      %v294 = vld [vmem:[%s219 + $0x110] sm:$0xf]
      %v295 = vld [vmem:[%s219 + $0x114] sm:$0xf]
      %v296 = vld [vmem:[%s219 + $0x118] sm:$0xf]
      %v297 = vld [vmem:[%s219 + $0x11c] sm:$0xf]
      %v298 = vld [vmem:[%s219 + $0x120] sm:$0xf]
      %v299 = vld [vmem:[%s219 + $0x124] sm:$0xf]
      %v300 = vld [vmem:[%s219 + $0x128] sm:$0xf]
      %v301 = vld [vmem:[%s219 + $0x12c] sm:$0xf]
      %v302 = vld [vmem:[%s219 + $0x130] sm:$0xf]
      %v303 = vld [vmem:[%s219 + $0x134] sm:$0xf]
      %v304 = vld [vmem:[%s219 + $0x138] sm:$0xf]
      %v305 = vld [vmem:[%s219 + $0x13c] sm:$0xf]
      %v306 = vld [vmem:[%s219 + $0x140] sm:$0xf]
      %v307 = vld [vmem:[%s219 + $0x144] sm:$0xf]
      %v308 = vld [vmem:[%s219 + $0x148] sm:$0xf]
      %v309 = vld [vmem:[%s219 + $0x14c] sm:$0xf]
      %v310 = vld [vmem:[%s219 + $0x150] sm:$0xf]
      %v311 = vld [vmem:[%s219 + $0x154] sm:$0xf]
      %v312 = vld [vmem:[%s219 + $0x158] sm:$0xf]
      %v313 = vld [vmem:[%s219 + $0x15c] sm:$0xf]
      %v314 = vld [vmem:[%s219 + $0x160] sm:$0xf]
      %v315 = vld [vmem:[%s219 + $0x164] sm:$0xf]
      %v316 = vld [vmem:[%s219 + $0x168] sm:$0xf]
      %v317 = vld [vmem:[%s219 + $0x16c] sm:$0xf]
      %v318 = vld [vmem:[%s219 + $0x170] sm:$0xf]
      %v319 = vld [vmem:[%s219 + $0x174] sm:$0xf]
      %v320 = vld [vmem:[%s219 + $0x178] sm:$0xf]
      %v321 = vld [vmem:[%s219 + $0x17c] sm:$0xf]
      %v322 = vld [vmem:[%s219 + $0x180] sm:$0xf]
      %v323 = vld [vmem:[%s219 + $0x184] sm:$0xf]
      %v324 = vld [vmem:[%s1] sm:$0xf]
      %v325 = vld [vmem:[%s1 + $0x4] sm:$0xf]
      %v326 = vld [vmem:[%s1 + $0x8] sm:$0xf]
      %v327 = vld [vmem:[%s1 + $0xc] sm:$0xf]
      %v328 = vld [vmem:[%s1 + $0x10] sm:$0xf]
      %v329 = vld [vmem:[%s1 + $0x14] sm:$0xf]
      %v330 = vld [vmem:[%s1 + $0x18] sm:$0xf]
      %v331 = vld [vmem:[%s1 + $0x1c] sm:$0xf]
      %v332 = vld [vmem:[%s1 + $0x20] sm:$0xf]
      %v333 = vld [vmem:[%s1 + $0x24] sm:$0xf]
      %v334 = vld [vmem:[%s1 + $0x28] sm:$0xf]
      %v335 = vld [vmem:[%s1 + $0x2c] sm:$0xf]
      %v336 = vld [vmem:[%s1 + $0x30] sm:$0xf]
      %v337 = vld [vmem:[%s1 + $0x34] sm:$0xf]
      %v338 = vld [vmem:[%s1 + $0x38] sm:$0xf]
      %v339 = vld [vmem:[%s1 + $0x3c] sm:$0xf]
      %v438 = vunpack.c.l.b16 %v226
      %v439 = vunpack.c.l.b16 %v227
      %v440 = vunpack.c.l.b16 %v228
      %v441 = vunpack.c.l.b16 %v229
      %v442 = vunpack.c.l.b16 %v230
      %v443 = vunpack.c.l.b16 %v231
      %v444 = vunpack.c.l.b16 %v232
      %v445 = vunpack.c.l.b16 %v233
      %v446 = vunpack.c.l.b16 %v234
      %v447 = vunpack.c.l.b16 %v235
      %v448 = vunpack.c.l.b16 %v236
      %v449 = vunpack.c.l.b16 %v237
      %v450 = vunpack.c.l.b16 %v238
      %v451 = vunpack.c.l.b16 %v239
      %v452 = vunpack.c.l.b16 %v240
      %v453 = vunpack.c.l.b16 %v241
      %v454 = vunpack.c.l.b16 %v242
      %v455 = vunpack.c.l.b16 %v243
      %v456 = vunpack.c.l.b16 %v244
      %v457 = vunpack.c.l.b16 %v245
      %v458 = vunpack.c.l.b16 %v246
      %v459 = vunpack.c.l.b16 %v247
      %v460 = vunpack.c.l.b16 %v248
      %v461 = vunpack.c.l.b16 %v249
      %v462 = vunpack.c.l.b16 %v250
      %v463 = vunpack.c.l.b16 %v251
      %v464 = vunpack.c.l.b16 %v252
      %v465 = vunpack.c.l.b16 %v253
      %v466 = vunpack.c.l.b16 %v254
      %v467 = vunpack.c.l.b16 %v255
      %v468 = vunpack.c.l.b16 %v256
      %v469 = vunpack.c.l.b16 %v257
      %v470 = vunpack.c.l.b16 %v258
      %v471 = vunpack.c.l.b16 %v259
      %v472 = vunpack.c.l.b16 %v260
      %v473 = vunpack.c.l.b16 %v261
      %v474 = vunpack.c.l.b16 %v262
      %v475 = vunpack.c.l.b16 %v263
      %v476 = vunpack.c.l.b16 %v264
      %v477 = vunpack.c.l.b16 %v265
      %v478 = vunpack.c.l.b16 %v266
      %v479 = vunpack.c.l.b16 %v267
      %v480 = vunpack.c.l.b16 %v268
      %v481 = vunpack.c.l.b16 %v269
      %v482 = vunpack.c.l.b16 %v270
      %v483 = vunpack.c.l.b16 %v271
      %v484 = vunpack.c.l.b16 %v272
      %v485 = vunpack.c.l.b16 %v273
      %v486 = vunpack.c.l.b16 %v274
      %v487 = vunpack.c.l.b16 %v275
      %v488 = vunpack.c.l.b16 %v276
      %v489 = vunpack.c.l.b16 %v277
      %v490 = vunpack.c.l.b16 %v278
      %v491 = vunpack.c.l.b16 %v279
      %v492 = vunpack.c.l.b16 %v280
      %v493 = vunpack.c.l.b16 %v281
      %v494 = vunpack.c.l.b16 %v282
      %v495 = vunpack.c.l.b16 %v283
      %v496 = vunpack.c.l.b16 %v284
      %v497 = vunpack.c.l.b16 %v285
      %v498 = vunpack.c.l.b16 %v286
      %v499 = vunpack.c.l.b16 %v287
      %v500 = vunpack.c.l.b16 %v288
      %v501 = vunpack.c.l.b16 %v289
      %v502 = vunpack.c.l.b16 %v290
      %v503 = vunpack.c.l.b16 %v291
      %v504 = vunpack.c.l.b16 %v292
      %v505 = vunpack.c.l.b16 %v293
      %v506 = vunpack.c.l.b16 %v294
      %v507 = vunpack.c.l.b16 %v295
      %v508 = vunpack.c.l.b16 %v296
      %v509 = vunpack.c.l.b16 %v297
      %v510 = vunpack.c.l.b16 %v298
      %v511 = vunpack.c.l.b16 %v299
      %v512 = vunpack.c.l.b16 %v300
      %v513 = vunpack.c.l.b16 %v301
      %v514 = vunpack.c.l.b16 %v302
      %v515 = vunpack.c.l.b16 %v303
      %v516 = vunpack.c.l.b16 %v304
      %v517 = vunpack.c.l.b16 %v305
      %v518 = vunpack.c.l.b16 %v306
      %v519 = vunpack.c.l.b16 %v307
      %v520 = vunpack.c.l.b16 %v308
      %v521 = vunpack.c.l.b16 %v309
      %v522 = vunpack.c.l.b16 %v310
      %v523 = vunpack.c.l.b16 %v311
      %v524 = vunpack.c.l.b16 %v312
      %v525 = vunpack.c.l.b16 %v313
      %v526 = vunpack.c.l.b16 %v314
      %v527 = vunpack.c.l.b16 %v315
      %v528 = vunpack.c.l.b16 %v316
      %v529 = vunpack.c.l.b16 %v317
      %v530 = vunpack.c.l.b16 %v318
      %v531 = vunpack.c.l.b16 %v319
      %v532 = vunpack.c.l.b16 %v320
      %v533 = vunpack.c.l.b16 %v321
      %v534 = vunpack.c.l.b16 %v322
      %v535 = vunpack.c.l.b16 %v323
      %v536 = vpack.c.b16 %v439, %v438
      %v537 = vpack.c.b16 %v441, %v440
      %v538 = vpack.c.b16 %v443, %v442
      %v539 = vpack.c.b16 %v445, %v444
      %v540 = vpack.c.b16 %v447, %v446
      %v541 = vpack.c.b16 %v449, %v448
      %v542 = vpack.c.b16 %v451, %v450
      %v543 = vpack.c.b16 %v453, %v452
      %v544 = vpack.c.b16 %v455, %v454
      %v545 = vpack.c.b16 %v457, %v456
      %v546 = vpack.c.b16 %v459, %v458
      %v547 = vpack.c.b16 %v461, %v460
      %v548 = vpack.c.b16 %v463, %v462
      %v549 = vpack.c.b16 %v465, %v464
      %v550 = vpack.c.b16 %v467, %v466
      %v551 = vpack.c.b16 %v469, %v468
      %v552 = vpack.c.b16 %v471, %v470
      %v553 = vpack.c.b16 %v473, %v472
      %v554 = vpack.c.b16 %v475, %v474
      %v555 = vpack.c.b16 %v477, %v476
      %v556 = vpack.c.b16 %v479, %v478
      %v557 = vpack.c.b16 %v481, %v480
      %v558 = vpack.c.b16 %v483, %v482
      %v559 = vpack.c.b16 %v485, %v484
      %v560 = vpack.c.b16 %v487, %v486
      %v561 = vpack.c.b16 %v489, %v488
      %v562 = vpack.c.b16 %v491, %v490
      %v563 = vpack.c.b16 %v493, %v492
      %v564 = vpack.c.b16 %v495, %v494
      %v565 = vpack.c.b16 %v497, %v496
      %v566 = vpack.c.b16 %v499, %v498
      %v567 = vpack.c.b16 %v501, %v500
      %v568 = vpack.c.b16 %v503, %v502
      %v569 = vpack.c.b16 %v505, %v504
      %v570 = vpack.c.b16 %v507, %v506
      %v571 = vpack.c.b16 %v509, %v508
      %v572 = vpack.c.b16 %v511, %v510
      %v573 = vpack.c.b16 %v513, %v512
      %v574 = vpack.c.b16 %v515, %v514
      %v575 = vpack.c.b16 %v517, %v516
      %v576 = vpack.c.b16 %v519, %v518
      %v577 = vpack.c.b16 %v521, %v520
      %v578 = vpack.c.b16 %v523, %v522
      %v579 = vpack.c.b16 %v525, %v524
      %v580 = vpack.c.b16 %v527, %v526
      %v581 = vpack.c.b16 %v529, %v528
      %v582 = vpack.c.b16 %v531, %v530
      %v583 = vpack.c.b16 %v533, %v532
      %v584 = vpack.c.b16 %v535, %v534
      %v650 = vunpack.c.l.b16 %v324
      %v651 = vunpack.c.l.b16 %v325
      %v652 = vunpack.c.l.b16 %v326
      %v653 = vunpack.c.l.b16 %v327
      %v654 = vunpack.c.l.b16 %v328
      %v655 = vunpack.c.l.b16 %v329
      %v656 = vunpack.c.l.b16 %v330
      %v657 = vunpack.c.l.b16 %v331
      %v658 = vunpack.c.l.b16 %v332
      %v659 = vunpack.c.l.b16 %v333
      %v660 = vunpack.c.l.b16 %v334
      %v661 = vunpack.c.l.b16 %v335
      %v662 = vunpack.c.l.b16 %v336
      %v663 = vunpack.c.l.b16 %v337
      %v664 = vunpack.c.l.b16 %v338
      %v665 = vunpack.c.l.b16 %v339
      %v666 = vpack.c.b16 %v651, %v650
      %v667 = vpack.c.b16 %v653, %v652
      %v668 = vpack.c.b16 %v655, %v654
      %v669 = vpack.c.b16 %v657, %v656
      %v670 = vpack.c.b16 %v659, %v658
      %v671 = vpack.c.b16 %v661, %v660
      %v672 = vpack.c.b16 %v663, %v662
      %v673 = vpack.c.b16 %v665, %v664
      %682 = vmatprep.subr.bf16.mxu0 0
      %683 = vmatpush1.bf16.msra.mxu0 %v666
      %684 = vmatprep.subr.bf16.mxu0 0
      %685 = vmatpush1.bf16.msra.mxu0 %v667
      %686 = vmatprep.subr.bf16.mxu0 0
      %687 = vmatpush1.bf16.msra.mxu0 %v668
      %688 = vmatprep.subr.bf16.mxu0 0
      %689 = vmatpush1.bf16.msra.mxu0 %v669
      %690 = vmatprep.subr.bf16.mxu0 0
      %691 = vmatpush1.bf16.msra.mxu0 %v670
      %692 = vmatprep.subr.bf16.mxu0 0
      %693 = vmatpush1.bf16.msra.mxu0 %v671
      %694 = vmatprep.subr.bf16.mxu0 0
      %695 = vmatpush1.bf16.msra.mxu0 %v672
      %696 = vmatprep.subr.bf16.mxu0 0
      %697 = vmatpush1.bf16.msra.mxu0 %v673
      %698 = vmatprep.subr.bf16.mxu0 0
      %699 = vmatpush1.bf16.msra.mxu0 0
      %700 = vmatprep.subr.bf16.mxu0 0
      %701 = vmatpush1.bf16.msra.mxu0 0
      %702 = vmatprep.subr.bf16.mxu0 0
      %703 = vmatpush1.bf16.msra.mxu0 0
      %704 = vmatprep.subr.bf16.mxu0 0
      %705 = vmatpush1.bf16.msra.mxu0 0
      %706 = vmatprep.subr.bf16.mxu0 0
      %707 = vmatpush1.bf16.msra.mxu0 0
      %708 = vmatprep.subr.bf16.mxu0 0
      %709 = vmatpush1.bf16.msra.mxu0 0
      %710 = vmatprep.subr.bf16.mxu0 0
      %711 = vmatpush1.bf16.msra.mxu0 0
      %712 = vmatprep.subr.bf16.mxu0 0
      %713 = vmatpush1.bf16.msra.mxu0 0
      %714 = vmatprep.mubr.bf16.mxu0 0
      %715 = vmatmul.mubr.bf16.gmra.mrb[0].mxu0 %v536
      %v716 = vpop.f32.mrb[0].mxu0
      %v717 = vadd.f32 0.0, %v716
      %v718 = vpop.f32.mrb[0].mxu0
      %v719 = vpop.f32.mrb[0].mxu0
      %v720 = vadd.f32 0.0, %v719
      %v721 = vpop.f32.mrb[0].mxu0
      %722 = vmatprep.mubr.bf16.mxu0 0
      %723 = vmatmul.mubr.bf16.gmra.mrb[0].mxu0 %v537
      %v724 = vpop.f32.mrb[0].mxu0
      %v725 = vadd.f32 0.0, %v724
      %v726 = vpop.f32.mrb[0].mxu0
      %v727 = vpop.f32.mrb[0].mxu0
      %v728 = vadd.f32 0.0, %v727
      %v729 = vpop.f32.mrb[0].mxu0
      %730 = vmatprep.mubr.bf16.mxu0 0
      %731 = vmatmul.mubr.bf16.gmra.mrb[0].mxu0 %v538
      %v732 = vpop.f32.mrb[0].mxu0
      %v733 = vadd.f32 0.0, %v732
      %v734 = vpop.f32.mrb[0].mxu0
      %v735 = vpop.f32.mrb[0].mxu0
      %v736 = vadd.f32 0.0, %v735
      %v737 = vpop.f32.mrb[0].mxu0
      %738 = vmatprep.mubr.bf16.mxu0 0
      %739 = vmatmul.mubr.bf16.gmra.mrb[0].mxu0 %v539
      %v740 = vpop.f32.mrb[0].mxu0
      %v741 = vadd.f32 0.0, %v740
      %v742 = vpop.f32.mrb[0].mxu0
      %v743 = vpop.f32.mrb[0].mxu0
      %v744 = vadd.f32 0.0, %v743
      %v745 = vpop.f32.mrb[0].mxu0
      %746 = vmatprep.mubr.bf16.mxu0 0
      %747 = vmatmul.mubr.bf16.gmra.mrb[0].mxu0 %v540
      %v748 = vpop.f32.mrb[0].mxu0
      %v749 = vadd.f32 0.0, %v748
      %v750 = vpop.f32.mrb[0].mxu0
      %v751 = vpop.f32.mrb[0].mxu0
      %v752 = vadd.f32 0.0, %v751
      %v753 = vpop.f32.mrb[0].mxu0
      %754 = vmatprep.mubr.bf16.mxu0 0
      %755 = vmatmul.mubr.bf16.gmra.mrb[0].mxu0 %v541
      %v756 = vpop.f32.mrb[0].mxu0
      %v757 = vadd.f32 0.0, %v756
      %v758 = vpop.f32.mrb[0].mxu0
      %v759 = vpop.f32.mrb[0].mxu0
      %v760 = vadd.f32 0.0, %v759
      %v761 = vpop.f32.mrb[0].mxu0
      %762 = vmatprep.mubr.bf16.mxu0 0
      %763 = vmatmul.mubr.bf16.gmra.mrb[0].mxu0 %v542
      %v764 = vpop.f32.mrb[0].mxu0
      %v765 = vadd.f32 0.0, %v764
      %v766 = vpop.f32.mrb[0].mxu0
      %v767 = vpop.f32.mrb[0].mxu0
      %v768 = vadd.f32 0.0, %v767
      %v769 = vpop.f32.mrb[0].mxu0
      %770 = vmatprep.mubr.bf16.mxu0 0
      %771 = vmatmul.mubr.bf16.gmra.mrb[0].mxu0 %v543
      %v772 = vpop.f32.mrb[0].mxu0
      %v773 = vadd.f32 0.0, %v772
      %v774 = vpop.f32.mrb[0].mxu0
      %v775 = vpop.f32.mrb[0].mxu0
      %v776 = vadd.f32 0.0, %v775
      %v777 = vpop.f32.mrb[0].mxu0
      %778 = vmatprep.mubr.bf16.mxu0 0
      %779 = vmatmul.mubr.bf16.gmra.mrb[0].mxu0 %v544
      %v780 = vpop.f32.mrb[0].mxu0
      %v781 = vadd.f32 0.0, %v780
      %v782 = vpop.f32.mrb[0].mxu0
      %v783 = vpop.f32.mrb[0].mxu0
      %v784 = vadd.f32 0.0, %v783
      %v785 = vpop.f32.mrb[0].mxu0
      %786 = vmatprep.mubr.bf16.mxu0 0
      %787 = vmatmul.mubr.bf16.gmra.mrb[0].mxu0 %v545
      %v788 = vpop.f32.mrb[0].mxu0
      %v789 = vadd.f32 0.0, %v788
      %v790 = vpop.f32.mrb[0].mxu0
      %v791 = vpop.f32.mrb[0].mxu0
      %v792 = vadd.f32 0.0, %v791
      %v793 = vpop.f32.mrb[0].mxu0
      %794 = vmatprep.mubr.bf16.mxu0 0
      %795 = vmatmul.mubr.bf16.gmra.mrb[0].mxu0 %v546
      %v796 = vpop.f32.mrb[0].mxu0
      %v797 = vadd.f32 0.0, %v796
      %v798 = vpop.f32.mrb[0].mxu0
      %v799 = vpop.f32.mrb[0].mxu0
      %v800 = vadd.f32 0.0, %v799
      %v801 = vpop.f32.mrb[0].mxu0
      %802 = vmatprep.mubr.bf16.mxu0 0
      %803 = vmatmul.mubr.bf16.gmra.mrb[0].mxu0 %v547
      %v804 = vpop.f32.mrb[0].mxu0
      %v805 = vadd.f32 0.0, %v804
      %v806 = vpop.f32.mrb[0].mxu0
      %v807 = vpop.f32.mrb[0].mxu0
      %v808 = vadd.f32 0.0, %v807
      %v809 = vpop.f32.mrb[0].mxu0
      %810 = vmatprep.mubr.bf16.mxu0 0
      %811 = vmatmul.mubr.bf16.gmra.mrb[0].mxu0 %v548
      %v812 = vpop.f32.mrb[0].mxu0
      %v813 = vadd.f32 0.0, %v812
      %v814 = vpop.f32.mrb[0].mxu0
      %v815 = vpop.f32.mrb[0].mxu0
      %v816 = vadd.f32 0.0, %v815
      %v817 = vpop.f32.mrb[0].mxu0
      %818 = vmatprep.mubr.bf16.mxu0 0
      %819 = vmatmul.mubr.bf16.gmra.mrb[0].mxu0 %v549
      %v820 = vpop.f32.mrb[0].mxu0
      %v821 = vadd.f32 0.0, %v820
      %v822 = vpop.f32.mrb[0].mxu0
      %v823 = vpop.f32.mrb[0].mxu0
      %v824 = vadd.f32 0.0, %v823
      %v825 = vpop.f32.mrb[0].mxu0
      %826 = vmatprep.mubr.bf16.mxu0 0
      %827 = vmatmul.mubr.bf16.gmra.mrb[0].mxu0 %v550
      %v828 = vpop.f32.mrb[0].mxu0
      %v829 = vadd.f32 0.0, %v828
      %v830 = vpop.f32.mrb[0].mxu0
      %v831 = vpop.f32.mrb[0].mxu0
      %v832 = vadd.f32 0.0, %v831
      %v833 = vpop.f32.mrb[0].mxu0
      %834 = vmatprep.mubr.bf16.mxu0 0
      %835 = vmatmul.mubr.bf16.gmra.mrb[0].mxu0 %v551
      %v836 = vpop.f32.mrb[0].mxu0
      %v837 = vadd.f32 0.0, %v836
      %v838 = vpop.f32.mrb[0].mxu0
      %v839 = vpop.f32.mrb[0].mxu0
      %v840 = vadd.f32 0.0, %v839
      %v841 = vpop.f32.mrb[0].mxu0
      %842 = vmatprep.mubr.bf16.mxu0 0
      %843 = vmatmul.mubr.bf16.gmra.mrb[0].mxu0 %v552
      %v844 = vpop.f32.mrb[0].mxu0
      %v845 = vadd.f32 0.0, %v844
      %v846 = vpop.f32.mrb[0].mxu0
      %v847 = vpop.f32.mrb[0].mxu0
      %v848 = vadd.f32 0.0, %v847
      %v849 = vpop.f32.mrb[0].mxu0
      %850 = vmatprep.mubr.bf16.mxu0 0
      %851 = vmatmul.mubr.bf16.gmra.mrb[0].mxu0 %v553
      %v852 = vpop.f32.mrb[0].mxu0
      %v853 = vadd.f32 0.0, %v852
      %v854 = vpop.f32.mrb[0].mxu0
      %v855 = vpop.f32.mrb[0].mxu0
      %v856 = vadd.f32 0.0, %v855
      %v857 = vpop.f32.mrb[0].mxu0
      %858 = vmatprep.mubr.bf16.mxu0 0
      %859 = vmatmul.mubr.bf16.gmra.mrb[0].mxu0 %v554
      %v860 = vpop.f32.mrb[0].mxu0
      %v861 = vadd.f32 0.0, %v860
      %v862 = vpop.f32.mrb[0].mxu0
      %v863 = vpop.f32.mrb[0].mxu0
      %v864 = vadd.f32 0.0, %v863
      %v865 = vpop.f32.mrb[0].mxu0
      %866 = vmatprep.mubr.bf16.mxu0 0
      %867 = vmatmul.mubr.bf16.gmra.mrb[0].mxu0 %v555
      %v868 = vpop.f32.mrb[0].mxu0
      %v869 = vadd.f32 0.0, %v868
      %v870 = vpop.f32.mrb[0].mxu0
      %v871 = vpop.f32.mrb[0].mxu0
      %v872 = vadd.f32 0.0, %v871
      %v873 = vpop.f32.mrb[0].mxu0
      %874 = vmatprep.mubr.bf16.mxu0 0
      %875 = vmatmul.mubr.bf16.gmra.mrb[0].mxu0 %v556
      %v876 = vpop.f32.mrb[0].mxu0
      %v877 = vadd.f32 0.0, %v876
      %v878 = vpop.f32.mrb[0].mxu0
      %v879 = vpop.f32.mrb[0].mxu0
      %v880 = vadd.f32 0.0, %v879
      %v881 = vpop.f32.mrb[0].mxu0
      %882 = vmatprep.mubr.bf16.mxu0 0
      %883 = vmatmul.mubr.bf16.gmra.mrb[0].mxu0 %v557
      %v884 = vpop.f32.mrb[0].mxu0
      %v885 = vadd.f32 0.0, %v884
      %v886 = vpop.f32.mrb[0].mxu0
      %v887 = vpop.f32.mrb[0].mxu0
      %v888 = vadd.f32 0.0, %v887
      %v889 = vpop.f32.mrb[0].mxu0
      %890 = vmatprep.mubr.bf16.mxu0 0
      %891 = vmatmul.mubr.bf16.gmra.mrb[0].mxu0 %v558
      %v892 = vpop.f32.mrb[0].mxu0
      %v893 = vadd.f32 0.0, %v892
      %v894 = vpop.f32.mrb[0].mxu0
      %v895 = vpop.f32.mrb[0].mxu0
      %v896 = vadd.f32 0.0, %v895
      %v897 = vpop.f32.mrb[0].mxu0
      %898 = vmatprep.mubr.bf16.mxu0 0
      %899 = vmatmul.mubr.bf16.gmra.mrb[0].mxu0 %v559
      %v900 = vpop.f32.mrb[0].mxu0
      %v901 = vadd.f32 0.0, %v900
      %v902 = vpop.f32.mrb[0].mxu0
      %v903 = vpop.f32.mrb[0].mxu0
      %v904 = vadd.f32 0.0, %v903
      %v905 = vpop.f32.mrb[0].mxu0
      %906 = vmatprep.mubr.bf16.mxu0 0
      %907 = vmatmul.mubr.bf16.gmra.mrb[0].mxu0 %v560
      %v908 = vpop.f32.mrb[0].mxu0
      %v909 = vadd.f32 0.0, %v908
      %v910 = vpop.f32.mrb[0].mxu0
      %v911 = vpop.f32.mrb[0].mxu0
      %v912 = vadd.f32 0.0, %v911
      %v913 = vpop.f32.mrb[0].mxu0
      %914 = vmatprep.mubr.bf16.mxu0 0
      %915 = vmatmul.mubr.bf16.gmra.mrb[0].mxu0 %v561
      %v916 = vpop.f32.mrb[0].mxu0
      %v917 = vadd.f32 0.0, %v916
      %v918 = vpop.f32.mrb[0].mxu0
      %v919 = vpop.f32.mrb[0].mxu0
      %v920 = vadd.f32 0.0, %v919
      %v921 = vpop.f32.mrb[0].mxu0
      %922 = vmatprep.mubr.bf16.mxu0 0
      %923 = vmatmul.mubr.bf16.gmra.mrb[0].mxu0 %v562
      %v924 = vpop.f32.mrb[0].mxu0
      %v925 = vadd.f32 0.0, %v924
      %v926 = vpop.f32.mrb[0].mxu0
      %v927 = vpop.f32.mrb[0].mxu0
      %v928 = vadd.f32 0.0, %v927
      %v929 = vpop.f32.mrb[0].mxu0
      %930 = vmatprep.mubr.bf16.mxu0 0
      %931 = vmatmul.mubr.bf16.gmra.mrb[0].mxu0 %v563
      %v932 = vpop.f32.mrb[0].mxu0
      %v933 = vadd.f32 0.0, %v932
      %v934 = vpop.f32.mrb[0].mxu0
      %v935 = vpop.f32.mrb[0].mxu0
      %v936 = vadd.f32 0.0, %v935
      %v937 = vpop.f32.mrb[0].mxu0
      %938 = vmatprep.mubr.bf16.mxu0 0
      %939 = vmatmul.mubr.bf16.gmra.mrb[0].mxu0 %v564
      %v940 = vpop.f32.mrb[0].mxu0
      %v941 = vadd.f32 0.0, %v940
      %v942 = vpop.f32.mrb[0].mxu0
      %v943 = vpop.f32.mrb[0].mxu0
      %v944 = vadd.f32 0.0, %v943
      %v945 = vpop.f32.mrb[0].mxu0
      %946 = vmatprep.mubr.bf16.mxu0 0
      %947 = vmatmul.mubr.bf16.gmra.mrb[0].mxu0 %v565
      %v948 = vpop.f32.mrb[0].mxu0
      %v949 = vadd.f32 0.0, %v948
      %v950 = vpop.f32.mrb[0].mxu0
      %v951 = vpop.f32.mrb[0].mxu0
      %v952 = vadd.f32 0.0, %v951
      %v953 = vpop.f32.mrb[0].mxu0
      %954 = vmatprep.mubr.bf16.mxu0 0
      %955 = vmatmul.mubr.bf16.gmra.mrb[0].mxu0 %v566
      %v956 = vpop.f32.mrb[0].mxu0
      %v957 = vadd.f32 0.0, %v956
      %v958 = vpop.f32.mrb[0].mxu0
      %v959 = vpop.f32.mrb[0].mxu0
      %v960 = vadd.f32 0.0, %v959
      %v961 = vpop.f32.mrb[0].mxu0
      %962 = vmatprep.mubr.bf16.mxu0 0
      %963 = vmatmul.mubr.bf16.gmra.mrb[0].mxu0 %v567
      %v964 = vpop.f32.mrb[0].mxu0
      %v965 = vadd.f32 0.0, %v964
      %v966 = vpop.f32.mrb[0].mxu0
      %v967 = vpop.f32.mrb[0].mxu0
      %v968 = vadd.f32 0.0, %v967
      %v969 = vpop.f32.mrb[0].mxu0
      %970 = vmatprep.mubr.bf16.mxu0 0
      %971 = vmatmul.mubr.bf16.gmra.mrb[0].mxu0 %v568
      %v972 = vpop.f32.mrb[0].mxu0
      %v973 = vadd.f32 0.0, %v972
      %v974 = vpop.f32.mrb[0].mxu0
      %v975 = vpop.f32.mrb[0].mxu0
      %v976 = vadd.f32 0.0, %v975
      %v977 = vpop.f32.mrb[0].mxu0
      %978 = vmatprep.mubr.bf16.mxu0 0
      %979 = vmatmul.mubr.bf16.gmra.mrb[0].mxu0 %v569
      %v980 = vpop.f32.mrb[0].mxu0
      %v981 = vadd.f32 0.0, %v980
      %v982 = vpop.f32.mrb[0].mxu0
      %v983 = vpop.f32.mrb[0].mxu0
      %v984 = vadd.f32 0.0, %v983
      %v985 = vpop.f32.mrb[0].mxu0
      %986 = vmatprep.mubr.bf16.mxu0 0
      %987 = vmatmul.mubr.bf16.gmra.mrb[0].mxu0 %v570
      %v988 = vpop.f32.mrb[0].mxu0
      %v989 = vadd.f32 0.0, %v988
      %v990 = vpop.f32.mrb[0].mxu0
      %v991 = vpop.f32.mrb[0].mxu0
      %v992 = vadd.f32 0.0, %v991
      %v993 = vpop.f32.mrb[0].mxu0
      %994 = vmatprep.mubr.bf16.mxu0 0
      %995 = vmatmul.mubr.bf16.gmra.mrb[0].mxu0 %v571
      %v996 = vpop.f32.mrb[0].mxu0
      %v997 = vadd.f32 0.0, %v996
      %v998 = vpop.f32.mrb[0].mxu0
      %v999 = vpop.f32.mrb[0].mxu0
      %v1000 = vadd.f32 0.0, %v999
      %v1001 = vpop.f32.mrb[0].mxu0
      %1002 = vmatprep.mubr.bf16.mxu0 0
      %1003 = vmatmul.mubr.bf16.gmra.mrb[0].mxu0 %v572
      %v1004 = vpop.f32.mrb[0].mxu0
      %v1005 = vadd.f32 0.0, %v1004
      %v1006 = vpop.f32.mrb[0].mxu0
      %v1007 = vpop.f32.mrb[0].mxu0
      %v1008 = vadd.f32 0.0, %v1007
      %v1009 = vpop.f32.mrb[0].mxu0
      %1010 = vmatprep.mubr.bf16.mxu0 0
      %1011 = vmatmul.mubr.bf16.gmra.mrb[0].mxu0 %v573
      %v1012 = vpop.f32.mrb[0].mxu0
      %v1013 = vadd.f32 0.0, %v1012
      %v1014 = vpop.f32.mrb[0].mxu0
      %v1015 = vpop.f32.mrb[0].mxu0
      %v1016 = vadd.f32 0.0, %v1015
      %v1017 = vpop.f32.mrb[0].mxu0
      %1018 = vmatprep.mubr.bf16.mxu0 0
      %1019 = vmatmul.mubr.bf16.gmra.mrb[0].mxu0 %v574
      %v1020 = vpop.f32.mrb[0].mxu0
      %v1021 = vadd.f32 0.0, %v1020
      %v1022 = vpop.f32.mrb[0].mxu0
      %v1023 = vpop.f32.mrb[0].mxu0
      %v1024 = vadd.f32 0.0, %v1023
      %v1025 = vpop.f32.mrb[0].mxu0
      %1026 = vmatprep.mubr.bf16.mxu0 0
      %1027 = vmatmul.mubr.bf16.gmra.mrb[0].mxu0 %v575
      %v1028 = vpop.f32.mrb[0].mxu0
      %v1029 = vadd.f32 0.0, %v1028
      %v1030 = vpop.f32.mrb[0].mxu0
      %v1031 = vpop.f32.mrb[0].mxu0
      %v1032 = vadd.f32 0.0, %v1031
      %v1033 = vpop.f32.mrb[0].mxu0
      %1034 = vmatprep.mubr.bf16.mxu0 0
      %1035 = vmatmul.mubr.bf16.gmra.mrb[0].mxu0 %v576
      %v1036 = vpop.f32.mrb[0].mxu0
      %v1037 = vadd.f32 0.0, %v1036
      %v1038 = vpop.f32.mrb[0].mxu0
      %v1039 = vpop.f32.mrb[0].mxu0
      %v1040 = vadd.f32 0.0, %v1039
      %v1041 = vpop.f32.mrb[0].mxu0
      %1042 = vmatprep.mubr.bf16.mxu0 0
      %1043 = vmatmul.mubr.bf16.gmra.mrb[0].mxu0 %v577
      %v1044 = vpop.f32.mrb[0].mxu0
      %v1045 = vadd.f32 0.0, %v1044
      %v1046 = vpop.f32.mrb[0].mxu0
      %v1047 = vpop.f32.mrb[0].mxu0
      %v1048 = vadd.f32 0.0, %v1047
      %v1049 = vpop.f32.mrb[0].mxu0
      %1050 = vmatprep.mubr.bf16.mxu0 0
      %1051 = vmatmul.mubr.bf16.gmra.mrb[0].mxu0 %v578
      %v1052 = vpop.f32.mrb[0].mxu0
      %v1053 = vadd.f32 0.0, %v1052
      %v1054 = vpop.f32.mrb[0].mxu0
      %v1055 = vpop.f32.mrb[0].mxu0
      %v1056 = vadd.f32 0.0, %v1055
      %v1057 = vpop.f32.mrb[0].mxu0
      %1058 = vmatprep.mubr.bf16.mxu0 0
      %1059 = vmatmul.mubr.bf16.gmra.mrb[0].mxu0 %v579
      %v1060 = vpop.f32.mrb[0].mxu0
      %v1061 = vadd.f32 0.0, %v1060
      %v1062 = vpop.f32.mrb[0].mxu0
      %v1063 = vpop.f32.mrb[0].mxu0
      %v1064 = vadd.f32 0.0, %v1063
      %v1065 = vpop.f32.mrb[0].mxu0
      %1066 = vmatprep.mubr.bf16.mxu0 0
      %1067 = vmatmul.mubr.bf16.gmra.mrb[0].mxu0 %v580
      %v1068 = vpop.f32.mrb[0].mxu0
      %v1069 = vadd.f32 0.0, %v1068
      %v1070 = vpop.f32.mrb[0].mxu0
      %v1071 = vpop.f32.mrb[0].mxu0
      %v1072 = vadd.f32 0.0, %v1071
      %v1073 = vpop.f32.mrb[0].mxu0
      %1074 = vmatprep.mubr.bf16.mxu0 0
      %1075 = vmatmul.mubr.bf16.gmra.mrb[0].mxu0 %v581
      %v1076 = vpop.f32.mrb[0].mxu0
      %v1077 = vadd.f32 0.0, %v1076
      %v1078 = vpop.f32.mrb[0].mxu0
      %v1079 = vpop.f32.mrb[0].mxu0
      %v1080 = vadd.f32 0.0, %v1079
      %v1081 = vpop.f32.mrb[0].mxu0
      %1082 = vmatprep.mubr.bf16.mxu0 0
      %1083 = vmatmul.mubr.bf16.gmra.mrb[0].mxu0 %v582
      %v1084 = vpop.f32.mrb[0].mxu0
      %v1085 = vadd.f32 0.0, %v1084
      %v1086 = vpop.f32.mrb[0].mxu0
      %v1087 = vpop.f32.mrb[0].mxu0
      %v1088 = vadd.f32 0.0, %v1087
      %v1089 = vpop.f32.mrb[0].mxu0
      %1090 = vmatprep.mubr.bf16.mxu0 0
      %1091 = vmatmul.mubr.bf16.gmra.mrb[0].mxu0 %v583
      %v1092 = vpop.f32.mrb[0].mxu0
      %v1093 = vadd.f32 0.0, %v1092
      %v1094 = vpop.f32.mrb[0].mxu0
      %v1095 = vpop.f32.mrb[0].mxu0
      %v1096 = vadd.f32 0.0, %v1095
      %v1097 = vpop.f32.mrb[0].mxu0
      %1098 = vmatprep.mubr.bf16.mxu0 0
      %1099 = vmatmul.mubr.bf16.gmra.mrb[0].mxu0 %v584
      %v1100 = vpop.f32.mrb[0].mxu0
      %v1101 = vadd.f32 0.0, %v1100
      %v1102 = vpop.f32.mrb[0].mxu0
      %v1103 = vpop.f32.mrb[0].mxu0
      %v1104 = vadd.f32 0.0, %v1103
      %v1105 = vpop.f32.mrb[0].mxu0
      %1106 = vdwg.mxu0
      %vm1107 = vcmask 130048
      %1108 = vst.msk [vmem:[#allocation2] sm:$0xff] %vm1107, %v717
      %1109 = vst.msk [vmem:[#allocation2 + $0x8] sm:$0xff] %vm1107, %v720
      %1110 = vst.msk [vmem:[#allocation2 + $0x10] sm:$0xff] %vm1107, %v725
      %1111 = vst.msk [vmem:[#allocation2 + $0x18] sm:$0xff] %vm1107, %v728
      %1112 = vst.msk [vmem:[#allocation2 + $0x20] sm:$0xff] %vm1107, %v733
      %1113 = vst.msk [vmem:[#allocation2 + $0x28] sm:$0xff] %vm1107, %v736
      %1114 = vst.msk [vmem:[#allocation2 + $0x30] sm:$0xff] %vm1107, %v741
      %1115 = vst.msk [vmem:[#allocation2 + $0x38] sm:$0xff] %vm1107, %v744
      %1116 = vst.msk [vmem:[#allocation2 + $0x40] sm:$0xff] %vm1107, %v749
      %1117 = vst.msk [vmem:[#allocation2 + $0x48] sm:$0xff] %vm1107, %v752
      %1118 = vst.msk [vmem:[#allocation2 + $0x50] sm:$0xff] %vm1107, %v757
      %1119 = vst.msk [vmem:[#allocation2 + $0x58] sm:$0xff] %vm1107, %v760
      %1120 = vst.msk [vmem:[#allocation2 + $0x60] sm:$0xff] %vm1107, %v765
      %1121 = vst.msk [vmem:[#allocation2 + $0x68] sm:$0xff] %vm1107, %v768
      %1122 = vst.msk [vmem:[#allocation2 + $0x70] sm:$0xff] %vm1107, %v773
      %1123 = vst.msk [vmem:[#allocation2 + $0x78] sm:$0xff] %vm1107, %v776
      %1124 = vst.msk [vmem:[#allocation2 + $0x80] sm:$0xff] %vm1107, %v781
      %1125 = vst.msk [vmem:[#allocation2 + $0x88] sm:$0xff] %vm1107, %v784
      %1126 = vst.msk [vmem:[#allocation2 + $0x90] sm:$0xff] %vm1107, %v789
      %1127 = vst.msk [vmem:[#allocation2 + $0x98] sm:$0xff] %vm1107, %v792
      %1128 = vst.msk [vmem:[#allocation2 + $0xa0] sm:$0xff] %vm1107, %v797
      %1129 = vst.msk [vmem:[#allocation2 + $0xa8] sm:$0xff] %vm1107, %v800
      %1130 = vst.msk [vmem:[#allocation2 + $0xb0] sm:$0xff] %vm1107, %v805
      %1131 = vst.msk [vmem:[#allocation2 + $0xb8] sm:$0xff] %vm1107, %v808
      %1132 = vst.msk [vmem:[#allocation2 + $0xc0] sm:$0xff] %vm1107, %v813
      %1133 = vst.msk [vmem:[#allocation2 + $0xc8] sm:$0xff] %vm1107, %v816
      %1134 = vst.msk [vmem:[#allocation2 + $0xd0] sm:$0xff] %vm1107, %v821
      %1135 = vst.msk [vmem:[#allocation2 + $0xd8] sm:$0xff] %vm1107, %v824
      %1136 = vst.msk [vmem:[#allocation2 + $0xe0] sm:$0xff] %vm1107, %v829
      %1137 = vst.msk [vmem:[#allocation2 + $0xe8] sm:$0xff] %vm1107, %v832
      %1138 = vst.msk [vmem:[#allocation2 + $0xf0] sm:$0xff] %vm1107, %v837
      %1139 = vst.msk [vmem:[#allocation2 + $0xf8] sm:$0xff] %vm1107, %v840
      %1140 = vst.msk [vmem:[#allocation2 + $0x100] sm:$0xff] %vm1107, %v845
      %1141 = vst.msk [vmem:[#allocation2 + $0x108] sm:$0xff] %vm1107, %v848
      %1142 = vst.msk [vmem:[#allocation2 + $0x110] sm:$0xff] %vm1107, %v853
      %1143 = vst.msk [vmem:[#allocation2 + $0x118] sm:$0xff] %vm1107, %v856
      %1144 = vst.msk [vmem:[#allocation2 + $0x120] sm:$0xff] %vm1107, %v861
      %1145 = vst.msk [vmem:[#allocation2 + $0x128] sm:$0xff] %vm1107, %v864
      %1146 = vst.msk [vmem:[#allocation2 + $0x130] sm:$0xff] %vm1107, %v869
      %1147 = vst.msk [vmem:[#allocation2 + $0x138] sm:$0xff] %vm1107, %v872
      %1148 = vst.msk [vmem:[#allocation2 + $0x140] sm:$0xff] %vm1107, %v877
      %1149 = vst.msk [vmem:[#allocation2 + $0x148] sm:$0xff] %vm1107, %v880
      %1150 = vst.msk [vmem:[#allocation2 + $0x150] sm:$0xff] %vm1107, %v885
      %1151 = vst.msk [vmem:[#allocation2 + $0x158] sm:$0xff] %vm1107, %v888
      %1152 = vst.msk [vmem:[#allocation2 + $0x160] sm:$0xff] %vm1107, %v893
      %1153 = vst.msk [vmem:[#allocation2 + $0x168] sm:$0xff] %vm1107, %v896
      %1154 = vst.msk [vmem:[#allocation2 + $0x170] sm:$0xff] %vm1107, %v901
      %1155 = vst.msk [vmem:[#allocation2 + $0x178] sm:$0xff] %vm1107, %v904
      %1156 = vst.msk [vmem:[#allocation2 + $0x180] sm:$0xff] %vm1107, %v909
      %1157 = vst.msk [vmem:[#allocation2 + $0x188] sm:$0xff] %vm1107, %v912
      %1158 = vst.msk [vmem:[#allocation2 + $0x190] sm:$0xff] %vm1107, %v917
      %1159 = vst.msk [vmem:[#allocation2 + $0x198] sm:$0xff] %vm1107, %v920
      %1160 = vst.msk [vmem:[#allocation2 + $0x1a0] sm:$0xff] %vm1107, %v925
      %1161 = vst.msk [vmem:[#allocation2 + $0x1a8] sm:$0xff] %vm1107, %v928
      %1162 = vst.msk [vmem:[#allocation2 + $0x1b0] sm:$0xff] %vm1107, %v933
      %1163 = vst.msk [vmem:[#allocation2 + $0x1b8] sm:$0xff] %vm1107, %v936
      %1164 = vst.msk [vmem:[#allocation2 + $0x1c0] sm:$0xff] %vm1107, %v941
      %1165 = vst.msk [vmem:[#allocation2 + $0x1c8] sm:$0xff] %vm1107, %v944
      %1166 = vst.msk [vmem:[#allocation2 + $0x1d0] sm:$0xff] %vm1107, %v949
      %1167 = vst.msk [vmem:[#allocation2 + $0x1d8] sm:$0xff] %vm1107, %v952
      %1168 = vst.msk [vmem:[#allocation2 + $0x1e0] sm:$0xff] %vm1107, %v957
      %1169 = vst.msk [vmem:[#allocation2 + $0x1e8] sm:$0xff] %vm1107, %v960
      %1170 = vst.msk [vmem:[#allocation2 + $0x1f0] sm:$0xff] %vm1107, %v965
      %1171 = vst.msk [vmem:[#allocation2 + $0x1f8] sm:$0xff] %vm1107, %v968
      %1172 = vst.msk [vmem:[#allocation2 + $0x200] sm:$0xff] %vm1107, %v973
      %1173 = vst.msk [vmem:[#allocation2 + $0x208] sm:$0xff] %vm1107, %v976
      %1174 = vst.msk [vmem:[#allocation2 + $0x210] sm:$0xff] %vm1107, %v981
      %1175 = vst.msk [vmem:[#allocation2 + $0x218] sm:$0xff] %vm1107, %v984
      %1176 = vst.msk [vmem:[#allocation2 + $0x220] sm:$0xff] %vm1107, %v989
      %1177 = vst.msk [vmem:[#allocation2 + $0x228] sm:$0xff] %vm1107, %v992
      %1178 = vst.msk [vmem:[#allocation2 + $0x230] sm:$0xff] %vm1107, %v997
      %1179 = vst.msk [vmem:[#allocation2 + $0x238] sm:$0xff] %vm1107, %v1000
      %1180 = vst.msk [vmem:[#allocation2 + $0x240] sm:$0xff] %vm1107, %v1005
      %1181 = vst.msk [vmem:[#allocation2 + $0x248] sm:$0xff] %vm1107, %v1008
      %1182 = vst.msk [vmem:[#allocation2 + $0x250] sm:$0xff] %vm1107, %v1013
      %1183 = vst.msk [vmem:[#allocation2 + $0x258] sm:$0xff] %vm1107, %v1016
      %1184 = vst.msk [vmem:[#allocation2 + $0x260] sm:$0xff] %vm1107, %v1021
      %1185 = vst.msk [vmem:[#allocation2 + $0x268] sm:$0xff] %vm1107, %v1024
      %1186 = vst.msk [vmem:[#allocation2 + $0x270] sm:$0xff] %vm1107, %v1029
      %1187 = vst.msk [vmem:[#allocation2 + $0x278] sm:$0xff] %vm1107, %v1032
      %1188 = vst.msk [vmem:[#allocation2 + $0x280] sm:$0xff] %vm1107, %v1037
      %1189 = vst.msk [vmem:[#allocation2 + $0x288] sm:$0xff] %vm1107, %v1040
      %1190 = vst.msk [vmem:[#allocation2 + $0x290] sm:$0xff] %vm1107, %v1045
      %1191 = vst.msk [vmem:[#allocation2 + $0x298] sm:$0xff] %vm1107, %v1048
      %1192 = vst.msk [vmem:[#allocation2 + $0x2a0] sm:$0xff] %vm1107, %v1053
      %1193 = vst.msk [vmem:[#allocation2 + $0x2a8] sm:$0xff] %vm1107, %v1056
      %1194 = vst.msk [vmem:[#allocation2 + $0x2b0] sm:$0xff] %vm1107, %v1061
      %1195 = vst.msk [vmem:[#allocation2 + $0x2b8] sm:$0xff] %vm1107, %v1064
      %1196 = vst.msk [vmem:[#allocation2 + $0x2c0] sm:$0xff] %vm1107, %v1069
      %1197 = vst.msk [vmem:[#allocation2 + $0x2c8] sm:$0xff] %vm1107, %v1072
      %1198 = vst.msk [vmem:[#allocation2 + $0x2d0] sm:$0xff] %vm1107, %v1077
      %1199 = vst.msk [vmem:[#allocation2 + $0x2d8] sm:$0xff] %vm1107, %v1080
      %1200 = vst.msk [vmem:[#allocation2 + $0x2e0] sm:$0xff] %vm1107, %v1085
      %1201 = vst.msk [vmem:[#allocation2 + $0x2e8] sm:$0xff] %vm1107, %v1088
      %1202 = vst.msk [vmem:[#allocation2 + $0x2f0] sm:$0xff] %vm1107, %v1093
      %1203 = vst.msk [vmem:[#allocation2 + $0x2f8] sm:$0xff] %vm1107, %v1096
      %1204 = vst.msk [vmem:[#allocation2 + $0x300] sm:$0xff] %vm1107, %v1101
      %1205 = vst.msk [vmem:[#allocation2 + $0x308] sm:$0xff] %vm1107, %v1104
      %v1206 = vld [vmem:[%s2] sm:$0x1]
      %v1207 = vld [vmem:[#allocation2] ss:$2 sm:$0xff]
      %s1208 = scalar_lea.vmem [#allocation2], 16
      %v1209 = vld [vmem:[%s1208] ss:$2 sm:$0x3f]
      %s1210 = scalar_lea.vmem [#allocation2], 1
      %v1211 = vld [vmem:[%s1210] ss:$2 sm:$0xff]
      %s1212 = scalar_lea.vmem [#allocation2], 17
      %v1213 = vld [vmem:[%s1212] ss:$2 sm:$0x3f]
      %s1214 = scalar_lea.vmem [#allocation2], 28
      %v1215 = vld [vmem:[%s1214] ss:$2 sm:$0xff]
      %s1216 = scalar_lea.vmem [#allocation2], 44
      %v1217 = vld [vmem:[%s1216] ss:$2 sm:$0x3f]
      %s1218 = scalar_lea.vmem [#allocation2], 29
      %v1219 = vld [vmem:[%s1218] ss:$2 sm:$0xff]
      %s1220 = scalar_lea.vmem [#allocation2], 45
      %v1221 = vld [vmem:[%s1220] ss:$2 sm:$0x3f]
      %v1222 = vmax.f32 %v1207, %v1211
      %v1223 = vmax.f32 %v1209, %v1213
      %v1224 = vmax.f32 %v1215, %v1219
      %v1225 = vmax.f32 %v1217, %v1221
      %v1226 = vmax.f32 %v1222, %v1224
      %v1227 = vmax.f32 %v1223, %v1225
      %v1229 = vlaneseq
      %v1230 = vshrl.u32 %v1229, 7
      %v1231 = vsub.s32 0, %v1230
      %v1232 = vrot.slane %v1206, %v1231
      %v1234 = vadd.f32 %v1226, %v1232
      %v1235 = vadd.f32 %v1227, %v1232
      %v1236 = vmax.f32 %v1234, 0.0
      %v1237 = vmax.f32 %v1235, 0.0
      %1238 = vst.msk [vmem:[#allocation3] sm:$0xff] %vm1107, %v1236
      %vm1239 = vcmask 128000
      %1240 = vst.msk [vmem:[#allocation3 + $0x8] sm:$0x3f] %vm1239, %v1237
      %s1241 = scalar_lea.vmem [#allocation2], 56
      %v1242 = vld [vmem:[%s1241] ss:$2 sm:$0xff]
      %s1243 = scalar_lea.vmem [#allocation2], 72
      %v1244 = vld [vmem:[%s1243] ss:$2 sm:$0x3f]
      %s1245 = scalar_lea.vmem [#allocation2], 57
      %v1246 = vld [vmem:[%s1245] ss:$2 sm:$0xff]
      %s1247 = scalar_lea.vmem [#allocation2], 73
      %v1248 = vld [vmem:[%s1247] ss:$2 sm:$0x3f]
      %s1249 = scalar_lea.vmem [#allocation2], 84
      %v1250 = vld [vmem:[%s1249] ss:$2 sm:$0xff]
      %s1251 = scalar_lea.vmem [#allocation2], 100
      %v1252 = vld [vmem:[%s1251] ss:$2 sm:$0x3f]
      %s1253 = scalar_lea.vmem [#allocation2], 85
      %v1254 = vld [vmem:[%s1253] ss:$2 sm:$0xff]
      %s1255 = scalar_lea.vmem [#allocation2], 101
      %v1256 = vld [vmem:[%s1255] ss:$2 sm:$0x3f]
      %v1257 = vmax.f32 %v1242, %v1246
      %v1258 = vmax.f32 %v1244, %v1248
      %v1259 = vmax.f32 %v1250, %v1254
      %v1260 = vmax.f32 %v1252, %v1256
      %v1261 = vmax.f32 %v1257, %v1259
      %v1262 = vmax.f32 %v1258, %v1260
      %v1263 = vadd.f32 %v1261, %v1232
      %v1264 = vadd.f32 %v1262, %v1232
      %v1265 = vmax.f32 %v1263, 0.0
      %v1266 = vmax.f32 %v1264, 0.0
      %1267 = vst.msk [vmem:[#allocation3 + $0xe] sm:$0xff] %vm1107, %v1265
      %1268 = vst.msk [vmem:[#allocation3 + $0x16] sm:$0x3f] %vm1239, %v1266
      %s1269 = scalar_lea.vmem [#allocation2], 112
      %v1270 = vld [vmem:[%s1269] ss:$2 sm:$0xff]
      %s1271 = scalar_lea.vmem [#allocation2], 128
      %v1272 = vld [vmem:[%s1271] ss:$2 sm:$0x3f]
      %s1273 = scalar_lea.vmem [#allocation2], 113
      %v1274 = vld [vmem:[%s1273] ss:$2 sm:$0xff]
      %s1275 = scalar_lea.vmem [#allocation2], 129
      %v1276 = vld [vmem:[%s1275] ss:$2 sm:$0x3f]
      %s1277 = scalar_lea.vmem [#allocation2], 140
      %v1278 = vld [vmem:[%s1277] ss:$2 sm:$0xff]
      %s1279 = scalar_lea.vmem [#allocation2], 156
      %v1280 = vld [vmem:[%s1279] ss:$2 sm:$0x3f]
      %s1281 = scalar_lea.vmem [#allocation2], 141
      %v1282 = vld [vmem:[%s1281] ss:$2 sm:$0xff]
      %s1283 = scalar_lea.vmem [#allocation2], 157
      %v1284 = vld [vmem:[%s1283] ss:$2 sm:$0x3f]
      %v1285 = vmax.f32 %v1270, %v1274
      %v1286 = vmax.f32 %v1272, %v1276
      %v1287 = vmax.f32 %v1278, %v1282
      %v1288 = vmax.f32 %v1280, %v1284
      %v1289 = vmax.f32 %v1285, %v1287
      %v1290 = vmax.f32 %v1286, %v1288
      %v1291 = vadd.f32 %v1289, %v1232
      %v1292 = vadd.f32 %v1290, %v1232
      %v1293 = vmax.f32 %v1291, 0.0
      %v1294 = vmax.f32 %v1292, 0.0
      %1295 = vst.msk [vmem:[#allocation3 + $0x1c] sm:$0xff] %vm1107, %v1293
      %1296 = vst.msk [vmem:[#allocation3 + $0x24] sm:$0x3f] %vm1239, %v1294
      %s1297 = scalar_lea.vmem [#allocation2], 168
      %v1298 = vld [vmem:[%s1297] ss:$2 sm:$0xff]
      %s1299 = scalar_lea.vmem [#allocation2], 184
      %v1300 = vld [vmem:[%s1299] ss:$2 sm:$0x3f]
      %s1301 = scalar_lea.vmem [#allocation2], 169
      %v1302 = vld [vmem:[%s1301] ss:$2 sm:$0xff]
      %s1303 = scalar_lea.vmem [#allocation2], 185
      %v1304 = vld [vmem:[%s1303] ss:$2 sm:$0x3f]
      %s1305 = scalar_lea.vmem [#allocation2], 196
      %v1306 = vld [vmem:[%s1305] ss:$2 sm:$0xff]
      %s1307 = scalar_lea.vmem [#allocation2], 212
      %v1308 = vld [vmem:[%s1307] ss:$2 sm:$0x3f]
      %s1309 = scalar_lea.vmem [#allocation2], 197
      %v1310 = vld [vmem:[%s1309] ss:$2 sm:$0xff]
      %s1311 = scalar_lea.vmem [#allocation2], 213
      %v1312 = vld [vmem:[%s1311] ss:$2 sm:$0x3f]
      %v1313 = vmax.f32 %v1298, %v1302
      %v1314 = vmax.f32 %v1300, %v1304
      %v1315 = vmax.f32 %v1306, %v1310
      %v1316 = vmax.f32 %v1308, %v1312
      %v1317 = vmax.f32 %v1313, %v1315
      %v1318 = vmax.f32 %v1314, %v1316
      %v1319 = vadd.f32 %v1317, %v1232
      %v1320 = vadd.f32 %v1318, %v1232
      %v1321 = vmax.f32 %v1319, 0.0
      %v1322 = vmax.f32 %v1320, 0.0
      %1323 = vst.msk [vmem:[#allocation3 + $0x2a] sm:$0xff] %vm1107, %v1321
      %1324 = vst.msk [vmem:[#allocation3 + $0x32] sm:$0x3f] %vm1239, %v1322
      %s1325 = scalar_lea.vmem [#allocation2], 224
      %v1326 = vld [vmem:[%s1325] ss:$2 sm:$0xff]
      %s1327 = scalar_lea.vmem [#allocation2], 240
      %v1328 = vld [vmem:[%s1327] ss:$2 sm:$0x3f]
      %s1329 = scalar_lea.vmem [#allocation2], 225
      %v1330 = vld [vmem:[%s1329] ss:$2 sm:$0xff]
      %s1331 = scalar_lea.vmem [#allocation2], 241
      %v1332 = vld [vmem:[%s1331] ss:$2 sm:$0x3f]
      %s1333 = scalar_lea.vmem [#allocation2], 252
      %v1334 = vld [vmem:[%s1333] ss:$2 sm:$0xff]
      %s1335 = scalar_lea.vmem [#allocation2], 268
      %v1336 = vld [vmem:[%s1335] ss:$2 sm:$0x3f]
      %s1337 = scalar_lea.vmem [#allocation2], 253
      %v1338 = vld [vmem:[%s1337] ss:$2 sm:$0xff]
      %s1339 = scalar_lea.vmem [#allocation2], 269
      %v1340 = vld [vmem:[%s1339] ss:$2 sm:$0x3f]
      %v1341 = vmax.f32 %v1326, %v1330
      %v1342 = vmax.f32 %v1328, %v1332
      %v1343 = vmax.f32 %v1334, %v1338
      %v1344 = vmax.f32 %v1336, %v1340
      %v1345 = vmax.f32 %v1341, %v1343
      %v1346 = vmax.f32 %v1342, %v1344
      %v1347 = vadd.f32 %v1345, %v1232
      %v1348 = vadd.f32 %v1346, %v1232
      %v1349 = vmax.f32 %v1347, 0.0
      %v1350 = vmax.f32 %v1348, 0.0
      %1351 = vst.msk [vmem:[#allocation3 + $0x38] sm:$0xff] %vm1107, %v1349
      %1352 = vst.msk [vmem:[#allocation3 + $0x40] sm:$0x3f] %vm1239, %v1350
      %s1353 = scalar_lea.vmem [#allocation2], 280
      %v1354 = vld [vmem:[%s1353] ss:$2 sm:$0xff]
      %s1355 = scalar_lea.vmem [#allocation2], 296
      %v1356 = vld [vmem:[%s1355] ss:$2 sm:$0x3f]
      %s1357 = scalar_lea.vmem [#allocation2], 281
      %v1358 = vld [vmem:[%s1357] ss:$2 sm:$0xff]
      %s1359 = scalar_lea.vmem [#allocation2], 297
      %v1360 = vld [vmem:[%s1359] ss:$2 sm:$0x3f]
      %s1361 = scalar_lea.vmem [#allocation2], 308
      %v1362 = vld [vmem:[%s1361] ss:$2 sm:$0xff]
      %s1363 = scalar_lea.vmem [#allocation2], 324
      %v1364 = vld [vmem:[%s1363] ss:$2 sm:$0x3f]
      %s1365 = scalar_lea.vmem [#allocation2], 309
      %v1366 = vld [vmem:[%s1365] ss:$2 sm:$0xff]
      %s1367 = scalar_lea.vmem [#allocation2], 325
      %v1368 = vld [vmem:[%s1367] ss:$2 sm:$0x3f]
      %v1369 = vmax.f32 %v1354, %v1358
      %v1370 = vmax.f32 %v1356, %v1360
      %v1371 = vmax.f32 %v1362, %v1366
      %v1372 = vmax.f32 %v1364, %v1368
      %v1373 = vmax.f32 %v1369, %v1371
      %v1374 = vmax.f32 %v1370, %v1372
      %v1375 = vadd.f32 %v1373, %v1232
      %v1376 = vadd.f32 %v1374, %v1232
      %v1377 = vmax.f32 %v1375, 0.0
      %v1378 = vmax.f32 %v1376, 0.0
      %1379 = vst.msk [vmem:[#allocation3 + $0x46] sm:$0xff] %vm1107, %v1377
      %1380 = vst.msk [vmem:[#allocation3 + $0x4e] sm:$0x3f] %vm1239, %v1378
      %s1381 = scalar_lea.vmem [#allocation2], 336
      %v1382 = vld [vmem:[%s1381] ss:$2 sm:$0xff]
      %s1383 = scalar_lea.vmem [#allocation2], 352
      %v1384 = vld [vmem:[%s1383] ss:$2 sm:$0x3f]
      %s1385 = scalar_lea.vmem [#allocation2], 337
      %v1386 = vld [vmem:[%s1385] ss:$2 sm:$0xff]
      %s1387 = scalar_lea.vmem [#allocation2], 353
      %v1388 = vld [vmem:[%s1387] ss:$2 sm:$0x3f]
      %s1389 = scalar_lea.vmem [#allocation2], 364
      %v1390 = vld [vmem:[%s1389] ss:$2 sm:$0xff]
      %s1391 = scalar_lea.vmem [#allocation2], 380
      %v1392 = vld [vmem:[%s1391] ss:$2 sm:$0x3f]
      %s1393 = scalar_lea.vmem [#allocation2], 365
      %v1394 = vld [vmem:[%s1393] ss:$2 sm:$0xff]
      %s1395 = scalar_lea.vmem [#allocation2], 381
      %v1396 = vld [vmem:[%s1395] ss:$2 sm:$0x3f]
      %v1397 = vmax.f32 %v1382, %v1386
      %v1398 = vmax.f32 %v1384, %v1388
      %v1399 = vmax.f32 %v1390, %v1394
      %v1400 = vmax.f32 %v1392, %v1396
      %v1401 = vmax.f32 %v1397, %v1399
      %v1402 = vmax.f32 %v1398, %v1400
      %v1403 = vadd.f32 %v1401, %v1232
      %v1404 = vadd.f32 %v1402, %v1232
      %v1405 = vmax.f32 %v1403, 0.0
      %v1406 = vmax.f32 %v1404, 0.0
      %1407 = vst.msk [vmem:[#allocation3 + $0x54] sm:$0xff] %vm1107, %v1405
      %1408 = vst.msk [vmem:[#allocation3 + $0x5c] sm:$0x3f] %vm1239, %v1406
      %s1409 = scalar_lea.vmem [#allocation2], 392
      %v1410 = vld [vmem:[%s1409] ss:$2 sm:$0xff]
      %s1411 = scalar_lea.vmem [#allocation2], 408
      %v1412 = vld [vmem:[%s1411] ss:$2 sm:$0x3f]
      %s1413 = scalar_lea.vmem [#allocation2], 393
      %v1414 = vld [vmem:[%s1413] ss:$2 sm:$0xff]
      %s1415 = scalar_lea.vmem [#allocation2], 409
      %v1416 = vld [vmem:[%s1415] ss:$2 sm:$0x3f]
      %s1417 = scalar_lea.vmem [#allocation2], 420
      %v1418 = vld [vmem:[%s1417] ss:$2 sm:$0xff]
      %s1419 = scalar_lea.vmem [#allocation2], 436
      %v1420 = vld [vmem:[%s1419] ss:$2 sm:$0x3f]
      %s1421 = scalar_lea.vmem [#allocation2], 421
      %v1422 = vld [vmem:[%s1421] ss:$2 sm:$0xff]
      %s1423 = scalar_lea.vmem [#allocation2], 437
      %v1424 = vld [vmem:[%s1423] ss:$2 sm:$0x3f]
      %v1425 = vmax.f32 %v1410, %v1414
      %v1426 = vmax.f32 %v1412, %v1416
      %v1427 = vmax.f32 %v1418, %v1422
      %v1428 = vmax.f32 %v1420, %v1424
      %v1429 = vmax.f32 %v1425, %v1427
      %v1430 = vmax.f32 %v1426, %v1428
      %v1431 = vadd.f32 %v1429, %v1232
      %v1432 = vadd.f32 %v1430, %v1232
      %v1433 = vmax.f32 %v1431, 0.0
      %v1434 = vmax.f32 %v1432, 0.0
      %1435 = vst.msk [vmem:[#allocation3 + $0x62] sm:$0xff] %vm1107, %v1433
      %1436 = vst.msk [vmem:[#allocation3 + $0x6a] sm:$0x3f] %vm1239, %v1434
      %s1437 = scalar_lea.vmem [#allocation2], 448
      %v1438 = vld [vmem:[%s1437] ss:$2 sm:$0xff]
      %s1439 = scalar_lea.vmem [#allocation2], 464
      %v1440 = vld [vmem:[%s1439] ss:$2 sm:$0x3f]
      %s1441 = scalar_lea.vmem [#allocation2], 449
      %v1442 = vld [vmem:[%s1441] ss:$2 sm:$0xff]
      %s1443 = scalar_lea.vmem [#allocation2], 465
      %v1444 = vld [vmem:[%s1443] ss:$2 sm:$0x3f]
      %s1445 = scalar_lea.vmem [#allocation2], 476
      %v1446 = vld [vmem:[%s1445] ss:$2 sm:$0xff]
      %s1447 = scalar_lea.vmem [#allocation2], 492
      %v1448 = vld [vmem:[%s1447] ss:$2 sm:$0x3f]
      %s1449 = scalar_lea.vmem [#allocation2], 477
      %v1450 = vld [vmem:[%s1449] ss:$2 sm:$0xff]
      %s1451 = scalar_lea.vmem [#allocation2], 493
      %v1452 = vld [vmem:[%s1451] ss:$2 sm:$0x3f]
      %v1453 = vmax.f32 %v1438, %v1442
      %v1454 = vmax.f32 %v1440, %v1444
      %v1455 = vmax.f32 %v1446, %v1450
      %v1456 = vmax.f32 %v1448, %v1452
      %v1457 = vmax.f32 %v1453, %v1455
      %v1458 = vmax.f32 %v1454, %v1456
      %v1459 = vadd.f32 %v1457, %v1232
      %v1460 = vadd.f32 %v1458, %v1232
      %v1461 = vmax.f32 %v1459, 0.0
      %v1462 = vmax.f32 %v1460, 0.0
      %1463 = vst.msk [vmem:[#allocation3 + $0x70] sm:$0xff] %vm1107, %v1461
      %1464 = vst.msk [vmem:[#allocation3 + $0x78] sm:$0x3f] %vm1239, %v1462
      %s1465 = scalar_lea.vmem [#allocation2], 504
      %v1466 = vld [vmem:[%s1465] ss:$2 sm:$0xff]
      %s1467 = scalar_lea.vmem [#allocation2], 520
      %v1468 = vld [vmem:[%s1467] ss:$2 sm:$0x3f]
      %s1469 = scalar_lea.vmem [#allocation2], 505
      %v1470 = vld [vmem:[%s1469] ss:$2 sm:$0xff]
      %s1471 = scalar_lea.vmem [#allocation2], 521
      %v1472 = vld [vmem:[%s1471] ss:$2 sm:$0x3f]
      %s1473 = scalar_lea.vmem [#allocation2], 532
      %v1474 = vld [vmem:[%s1473] ss:$2 sm:$0xff]
      %s1475 = scalar_lea.vmem [#allocation2], 548
      %v1476 = vld [vmem:[%s1475] ss:$2 sm:$0x3f]
      %s1477 = scalar_lea.vmem [#allocation2], 533
      %v1478 = vld [vmem:[%s1477] ss:$2 sm:$0xff]
      %s1479 = scalar_lea.vmem [#allocation2], 549
      %v1480 = vld [vmem:[%s1479] ss:$2 sm:$0x3f]
      %v1481 = vmax.f32 %v1466, %v1470
      %v1482 = vmax.f32 %v1468, %v1472
      %v1483 = vmax.f32 %v1474, %v1478
      %v1484 = vmax.f32 %v1476, %v1480
      %v1485 = vmax.f32 %v1481, %v1483
      %v1486 = vmax.f32 %v1482, %v1484
      %v1487 = vadd.f32 %v1485, %v1232
      %v1488 = vadd.f32 %v1486, %v1232
      %v1489 = vmax.f32 %v1487, 0.0
      %v1490 = vmax.f32 %v1488, 0.0
      %1491 = vst.msk [vmem:[#allocation3 + $0x7e] sm:$0xff] %vm1107, %v1489
      %1492 = vst.msk [vmem:[#allocation3 + $0x86] sm:$0x3f] %vm1239, %v1490
      %s1493 = scalar_lea.vmem [#allocation2], 560
      %v1494 = vld [vmem:[%s1493] ss:$2 sm:$0xff]
      %s1495 = scalar_lea.vmem [#allocation2], 576
      %v1496 = vld [vmem:[%s1495] ss:$2 sm:$0x3f]
      %s1497 = scalar_lea.vmem [#allocation2], 561
      %v1498 = vld [vmem:[%s1497] ss:$2 sm:$0xff]
      %s1499 = scalar_lea.vmem [#allocation2], 577
      %v1500 = vld [vmem:[%s1499] ss:$2 sm:$0x3f]
      %s1501 = scalar_lea.vmem [#allocation2], 588
      %v1502 = vld [vmem:[%s1501] ss:$2 sm:$0xff]
      %s1503 = scalar_lea.vmem [#allocation2], 604
      %v1504 = vld [vmem:[%s1503] ss:$2 sm:$0x3f]
      %s1505 = scalar_lea.vmem [#allocation2], 589
      %v1506 = vld [vmem:[%s1505] ss:$2 sm:$0xff]
      %s1507 = scalar_lea.vmem [#allocation2], 605
      %v1508 = vld [vmem:[%s1507] ss:$2 sm:$0x3f]
      %v1509 = vmax.f32 %v1494, %v1498
      %v1510 = vmax.f32 %v1496, %v1500
      %v1511 = vmax.f32 %v1502, %v1506
      %v1512 = vmax.f32 %v1504, %v1508
      %v1513 = vmax.f32 %v1509, %v1511
      %v1514 = vmax.f32 %v1510, %v1512
      %v1515 = vadd.f32 %v1513, %v1232
      %v1516 = vadd.f32 %v1514, %v1232
      %v1517 = vmax.f32 %v1515, 0.0
      %v1518 = vmax.f32 %v1516, 0.0
      %1519 = vst.msk [vmem:[#allocation3 + $0x8c] sm:$0xff] %vm1107, %v1517
      %1520 = vst.msk [vmem:[#allocation3 + $0x94] sm:$0x3f] %vm1239, %v1518
      %s1521 = scalar_lea.vmem [#allocation2], 616
      %v1522 = vld [vmem:[%s1521] ss:$2 sm:$0xff]
      %s1523 = scalar_lea.vmem [#allocation2], 632
      %v1524 = vld [vmem:[%s1523] ss:$2 sm:$0x3f]
      %s1525 = scalar_lea.vmem [#allocation2], 617
      %v1526 = vld [vmem:[%s1525] ss:$2 sm:$0xff]
      %s1527 = scalar_lea.vmem [#allocation2], 633
      %v1528 = vld [vmem:[%s1527] ss:$2 sm:$0x3f]
      %s1529 = scalar_lea.vmem [#allocation2], 644
      %v1530 = vld [vmem:[%s1529] ss:$2 sm:$0xff]
      %s1531 = scalar_lea.vmem [#allocation2], 660
      %v1532 = vld [vmem:[%s1531] ss:$2 sm:$0x3f]
      %s1533 = scalar_lea.vmem [#allocation2], 645
      %v1534 = vld [vmem:[%s1533] ss:$2 sm:$0xff]
      %s1535 = scalar_lea.vmem [#allocation2], 661
      %v1536 = vld [vmem:[%s1535] ss:$2 sm:$0x3f]
      %v1537 = vmax.f32 %v1522, %v1526
      %v1538 = vmax.f32 %v1524, %v1528
      %v1539 = vmax.f32 %v1530, %v1534
      %v1540 = vmax.f32 %v1532, %v1536
      %v1541 = vmax.f32 %v1537, %v1539
      %v1542 = vmax.f32 %v1538, %v1540
      %v1543 = vadd.f32 %v1541, %v1232
      %v1544 = vadd.f32 %v1542, %v1232
      %v1545 = vmax.f32 %v1543, 0.0
      %v1546 = vmax.f32 %v1544, 0.0
      %1547 = vst.msk [vmem:[#allocation3 + $0x9a] sm:$0xff] %vm1107, %v1545
      %1548 = vst.msk [vmem:[#allocation3 + $0xa2] sm:$0x3f] %vm1239, %v1546
      %s1549 = scalar_lea.vmem [#allocation2], 672
      %v1550 = vld [vmem:[%s1549] ss:$2 sm:$0xff]
      %s1551 = scalar_lea.vmem [#allocation2], 688
      %v1552 = vld [vmem:[%s1551] ss:$2 sm:$0x3f]
      %s1553 = scalar_lea.vmem [#allocation2], 673
      %v1554 = vld [vmem:[%s1553] ss:$2 sm:$0xff]
      %s1555 = scalar_lea.vmem [#allocation2], 689
      %v1556 = vld [vmem:[%s1555] ss:$2 sm:$0x3f]
      %s1557 = scalar_lea.vmem [#allocation2], 700
      %v1558 = vld [vmem:[%s1557] ss:$2 sm:$0xff]
      %s1559 = scalar_lea.vmem [#allocation2], 716
      %v1560 = vld [vmem:[%s1559] ss:$2 sm:$0x3f]
      %s1561 = scalar_lea.vmem [#allocation2], 701
      %v1562 = vld [vmem:[%s1561] ss:$2 sm:$0xff]
      %s1563 = scalar_lea.vmem [#allocation2], 717
      %v1564 = vld [vmem:[%s1563] ss:$2 sm:$0x3f]
      %v1565 = vmax.f32 %v1550, %v1554
      %v1566 = vmax.f32 %v1552, %v1556
      %v1567 = vmax.f32 %v1558, %v1562
      %v1568 = vmax.f32 %v1560, %v1564
      %v1569 = vmax.f32 %v1565, %v1567
      %v1570 = vmax.f32 %v1566, %v1568
      %v1571 = vadd.f32 %v1569, %v1232
      %v1572 = vadd.f32 %v1570, %v1232
      %v1573 = vmax.f32 %v1571, 0.0
      %v1574 = vmax.f32 %v1572, 0.0
      %1575 = vst.msk [vmem:[#allocation3 + $0xa8] sm:$0xff] %vm1107, %v1573
      %1576 = vst.msk [vmem:[#allocation3 + $0xb0] sm:$0x3f] %vm1239, %v1574
      %s1577 = scalar_lea.vmem [#allocation2], 728
      %v1578 = vld [vmem:[%s1577] ss:$2 sm:$0xff]
      %s1579 = scalar_lea.vmem [#allocation2], 744
      %v1580 = vld [vmem:[%s1579] ss:$2 sm:$0x3f]
      %s1581 = scalar_lea.vmem [#allocation2], 729
      %v1582 = vld [vmem:[%s1581] ss:$2 sm:$0xff]
      %s1583 = scalar_lea.vmem [#allocation2], 745
      %v1584 = vld [vmem:[%s1583] ss:$2 sm:$0x3f]
      %s1585 = scalar_lea.vmem [#allocation2], 756
      %v1586 = vld [vmem:[%s1585] ss:$2 sm:$0xff]
      %s1587 = scalar_lea.vmem [#allocation2], 772
      %v1588 = vld [vmem:[%s1587] ss:$2 sm:$0x3f]
      %s1589 = scalar_lea.vmem [#allocation2], 757
      %v1590 = vld [vmem:[%s1589] ss:$2 sm:$0xff]
      %s1591 = scalar_lea.vmem [#allocation2], 773
      %v1592 = vld [vmem:[%s1591] ss:$2 sm:$0x3f]
      %v1593 = vmax.f32 %v1578, %v1582
      %v1594 = vmax.f32 %v1580, %v1584
      %v1595 = vmax.f32 %v1586, %v1590
      %v1596 = vmax.f32 %v1588, %v1592
      %v1597 = vmax.f32 %v1593, %v1595
      %v1598 = vmax.f32 %v1594, %v1596
      %v1599 = vadd.f32 %v1597, %v1232
      %v1600 = vadd.f32 %v1598, %v1232
      %v1601 = vmax.f32 %v1599, 0.0
      %v1602 = vmax.f32 %v1600, 0.0
      %1603 = vst.msk [vmem:[#allocation3 + $0xb6] sm:$0xff] %vm1107, %v1601
      %1604 = vst.msk [vmem:[#allocation3 + $0xbe] sm:$0x3f] %vm1239, %v1602
      %v1605 = vld [vmem:[#allocation3] sm:$0xff]
      %v1606 = vld [vmem:[#allocation3 + $0x8] sm:$0xff]
      %v1607 = vld [vmem:[#allocation3 + $0x10] sm:$0xff]
      %v1608 = vld [vmem:[#allocation3 + $0x18] sm:$0xff]
      %v1609 = vld [vmem:[#allocation3 + $0x20] sm:$0xff]
      %v1610 = vld [vmem:[#allocation3 + $0x28] sm:$0xff]
      %v1611 = vld [vmem:[#allocation3 + $0x30] sm:$0xff]
      %v1612 = vld [vmem:[#allocation3 + $0x38] sm:$0xff]
      %v1613 = vld [vmem:[#allocation3 + $0x40] sm:$0xff]
      %v1614 = vld [vmem:[#allocation3 + $0x48] sm:$0xff]
      %v1615 = vld [vmem:[#allocation3 + $0x50] sm:$0xff]
      %v1616 = vld [vmem:[#allocation3 + $0x58] sm:$0xff]
      %v1617 = vld [vmem:[#allocation3 + $0x60] sm:$0xff]
      %v1618 = vld [vmem:[#allocation3 + $0x68] sm:$0xff]
      %v1619 = vld [vmem:[#allocation3 + $0x70] sm:$0xff]
      %v1620 = vld [vmem:[#allocation3 + $0x78] sm:$0xff]
      %v1621 = vld [vmem:[#allocation3 + $0x80] sm:$0xff]
      %v1622 = vpack.c.bf16 %v1606, %v1605
      %v1623 = vpack.c.bf16 %v1608, %v1607
      %v1624 = vpack.c.bf16 %v1610, %v1609
      %v1625 = vpack.c.bf16 %v1612, %v1611
      %v1626 = vpack.c.bf16 %v1614, %v1613
      %v1627 = vpack.c.bf16 %v1616, %v1615
      %v1628 = vpack.c.bf16 %v1618, %v1617
      %v1629 = vpack.c.bf16 %v1620, %v1619
      %v1630 = vpack.c.bf16 %v1621, %v1621
      %v1640 = vunpack.c.l.b16 %v1622
      %v1641 = vunpack.c.h.b16 %v1622
      %v1642 = vunpack.c.l.b16 %v1623
      %v1643 = vunpack.c.h.b16 %v1623
      %v1644 = vunpack.c.l.b16 %v1624
      %v1645 = vunpack.c.h.b16 %v1624
      %v1646 = vunpack.c.l.b16 %v1625
      %v1647 = vunpack.c.h.b16 %v1625
      %v1648 = vunpack.c.l.b16 %v1626
      %v1649 = vunpack.c.h.b16 %v1626
      %v1650 = vunpack.c.l.b16 %v1627
      %v1651 = vunpack.c.h.b16 %v1627
      %v1652 = vunpack.c.l.b16 %v1628
      %v1653 = vunpack.c.h.b16 %v1628
      %v1654 = vunpack.c.l.b16 %v1629
      %v1655 = vunpack.c.h.b16 %v1629
      %v1656 = vunpack.c.l.b16 %v1630
      %v1657 = vpack.c.b16 %v1640, %v1640
      %v1658 = vpack.c.b16 %v1641, %v1641
      %v1659 = vpack.c.b16 %v1642, %v1642
      %v1660 = vpack.c.b16 %v1643, %v1643
      %v1661 = vpack.c.b16 %v1644, %v1644
      %v1662 = vpack.c.b16 %v1645, %v1645
      %v1663 = vpack.c.b16 %v1646, %v1646
      %v1664 = vpack.c.b16 %v1647, %v1647
      %v1665 = vpack.c.b16 %v1648, %v1648
      %v1666 = vpack.c.b16 %v1649, %v1649
      %v1667 = vpack.c.b16 %v1650, %v1650
      %v1668 = vpack.c.b16 %v1651, %v1651
      %v1669 = vpack.c.b16 %v1652, %v1652
      %v1670 = vpack.c.b16 %v1653, %v1653
      %v1671 = vpack.c.b16 %v1654, %v1654
      %v1672 = vpack.c.b16 %v1655, %v1655
      %v1673 = vpack.c.b16 %v1656, %v1656
      %vm1691 = vcmask 125952
      %1692 = vst.msk [vmem:[#allocation4] sm:$0xf] %vm1691, %v1657
      %1693 = vst.msk [vmem:[#allocation4 + $0x10] sm:$0xf] %vm1691, %v1658
      %1694 = vst.msk [vmem:[#allocation4 + $0x20] sm:$0xf] %vm1691, %v1659
      %1695 = vst.msk [vmem:[#allocation4 + $0x30] sm:$0xf] %vm1691, %v1660
      %1696 = vst.msk [vmem:[#allocation4 + $0x40] sm:$0xf] %vm1691, %v1661
      %1697 = vst.msk [vmem:[#allocation4 + $0x50] sm:$0xf] %vm1691, %v1662
      %1698 = vst.msk [vmem:[#allocation4 + $0x60] sm:$0xf] %vm1691, %v1663
      %1699 = vst.msk [vmem:[#allocation4 + $0x70] sm:$0xf] %vm1691, %v1664
      %1700 = vst.msk [vmem:[#allocation4 + $0x80] sm:$0xf] %vm1691, %v1665
      %1701 = vst.msk [vmem:[#allocation4 + $0x90] sm:$0xf] %vm1691, %v1666
      %1702 = vst.msk [vmem:[#allocation4 + $0xa0] sm:$0xf] %vm1691, %v1667
      %1703 = vst.msk [vmem:[#allocation4 + $0xb0] sm:$0xf] %vm1691, %v1668
      %1704 = vst.msk [vmem:[#allocation4 + $0xc0] sm:$0xf] %vm1691, %v1669
      %1705 = vst.msk [vmem:[#allocation4 + $0xd0] sm:$0xf] %vm1691, %v1670
      %1706 = vst.msk [vmem:[#allocation4 + $0xe0] sm:$0xf] %vm1691, %v1671
      %1707 = vst.msk [vmem:[#allocation4 + $0xf0] sm:$0xf] %vm1691, %v1672
      %1708 = vst.msk [vmem:[#allocation4 + $0x100] sm:$0xf] %vm1691, %v1673
      %v1709 = vld [vmem:[#allocation3 + $0x1] sm:$0xff]
      %v1710 = vld [vmem:[#allocation3 + $0x9] sm:$0xff]
      %v1711 = vld [vmem:[#allocation3 + $0x11] sm:$0xff]
      %v1712 = vld [vmem:[#allocation3 + $0x19] sm:$0xff]
      %v1713 = vld [vmem:[#allocation3 + $0x21] sm:$0xff]
      %v1714 = vld [vmem:[#allocation3 + $0x29] sm:$0xff]
      %v1715 = vld [vmem:[#allocation3 + $0x31] sm:$0xff]
      %v1716 = vld [vmem:[#allocation3 + $0x39] sm:$0xff]
      %v1717 = vld [vmem:[#allocation3 + $0x41] sm:$0xff]
      %v1718 = vld [vmem:[#allocation3 + $0x49] sm:$0xff]
      %v1719 = vld [vmem:[#allocation3 + $0x51] sm:$0xff]
      %v1720 = vld [vmem:[#allocation3 + $0x59] sm:$0xff]
      %v1721 = vld [vmem:[#allocation3 + $0x61] sm:$0xff]
      %v1722 = vld [vmem:[#allocation3 + $0x69] sm:$0xff]
      %v1723 = vld [vmem:[#allocation3 + $0x71] sm:$0xff]
      %v1724 = vld [vmem:[#allocation3 + $0x79] sm:$0xff]
      %v1725 = vld [vmem:[#allocation3 + $0x81] sm:$0xff]
      %v1726 = vpack.c.bf16 %v1710, %v1709
      %v1727 = vpack.c.bf16 %v1712, %v1711
      %v1728 = vpack.c.bf16 %v1714, %v1713
      %v1729 = vpack.c.bf16 %v1716, %v1715
      %v1730 = vpack.c.bf16 %v1718, %v1717
      %v1731 = vpack.c.bf16 %v1720, %v1719
      %v1732 = vpack.c.bf16 %v1722, %v1721
      %v1733 = vpack.c.bf16 %v1724, %v1723
      %v1734 = vpack.c.bf16 %v1725, %v1725
      %v1744 = vunpack.c.l.b16 %v1726
      %v1745 = vunpack.c.h.b16 %v1726
      %v1746 = vunpack.c.l.b16 %v1727
      %v1747 = vunpack.c.h.b16 %v1727
      %v1748 = vunpack.c.l.b16 %v1728
      %v1749 = vunpack.c.h.b16 %v1728
      %v1750 = vunpack.c.l.b16 %v1729
      %v1751 = vunpack.c.h.b16 %v1729
      %v1752 = vunpack.c.l.b16 %v1730
      %v1753 = vunpack.c.h.b16 %v1730
      %v1754 = vunpack.c.l.b16 %v1731
      %v1755 = vunpack.c.h.b16 %v1731
      %v1756 = vunpack.c.l.b16 %v1732
      %v1757 = vunpack.c.h.b16 %v1732
      %v1758 = vunpack.c.l.b16 %v1733
      %v1759 = vunpack.c.h.b16 %v1733
      %v1760 = vunpack.c.l.b16 %v1734
      %v1761 = vpack.c.b16 %v1744, %v1744
      %v1762 = vpack.c.b16 %v1745, %v1745
      %v1763 = vpack.c.b16 %v1746, %v1746
      %v1764 = vpack.c.b16 %v1747, %v1747
      %v1765 = vpack.c.b16 %v1748, %v1748
      %v1766 = vpack.c.b16 %v1749, %v1749
      %v1767 = vpack.c.b16 %v1750, %v1750
      %v1768 = vpack.c.b16 %v1751, %v1751
      %v1769 = vpack.c.b16 %v1752, %v1752
      %v1770 = vpack.c.b16 %v1753, %v1753
      %v1771 = vpack.c.b16 %v1754, %v1754
      %v1772 = vpack.c.b16 %v1755, %v1755
      %v1773 = vpack.c.b16 %v1756, %v1756
      %v1774 = vpack.c.b16 %v1757, %v1757
      %v1775 = vpack.c.b16 %v1758, %v1758
      %v1776 = vpack.c.b16 %v1759, %v1759
      %v1777 = vpack.c.b16 %v1760, %v1760
      %1778 = vrot.lane.b32.xlu0 %v1761, 16
      %v1779 = vpop.permute.xlu0 %1778
      %1780 = vrot.lane.b32.xlu0 %v1762, 16
      %v1781 = vpop.permute.xlu0 %1780
      %1782 = vrot.lane.b32.xlu0 %v1763, 16
      %v1783 = vpop.permute.xlu0 %1782
      %1784 = vrot.lane.b32.xlu0 %v1764, 16
      %v1785 = vpop.permute.xlu0 %1784
      %1786 = vrot.lane.b32.xlu0 %v1765, 16
      %v1787 = vpop.permute.xlu0 %1786
      %1788 = vrot.lane.b32.xlu0 %v1766, 16
      %v1789 = vpop.permute.xlu0 %1788
      %1790 = vrot.lane.b32.xlu0 %v1767, 16
      %v1791 = vpop.permute.xlu0 %1790
      %1792 = vrot.lane.b32.xlu0 %v1768, 16
      %v1793 = vpop.permute.xlu0 %1792
      %1794 = vrot.lane.b32.xlu0 %v1769, 16
      %v1795 = vpop.permute.xlu0 %1794
      %1796 = vrot.lane.b32.xlu0 %v1770, 16
      %v1797 = vpop.permute.xlu0 %1796
      %1798 = vrot.lane.b32.xlu0 %v1771, 16
      %v1799 = vpop.permute.xlu0 %1798
      %1800 = vrot.lane.b32.xlu0 %v1772, 16
      %v1801 = vpop.permute.xlu0 %1800
      %1802 = vrot.lane.b32.xlu0 %v1773, 16
      %v1803 = vpop.permute.xlu0 %1802
      %1804 = vrot.lane.b32.xlu0 %v1774, 16
      %v1805 = vpop.permute.xlu0 %1804
      %1806 = vrot.lane.b32.xlu0 %v1775, 16
      %v1807 = vpop.permute.xlu0 %1806
      %1808 = vrot.lane.b32.xlu0 %v1776, 16
      %v1809 = vpop.permute.xlu0 %1808
      %1810 = vrot.lane.b32.xlu0 %v1777, 16
      %v1811 = vpop.permute.xlu0 %1810
      %vm1829 = vcmask 257152
      %1830 = vst.msk [vmem:[#allocation4] sm:$0xf] %vm1829, %v1779
      %1831 = vst.msk [vmem:[#allocation4 + $0x10] sm:$0xf] %vm1829, %v1781
      %1832 = vst.msk [vmem:[#allocation4 + $0x20] sm:$0xf] %vm1829, %v1783
      %1833 = vst.msk [vmem:[#allocation4 + $0x30] sm:$0xf] %vm1829, %v1785
      %1834 = vst.msk [vmem:[#allocation4 + $0x40] sm:$0xf] %vm1829, %v1787
      %1835 = vst.msk [vmem:[#allocation4 + $0x50] sm:$0xf] %vm1829, %v1789
      %1836 = vst.msk [vmem:[#allocation4 + $0x60] sm:$0xf] %vm1829, %v1791
      %1837 = vst.msk [vmem:[#allocation4 + $0x70] sm:$0xf] %vm1829, %v1793
      %1838 = vst.msk [vmem:[#allocation4 + $0x80] sm:$0xf] %vm1829, %v1795
      %1839 = vst.msk [vmem:[#allocation4 + $0x90] sm:$0xf] %vm1829, %v1797
      %1840 = vst.msk [vmem:[#allocation4 + $0xa0] sm:$0xf] %vm1829, %v1799
      %1841 = vst.msk [vmem:[#allocation4 + $0xb0] sm:$0xf] %vm1829, %v1801
      %1842 = vst.msk [vmem:[#allocation4 + $0xc0] sm:$0xf] %vm1829, %v1803
      %1843 = vst.msk [vmem:[#allocation4 + $0xd0] sm:$0xf] %vm1829, %v1805
      %1844 = vst.msk [vmem:[#allocation4 + $0xe0] sm:$0xf] %vm1829, %v1807
      %1845 = vst.msk [vmem:[#allocation4 + $0xf0] sm:$0xf] %vm1829, %v1809
      %1846 = vst.msk [vmem:[#allocation4 + $0x100] sm:$0xf] %vm1829, %v1811
      %v1847 = vld [vmem:[#allocation3 + $0x2] sm:$0xff]
      %v1848 = vld [vmem:[#allocation3 + $0xa] sm:$0xff]
      %v1849 = vld [vmem:[#allocation3 + $0x12] sm:$0xff]
      %v1850 = vld [vmem:[#allocation3 + $0x1a] sm:$0xff]
      %v1851 = vld [vmem:[#allocation3 + $0x22] sm:$0xff]
      %v1852 = vld [vmem:[#allocation3 + $0x2a] sm:$0xff]
      %v1853 = vld [vmem:[#allocation3 + $0x32] sm:$0xff]
      %v1854 = vld [vmem:[#allocation3 + $0x3a] sm:$0xff]
      %v1855 = vld [vmem:[#allocation3 + $0x42] sm:$0xff]
      %v1856 = vld [vmem:[#allocation3 + $0x4a] sm:$0xff]
      %v1857 = vld [vmem:[#allocation3 + $0x52] sm:$0xff]
      %v1858 = vld [vmem:[#allocation3 + $0x5a] sm:$0xff]
      %v1859 = vld [vmem:[#allocation3 + $0x62] sm:$0xff]
      %v1860 = vld [vmem:[#allocation3 + $0x6a] sm:$0xff]
      %v1861 = vld [vmem:[#allocation3 + $0x72] sm:$0xff]
      %v1862 = vld [vmem:[#allocation3 + $0x7a] sm:$0xff]
      %v1863 = vld [vmem:[#allocation3 + $0x82] sm:$0xff]
      %v1864 = vpack.c.bf16 %v1848, %v1847
      %v1865 = vpack.c.bf16 %v1850, %v1849
      %v1866 = vpack.c.bf16 %v1852, %v1851
      %v1867 = vpack.c.bf16 %v1854, %v1853
      %v1868 = vpack.c.bf16 %v1856, %v1855
      %v1869 = vpack.c.bf16 %v1858, %v1857
      %v1870 = vpack.c.bf16 %v1860, %v1859
      %v1871 = vpack.c.bf16 %v1862, %v1861
      %v1872 = vpack.c.bf16 %v1863, %v1863
      %v1882 = vunpack.c.l.b16 %v1864
      %v1883 = vunpack.c.h.b16 %v1864
      %v1884 = vunpack.c.l.b16 %v1865
      %v1885 = vunpack.c.h.b16 %v1865
      %v1886 = vunpack.c.l.b16 %v1866
      %v1887 = vunpack.c.h.b16 %v1866
      %v1888 = vunpack.c.l.b16 %v1867
      %v1889 = vunpack.c.h.b16 %v1867
      %v1890 = vunpack.c.l.b16 %v1868
      %v1891 = vunpack.c.h.b16 %v1868
      %v1892 = vunpack.c.l.b16 %v1869
      %v1893 = vunpack.c.h.b16 %v1869
      %v1894 = vunpack.c.l.b16 %v1870
      %v1895 = vunpack.c.h.b16 %v1870
      %v1896 = vunpack.c.l.b16 %v1871
      %v1897 = vunpack.c.h.b16 %v1871
      %v1898 = vunpack.c.l.b16 %v1872
      %v1899 = vpack.c.b16 %v1882, %v1882
      %v1900 = vpack.c.b16 %v1883, %v1883
      %v1901 = vpack.c.b16 %v1884, %v1884
      %v1902 = vpack.c.b16 %v1885, %v1885
      %v1903 = vpack.c.b16 %v1886, %v1886
      %v1904 = vpack.c.b16 %v1887, %v1887
      %v1905 = vpack.c.b16 %v1888, %v1888
      %v1906 = vpack.c.b16 %v1889, %v1889
      %v1907 = vpack.c.b16 %v1890, %v1890
      %v1908 = vpack.c.b16 %v1891, %v1891
      %v1909 = vpack.c.b16 %v1892, %v1892
      %v1910 = vpack.c.b16 %v1893, %v1893
      %v1911 = vpack.c.b16 %v1894, %v1894
      %v1912 = vpack.c.b16 %v1895, %v1895
      %v1913 = vpack.c.b16 %v1896, %v1896
      %v1914 = vpack.c.b16 %v1897, %v1897
      %v1915 = vpack.c.b16 %v1898, %v1898
      %1916 = vrot.lane.b32.xlu0 %v1899, 32
      %v1917 = vpop.permute.xlu0 %1916
      %1918 = vrot.lane.b32.xlu0 %v1900, 32
      %v1919 = vpop.permute.xlu0 %1918
      %1920 = vrot.lane.b32.xlu0 %v1901, 32
      %v1921 = vpop.permute.xlu0 %1920
      %1922 = vrot.lane.b32.xlu0 %v1902, 32
      %v1923 = vpop.permute.xlu0 %1922
      %1924 = vrot.lane.b32.xlu0 %v1903, 32
      %v1925 = vpop.permute.xlu0 %1924
      %1926 = vrot.lane.b32.xlu0 %v1904, 32
      %v1927 = vpop.permute.xlu0 %1926
      %1928 = vrot.lane.b32.xlu0 %v1905, 32
      %v1929 = vpop.permute.xlu0 %1928
      %1930 = vrot.lane.b32.xlu0 %v1906, 32
      %v1931 = vpop.permute.xlu0 %1930
      %1932 = vrot.lane.b32.xlu0 %v1907, 32
      %v1933 = vpop.permute.xlu0 %1932
      %1934 = vrot.lane.b32.xlu0 %v1908, 32
      %v1935 = vpop.permute.xlu0 %1934
      %1936 = vrot.lane.b32.xlu0 %v1909, 32
      %v1937 = vpop.permute.xlu0 %1936
      %1938 = vrot.lane.b32.xlu0 %v1910, 32
      %v1939 = vpop.permute.xlu0 %1938
      %1940 = vrot.lane.b32.xlu0 %v1911, 32
      %v1941 = vpop.permute.xlu0 %1940
      %1942 = vrot.lane.b32.xlu0 %v1912, 32
      %v1943 = vpop.permute.xlu0 %1942
      %1944 = vrot.lane.b32.xlu0 %v1913, 32
      %v1945 = vpop.permute.xlu0 %1944
      %1946 = vrot.lane.b32.xlu0 %v1914, 32
      %v1947 = vpop.permute.xlu0 %1946
      %1948 = vrot.lane.b32.xlu0 %v1915, 32
      %v1949 = vpop.permute.xlu0 %1948
      %vm1967 = vcmask 388352
      %1968 = vst.msk [vmem:[#allocation4] sm:$0xf] %vm1967, %v1917
      %1969 = vst.msk [vmem:[#allocation4 + $0x10] sm:$0xf] %vm1967, %v1919
      %1970 = vst.msk [vmem:[#allocation4 + $0x20] sm:$0xf] %vm1967, %v1921
      %1971 = vst.msk [vmem:[#allocation4 + $0x30] sm:$0xf] %vm1967, %v1923
      %1972 = vst.msk [vmem:[#allocation4 + $0x40] sm:$0xf] %vm1967, %v1925
      %1973 = vst.msk [vmem:[#allocation4 + $0x50] sm:$0xf] %vm1967, %v1927
      %1974 = vst.msk [vmem:[#allocation4 + $0x60] sm:$0xf] %vm1967, %v1929
      %1975 = vst.msk [vmem:[#allocation4 + $0x70] sm:$0xf] %vm1967, %v1931
      %1976 = vst.msk [vmem:[#allocation4 + $0x80] sm:$0xf] %vm1967, %v1933
      %1977 = vst.msk [vmem:[#allocation4 + $0x90] sm:$0xf] %vm1967, %v1935
      %1978 = vst.msk [vmem:[#allocation4 + $0xa0] sm:$0xf] %vm1967, %v1937
      %1979 = vst.msk [vmem:[#allocation4 + $0xb0] sm:$0xf] %vm1967, %v1939
      %1980 = vst.msk [vmem:[#allocation4 + $0xc0] sm:$0xf] %vm1967, %v1941
      %1981 = vst.msk [vmem:[#allocation4 + $0xd0] sm:$0xf] %vm1967, %v1943
      %1982 = vst.msk [vmem:[#allocation4 + $0xe0] sm:$0xf] %vm1967, %v1945
      %1983 = vst.msk [vmem:[#allocation4 + $0xf0] sm:$0xf] %vm1967, %v1947
      %1984 = vst.msk [vmem:[#allocation4 + $0x100] sm:$0xf] %vm1967, %v1949
      %v1985 = vld [vmem:[#allocation3 + $0x3] sm:$0xff]
      %v1986 = vld [vmem:[#allocation3 + $0xb] sm:$0xff]
      %v1987 = vld [vmem:[#allocation3 + $0x13] sm:$0xff]
      %v1988 = vld [vmem:[#allocation3 + $0x1b] sm:$0xff]
      %v1989 = vld [vmem:[#allocation3 + $0x23] sm:$0xff]
      %v1990 = vld [vmem:[#allocation3 + $0x2b] sm:$0xff]
      %v1991 = vld [vmem:[#allocation3 + $0x33] sm:$0xff]
      %v1992 = vld [vmem:[#allocation3 + $0x3b] sm:$0xff]
      %v1993 = vld [vmem:[#allocation3 + $0x43] sm:$0xff]
      %v1994 = vld [vmem:[#allocation3 + $0x4b] sm:$0xff]
      %v1995 = vld [vmem:[#allocation3 + $0x53] sm:$0xff]
      %v1996 = vld [vmem:[#allocation3 + $0x5b] sm:$0xff]
      %v1997 = vld [vmem:[#allocation3 + $0x63] sm:$0xff]
      %v1998 = vld [vmem:[#allocation3 + $0x6b] sm:$0xff]
      %v1999 = vld [vmem:[#allocation3 + $0x73] sm:$0xff]
      %v2000 = vld [vmem:[#allocation3 + $0x7b] sm:$0xff]
      %v2001 = vld [vmem:[#allocation3 + $0x83] sm:$0xff]
      %v2002 = vpack.c.bf16 %v1986, %v1985
      %v2003 = vpack.c.bf16 %v1988, %v1987
      %v2004 = vpack.c.bf16 %v1990, %v1989
      %v2005 = vpack.c.bf16 %v1992, %v1991
      %v2006 = vpack.c.bf16 %v1994, %v1993
      %v2007 = vpack.c.bf16 %v1996, %v1995
      %v2008 = vpack.c.bf16 %v1998, %v1997
      %v2009 = vpack.c.bf16 %v2000, %v1999
      %v2010 = vpack.c.bf16 %v2001, %v2001
      %v2020 = vunpack.c.l.b16 %v2002
      %v2021 = vunpack.c.h.b16 %v2002
      %v2022 = vunpack.c.l.b16 %v2003
      %v2023 = vunpack.c.h.b16 %v2003
      %v2024 = vunpack.c.l.b16 %v2004
      %v2025 = vunpack.c.h.b16 %v2004
      %v2026 = vunpack.c.l.b16 %v2005
      %v2027 = vunpack.c.h.b16 %v2005
      %v2028 = vunpack.c.l.b16 %v2006
      %v2029 = vunpack.c.h.b16 %v2006
      %v2030 = vunpack.c.l.b16 %v2007
      %v2031 = vunpack.c.h.b16 %v2007
      %v2032 = vunpack.c.l.b16 %v2008
      %v2033 = vunpack.c.h.b16 %v2008
      %v2034 = vunpack.c.l.b16 %v2009
      %v2035 = vunpack.c.h.b16 %v2009
      %v2036 = vunpack.c.l.b16 %v2010
      %v2037 = vpack.c.b16 %v2020, %v2020
      %v2038 = vpack.c.b16 %v2021, %v2021
      %v2039 = vpack.c.b16 %v2022, %v2022
      %v2040 = vpack.c.b16 %v2023, %v2023
      %v2041 = vpack.c.b16 %v2024, %v2024
      %v2042 = vpack.c.b16 %v2025, %v2025
      %v2043 = vpack.c.b16 %v2026, %v2026
      %v2044 = vpack.c.b16 %v2027, %v2027
      %v2045 = vpack.c.b16 %v2028, %v2028
      %v2046 = vpack.c.b16 %v2029, %v2029
      %v2047 = vpack.c.b16 %v2030, %v2030
      %v2048 = vpack.c.b16 %v2031, %v2031
      %v2049 = vpack.c.b16 %v2032, %v2032
      %v2050 = vpack.c.b16 %v2033, %v2033
      %v2051 = vpack.c.b16 %v2034, %v2034
      %v2052 = vpack.c.b16 %v2035, %v2035
      %v2053 = vpack.c.b16 %v2036, %v2036
      %2054 = vrot.lane.b32.xlu0 %v2037, 48
      %v2055 = vpop.permute.xlu0 %2054
      %2056 = vrot.lane.b32.xlu0 %v2038, 48
      %v2057 = vpop.permute.xlu0 %2056
      %2058 = vrot.lane.b32.xlu0 %v2039, 48
      %v2059 = vpop.permute.xlu0 %2058
      %2060 = vrot.lane.b32.xlu0 %v2040, 48
      %v2061 = vpop.permute.xlu0 %2060
      %2062 = vrot.lane.b32.xlu0 %v2041, 48
      %v2063 = vpop.permute.xlu0 %2062
      %2064 = vrot.lane.b32.xlu0 %v2042, 48
      %v2065 = vpop.permute.xlu0 %2064
      %2066 = vrot.lane.b32.xlu0 %v2043, 48
      %v2067 = vpop.permute.xlu0 %2066
      %2068 = vrot.lane.b32.xlu0 %v2044, 48
      %v2069 = vpop.permute.xlu0 %2068
      %2070 = vrot.lane.b32.xlu0 %v2045, 48
      %v2071 = vpop.permute.xlu0 %2070
      %2072 = vrot.lane.b32.xlu0 %v2046, 48
      %v2073 = vpop.permute.xlu0 %2072
      %2074 = vrot.lane.b32.xlu0 %v2047, 48
      %v2075 = vpop.permute.xlu0 %2074
      %2076 = vrot.lane.b32.xlu0 %v2048, 48
      %v2077 = vpop.permute.xlu0 %2076
      %2078 = vrot.lane.b32.xlu0 %v2049, 48
      %v2079 = vpop.permute.xlu0 %2078
      %2080 = vrot.lane.b32.xlu0 %v2050, 48
      %v2081 = vpop.permute.xlu0 %2080
      %2082 = vrot.lane.b32.xlu0 %v2051, 48
      %v2083 = vpop.permute.xlu0 %2082
      %2084 = vrot.lane.b32.xlu0 %v2052, 48
      %v2085 = vpop.permute.xlu0 %2084
      %2086 = vrot.lane.b32.xlu0 %v2053, 48
      %v2087 = vpop.permute.xlu0 %2086
      %vm2105 = vcmask 519552
      %2106 = vst.msk [vmem:[#allocation4] sm:$0xf] %vm2105, %v2055
      %2107 = vst.msk [vmem:[#allocation4 + $0x10] sm:$0xf] %vm2105, %v2057
      %2108 = vst.msk [vmem:[#allocation4 + $0x20] sm:$0xf] %vm2105, %v2059
      %2109 = vst.msk [vmem:[#allocation4 + $0x30] sm:$0xf] %vm2105, %v2061
      %2110 = vst.msk [vmem:[#allocation4 + $0x40] sm:$0xf] %vm2105, %v2063
      %2111 = vst.msk [vmem:[#allocation4 + $0x50] sm:$0xf] %vm2105, %v2065
      %2112 = vst.msk [vmem:[#allocation4 + $0x60] sm:$0xf] %vm2105, %v2067
      %2113 = vst.msk [vmem:[#allocation4 + $0x70] sm:$0xf] %vm2105, %v2069
      %2114 = vst.msk [vmem:[#allocation4 + $0x80] sm:$0xf] %vm2105, %v2071
      %2115 = vst.msk [vmem:[#allocation4 + $0x90] sm:$0xf] %vm2105, %v2073
      %2116 = vst.msk [vmem:[#allocation4 + $0xa0] sm:$0xf] %vm2105, %v2075
      %2117 = vst.msk [vmem:[#allocation4 + $0xb0] sm:$0xf] %vm2105, %v2077
      %2118 = vst.msk [vmem:[#allocation4 + $0xc0] sm:$0xf] %vm2105, %v2079
      %2119 = vst.msk [vmem:[#allocation4 + $0xd0] sm:$0xf] %vm2105, %v2081
      %2120 = vst.msk [vmem:[#allocation4 + $0xe0] sm:$0xf] %vm2105, %v2083
      %2121 = vst.msk [vmem:[#allocation4 + $0xf0] sm:$0xf] %vm2105, %v2085
      %2122 = vst.msk [vmem:[#allocation4 + $0x100] sm:$0xf] %vm2105, %v2087
      %v2123 = vld [vmem:[#allocation3 + $0x4] sm:$0xff]
      %v2124 = vld [vmem:[#allocation3 + $0xc] sm:$0xff]
      %v2125 = vld [vmem:[#allocation3 + $0x14] sm:$0xff]
      %v2126 = vld [vmem:[#allocation3 + $0x1c] sm:$0xff]
      %v2127 = vld [vmem:[#allocation3 + $0x24] sm:$0xff]
      %v2128 = vld [vmem:[#allocation3 + $0x2c] sm:$0xff]
      %v2129 = vld [vmem:[#allocation3 + $0x34] sm:$0xff]
      %v2130 = vld [vmem:[#allocation3 + $0x3c] sm:$0xff]
      %v2131 = vld [vmem:[#allocation3 + $0x44] sm:$0xff]
      %v2132 = vld [vmem:[#allocation3 + $0x4c] sm:$0xff]
      %v2133 = vld [vmem:[#allocation3 + $0x54] sm:$0xff]
      %v2134 = vld [vmem:[#allocation3 + $0x5c] sm:$0xff]
      %v2135 = vld [vmem:[#allocation3 + $0x64] sm:$0xff]
      %v2136 = vld [vmem:[#allocation3 + $0x6c] sm:$0xff]
      %v2137 = vld [vmem:[#allocation3 + $0x74] sm:$0xff]
      %v2138 = vld [vmem:[#allocation3 + $0x7c] sm:$0xff]
      %v2139 = vld [vmem:[#allocation3 + $0x84] sm:$0xff]
      %v2140 = vpack.c.bf16 %v2124, %v2123
      %v2141 = vpack.c.bf16 %v2126, %v2125
      %v2142 = vpack.c.bf16 %v2128, %v2127
      %v2143 = vpack.c.bf16 %v2130, %v2129
      %v2144 = vpack.c.bf16 %v2132, %v2131
      %v2145 = vpack.c.bf16 %v2134, %v2133
      %v2146 = vpack.c.bf16 %v2136, %v2135
      %v2147 = vpack.c.bf16 %v2138, %v2137
      %v2148 = vpack.c.bf16 %v2139, %v2139
      %v2158 = vunpack.c.l.b16 %v2140
      %v2159 = vunpack.c.h.b16 %v2140
      %v2160 = vunpack.c.l.b16 %v2141
      %v2161 = vunpack.c.h.b16 %v2141
      %v2162 = vunpack.c.l.b16 %v2142
      %v2163 = vunpack.c.h.b16 %v2142
      %v2164 = vunpack.c.l.b16 %v2143
      %v2165 = vunpack.c.h.b16 %v2143
      %v2166 = vunpack.c.l.b16 %v2144
      %v2167 = vunpack.c.h.b16 %v2144
      %v2168 = vunpack.c.l.b16 %v2145
      %v2169 = vunpack.c.h.b16 %v2145
      %v2170 = vunpack.c.l.b16 %v2146
      %v2171 = vunpack.c.h.b16 %v2146
      %v2172 = vunpack.c.l.b16 %v2147
      %v2173 = vunpack.c.h.b16 %v2147
      %v2174 = vunpack.c.l.b16 %v2148
      %v2175 = vpack.c.b16 %v2158, %v2158
      %v2176 = vpack.c.b16 %v2159, %v2159
      %v2177 = vpack.c.b16 %v2160, %v2160
      %v2178 = vpack.c.b16 %v2161, %v2161
      %v2179 = vpack.c.b16 %v2162, %v2162
      %v2180 = vpack.c.b16 %v2163, %v2163
      %v2181 = vpack.c.b16 %v2164, %v2164
      %v2182 = vpack.c.b16 %v2165, %v2165
      %v2183 = vpack.c.b16 %v2166, %v2166
      %v2184 = vpack.c.b16 %v2167, %v2167
      %v2185 = vpack.c.b16 %v2168, %v2168
      %v2186 = vpack.c.b16 %v2169, %v2169
      %v2187 = vpack.c.b16 %v2170, %v2170
      %v2188 = vpack.c.b16 %v2171, %v2171
      %v2189 = vpack.c.b16 %v2172, %v2172
      %v2190 = vpack.c.b16 %v2173, %v2173
      %v2191 = vpack.c.b16 %v2174, %v2174
      %2192 = vrot.lane.b32.xlu0 %v2175, 64
      %v2193 = vpop.permute.xlu0 %2192
      %2194 = vrot.lane.b32.xlu0 %v2176, 64
      %v2195 = vpop.permute.xlu0 %2194
      %2196 = vrot.lane.b32.xlu0 %v2177, 64
      %v2197 = vpop.permute.xlu0 %2196
      %2198 = vrot.lane.b32.xlu0 %v2178, 64
      %v2199 = vpop.permute.xlu0 %2198
      %2200 = vrot.lane.b32.xlu0 %v2179, 64
      %v2201 = vpop.permute.xlu0 %2200
      %2202 = vrot.lane.b32.xlu0 %v2180, 64
      %v2203 = vpop.permute.xlu0 %2202
      %2204 = vrot.lane.b32.xlu0 %v2181, 64
      %v2205 = vpop.permute.xlu0 %2204
      %2206 = vrot.lane.b32.xlu0 %v2182, 64
      %v2207 = vpop.permute.xlu0 %2206
      %2208 = vrot.lane.b32.xlu0 %v2183, 64
      %v2209 = vpop.permute.xlu0 %2208
      %2210 = vrot.lane.b32.xlu0 %v2184, 64
      %v2211 = vpop.permute.xlu0 %2210
      %2212 = vrot.lane.b32.xlu0 %v2185, 64
      %v2213 = vpop.permute.xlu0 %2212
      %2214 = vrot.lane.b32.xlu0 %v2186, 64
      %v2215 = vpop.permute.xlu0 %2214
      %2216 = vrot.lane.b32.xlu0 %v2187, 64
      %v2217 = vpop.permute.xlu0 %2216
      %2218 = vrot.lane.b32.xlu0 %v2188, 64
      %v2219 = vpop.permute.xlu0 %2218
      %2220 = vrot.lane.b32.xlu0 %v2189, 64
      %v2221 = vpop.permute.xlu0 %2220
      %2222 = vrot.lane.b32.xlu0 %v2190, 64
      %v2223 = vpop.permute.xlu0 %2222
      %2224 = vrot.lane.b32.xlu0 %v2191, 64
      %v2225 = vpop.permute.xlu0 %2224
      %vm2243 = vcmask 650752
      %2244 = vst.msk [vmem:[#allocation4] sm:$0xf] %vm2243, %v2193
      %2245 = vst.msk [vmem:[#allocation4 + $0x10] sm:$0xf] %vm2243, %v2195
      %2246 = vst.msk [vmem:[#allocation4 + $0x20] sm:$0xf] %vm2243, %v2197
      %2247 = vst.msk [vmem:[#allocation4 + $0x30] sm:$0xf] %vm2243, %v2199
      %2248 = vst.msk [vmem:[#allocation4 + $0x40] sm:$0xf] %vm2243, %v2201
      %2249 = vst.msk [vmem:[#allocation4 + $0x50] sm:$0xf] %vm2243, %v2203
      %2250 = vst.msk [vmem:[#allocation4 + $0x60] sm:$0xf] %vm2243, %v2205
      %2251 = vst.msk [vmem:[#allocation4 + $0x70] sm:$0xf] %vm2243, %v2207
      %2252 = vst.msk [vmem:[#allocation4 + $0x80] sm:$0xf] %vm2243, %v2209
      %2253 = vst.msk [vmem:[#allocation4 + $0x90] sm:$0xf] %vm2243, %v2211
      %2254 = vst.msk [vmem:[#allocation4 + $0xa0] sm:$0xf] %vm2243, %v2213
      %2255 = vst.msk [vmem:[#allocation4 + $0xb0] sm:$0xf] %vm2243, %v2215
      %2256 = vst.msk [vmem:[#allocation4 + $0xc0] sm:$0xf] %vm2243, %v2217
      %2257 = vst.msk [vmem:[#allocation4 + $0xd0] sm:$0xf] %vm2243, %v2219
      %2258 = vst.msk [vmem:[#allocation4 + $0xe0] sm:$0xf] %vm2243, %v2221
      %2259 = vst.msk [vmem:[#allocation4 + $0xf0] sm:$0xf] %vm2243, %v2223
      %2260 = vst.msk [vmem:[#allocation4 + $0x100] sm:$0xf] %vm2243, %v2225
      %v2261 = vld [vmem:[#allocation3 + $0xe] sm:$0xff]
      %v2262 = vld [vmem:[#allocation3 + $0x16] sm:$0xff]
      %v2263 = vld [vmem:[#allocation3 + $0x1e] sm:$0xff]
      %v2264 = vld [vmem:[#allocation3 + $0x26] sm:$0xff]
      %v2265 = vld [vmem:[#allocation3 + $0x2e] sm:$0xff]
      %v2266 = vld [vmem:[#allocation3 + $0x36] sm:$0xff]
      %v2267 = vld [vmem:[#allocation3 + $0x3e] sm:$0xff]
      %v2268 = vld [vmem:[#allocation3 + $0x46] sm:$0xff]
      %v2269 = vld [vmem:[#allocation3 + $0x4e] sm:$0xff]
      %v2270 = vld [vmem:[#allocation3 + $0x56] sm:$0xff]
      %v2271 = vld [vmem:[#allocation3 + $0x5e] sm:$0xff]
      %v2272 = vld [vmem:[#allocation3 + $0x66] sm:$0xff]
      %v2273 = vld [vmem:[#allocation3 + $0x6e] sm:$0xff]
      %v2274 = vld [vmem:[#allocation3 + $0x76] sm:$0xff]
      %v2275 = vld [vmem:[#allocation3 + $0x7e] sm:$0xff]
      %v2276 = vld [vmem:[#allocation3 + $0x86] sm:$0xff]
      %v2277 = vld [vmem:[#allocation3 + $0x8e] sm:$0xff]
      %v2278 = vpack.c.bf16 %v2262, %v2261
      %v2279 = vpack.c.bf16 %v2264, %v2263
      %v2280 = vpack.c.bf16 %v2266, %v2265
      %v2281 = vpack.c.bf16 %v2268, %v2267
      %v2282 = vpack.c.bf16 %v2270, %v2269
      %v2283 = vpack.c.bf16 %v2272, %v2271
      %v2284 = vpack.c.bf16 %v2274, %v2273
      %v2285 = vpack.c.bf16 %v2276, %v2275
      %v2286 = vpack.c.bf16 %v2277, %v2277
      %v2296 = vunpack.c.l.b16 %v2278
      %v2297 = vunpack.c.h.b16 %v2278
      %v2298 = vunpack.c.l.b16 %v2279
      %v2299 = vunpack.c.h.b16 %v2279
      %v2300 = vunpack.c.l.b16 %v2280
      %v2301 = vunpack.c.h.b16 %v2280
      %v2302 = vunpack.c.l.b16 %v2281
      %v2303 = vunpack.c.h.b16 %v2281
      %v2304 = vunpack.c.l.b16 %v2282
      %v2305 = vunpack.c.h.b16 %v2282
      %v2306 = vunpack.c.l.b16 %v2283
      %v2307 = vunpack.c.h.b16 %v2283
      %v2308 = vunpack.c.l.b16 %v2284
      %v2309 = vunpack.c.h.b16 %v2284
      %v2310 = vunpack.c.l.b16 %v2285
      %v2311 = vunpack.c.h.b16 %v2285
      %v2312 = vunpack.c.l.b16 %v2286
      %v2313 = vpack.c.b16 %v2296, %v2296
      %v2314 = vpack.c.b16 %v2297, %v2297
      %v2315 = vpack.c.b16 %v2298, %v2298
      %v2316 = vpack.c.b16 %v2299, %v2299
      %v2317 = vpack.c.b16 %v2300, %v2300
      %v2318 = vpack.c.b16 %v2301, %v2301
      %v2319 = vpack.c.b16 %v2302, %v2302
      %v2320 = vpack.c.b16 %v2303, %v2303
      %v2321 = vpack.c.b16 %v2304, %v2304
      %v2322 = vpack.c.b16 %v2305, %v2305
      %v2323 = vpack.c.b16 %v2306, %v2306
      %v2324 = vpack.c.b16 %v2307, %v2307
      %v2325 = vpack.c.b16 %v2308, %v2308
      %v2326 = vpack.c.b16 %v2309, %v2309
      %v2327 = vpack.c.b16 %v2310, %v2310
      %v2328 = vpack.c.b16 %v2311, %v2311
      %v2329 = vpack.c.b16 %v2312, %v2312
      %2330 = vrot.lane.b32.xlu0 %v2313, 80
      %v2331 = vpop.permute.xlu0 %2330
      %2332 = vrot.lane.b32.xlu0 %v2314, 80
      %v2333 = vpop.permute.xlu0 %2332
      %2334 = vrot.lane.b32.xlu0 %v2315, 80
      %v2335 = vpop.permute.xlu0 %2334
      %2336 = vrot.lane.b32.xlu0 %v2316, 80
      %v2337 = vpop.permute.xlu0 %2336
      %2338 = vrot.lane.b32.xlu0 %v2317, 80
      %v2339 = vpop.permute.xlu0 %2338
      %2340 = vrot.lane.b32.xlu0 %v2318, 80
      %v2341 = vpop.permute.xlu0 %2340
      %2342 = vrot.lane.b32.xlu0 %v2319, 80
      %v2343 = vpop.permute.xlu0 %2342
      %2344 = vrot.lane.b32.xlu0 %v2320, 80
      %v2345 = vpop.permute.xlu0 %2344
      %2346 = vrot.lane.b32.xlu0 %v2321, 80
      %v2347 = vpop.permute.xlu0 %2346
      %2348 = vrot.lane.b32.xlu0 %v2322, 80
      %v2349 = vpop.permute.xlu0 %2348
      %2350 = vrot.lane.b32.xlu0 %v2323, 80
      %v2351 = vpop.permute.xlu0 %2350
      %2352 = vrot.lane.b32.xlu0 %v2324, 80
      %v2353 = vpop.permute.xlu0 %2352
      %2354 = vrot.lane.b32.xlu0 %v2325, 80
      %v2355 = vpop.permute.xlu0 %2354
      %2356 = vrot.lane.b32.xlu0 %v2326, 80
      %v2357 = vpop.permute.xlu0 %2356
      %2358 = vrot.lane.b32.xlu0 %v2327, 80
      %v2359 = vpop.permute.xlu0 %2358
      %2360 = vrot.lane.b32.xlu0 %v2328, 80
      %v2361 = vpop.permute.xlu0 %2360
      %2362 = vrot.lane.b32.xlu0 %v2329, 80
      %v2363 = vpop.permute.xlu0 %2362
      %vm2381 = vcmask 781952
      %2382 = vst.msk [vmem:[#allocation4] sm:$0xf] %vm2381, %v2331
      %2383 = vst.msk [vmem:[#allocation4 + $0x10] sm:$0xf] %vm2381, %v2333
      %2384 = vst.msk [vmem:[#allocation4 + $0x20] sm:$0xf] %vm2381, %v2335
      %2385 = vst.msk [vmem:[#allocation4 + $0x30] sm:$0xf] %vm2381, %v2337
      %2386 = vst.msk [vmem:[#allocation4 + $0x40] sm:$0xf] %vm2381, %v2339
      %2387 = vst.msk [vmem:[#allocation4 + $0x50] sm:$0xf] %vm2381, %v2341
      %2388 = vst.msk [vmem:[#allocation4 + $0x60] sm:$0xf] %vm2381, %v2343
      %2389 = vst.msk [vmem:[#allocation4 + $0x70] sm:$0xf] %vm2381, %v2345
      %2390 = vst.msk [vmem:[#allocation4 + $0x80] sm:$0xf] %vm2381, %v2347
      %2391 = vst.msk [vmem:[#allocation4 + $0x90] sm:$0xf] %vm2381, %v2349
      %2392 = vst.msk [vmem:[#allocation4 + $0xa0] sm:$0xf] %vm2381, %v2351
      %2393 = vst.msk [vmem:[#allocation4 + $0xb0] sm:$0xf] %vm2381, %v2353
      %2394 = vst.msk [vmem:[#allocation4 + $0xc0] sm:$0xf] %vm2381, %v2355
      %2395 = vst.msk [vmem:[#allocation4 + $0xd0] sm:$0xf] %vm2381, %v2357
      %2396 = vst.msk [vmem:[#allocation4 + $0xe0] sm:$0xf] %vm2381, %v2359
      %2397 = vst.msk [vmem:[#allocation4 + $0xf0] sm:$0xf] %vm2381, %v2361
      %2398 = vst.msk [vmem:[#allocation4 + $0x100] sm:$0xf] %vm2381, %v2363
      %v2399 = vld [vmem:[#allocation3 + $0xf] sm:$0xff]
      %v2400 = vld [vmem:[#allocation3 + $0x17] sm:$0xff]
      %v2401 = vld [vmem:[#allocation3 + $0x1f] sm:$0xff]
      %v2402 = vld [vmem:[#allocation3 + $0x27] sm:$0xff]
      %v2403 = vld [vmem:[#allocation3 + $0x2f] sm:$0xff]
      %v2404 = vld [vmem:[#allocation3 + $0x37] sm:$0xff]
      %v2405 = vld [vmem:[#allocation3 + $0x3f] sm:$0xff]
      %v2406 = vld [vmem:[#allocation3 + $0x47] sm:$0xff]
      %v2407 = vld [vmem:[#allocation3 + $0x4f] sm:$0xff]
      %v2408 = vld [vmem:[#allocation3 + $0x57] sm:$0xff]
      %v2409 = vld [vmem:[#allocation3 + $0x5f] sm:$0xff]
      %v2410 = vld [vmem:[#allocation3 + $0x67] sm:$0xff]
      %v2411 = vld [vmem:[#allocation3 + $0x6f] sm:$0xff]
      %v2412 = vld [vmem:[#allocation3 + $0x77] sm:$0xff]
      %v2413 = vld [vmem:[#allocation3 + $0x7f] sm:$0xff]
      %v2414 = vld [vmem:[#allocation3 + $0x87] sm:$0xff]
      %v2415 = vld [vmem:[#allocation3 + $0x8f] sm:$0xff]
      %v2416 = vpack.c.bf16 %v2400, %v2399
      %v2417 = vpack.c.bf16 %v2402, %v2401
      %v2418 = vpack.c.bf16 %v2404, %v2403
      %v2419 = vpack.c.bf16 %v2406, %v2405
      %v2420 = vpack.c.bf16 %v2408, %v2407
      %v2421 = vpack.c.bf16 %v2410, %v2409
      %v2422 = vpack.c.bf16 %v2412, %v2411
      %v2423 = vpack.c.bf16 %v2414, %v2413
      %v2424 = vpack.c.bf16 %v2415, %v2415
      %v2434 = vunpack.c.l.b16 %v2416
      %v2435 = vunpack.c.h.b16 %v2416
      %v2436 = vunpack.c.l.b16 %v2417
      %v2437 = vunpack.c.h.b16 %v2417
      %v2438 = vunpack.c.l.b16 %v2418
      %v2439 = vunpack.c.h.b16 %v2418
      %v2440 = vunpack.c.l.b16 %v2419
      %v2441 = vunpack.c.h.b16 %v2419
      %v2442 = vunpack.c.l.b16 %v2420
      %v2443 = vunpack.c.h.b16 %v2420
      %v2444 = vunpack.c.l.b16 %v2421
      %v2445 = vunpack.c.h.b16 %v2421
      %v2446 = vunpack.c.l.b16 %v2422
      %v2447 = vunpack.c.h.b16 %v2422
      %v2448 = vunpack.c.l.b16 %v2423
      %v2449 = vunpack.c.h.b16 %v2423
      %v2450 = vunpack.c.l.b16 %v2424
      %v2451 = vpack.c.b16 %v2434, %v2434
      %v2452 = vpack.c.b16 %v2435, %v2435
      %v2453 = vpack.c.b16 %v2436, %v2436
      %v2454 = vpack.c.b16 %v2437, %v2437
      %v2455 = vpack.c.b16 %v2438, %v2438
      %v2456 = vpack.c.b16 %v2439, %v2439
      %v2457 = vpack.c.b16 %v2440, %v2440
      %v2458 = vpack.c.b16 %v2441, %v2441
      %v2459 = vpack.c.b16 %v2442, %v2442
      %v2460 = vpack.c.b16 %v2443, %v2443
      %v2461 = vpack.c.b16 %v2444, %v2444
      %v2462 = vpack.c.b16 %v2445, %v2445
      %v2463 = vpack.c.b16 %v2446, %v2446
      %v2464 = vpack.c.b16 %v2447, %v2447
      %v2465 = vpack.c.b16 %v2448, %v2448
      %v2466 = vpack.c.b16 %v2449, %v2449
      %v2467 = vpack.c.b16 %v2450, %v2450
      %2468 = vrot.lane.b32.xlu0 %v2451, 96
      %v2469 = vpop.permute.xlu0 %2468
      %2470 = vrot.lane.b32.xlu0 %v2452, 96
      %v2471 = vpop.permute.xlu0 %2470
      %2472 = vrot.lane.b32.xlu0 %v2453, 96
      %v2473 = vpop.permute.xlu0 %2472
      %2474 = vrot.lane.b32.xlu0 %v2454, 96
      %v2475 = vpop.permute.xlu0 %2474
      %2476 = vrot.lane.b32.xlu0 %v2455, 96
      %v2477 = vpop.permute.xlu0 %2476
      %2478 = vrot.lane.b32.xlu0 %v2456, 96
      %v2479 = vpop.permute.xlu0 %2478
      %2480 = vrot.lane.b32.xlu0 %v2457, 96
      %v2481 = vpop.permute.xlu0 %2480
      %2482 = vrot.lane.b32.xlu0 %v2458, 96
      %v2483 = vpop.permute.xlu0 %2482
      %2484 = vrot.lane.b32.xlu0 %v2459, 96
      %v2485 = vpop.permute.xlu0 %2484
      %2486 = vrot.lane.b32.xlu0 %v2460, 96
      %v2487 = vpop.permute.xlu0 %2486
      %2488 = vrot.lane.b32.xlu0 %v2461, 96
      %v2489 = vpop.permute.xlu0 %2488
      %2490 = vrot.lane.b32.xlu0 %v2462, 96
      %v2491 = vpop.permute.xlu0 %2490
      %2492 = vrot.lane.b32.xlu0 %v2463, 96
      %v2493 = vpop.permute.xlu0 %2492
      %2494 = vrot.lane.b32.xlu0 %v2464, 96
      %v2495 = vpop.permute.xlu0 %2494
      %2496 = vrot.lane.b32.xlu0 %v2465, 96
      %v2497 = vpop.permute.xlu0 %2496
      %2498 = vrot.lane.b32.xlu0 %v2466, 96
      %v2499 = vpop.permute.xlu0 %2498
      %2500 = vrot.lane.b32.xlu0 %v2467, 96
      %v2501 = vpop.permute.xlu0 %2500
      %vm2519 = vcmask 913152
      %2520 = vst.msk [vmem:[#allocation4] sm:$0xf] %vm2519, %v2469
      %2521 = vst.msk [vmem:[#allocation4 + $0x10] sm:$0xf] %vm2519, %v2471
      %2522 = vst.msk [vmem:[#allocation4 + $0x20] sm:$0xf] %vm2519, %v2473
      %2523 = vst.msk [vmem:[#allocation4 + $0x30] sm:$0xf] %vm2519, %v2475
      %2524 = vst.msk [vmem:[#allocation4 + $0x40] sm:$0xf] %vm2519, %v2477
      %2525 = vst.msk [vmem:[#allocation4 + $0x50] sm:$0xf] %vm2519, %v2479
      %2526 = vst.msk [vmem:[#allocation4 + $0x60] sm:$0xf] %vm2519, %v2481
      %2527 = vst.msk [vmem:[#allocation4 + $0x70] sm:$0xf] %vm2519, %v2483
      %2528 = vst.msk [vmem:[#allocation4 + $0x80] sm:$0xf] %vm2519, %v2485
      %2529 = vst.msk [vmem:[#allocation4 + $0x90] sm:$0xf] %vm2519, %v2487
      %2530 = vst.msk [vmem:[#allocation4 + $0xa0] sm:$0xf] %vm2519, %v2489
      %2531 = vst.msk [vmem:[#allocation4 + $0xb0] sm:$0xf] %vm2519, %v2491
      %2532 = vst.msk [vmem:[#allocation4 + $0xc0] sm:$0xf] %vm2519, %v2493
      %2533 = vst.msk [vmem:[#allocation4 + $0xd0] sm:$0xf] %vm2519, %v2495
      %2534 = vst.msk [vmem:[#allocation4 + $0xe0] sm:$0xf] %vm2519, %v2497
      %2535 = vst.msk [vmem:[#allocation4 + $0xf0] sm:$0xf] %vm2519, %v2499
      %2536 = vst.msk [vmem:[#allocation4 + $0x100] sm:$0xf] %vm2519, %v2501
      %v2537 = vld [vmem:[#allocation3 + $0x10] sm:$0xff]
      %v2538 = vld [vmem:[#allocation3 + $0x18] sm:$0xff]
      %v2539 = vld [vmem:[#allocation3 + $0x20] sm:$0xff]
      %v2540 = vld [vmem:[#allocation3 + $0x28] sm:$0xff]
      %v2541 = vld [vmem:[#allocation3 + $0x30] sm:$0xff]
      %v2542 = vld [vmem:[#allocation3 + $0x38] sm:$0xff]
      %v2543 = vld [vmem:[#allocation3 + $0x40] sm:$0xff]
      %v2544 = vld [vmem:[#allocation3 + $0x48] sm:$0xff]
      %v2545 = vld [vmem:[#allocation3 + $0x50] sm:$0xff]
      %v2546 = vld [vmem:[#allocation3 + $0x58] sm:$0xff]
      %v2547 = vld [vmem:[#allocation3 + $0x60] sm:$0xff]
      %v2548 = vld [vmem:[#allocation3 + $0x68] sm:$0xff]
      %v2549 = vld [vmem:[#allocation3 + $0x70] sm:$0xff]
      %v2550 = vld [vmem:[#allocation3 + $0x78] sm:$0xff]
      %v2551 = vld [vmem:[#allocation3 + $0x80] sm:$0xff]
      %v2552 = vld [vmem:[#allocation3 + $0x88] sm:$0xff]
      %v2553 = vld [vmem:[#allocation3 + $0x90] sm:$0xff]
      %v2554 = vpack.c.bf16 %v2538, %v2537
      %v2555 = vpack.c.bf16 %v2540, %v2539
      %v2556 = vpack.c.bf16 %v2542, %v2541
      %v2557 = vpack.c.bf16 %v2544, %v2543
      %v2558 = vpack.c.bf16 %v2546, %v2545
      %v2559 = vpack.c.bf16 %v2548, %v2547
      %v2560 = vpack.c.bf16 %v2550, %v2549
      %v2561 = vpack.c.bf16 %v2552, %v2551
      %v2562 = vpack.c.bf16 %v2553, %v2553
      %v2572 = vunpack.c.l.b16 %v2554
      %v2573 = vunpack.c.h.b16 %v2554
      %v2574 = vunpack.c.l.b16 %v2555
      %v2575 = vunpack.c.h.b16 %v2555
      %v2576 = vunpack.c.l.b16 %v2556
      %v2577 = vunpack.c.h.b16 %v2556
      %v2578 = vunpack.c.l.b16 %v2557
      %v2579 = vunpack.c.h.b16 %v2557
      %v2580 = vunpack.c.l.b16 %v2558
      %v2581 = vunpack.c.h.b16 %v2558
      %v2582 = vunpack.c.l.b16 %v2559
      %v2583 = vunpack.c.h.b16 %v2559
      %v2584 = vunpack.c.l.b16 %v2560
      %v2585 = vunpack.c.h.b16 %v2560
      %v2586 = vunpack.c.l.b16 %v2561
      %v2587 = vunpack.c.h.b16 %v2561
      %v2588 = vunpack.c.l.b16 %v2562
      %v2589 = vpack.c.b16 %v2572, %v2572
      %v2590 = vpack.c.b16 %v2573, %v2573
      %v2591 = vpack.c.b16 %v2574, %v2574
      %v2592 = vpack.c.b16 %v2575, %v2575
      %v2593 = vpack.c.b16 %v2576, %v2576
      %v2594 = vpack.c.b16 %v2577, %v2577
      %v2595 = vpack.c.b16 %v2578, %v2578
      %v2596 = vpack.c.b16 %v2579, %v2579
      %v2597 = vpack.c.b16 %v2580, %v2580
      %v2598 = vpack.c.b16 %v2581, %v2581
      %v2599 = vpack.c.b16 %v2582, %v2582
      %v2600 = vpack.c.b16 %v2583, %v2583
      %v2601 = vpack.c.b16 %v2584, %v2584
      %v2602 = vpack.c.b16 %v2585, %v2585
      %v2603 = vpack.c.b16 %v2586, %v2586
      %v2604 = vpack.c.b16 %v2587, %v2587
      %v2605 = vpack.c.b16 %v2588, %v2588
      %2606 = vrot.lane.b32.xlu0 %v2589, 112
      %v2607 = vpop.permute.xlu0 %2606
      %2608 = vrot.lane.b32.xlu0 %v2590, 112
      %v2609 = vpop.permute.xlu0 %2608
      %2610 = vrot.lane.b32.xlu0 %v2591, 112
      %v2611 = vpop.permute.xlu0 %2610
      %2612 = vrot.lane.b32.xlu0 %v2592, 112
      %v2613 = vpop.permute.xlu0 %2612
      %2614 = vrot.lane.b32.xlu0 %v2593, 112
      %v2615 = vpop.permute.xlu0 %2614
      %2616 = vrot.lane.b32.xlu0 %v2594, 112
      %v2617 = vpop.permute.xlu0 %2616
      %2618 = vrot.lane.b32.xlu0 %v2595, 112
      %v2619 = vpop.permute.xlu0 %2618
      %2620 = vrot.lane.b32.xlu0 %v2596, 112
      %v2621 = vpop.permute.xlu0 %2620
      %2622 = vrot.lane.b32.xlu0 %v2597, 112
      %v2623 = vpop.permute.xlu0 %2622
      %2624 = vrot.lane.b32.xlu0 %v2598, 112
      %v2625 = vpop.permute.xlu0 %2624
      %2626 = vrot.lane.b32.xlu0 %v2599, 112
      %v2627 = vpop.permute.xlu0 %2626
      %2628 = vrot.lane.b32.xlu0 %v2600, 112
      %v2629 = vpop.permute.xlu0 %2628
      %2630 = vrot.lane.b32.xlu0 %v2601, 112
      %v2631 = vpop.permute.xlu0 %2630
      %2632 = vrot.lane.b32.xlu0 %v2602, 112
      %v2633 = vpop.permute.xlu0 %2632
      %2634 = vrot.lane.b32.xlu0 %v2603, 112
      %v2635 = vpop.permute.xlu0 %2634
      %2636 = vrot.lane.b32.xlu0 %v2604, 112
      %v2637 = vpop.permute.xlu0 %2636
      %2638 = vrot.lane.b32.xlu0 %v2605, 112
      %v2639 = vpop.permute.xlu0 %2638
      %vm2657 = vcmask 1044352
      %2658 = vst.msk [vmem:[#allocation4] sm:$0xf] %vm2657, %v2607
      %2659 = vst.msk [vmem:[#allocation4 + $0x10] sm:$0xf] %vm2657, %v2609
      %2660 = vst.msk [vmem:[#allocation4 + $0x20] sm:$0xf] %vm2657, %v2611
      %2661 = vst.msk [vmem:[#allocation4 + $0x30] sm:$0xf] %vm2657, %v2613
      %2662 = vst.msk [vmem:[#allocation4 + $0x40] sm:$0xf] %vm2657, %v2615
      %2663 = vst.msk [vmem:[#allocation4 + $0x50] sm:$0xf] %vm2657, %v2617
      %2664 = vst.msk [vmem:[#allocation4 + $0x60] sm:$0xf] %vm2657, %v2619
      %2665 = vst.msk [vmem:[#allocation4 + $0x70] sm:$0xf] %vm2657, %v2621
      %2666 = vst.msk [vmem:[#allocation4 + $0x80] sm:$0xf] %vm2657, %v2623
      %2667 = vst.msk [vmem:[#allocation4 + $0x90] sm:$0xf] %vm2657, %v2625
      %2668 = vst.msk [vmem:[#allocation4 + $0xa0] sm:$0xf] %vm2657, %v2627
      %2669 = vst.msk [vmem:[#allocation4 + $0xb0] sm:$0xf] %vm2657, %v2629
      %2670 = vst.msk [vmem:[#allocation4 + $0xc0] sm:$0xf] %vm2657, %v2631
      %2671 = vst.msk [vmem:[#allocation4 + $0xd0] sm:$0xf] %vm2657, %v2633
      %2672 = vst.msk [vmem:[#allocation4 + $0xe0] sm:$0xf] %vm2657, %v2635
      %2673 = vst.msk [vmem:[#allocation4 + $0xf0] sm:$0xf] %vm2657, %v2637
      %2674 = vst.msk [vmem:[#allocation4 + $0x100] sm:$0xf] %vm2657, %v2639
      %v2675 = vld [vmem:[#allocation3 + $0x11] sm:$0xff]
      %v2676 = vld [vmem:[#allocation3 + $0x19] sm:$0xff]
      %v2677 = vld [vmem:[#allocation3 + $0x21] sm:$0xff]
      %v2678 = vld [vmem:[#allocation3 + $0x29] sm:$0xff]
      %v2679 = vld [vmem:[#allocation3 + $0x31] sm:$0xff]
      %v2680 = vld [vmem:[#allocation3 + $0x39] sm:$0xff]
      %v2681 = vld [vmem:[#allocation3 + $0x41] sm:$0xff]
      %v2682 = vld [vmem:[#allocation3 + $0x49] sm:$0xff]
      %v2683 = vld [vmem:[#allocation3 + $0x51] sm:$0xff]
      %v2684 = vld [vmem:[#allocation3 + $0x59] sm:$0xff]
      %v2685 = vld [vmem:[#allocation3 + $0x61] sm:$0xff]
      %v2686 = vld [vmem:[#allocation3 + $0x69] sm:$0xff]
      %v2687 = vld [vmem:[#allocation3 + $0x71] sm:$0xff]
      %v2688 = vld [vmem:[#allocation3 + $0x79] sm:$0xff]
      %v2689 = vld [vmem:[#allocation3 + $0x81] sm:$0xff]
      %v2690 = vld [vmem:[#allocation3 + $0x89] sm:$0xff]
      %v2691 = vld [vmem:[#allocation3 + $0x91] sm:$0xff]
      %v2692 = vpack.c.bf16 %v2676, %v2675
      %v2693 = vpack.c.bf16 %v2678, %v2677
      %v2694 = vpack.c.bf16 %v2680, %v2679
      %v2695 = vpack.c.bf16 %v2682, %v2681
      %v2696 = vpack.c.bf16 %v2684, %v2683
      %v2697 = vpack.c.bf16 %v2686, %v2685
      %v2698 = vpack.c.bf16 %v2688, %v2687
      %v2699 = vpack.c.bf16 %v2690, %v2689
      %v2700 = vpack.c.bf16 %v2691, %v2691
      %v2710 = vunpack.c.l.b16 %v2692
      %v2711 = vunpack.c.h.b16 %v2692
      %v2712 = vunpack.c.l.b16 %v2693
      %v2713 = vunpack.c.h.b16 %v2693
      %v2714 = vunpack.c.l.b16 %v2694
      %v2715 = vunpack.c.h.b16 %v2694
      %v2716 = vunpack.c.l.b16 %v2695
      %v2717 = vunpack.c.h.b16 %v2695
      %v2718 = vunpack.c.l.b16 %v2696
      %v2719 = vunpack.c.h.b16 %v2696
      %v2720 = vunpack.c.l.b16 %v2697
      %v2721 = vunpack.c.h.b16 %v2697
      %v2722 = vunpack.c.l.b16 %v2698
      %v2723 = vunpack.c.h.b16 %v2698
      %v2724 = vunpack.c.l.b16 %v2699
      %v2725 = vunpack.c.h.b16 %v2699
      %v2726 = vunpack.c.l.b16 %v2700
      %v2727 = vpack.c.b16 %v2710, %v2710
      %v2728 = vpack.c.b16 %v2711, %v2711
      %v2729 = vpack.c.b16 %v2712, %v2712
      %v2730 = vpack.c.b16 %v2713, %v2713
      %v2731 = vpack.c.b16 %v2714, %v2714
      %v2732 = vpack.c.b16 %v2715, %v2715
      %v2733 = vpack.c.b16 %v2716, %v2716
      %v2734 = vpack.c.b16 %v2717, %v2717
      %v2735 = vpack.c.b16 %v2718, %v2718
      %v2736 = vpack.c.b16 %v2719, %v2719
      %v2737 = vpack.c.b16 %v2720, %v2720
      %v2738 = vpack.c.b16 %v2721, %v2721
      %v2739 = vpack.c.b16 %v2722, %v2722
      %v2740 = vpack.c.b16 %v2723, %v2723
      %v2741 = vpack.c.b16 %v2724, %v2724
      %v2742 = vpack.c.b16 %v2725, %v2725
      %v2743 = vpack.c.b16 %v2726, %v2726
      %2761 = vst.msk [vmem:[#allocation4 + $0x4] sm:$0xf] %vm1691, %v2727
      %2762 = vst.msk [vmem:[#allocation4 + $0x14] sm:$0xf] %vm1691, %v2728
      %2763 = vst.msk [vmem:[#allocation4 + $0x24] sm:$0xf] %vm1691, %v2729
      %2764 = vst.msk [vmem:[#allocation4 + $0x34] sm:$0xf] %vm1691, %v2730
      %2765 = vst.msk [vmem:[#allocation4 + $0x44] sm:$0xf] %vm1691, %v2731
      %2766 = vst.msk [vmem:[#allocation4 + $0x54] sm:$0xf] %vm1691, %v2732
      %2767 = vst.msk [vmem:[#allocation4 + $0x64] sm:$0xf] %vm1691, %v2733
      %2768 = vst.msk [vmem:[#allocation4 + $0x74] sm:$0xf] %vm1691, %v2734
      %2769 = vst.msk [vmem:[#allocation4 + $0x84] sm:$0xf] %vm1691, %v2735
      %2770 = vst.msk [vmem:[#allocation4 + $0x94] sm:$0xf] %vm1691, %v2736
      %2771 = vst.msk [vmem:[#allocation4 + $0xa4] sm:$0xf] %vm1691, %v2737
      %2772 = vst.msk [vmem:[#allocation4 + $0xb4] sm:$0xf] %vm1691, %v2738
      %2773 = vst.msk [vmem:[#allocation4 + $0xc4] sm:$0xf] %vm1691, %v2739
      %2774 = vst.msk [vmem:[#allocation4 + $0xd4] sm:$0xf] %vm1691, %v2740
      %2775 = vst.msk [vmem:[#allocation4 + $0xe4] sm:$0xf] %vm1691, %v2741
      %2776 = vst.msk [vmem:[#allocation4 + $0xf4] sm:$0xf] %vm1691, %v2742
      %2777 = vst.msk [vmem:[#allocation4 + $0x104] sm:$0xf] %vm1691, %v2743
      %v2778 = vld [vmem:[#allocation3 + $0x12] sm:$0xff]
      %v2779 = vld [vmem:[#allocation3 + $0x1a] sm:$0xff]
      %v2780 = vld [vmem:[#allocation3 + $0x22] sm:$0xff]
      %v2781 = vld [vmem:[#allocation3 + $0x2a] sm:$0xff]
      %v2782 = vld [vmem:[#allocation3 + $0x32] sm:$0xff]
      %v2783 = vld [vmem:[#allocation3 + $0x3a] sm:$0xff]
      %v2784 = vld [vmem:[#allocation3 + $0x42] sm:$0xff]
      %v2785 = vld [vmem:[#allocation3 + $0x4a] sm:$0xff]
      %v2786 = vld [vmem:[#allocation3 + $0x52] sm:$0xff]
      %v2787 = vld [vmem:[#allocation3 + $0x5a] sm:$0xff]
      %v2788 = vld [vmem:[#allocation3 + $0x62] sm:$0xff]
      %v2789 = vld [vmem:[#allocation3 + $0x6a] sm:$0xff]
      %v2790 = vld [vmem:[#allocation3 + $0x72] sm:$0xff]
      %v2791 = vld [vmem:[#allocation3 + $0x7a] sm:$0xff]
      %v2792 = vld [vmem:[#allocation3 + $0x82] sm:$0xff]
      %v2793 = vld [vmem:[#allocation3 + $0x8a] sm:$0xff]
      %v2794 = vld [vmem:[#allocation3 + $0x92] sm:$0xff]
      %v2795 = vpack.c.bf16 %v2779, %v2778
      %v2796 = vpack.c.bf16 %v2781, %v2780
      %v2797 = vpack.c.bf16 %v2783, %v2782
      %v2798 = vpack.c.bf16 %v2785, %v2784
      %v2799 = vpack.c.bf16 %v2787, %v2786
      %v2800 = vpack.c.bf16 %v2789, %v2788
      %v2801 = vpack.c.bf16 %v2791, %v2790
      %v2802 = vpack.c.bf16 %v2793, %v2792
      %v2803 = vpack.c.bf16 %v2794, %v2794
      %v2813 = vunpack.c.l.b16 %v2795
      %v2814 = vunpack.c.h.b16 %v2795
      %v2815 = vunpack.c.l.b16 %v2796
      %v2816 = vunpack.c.h.b16 %v2796
      %v2817 = vunpack.c.l.b16 %v2797
      %v2818 = vunpack.c.h.b16 %v2797
      %v2819 = vunpack.c.l.b16 %v2798
      %v2820 = vunpack.c.h.b16 %v2798
      %v2821 = vunpack.c.l.b16 %v2799
      %v2822 = vunpack.c.h.b16 %v2799
      %v2823 = vunpack.c.l.b16 %v2800
      %v2824 = vunpack.c.h.b16 %v2800
      %v2825 = vunpack.c.l.b16 %v2801
      %v2826 = vunpack.c.h.b16 %v2801
      %v2827 = vunpack.c.l.b16 %v2802
      %v2828 = vunpack.c.h.b16 %v2802
      %v2829 = vunpack.c.l.b16 %v2803
      %v2830 = vpack.c.b16 %v2813, %v2813
      %v2831 = vpack.c.b16 %v2814, %v2814
      %v2832 = vpack.c.b16 %v2815, %v2815
      %v2833 = vpack.c.b16 %v2816, %v2816
      %v2834 = vpack.c.b16 %v2817, %v2817
      %v2835 = vpack.c.b16 %v2818, %v2818
      %v2836 = vpack.c.b16 %v2819, %v2819
      %v2837 = vpack.c.b16 %v2820, %v2820
      %v2838 = vpack.c.b16 %v2821, %v2821
      %v2839 = vpack.c.b16 %v2822, %v2822
      %v2840 = vpack.c.b16 %v2823, %v2823
      %v2841 = vpack.c.b16 %v2824, %v2824
      %v2842 = vpack.c.b16 %v2825, %v2825
      %v2843 = vpack.c.b16 %v2826, %v2826
      %v2844 = vpack.c.b16 %v2827, %v2827
      %v2845 = vpack.c.b16 %v2828, %v2828
      %v2846 = vpack.c.b16 %v2829, %v2829
      %2847 = vrot.lane.b32.xlu0 %v2830, 16
      %v2848 = vpop.permute.xlu0 %2847
      %2849 = vrot.lane.b32.xlu0 %v2831, 16
      %v2850 = vpop.permute.xlu0 %2849
      %2851 = vrot.lane.b32.xlu0 %v2832, 16
      %v2852 = vpop.permute.xlu0 %2851
      %2853 = vrot.lane.b32.xlu0 %v2833, 16
      %v2854 = vpop.permute.xlu0 %2853
      %2855 = vrot.lane.b32.xlu0 %v2834, 16
      %v2856 = vpop.permute.xlu0 %2855
      %2857 = vrot.lane.b32.xlu0 %v2835, 16
      %v2858 = vpop.permute.xlu0 %2857
      %2859 = vrot.lane.b32.xlu0 %v2836, 16
      %v2860 = vpop.permute.xlu0 %2859
      %2861 = vrot.lane.b32.xlu0 %v2837, 16
      %v2862 = vpop.permute.xlu0 %2861
      %2863 = vrot.lane.b32.xlu0 %v2838, 16
      %v2864 = vpop.permute.xlu0 %2863
      %2865 = vrot.lane.b32.xlu0 %v2839, 16
      %v2866 = vpop.permute.xlu0 %2865
      %2867 = vrot.lane.b32.xlu0 %v2840, 16
      %v2868 = vpop.permute.xlu0 %2867
      %2869 = vrot.lane.b32.xlu0 %v2841, 16
      %v2870 = vpop.permute.xlu0 %2869
      %2871 = vrot.lane.b32.xlu0 %v2842, 16
      %v2872 = vpop.permute.xlu0 %2871
      %2873 = vrot.lane.b32.xlu0 %v2843, 16
      %v2874 = vpop.permute.xlu0 %2873
      %2875 = vrot.lane.b32.xlu0 %v2844, 16
      %v2876 = vpop.permute.xlu0 %2875
      %2877 = vrot.lane.b32.xlu0 %v2845, 16
      %v2878 = vpop.permute.xlu0 %2877
      %2879 = vrot.lane.b32.xlu0 %v2846, 16
      %v2880 = vpop.permute.xlu0 %2879
      %2898 = vst.msk [vmem:[#allocation4 + $0x4] sm:$0xf] %vm1829, %v2848
      %2899 = vst.msk [vmem:[#allocation4 + $0x14] sm:$0xf] %vm1829, %v2850
      %2900 = vst.msk [vmem:[#allocation4 + $0x24] sm:$0xf] %vm1829, %v2852
      %2901 = vst.msk [vmem:[#allocation4 + $0x34] sm:$0xf] %vm1829, %v2854
      %2902 = vst.msk [vmem:[#allocation4 + $0x44] sm:$0xf] %vm1829, %v2856
      %2903 = vst.msk [vmem:[#allocation4 + $0x54] sm:$0xf] %vm1829, %v2858
      %2904 = vst.msk [vmem:[#allocation4 + $0x64] sm:$0xf] %vm1829, %v2860
      %2905 = vst.msk [vmem:[#allocation4 + $0x74] sm:$0xf] %vm1829, %v2862
      %2906 = vst.msk [vmem:[#allocation4 + $0x84] sm:$0xf] %vm1829, %v2864
      %2907 = vst.msk [vmem:[#allocation4 + $0x94] sm:$0xf] %vm1829, %v2866
      %2908 = vst.msk [vmem:[#allocation4 + $0xa4] sm:$0xf] %vm1829, %v2868
      %2909 = vst.msk [vmem:[#allocation4 + $0xb4] sm:$0xf] %vm1829, %v2870
      %2910 = vst.msk [vmem:[#allocation4 + $0xc4] sm:$0xf] %vm1829, %v2872
      %2911 = vst.msk [vmem:[#allocation4 + $0xd4] sm:$0xf] %vm1829, %v2874
      %2912 = vst.msk [vmem:[#allocation4 + $0xe4] sm:$0xf] %vm1829, %v2876
      %2913 = vst.msk [vmem:[#allocation4 + $0xf4] sm:$0xf] %vm1829, %v2878
      %2914 = vst.msk [vmem:[#allocation4 + $0x104] sm:$0xf] %vm1829, %v2880
      %v2915 = vld [vmem:[#allocation3 + $0x1c] sm:$0xff]
      %v2916 = vld [vmem:[#allocation3 + $0x24] sm:$0xff]
      %v2917 = vld [vmem:[#allocation3 + $0x2c] sm:$0xff]
      %v2918 = vld [vmem:[#allocation3 + $0x34] sm:$0xff]
      %v2919 = vld [vmem:[#allocation3 + $0x3c] sm:$0xff]
      %v2920 = vld [vmem:[#allocation3 + $0x44] sm:$0xff]
      %v2921 = vld [vmem:[#allocation3 + $0x4c] sm:$0xff]
      %v2922 = vld [vmem:[#allocation3 + $0x54] sm:$0xff]
      %v2923 = vld [vmem:[#allocation3 + $0x5c] sm:$0xff]
      %v2924 = vld [vmem:[#allocation3 + $0x64] sm:$0xff]
      %v2925 = vld [vmem:[#allocation3 + $0x6c] sm:$0xff]
      %v2926 = vld [vmem:[#allocation3 + $0x74] sm:$0xff]
      %v2927 = vld [vmem:[#allocation3 + $0x7c] sm:$0xff]
      %v2928 = vld [vmem:[#allocation3 + $0x84] sm:$0xff]
      %v2929 = vld [vmem:[#allocation3 + $0x8c] sm:$0xff]
      %v2930 = vld [vmem:[#allocation3 + $0x94] sm:$0xff]
      %v2931 = vld [vmem:[#allocation3 + $0x9c] sm:$0xff]
      %v2932 = vpack.c.bf16 %v2916, %v2915
      %v2933 = vpack.c.bf16 %v2918, %v2917
      %v2934 = vpack.c.bf16 %v2920, %v2919
      %v2935 = vpack.c.bf16 %v2922, %v2921
      %v2936 = vpack.c.bf16 %v2924, %v2923
      %v2937 = vpack.c.bf16 %v2926, %v2925
      %v2938 = vpack.c.bf16 %v2928, %v2927
      %v2939 = vpack.c.bf16 %v2930, %v2929
      %v2940 = vpack.c.bf16 %v2931, %v2931
      %v2950 = vunpack.c.l.b16 %v2932
      %v2951 = vunpack.c.h.b16 %v2932
      %v2952 = vunpack.c.l.b16 %v2933
      %v2953 = vunpack.c.h.b16 %v2933
      %v2954 = vunpack.c.l.b16 %v2934
      %v2955 = vunpack.c.h.b16 %v2934
      %v2956 = vunpack.c.l.b16 %v2935
      %v2957 = vunpack.c.h.b16 %v2935
      %v2958 = vunpack.c.l.b16 %v2936
      %v2959 = vunpack.c.h.b16 %v2936
      %v2960 = vunpack.c.l.b16 %v2937
      %v2961 = vunpack.c.h.b16 %v2937
      %v2962 = vunpack.c.l.b16 %v2938
      %v2963 = vunpack.c.h.b16 %v2938
      %v2964 = vunpack.c.l.b16 %v2939
      %v2965 = vunpack.c.h.b16 %v2939
      %v2966 = vunpack.c.l.b16 %v2940
      %v2967 = vpack.c.b16 %v2950, %v2950
      %v2968 = vpack.c.b16 %v2951, %v2951
      %v2969 = vpack.c.b16 %v2952, %v2952
      %v2970 = vpack.c.b16 %v2953, %v2953
      %v2971 = vpack.c.b16 %v2954, %v2954
      %v2972 = vpack.c.b16 %v2955, %v2955
      %v2973 = vpack.c.b16 %v2956, %v2956
      %v2974 = vpack.c.b16 %v2957, %v2957
      %v2975 = vpack.c.b16 %v2958, %v2958
      %v2976 = vpack.c.b16 %v2959, %v2959
      %v2977 = vpack.c.b16 %v2960, %v2960
      %v2978 = vpack.c.b16 %v2961, %v2961
      %v2979 = vpack.c.b16 %v2962, %v2962
      %v2980 = vpack.c.b16 %v2963, %v2963
      %v2981 = vpack.c.b16 %v2964, %v2964
      %v2982 = vpack.c.b16 %v2965, %v2965
      %v2983 = vpack.c.b16 %v2966, %v2966
      %2984 = vrot.lane.b32.xlu0 %v2967, 32
      %v2985 = vpop.permute.xlu0 %2984
      %2986 = vrot.lane.b32.xlu0 %v2968, 32
      %v2987 = vpop.permute.xlu0 %2986
      %2988 = vrot.lane.b32.xlu0 %v2969, 32
      %v2989 = vpop.permute.xlu0 %2988
      %2990 = vrot.lane.b32.xlu0 %v2970, 32
      %v2991 = vpop.permute.xlu0 %2990
      %2992 = vrot.lane.b32.xlu0 %v2971, 32
      %v2993 = vpop.permute.xlu0 %2992
      %2994 = vrot.lane.b32.xlu0 %v2972, 32
      %v2995 = vpop.permute.xlu0 %2994
      %2996 = vrot.lane.b32.xlu0 %v2973, 32
      %v2997 = vpop.permute.xlu0 %2996
      %2998 = vrot.lane.b32.xlu0 %v2974, 32
      %v2999 = vpop.permute.xlu0 %2998
      %3000 = vrot.lane.b32.xlu0 %v2975, 32
      %v3001 = vpop.permute.xlu0 %3000
      %3002 = vrot.lane.b32.xlu0 %v2976, 32
      %v3003 = vpop.permute.xlu0 %3002
      %3004 = vrot.lane.b32.xlu0 %v2977, 32
      %v3005 = vpop.permute.xlu0 %3004
      %3006 = vrot.lane.b32.xlu0 %v2978, 32
      %v3007 = vpop.permute.xlu0 %3006
      %3008 = vrot.lane.b32.xlu0 %v2979, 32
      %v3009 = vpop.permute.xlu0 %3008
      %3010 = vrot.lane.b32.xlu0 %v2980, 32
      %v3011 = vpop.permute.xlu0 %3010
      %3012 = vrot.lane.b32.xlu0 %v2981, 32
      %v3013 = vpop.permute.xlu0 %3012
      %3014 = vrot.lane.b32.xlu0 %v2982, 32
      %v3015 = vpop.permute.xlu0 %3014
      %3016 = vrot.lane.b32.xlu0 %v2983, 32
      %v3017 = vpop.permute.xlu0 %3016
      %3035 = vst.msk [vmem:[#allocation4 + $0x4] sm:$0xf] %vm1967, %v2985
      %3036 = vst.msk [vmem:[#allocation4 + $0x14] sm:$0xf] %vm1967, %v2987
      %3037 = vst.msk [vmem:[#allocation4 + $0x24] sm:$0xf] %vm1967, %v2989
      %3038 = vst.msk [vmem:[#allocation4 + $0x34] sm:$0xf] %vm1967, %v2991
      %3039 = vst.msk [vmem:[#allocation4 + $0x44] sm:$0xf] %vm1967, %v2993
      %3040 = vst.msk [vmem:[#allocation4 + $0x54] sm:$0xf] %vm1967, %v2995
      %3041 = vst.msk [vmem:[#allocation4 + $0x64] sm:$0xf] %vm1967, %v2997
      %3042 = vst.msk [vmem:[#allocation4 + $0x74] sm:$0xf] %vm1967, %v2999
      %3043 = vst.msk [vmem:[#allocation4 + $0x84] sm:$0xf] %vm1967, %v3001
      %3044 = vst.msk [vmem:[#allocation4 + $0x94] sm:$0xf] %vm1967, %v3003
      %3045 = vst.msk [vmem:[#allocation4 + $0xa4] sm:$0xf] %vm1967, %v3005
      %3046 = vst.msk [vmem:[#allocation4 + $0xb4] sm:$0xf] %vm1967, %v3007
      %3047 = vst.msk [vmem:[#allocation4 + $0xc4] sm:$0xf] %vm1967, %v3009
      %3048 = vst.msk [vmem:[#allocation4 + $0xd4] sm:$0xf] %vm1967, %v3011
      %3049 = vst.msk [vmem:[#allocation4 + $0xe4] sm:$0xf] %vm1967, %v3013
      %3050 = vst.msk [vmem:[#allocation4 + $0xf4] sm:$0xf] %vm1967, %v3015
      %3051 = vst.msk [vmem:[#allocation4 + $0x104] sm:$0xf] %vm1967, %v3017
      %v3052 = vld [vmem:[#allocation3 + $0x1d] sm:$0xff]
      %v3053 = vld [vmem:[#allocation3 + $0x25] sm:$0xff]
      %v3054 = vld [vmem:[#allocation3 + $0x2d] sm:$0xff]
      %v3055 = vld [vmem:[#allocation3 + $0x35] sm:$0xff]
      %v3056 = vld [vmem:[#allocation3 + $0x3d] sm:$0xff]
      %v3057 = vld [vmem:[#allocation3 + $0x45] sm:$0xff]
      %v3058 = vld [vmem:[#allocation3 + $0x4d] sm:$0xff]
      %v3059 = vld [vmem:[#allocation3 + $0x55] sm:$0xff]
      %v3060 = vld [vmem:[#allocation3 + $0x5d] sm:$0xff]
      %v3061 = vld [vmem:[#allocation3 + $0x65] sm:$0xff]
      %v3062 = vld [vmem:[#allocation3 + $0x6d] sm:$0xff]
      %v3063 = vld [vmem:[#allocation3 + $0x75] sm:$0xff]
      %v3064 = vld [vmem:[#allocation3 + $0x7d] sm:$0xff]
      %v3065 = vld [vmem:[#allocation3 + $0x85] sm:$0xff]
      %v3066 = vld [vmem:[#allocation3 + $0x8d] sm:$0xff]
      %v3067 = vld [vmem:[#allocation3 + $0x95] sm:$0xff]
      %v3068 = vld [vmem:[#allocation3 + $0x9d] sm:$0xff]
      %v3069 = vpack.c.bf16 %v3053, %v3052
      %v3070 = vpack.c.bf16 %v3055, %v3054
      %v3071 = vpack.c.bf16 %v3057, %v3056
      %v3072 = vpack.c.bf16 %v3059, %v3058
      %v3073 = vpack.c.bf16 %v3061, %v3060
      %v3074 = vpack.c.bf16 %v3063, %v3062
      %v3075 = vpack.c.bf16 %v3065, %v3064
      %v3076 = vpack.c.bf16 %v3067, %v3066
      %v3077 = vpack.c.bf16 %v3068, %v3068
      %v3087 = vunpack.c.l.b16 %v3069
      %v3088 = vunpack.c.h.b16 %v3069
      %v3089 = vunpack.c.l.b16 %v3070
      %v3090 = vunpack.c.h.b16 %v3070
      %v3091 = vunpack.c.l.b16 %v3071
      %v3092 = vunpack.c.h.b16 %v3071
      %v3093 = vunpack.c.l.b16 %v3072
      %v3094 = vunpack.c.h.b16 %v3072
      %v3095 = vunpack.c.l.b16 %v3073
      %v3096 = vunpack.c.h.b16 %v3073
      %v3097 = vunpack.c.l.b16 %v3074
      %v3098 = vunpack.c.h.b16 %v3074
      %v3099 = vunpack.c.l.b16 %v3075
      %v3100 = vunpack.c.h.b16 %v3075
      %v3101 = vunpack.c.l.b16 %v3076
      %v3102 = vunpack.c.h.b16 %v3076
      %v3103 = vunpack.c.l.b16 %v3077
      %v3104 = vpack.c.b16 %v3087, %v3087
      %v3105 = vpack.c.b16 %v3088, %v3088
      %v3106 = vpack.c.b16 %v3089, %v3089
      %v3107 = vpack.c.b16 %v3090, %v3090
      %v3108 = vpack.c.b16 %v3091, %v3091
      %v3109 = vpack.c.b16 %v3092, %v3092
      %v3110 = vpack.c.b16 %v3093, %v3093
      %v3111 = vpack.c.b16 %v3094, %v3094
      %v3112 = vpack.c.b16 %v3095, %v3095
      %v3113 = vpack.c.b16 %v3096, %v3096
      %v3114 = vpack.c.b16 %v3097, %v3097
      %v3115 = vpack.c.b16 %v3098, %v3098
      %v3116 = vpack.c.b16 %v3099, %v3099
      %v3117 = vpack.c.b16 %v3100, %v3100
      %v3118 = vpack.c.b16 %v3101, %v3101
      %v3119 = vpack.c.b16 %v3102, %v3102
      %v3120 = vpack.c.b16 %v3103, %v3103
      %3121 = vrot.lane.b32.xlu0 %v3104, 48
      %v3122 = vpop.permute.xlu0 %3121
      %3123 = vrot.lane.b32.xlu0 %v3105, 48
      %v3124 = vpop.permute.xlu0 %3123
      %3125 = vrot.lane.b32.xlu0 %v3106, 48
      %v3126 = vpop.permute.xlu0 %3125
      %3127 = vrot.lane.b32.xlu0 %v3107, 48
      %v3128 = vpop.permute.xlu0 %3127
      %3129 = vrot.lane.b32.xlu0 %v3108, 48
      %v3130 = vpop.permute.xlu0 %3129
      %3131 = vrot.lane.b32.xlu0 %v3109, 48
      %v3132 = vpop.permute.xlu0 %3131
      %3133 = vrot.lane.b32.xlu0 %v3110, 48
      %v3134 = vpop.permute.xlu0 %3133
      %3135 = vrot.lane.b32.xlu0 %v3111, 48
      %v3136 = vpop.permute.xlu0 %3135
      %3137 = vrot.lane.b32.xlu0 %v3112, 48
      %v3138 = vpop.permute.xlu0 %3137
      %3139 = vrot.lane.b32.xlu0 %v3113, 48
      %v3140 = vpop.permute.xlu0 %3139
      %3141 = vrot.lane.b32.xlu0 %v3114, 48
      %v3142 = vpop.permute.xlu0 %3141
      %3143 = vrot.lane.b32.xlu0 %v3115, 48
      %v3144 = vpop.permute.xlu0 %3143
      %3145 = vrot.lane.b32.xlu0 %v3116, 48
      %v3146 = vpop.permute.xlu0 %3145
      %3147 = vrot.lane.b32.xlu0 %v3117, 48
      %v3148 = vpop.permute.xlu0 %3147
      %3149 = vrot.lane.b32.xlu0 %v3118, 48
      %v3150 = vpop.permute.xlu0 %3149
      %3151 = vrot.lane.b32.xlu0 %v3119, 48
      %v3152 = vpop.permute.xlu0 %3151
      %3153 = vrot.lane.b32.xlu0 %v3120, 48
      %v3154 = vpop.permute.xlu0 %3153
      %3172 = vst.msk [vmem:[#allocation4 + $0x4] sm:$0xf] %vm2105, %v3122
      %3173 = vst.msk [vmem:[#allocation4 + $0x14] sm:$0xf] %vm2105, %v3124
      %3174 = vst.msk [vmem:[#allocation4 + $0x24] sm:$0xf] %vm2105, %v3126
      %3175 = vst.msk [vmem:[#allocation4 + $0x34] sm:$0xf] %vm2105, %v3128
      %3176 = vst.msk [vmem:[#allocation4 + $0x44] sm:$0xf] %vm2105, %v3130
      %3177 = vst.msk [vmem:[#allocation4 + $0x54] sm:$0xf] %vm2105, %v3132
      %3178 = vst.msk [vmem:[#allocation4 + $0x64] sm:$0xf] %vm2105, %v3134
      %3179 = vst.msk [vmem:[#allocation4 + $0x74] sm:$0xf] %vm2105, %v3136
      %3180 = vst.msk [vmem:[#allocation4 + $0x84] sm:$0xf] %vm2105, %v3138
      %3181 = vst.msk [vmem:[#allocation4 + $0x94] sm:$0xf] %vm2105, %v3140
      %3182 = vst.msk [vmem:[#allocation4 + $0xa4] sm:$0xf] %vm2105, %v3142
      %3183 = vst.msk [vmem:[#allocation4 + $0xb4] sm:$0xf] %vm2105, %v3144
      %3184 = vst.msk [vmem:[#allocation4 + $0xc4] sm:$0xf] %vm2105, %v3146
      %3185 = vst.msk [vmem:[#allocation4 + $0xd4] sm:$0xf] %vm2105, %v3148
      %3186 = vst.msk [vmem:[#allocation4 + $0xe4] sm:$0xf] %vm2105, %v3150
      %3187 = vst.msk [vmem:[#allocation4 + $0xf4] sm:$0xf] %vm2105, %v3152
      %3188 = vst.msk [vmem:[#allocation4 + $0x104] sm:$0xf] %vm2105, %v3154
      %v3189 = vld [vmem:[#allocation3 + $0x1e] sm:$0xff]
      %v3190 = vld [vmem:[#allocation3 + $0x26] sm:$0xff]
      %v3191 = vld [vmem:[#allocation3 + $0x2e] sm:$0xff]
      %v3192 = vld [vmem:[#allocation3 + $0x36] sm:$0xff]
      %v3193 = vld [vmem:[#allocation3 + $0x3e] sm:$0xff]
      %v3194 = vld [vmem:[#allocation3 + $0x46] sm:$0xff]
      %v3195 = vld [vmem:[#allocation3 + $0x4e] sm:$0xff]
      %v3196 = vld [vmem:[#allocation3 + $0x56] sm:$0xff]
      %v3197 = vld [vmem:[#allocation3 + $0x5e] sm:$0xff]
      %v3198 = vld [vmem:[#allocation3 + $0x66] sm:$0xff]
      %v3199 = vld [vmem:[#allocation3 + $0x6e] sm:$0xff]
      %v3200 = vld [vmem:[#allocation3 + $0x76] sm:$0xff]
      %v3201 = vld [vmem:[#allocation3 + $0x7e] sm:$0xff]
      %v3202 = vld [vmem:[#allocation3 + $0x86] sm:$0xff]
      %v3203 = vld [vmem:[#allocation3 + $0x8e] sm:$0xff]
      %v3204 = vld [vmem:[#allocation3 + $0x96] sm:$0xff]
      %v3205 = vld [vmem:[#allocation3 + $0x9e] sm:$0xff]
      %v3206 = vpack.c.bf16 %v3190, %v3189
      %v3207 = vpack.c.bf16 %v3192, %v3191
      %v3208 = vpack.c.bf16 %v3194, %v3193
      %v3209 = vpack.c.bf16 %v3196, %v3195
      %v3210 = vpack.c.bf16 %v3198, %v3197
      %v3211 = vpack.c.bf16 %v3200, %v3199
      %v3212 = vpack.c.bf16 %v3202, %v3201
      %v3213 = vpack.c.bf16 %v3204, %v3203
      %v3214 = vpack.c.bf16 %v3205, %v3205
      %v3224 = vunpack.c.l.b16 %v3206
      %v3225 = vunpack.c.h.b16 %v3206
      %v3226 = vunpack.c.l.b16 %v3207
      %v3227 = vunpack.c.h.b16 %v3207
      %v3228 = vunpack.c.l.b16 %v3208
      %v3229 = vunpack.c.h.b16 %v3208
      %v3230 = vunpack.c.l.b16 %v3209
      %v3231 = vunpack.c.h.b16 %v3209
      %v3232 = vunpack.c.l.b16 %v3210
      %v3233 = vunpack.c.h.b16 %v3210
      %v3234 = vunpack.c.l.b16 %v3211
      %v3235 = vunpack.c.h.b16 %v3211
      %v3236 = vunpack.c.l.b16 %v3212
      %v3237 = vunpack.c.h.b16 %v3212
      %v3238 = vunpack.c.l.b16 %v3213
      %v3239 = vunpack.c.h.b16 %v3213
      %v3240 = vunpack.c.l.b16 %v3214
      %v3241 = vpack.c.b16 %v3224, %v3224
      %v3242 = vpack.c.b16 %v3225, %v3225
      %v3243 = vpack.c.b16 %v3226, %v3226
      %v3244 = vpack.c.b16 %v3227, %v3227
      %v3245 = vpack.c.b16 %v3228, %v3228
      %v3246 = vpack.c.b16 %v3229, %v3229
      %v3247 = vpack.c.b16 %v3230, %v3230
      %v3248 = vpack.c.b16 %v3231, %v3231
      %v3249 = vpack.c.b16 %v3232, %v3232
      %v3250 = vpack.c.b16 %v3233, %v3233
      %v3251 = vpack.c.b16 %v3234, %v3234
      %v3252 = vpack.c.b16 %v3235, %v3235
      %v3253 = vpack.c.b16 %v3236, %v3236
      %v3254 = vpack.c.b16 %v3237, %v3237
      %v3255 = vpack.c.b16 %v3238, %v3238
      %v3256 = vpack.c.b16 %v3239, %v3239
      %v3257 = vpack.c.b16 %v3240, %v3240
      %3258 = vrot.lane.b32.xlu0 %v3241, 64
      %v3259 = vpop.permute.xlu0 %3258
      %3260 = vrot.lane.b32.xlu0 %v3242, 64
      %v3261 = vpop.permute.xlu0 %3260
      %3262 = vrot.lane.b32.xlu0 %v3243, 64
      %v3263 = vpop.permute.xlu0 %3262
      %3264 = vrot.lane.b32.xlu0 %v3244, 64
      %v3265 = vpop.permute.xlu0 %3264
      %3266 = vrot.lane.b32.xlu0 %v3245, 64
      %v3267 = vpop.permute.xlu0 %3266
      %3268 = vrot.lane.b32.xlu0 %v3246, 64
      %v3269 = vpop.permute.xlu0 %3268
      %3270 = vrot.lane.b32.xlu0 %v3247, 64
      %v3271 = vpop.permute.xlu0 %3270
      %3272 = vrot.lane.b32.xlu0 %v3248, 64
      %v3273 = vpop.permute.xlu0 %3272
      %3274 = vrot.lane.b32.xlu0 %v3249, 64
      %v3275 = vpop.permute.xlu0 %3274
      %3276 = vrot.lane.b32.xlu0 %v3250, 64
      %v3277 = vpop.permute.xlu0 %3276
      %3278 = vrot.lane.b32.xlu0 %v3251, 64
      %v3279 = vpop.permute.xlu0 %3278
      %3280 = vrot.lane.b32.xlu0 %v3252, 64
      %v3281 = vpop.permute.xlu0 %3280
      %3282 = vrot.lane.b32.xlu0 %v3253, 64
      %v3283 = vpop.permute.xlu0 %3282
      %3284 = vrot.lane.b32.xlu0 %v3254, 64
      %v3285 = vpop.permute.xlu0 %3284
      %3286 = vrot.lane.b32.xlu0 %v3255, 64
      %v3287 = vpop.permute.xlu0 %3286
      %3288 = vrot.lane.b32.xlu0 %v3256, 64
      %v3289 = vpop.permute.xlu0 %3288
      %3290 = vrot.lane.b32.xlu0 %v3257, 64
      %v3291 = vpop.permute.xlu0 %3290
      %3309 = vst.msk [vmem:[#allocation4 + $0x4] sm:$0xf] %vm2243, %v3259
      %3310 = vst.msk [vmem:[#allocation4 + $0x14] sm:$0xf] %vm2243, %v3261
      %3311 = vst.msk [vmem:[#allocation4 + $0x24] sm:$0xf] %vm2243, %v3263
      %3312 = vst.msk [vmem:[#allocation4 + $0x34] sm:$0xf] %vm2243, %v3265
      %3313 = vst.msk [vmem:[#allocation4 + $0x44] sm:$0xf] %vm2243, %v3267
      %3314 = vst.msk [vmem:[#allocation4 + $0x54] sm:$0xf] %vm2243, %v3269
      %3315 = vst.msk [vmem:[#allocation4 + $0x64] sm:$0xf] %vm2243, %v3271
      %3316 = vst.msk [vmem:[#allocation4 + $0x74] sm:$0xf] %vm2243, %v3273
      %3317 = vst.msk [vmem:[#allocation4 + $0x84] sm:$0xf] %vm2243, %v3275
      %3318 = vst.msk [vmem:[#allocation4 + $0x94] sm:$0xf] %vm2243, %v3277
      %3319 = vst.msk [vmem:[#allocation4 + $0xa4] sm:$0xf] %vm2243, %v3279
      %3320 = vst.msk [vmem:[#allocation4 + $0xb4] sm:$0xf] %vm2243, %v3281
      %3321 = vst.msk [vmem:[#allocation4 + $0xc4] sm:$0xf] %vm2243, %v3283
      %3322 = vst.msk [vmem:[#allocation4 + $0xd4] sm:$0xf] %vm2243, %v3285
      %3323 = vst.msk [vmem:[#allocation4 + $0xe4] sm:$0xf] %vm2243, %v3287
      %3324 = vst.msk [vmem:[#allocation4 + $0xf4] sm:$0xf] %vm2243, %v3289
      %3325 = vst.msk [vmem:[#allocation4 + $0x104] sm:$0xf] %vm2243, %v3291
      %v3326 = vld [vmem:[#allocation3 + $0x1f] sm:$0xff]
      %v3327 = vld [vmem:[#allocation3 + $0x27] sm:$0xff]
      %v3328 = vld [vmem:[#allocation3 + $0x2f] sm:$0xff]
      %v3329 = vld [vmem:[#allocation3 + $0x37] sm:$0xff]
      %v3330 = vld [vmem:[#allocation3 + $0x3f] sm:$0xff]
      %v3331 = vld [vmem:[#allocation3 + $0x47] sm:$0xff]
      %v3332 = vld [vmem:[#allocation3 + $0x4f] sm:$0xff]
      %v3333 = vld [vmem:[#allocation3 + $0x57] sm:$0xff]
      %v3334 = vld [vmem:[#allocation3 + $0x5f] sm:$0xff]
      %v3335 = vld [vmem:[#allocation3 + $0x67] sm:$0xff]
      %v3336 = vld [vmem:[#allocation3 + $0x6f] sm:$0xff]
      %v3337 = vld [vmem:[#allocation3 + $0x77] sm:$0xff]
      %v3338 = vld [vmem:[#allocation3 + $0x7f] sm:$0xff]
      %v3339 = vld [vmem:[#allocation3 + $0x87] sm:$0xff]
      %v3340 = vld [vmem:[#allocation3 + $0x8f] sm:$0xff]
      %v3341 = vld [vmem:[#allocation3 + $0x97] sm:$0xff]
      %v3342 = vld [vmem:[#allocation3 + $0x9f] sm:$0xff]
      %v3343 = vpack.c.bf16 %v3327, %v3326
      %v3344 = vpack.c.bf16 %v3329, %v3328
      %v3345 = vpack.c.bf16 %v3331, %v3330
      %v3346 = vpack.c.bf16 %v3333, %v3332
      %v3347 = vpack.c.bf16 %v3335, %v3334
      %v3348 = vpack.c.bf16 %v3337, %v3336
      %v3349 = vpack.c.bf16 %v3339, %v3338
      %v3350 = vpack.c.bf16 %v3341, %v3340
      %v3351 = vpack.c.bf16 %v3342, %v3342
      %v3361 = vunpack.c.l.b16 %v3343
      %v3362 = vunpack.c.h.b16 %v3343
      %v3363 = vunpack.c.l.b16 %v3344
      %v3364 = vunpack.c.h.b16 %v3344
      %v3365 = vunpack.c.l.b16 %v3345
      %v3366 = vunpack.c.h.b16 %v3345
      %v3367 = vunpack.c.l.b16 %v3346
      %v3368 = vunpack.c.h.b16 %v3346
      %v3369 = vunpack.c.l.b16 %v3347
      %v3370 = vunpack.c.h.b16 %v3347
      %v3371 = vunpack.c.l.b16 %v3348
      %v3372 = vunpack.c.h.b16 %v3348
      %v3373 = vunpack.c.l.b16 %v3349
      %v3374 = vunpack.c.h.b16 %v3349
      %v3375 = vunpack.c.l.b16 %v3350
      %v3376 = vunpack.c.h.b16 %v3350
      %v3377 = vunpack.c.l.b16 %v3351
      %v3378 = vpack.c.b16 %v3361, %v3361
      %v3379 = vpack.c.b16 %v3362, %v3362
      %v3380 = vpack.c.b16 %v3363, %v3363
      %v3381 = vpack.c.b16 %v3364, %v3364
      %v3382 = vpack.c.b16 %v3365, %v3365
      %v3383 = vpack.c.b16 %v3366, %v3366
      %v3384 = vpack.c.b16 %v3367, %v3367
      %v3385 = vpack.c.b16 %v3368, %v3368
      %v3386 = vpack.c.b16 %v3369, %v3369
      %v3387 = vpack.c.b16 %v3370, %v3370
      %v3388 = vpack.c.b16 %v3371, %v3371
      %v3389 = vpack.c.b16 %v3372, %v3372
      %v3390 = vpack.c.b16 %v3373, %v3373
      %v3391 = vpack.c.b16 %v3374, %v3374
      %v3392 = vpack.c.b16 %v3375, %v3375
      %v3393 = vpack.c.b16 %v3376, %v3376
      %v3394 = vpack.c.b16 %v3377, %v3377
      %3395 = vrot.lane.b32.xlu0 %v3378, 80
      %v3396 = vpop.permute.xlu0 %3395
      %3397 = vrot.lane.b32.xlu0 %v3379, 80
      %v3398 = vpop.permute.xlu0 %3397
      %3399 = vrot.lane.b32.xlu0 %v3380, 80
      %v3400 = vpop.permute.xlu0 %3399
      %3401 = vrot.lane.b32.xlu0 %v3381, 80
      %v3402 = vpop.permute.xlu0 %3401
      %3403 = vrot.lane.b32.xlu0 %v3382, 80
      %v3404 = vpop.permute.xlu0 %3403
      %3405 = vrot.lane.b32.xlu0 %v3383, 80
      %v3406 = vpop.permute.xlu0 %3405
      %3407 = vrot.lane.b32.xlu0 %v3384, 80
      %v3408 = vpop.permute.xlu0 %3407
      %3409 = vrot.lane.b32.xlu0 %v3385, 80
      %v3410 = vpop.permute.xlu0 %3409
      %3411 = vrot.lane.b32.xlu0 %v3386, 80
      %v3412 = vpop.permute.xlu0 %3411
      %3413 = vrot.lane.b32.xlu0 %v3387, 80
      %v3414 = vpop.permute.xlu0 %3413
      %3415 = vrot.lane.b32.xlu0 %v3388, 80
      %v3416 = vpop.permute.xlu0 %3415
      %3417 = vrot.lane.b32.xlu0 %v3389, 80
      %v3418 = vpop.permute.xlu0 %3417
      %3419 = vrot.lane.b32.xlu0 %v3390, 80
      %v3420 = vpop.permute.xlu0 %3419
      %3421 = vrot.lane.b32.xlu0 %v3391, 80
      %v3422 = vpop.permute.xlu0 %3421
      %3423 = vrot.lane.b32.xlu0 %v3392, 80
      %v3424 = vpop.permute.xlu0 %3423
      %3425 = vrot.lane.b32.xlu0 %v3393, 80
      %v3426 = vpop.permute.xlu0 %3425
      %3427 = vrot.lane.b32.xlu0 %v3394, 80
      %v3428 = vpop.permute.xlu0 %3427
      %3446 = vst.msk [vmem:[#allocation4 + $0x4] sm:$0xf] %vm2381, %v3396
      %3447 = vst.msk [vmem:[#allocation4 + $0x14] sm:$0xf] %vm2381, %v3398
      %3448 = vst.msk [vmem:[#allocation4 + $0x24] sm:$0xf] %vm2381, %v3400
      %3449 = vst.msk [vmem:[#allocation4 + $0x34] sm:$0xf] %vm2381, %v3402
      %3450 = vst.msk [vmem:[#allocation4 + $0x44] sm:$0xf] %vm2381, %v3404
      %3451 = vst.msk [vmem:[#allocation4 + $0x54] sm:$0xf] %vm2381, %v3406
      %3452 = vst.msk [vmem:[#allocation4 + $0x64] sm:$0xf] %vm2381, %v3408
      %3453 = vst.msk [vmem:[#allocation4 + $0x74] sm:$0xf] %vm2381, %v3410
      %3454 = vst.msk [vmem:[#allocation4 + $0x84] sm:$0xf] %vm2381, %v3412
      %3455 = vst.msk [vmem:[#allocation4 + $0x94] sm:$0xf] %vm2381, %v3414
      %3456 = vst.msk [vmem:[#allocation4 + $0xa4] sm:$0xf] %vm2381, %v3416
      %3457 = vst.msk [vmem:[#allocation4 + $0xb4] sm:$0xf] %vm2381, %v3418
      %3458 = vst.msk [vmem:[#allocation4 + $0xc4] sm:$0xf] %vm2381, %v3420
      %3459 = vst.msk [vmem:[#allocation4 + $0xd4] sm:$0xf] %vm2381, %v3422
      %3460 = vst.msk [vmem:[#allocation4 + $0xe4] sm:$0xf] %vm2381, %v3424
      %3461 = vst.msk [vmem:[#allocation4 + $0xf4] sm:$0xf] %vm2381, %v3426
      %3462 = vst.msk [vmem:[#allocation4 + $0x104] sm:$0xf] %vm2381, %v3428
      %v3463 = vld [vmem:[#allocation3 + $0x20] sm:$0xff]
      %v3464 = vld [vmem:[#allocation3 + $0x28] sm:$0xff]
      %v3465 = vld [vmem:[#allocation3 + $0x30] sm:$0xff]
      %v3466 = vld [vmem:[#allocation3 + $0x38] sm:$0xff]
      %v3467 = vld [vmem:[#allocation3 + $0x40] sm:$0xff]
      %v3468 = vld [vmem:[#allocation3 + $0x48] sm:$0xff]
      %v3469 = vld [vmem:[#allocation3 + $0x50] sm:$0xff]
      %v3470 = vld [vmem:[#allocation3 + $0x58] sm:$0xff]
      %v3471 = vld [vmem:[#allocation3 + $0x60] sm:$0xff]
      %v3472 = vld [vmem:[#allocation3 + $0x68] sm:$0xff]
      %v3473 = vld [vmem:[#allocation3 + $0x70] sm:$0xff]
      %v3474 = vld [vmem:[#allocation3 + $0x78] sm:$0xff]
      %v3475 = vld [vmem:[#allocation3 + $0x80] sm:$0xff]
      %v3476 = vld [vmem:[#allocation3 + $0x88] sm:$0xff]
      %v3477 = vld [vmem:[#allocation3 + $0x90] sm:$0xff]
      %v3478 = vld [vmem:[#allocation3 + $0x98] sm:$0xff]
      %v3479 = vld [vmem:[#allocation3 + $0xa0] sm:$0xff]
      %v3480 = vpack.c.bf16 %v3464, %v3463
      %v3481 = vpack.c.bf16 %v3466, %v3465
      %v3482 = vpack.c.bf16 %v3468, %v3467
      %v3483 = vpack.c.bf16 %v3470, %v3469
      %v3484 = vpack.c.bf16 %v3472, %v3471
      %v3485 = vpack.c.bf16 %v3474, %v3473
      %v3486 = vpack.c.bf16 %v3476, %v3475
      %v3487 = vpack.c.bf16 %v3478, %v3477
      %v3488 = vpack.c.bf16 %v3479, %v3479
      %v3498 = vunpack.c.l.b16 %v3480
      %v3499 = vunpack.c.h.b16 %v3480
      %v3500 = vunpack.c.l.b16 %v3481
      %v3501 = vunpack.c.h.b16 %v3481
      %v3502 = vunpack.c.l.b16 %v3482
      %v3503 = vunpack.c.h.b16 %v3482
      %v3504 = vunpack.c.l.b16 %v3483
      %v3505 = vunpack.c.h.b16 %v3483
      %v3506 = vunpack.c.l.b16 %v3484
      %v3507 = vunpack.c.h.b16 %v3484
      %v3508 = vunpack.c.l.b16 %v3485
      %v3509 = vunpack.c.h.b16 %v3485
      %v3510 = vunpack.c.l.b16 %v3486
      %v3511 = vunpack.c.h.b16 %v3486
      %v3512 = vunpack.c.l.b16 %v3487
      %v3513 = vunpack.c.h.b16 %v3487
      %v3514 = vunpack.c.l.b16 %v3488
      %v3515 = vpack.c.b16 %v3498, %v3498
      %v3516 = vpack.c.b16 %v3499, %v3499
      %v3517 = vpack.c.b16 %v3500, %v3500
      %v3518 = vpack.c.b16 %v3501, %v3501
      %v3519 = vpack.c.b16 %v3502, %v3502
      %v3520 = vpack.c.b16 %v3503, %v3503
      %v3521 = vpack.c.b16 %v3504, %v3504
      %v3522 = vpack.c.b16 %v3505, %v3505
      %v3523 = vpack.c.b16 %v3506, %v3506
      %v3524 = vpack.c.b16 %v3507, %v3507
      %v3525 = vpack.c.b16 %v3508, %v3508
      %v3526 = vpack.c.b16 %v3509, %v3509
      %v3527 = vpack.c.b16 %v3510, %v3510
      %v3528 = vpack.c.b16 %v3511, %v3511
      %v3529 = vpack.c.b16 %v3512, %v3512
      %v3530 = vpack.c.b16 %v3513, %v3513
      %v3531 = vpack.c.b16 %v3514, %v3514
      %3532 = vrot.lane.b32.xlu0 %v3515, 96
      %v3533 = vpop.permute.xlu0 %3532
      %3534 = vrot.lane.b32.xlu0 %v3516, 96
      %v3535 = vpop.permute.xlu0 %3534
      %3536 = vrot.lane.b32.xlu0 %v3517, 96
      %v3537 = vpop.permute.xlu0 %3536
      %3538 = vrot.lane.b32.xlu0 %v3518, 96
      %v3539 = vpop.permute.xlu0 %3538
      %3540 = vrot.lane.b32.xlu0 %v3519, 96
      %v3541 = vpop.permute.xlu0 %3540
      %3542 = vrot.lane.b32.xlu0 %v3520, 96
      %v3543 = vpop.permute.xlu0 %3542
      %3544 = vrot.lane.b32.xlu0 %v3521, 96
      %v3545 = vpop.permute.xlu0 %3544
      %3546 = vrot.lane.b32.xlu0 %v3522, 96
      %v3547 = vpop.permute.xlu0 %3546
      %3548 = vrot.lane.b32.xlu0 %v3523, 96
      %v3549 = vpop.permute.xlu0 %3548
      %3550 = vrot.lane.b32.xlu0 %v3524, 96
      %v3551 = vpop.permute.xlu0 %3550
      %3552 = vrot.lane.b32.xlu0 %v3525, 96
      %v3553 = vpop.permute.xlu0 %3552
      %3554 = vrot.lane.b32.xlu0 %v3526, 96
      %v3555 = vpop.permute.xlu0 %3554
      %3556 = vrot.lane.b32.xlu0 %v3527, 96
      %v3557 = vpop.permute.xlu0 %3556
      %3558 = vrot.lane.b32.xlu0 %v3528, 96
      %v3559 = vpop.permute.xlu0 %3558
      %3560 = vrot.lane.b32.xlu0 %v3529, 96
      %v3561 = vpop.permute.xlu0 %3560
      %3562 = vrot.lane.b32.xlu0 %v3530, 96
      %v3563 = vpop.permute.xlu0 %3562
      %3564 = vrot.lane.b32.xlu0 %v3531, 96
      %v3565 = vpop.permute.xlu0 %3564
      %3583 = vst.msk [vmem:[#allocation4 + $0x4] sm:$0xf] %vm2519, %v3533
      %3584 = vst.msk [vmem:[#allocation4 + $0x14] sm:$0xf] %vm2519, %v3535
      %3585 = vst.msk [vmem:[#allocation4 + $0x24] sm:$0xf] %vm2519, %v3537
      %3586 = vst.msk [vmem:[#allocation4 + $0x34] sm:$0xf] %vm2519, %v3539
      %3587 = vst.msk [vmem:[#allocation4 + $0x44] sm:$0xf] %vm2519, %v3541
      %3588 = vst.msk [vmem:[#allocation4 + $0x54] sm:$0xf] %vm2519, %v3543
      %3589 = vst.msk [vmem:[#allocation4 + $0x64] sm:$0xf] %vm2519, %v3545
      %3590 = vst.msk [vmem:[#allocation4 + $0x74] sm:$0xf] %vm2519, %v3547
      %3591 = vst.msk [vmem:[#allocation4 + $0x84] sm:$0xf] %vm2519, %v3549
      %3592 = vst.msk [vmem:[#allocation4 + $0x94] sm:$0xf] %vm2519, %v3551
      %3593 = vst.msk [vmem:[#allocation4 + $0xa4] sm:$0xf] %vm2519, %v3553
      %3594 = vst.msk [vmem:[#allocation4 + $0xb4] sm:$0xf] %vm2519, %v3555
      %3595 = vst.msk [vmem:[#allocation4 + $0xc4] sm:$0xf] %vm2519, %v3557
      %3596 = vst.msk [vmem:[#allocation4 + $0xd4] sm:$0xf] %vm2519, %v3559
      %3597 = vst.msk [vmem:[#allocation4 + $0xe4] sm:$0xf] %vm2519, %v3561
      %3598 = vst.msk [vmem:[#allocation4 + $0xf4] sm:$0xf] %vm2519, %v3563
      %3599 = vst.msk [vmem:[#allocation4 + $0x104] sm:$0xf] %vm2519, %v3565
      %v3600 = vld [vmem:[#allocation3 + $0x2a] sm:$0xff]
      %v3601 = vld [vmem:[#allocation3 + $0x32] sm:$0xff]
      %v3602 = vld [vmem:[#allocation3 + $0x3a] sm:$0xff]
      %v3603 = vld [vmem:[#allocation3 + $0x42] sm:$0xff]
      %v3604 = vld [vmem:[#allocation3 + $0x4a] sm:$0xff]
      %v3605 = vld [vmem:[#allocation3 + $0x52] sm:$0xff]
      %v3606 = vld [vmem:[#allocation3 + $0x5a] sm:$0xff]
      %v3607 = vld [vmem:[#allocation3 + $0x62] sm:$0xff]
      %v3608 = vld [vmem:[#allocation3 + $0x6a] sm:$0xff]
      %v3609 = vld [vmem:[#allocation3 + $0x72] sm:$0xff]
      %v3610 = vld [vmem:[#allocation3 + $0x7a] sm:$0xff]
      %v3611 = vld [vmem:[#allocation3 + $0x82] sm:$0xff]
      %v3612 = vld [vmem:[#allocation3 + $0x8a] sm:$0xff]
      %v3613 = vld [vmem:[#allocation3 + $0x92] sm:$0xff]
      %v3614 = vld [vmem:[#allocation3 + $0x9a] sm:$0xff]
      %v3615 = vld [vmem:[#allocation3 + $0xa2] sm:$0xff]
      %v3616 = vld [vmem:[#allocation3 + $0xaa] sm:$0xff]
      %v3617 = vpack.c.bf16 %v3601, %v3600
      %v3618 = vpack.c.bf16 %v3603, %v3602
      %v3619 = vpack.c.bf16 %v3605, %v3604
      %v3620 = vpack.c.bf16 %v3607, %v3606
      %v3621 = vpack.c.bf16 %v3609, %v3608
      %v3622 = vpack.c.bf16 %v3611, %v3610
      %v3623 = vpack.c.bf16 %v3613, %v3612
      %v3624 = vpack.c.bf16 %v3615, %v3614
      %v3625 = vpack.c.bf16 %v3616, %v3616
      %v3635 = vunpack.c.l.b16 %v3617
      %v3636 = vunpack.c.h.b16 %v3617
      %v3637 = vunpack.c.l.b16 %v3618
      %v3638 = vunpack.c.h.b16 %v3618
      %v3639 = vunpack.c.l.b16 %v3619
      %v3640 = vunpack.c.h.b16 %v3619
      %v3641 = vunpack.c.l.b16 %v3620
      %v3642 = vunpack.c.h.b16 %v3620
      %v3643 = vunpack.c.l.b16 %v3621
      %v3644 = vunpack.c.h.b16 %v3621
      %v3645 = vunpack.c.l.b16 %v3622
      %v3646 = vunpack.c.h.b16 %v3622
      %v3647 = vunpack.c.l.b16 %v3623
      %v3648 = vunpack.c.h.b16 %v3623
      %v3649 = vunpack.c.l.b16 %v3624
      %v3650 = vunpack.c.h.b16 %v3624
      %v3651 = vunpack.c.l.b16 %v3625
      %v3652 = vpack.c.b16 %v3635, %v3635
      %v3653 = vpack.c.b16 %v3636, %v3636
      %v3654 = vpack.c.b16 %v3637, %v3637
      %v3655 = vpack.c.b16 %v3638, %v3638
      %v3656 = vpack.c.b16 %v3639, %v3639
      %v3657 = vpack.c.b16 %v3640, %v3640
      %v3658 = vpack.c.b16 %v3641, %v3641
      %v3659 = vpack.c.b16 %v3642, %v3642
      %v3660 = vpack.c.b16 %v3643, %v3643
      %v3661 = vpack.c.b16 %v3644, %v3644
      %v3662 = vpack.c.b16 %v3645, %v3645
      %v3663 = vpack.c.b16 %v3646, %v3646
      %v3664 = vpack.c.b16 %v3647, %v3647
      %v3665 = vpack.c.b16 %v3648, %v3648
      %v3666 = vpack.c.b16 %v3649, %v3649
      %v3667 = vpack.c.b16 %v3650, %v3650
      %v3668 = vpack.c.b16 %v3651, %v3651
      %3669 = vrot.lane.b32.xlu0 %v3652, 112
      %v3670 = vpop.permute.xlu0 %3669
      %3671 = vrot.lane.b32.xlu0 %v3653, 112
      %v3672 = vpop.permute.xlu0 %3671
      %3673 = vrot.lane.b32.xlu0 %v3654, 112
      %v3674 = vpop.permute.xlu0 %3673
      %3675 = vrot.lane.b32.xlu0 %v3655, 112
      %v3676 = vpop.permute.xlu0 %3675
      %3677 = vrot.lane.b32.xlu0 %v3656, 112
      %v3678 = vpop.permute.xlu0 %3677
      %3679 = vrot.lane.b32.xlu0 %v3657, 112
      %v3680 = vpop.permute.xlu0 %3679
      %3681 = vrot.lane.b32.xlu0 %v3658, 112
      %v3682 = vpop.permute.xlu0 %3681
      %3683 = vrot.lane.b32.xlu0 %v3659, 112
      %v3684 = vpop.permute.xlu0 %3683
      %3685 = vrot.lane.b32.xlu0 %v3660, 112
      %v3686 = vpop.permute.xlu0 %3685
      %3687 = vrot.lane.b32.xlu0 %v3661, 112
      %v3688 = vpop.permute.xlu0 %3687
      %3689 = vrot.lane.b32.xlu0 %v3662, 112
      %v3690 = vpop.permute.xlu0 %3689
      %3691 = vrot.lane.b32.xlu0 %v3663, 112
      %v3692 = vpop.permute.xlu0 %3691
      %3693 = vrot.lane.b32.xlu0 %v3664, 112
      %v3694 = vpop.permute.xlu0 %3693
      %3695 = vrot.lane.b32.xlu0 %v3665, 112
      %v3696 = vpop.permute.xlu0 %3695
      %3697 = vrot.lane.b32.xlu0 %v3666, 112
      %v3698 = vpop.permute.xlu0 %3697
      %3699 = vrot.lane.b32.xlu0 %v3667, 112
      %v3700 = vpop.permute.xlu0 %3699
      %3701 = vrot.lane.b32.xlu0 %v3668, 112
      %v3702 = vpop.permute.xlu0 %3701
      %3720 = vst.msk [vmem:[#allocation4 + $0x4] sm:$0xf] %vm2657, %v3670
      %3721 = vst.msk [vmem:[#allocation4 + $0x14] sm:$0xf] %vm2657, %v3672
      %3722 = vst.msk [vmem:[#allocation4 + $0x24] sm:$0xf] %vm2657, %v3674
      %3723 = vst.msk [vmem:[#allocation4 + $0x34] sm:$0xf] %vm2657, %v3676
      %3724 = vst.msk [vmem:[#allocation4 + $0x44] sm:$0xf] %vm2657, %v3678
      %3725 = vst.msk [vmem:[#allocation4 + $0x54] sm:$0xf] %vm2657, %v3680
      %3726 = vst.msk [vmem:[#allocation4 + $0x64] sm:$0xf] %vm2657, %v3682
      %3727 = vst.msk [vmem:[#allocation4 + $0x74] sm:$0xf] %vm2657, %v3684
      %3728 = vst.msk [vmem:[#allocation4 + $0x84] sm:$0xf] %vm2657, %v3686
      %3729 = vst.msk [vmem:[#allocation4 + $0x94] sm:$0xf] %vm2657, %v3688
      %3730 = vst.msk [vmem:[#allocation4 + $0xa4] sm:$0xf] %vm2657, %v3690
      %3731 = vst.msk [vmem:[#allocation4 + $0xb4] sm:$0xf] %vm2657, %v3692
      %3732 = vst.msk [vmem:[#allocation4 + $0xc4] sm:$0xf] %vm2657, %v3694
      %3733 = vst.msk [vmem:[#allocation4 + $0xd4] sm:$0xf] %vm2657, %v3696
      %3734 = vst.msk [vmem:[#allocation4 + $0xe4] sm:$0xf] %vm2657, %v3698
      %3735 = vst.msk [vmem:[#allocation4 + $0xf4] sm:$0xf] %vm2657, %v3700
      %3736 = vst.msk [vmem:[#allocation4 + $0x104] sm:$0xf] %vm2657, %v3702
      %v3737 = vld [vmem:[#allocation3 + $0x2b] sm:$0xff]
      %v3738 = vld [vmem:[#allocation3 + $0x33] sm:$0xff]
      %v3739 = vld [vmem:[#allocation3 + $0x3b] sm:$0xff]
      %v3740 = vld [vmem:[#allocation3 + $0x43] sm:$0xff]
      %v3741 = vld [vmem:[#allocation3 + $0x4b] sm:$0xff]
      %v3742 = vld [vmem:[#allocation3 + $0x53] sm:$0xff]
      %v3743 = vld [vmem:[#allocation3 + $0x5b] sm:$0xff]
      %v3744 = vld [vmem:[#allocation3 + $0x63] sm:$0xff]
      %v3745 = vld [vmem:[#allocation3 + $0x6b] sm:$0xff]
      %v3746 = vld [vmem:[#allocation3 + $0x73] sm:$0xff]
      %v3747 = vld [vmem:[#allocation3 + $0x7b] sm:$0xff]
      %v3748 = vld [vmem:[#allocation3 + $0x83] sm:$0xff]
      %v3749 = vld [vmem:[#allocation3 + $0x8b] sm:$0xff]
      %v3750 = vld [vmem:[#allocation3 + $0x93] sm:$0xff]
      %v3751 = vld [vmem:[#allocation3 + $0x9b] sm:$0xff]
      %v3752 = vld [vmem:[#allocation3 + $0xa3] sm:$0xff]
      %v3753 = vld [vmem:[#allocation3 + $0xab] sm:$0xff]
      %v3754 = vpack.c.bf16 %v3738, %v3737
      %v3755 = vpack.c.bf16 %v3740, %v3739
      %v3756 = vpack.c.bf16 %v3742, %v3741
      %v3757 = vpack.c.bf16 %v3744, %v3743
      %v3758 = vpack.c.bf16 %v3746, %v3745
      %v3759 = vpack.c.bf16 %v3748, %v3747
      %v3760 = vpack.c.bf16 %v3750, %v3749
      %v3761 = vpack.c.bf16 %v3752, %v3751
      %v3762 = vpack.c.bf16 %v3753, %v3753
      %v3772 = vunpack.c.l.b16 %v3754
      %v3773 = vunpack.c.h.b16 %v3754
      %v3774 = vunpack.c.l.b16 %v3755
      %v3775 = vunpack.c.h.b16 %v3755
      %v3776 = vunpack.c.l.b16 %v3756
      %v3777 = vunpack.c.h.b16 %v3756
      %v3778 = vunpack.c.l.b16 %v3757
      %v3779 = vunpack.c.h.b16 %v3757
      %v3780 = vunpack.c.l.b16 %v3758
      %v3781 = vunpack.c.h.b16 %v3758
      %v3782 = vunpack.c.l.b16 %v3759
      %v3783 = vunpack.c.h.b16 %v3759
      %v3784 = vunpack.c.l.b16 %v3760
      %v3785 = vunpack.c.h.b16 %v3760
      %v3786 = vunpack.c.l.b16 %v3761
      %v3787 = vunpack.c.h.b16 %v3761
      %v3788 = vunpack.c.l.b16 %v3762
      %v3789 = vpack.c.b16 %v3772, %v3772
      %v3790 = vpack.c.b16 %v3773, %v3773
      %v3791 = vpack.c.b16 %v3774, %v3774
      %v3792 = vpack.c.b16 %v3775, %v3775
      %v3793 = vpack.c.b16 %v3776, %v3776
      %v3794 = vpack.c.b16 %v3777, %v3777
      %v3795 = vpack.c.b16 %v3778, %v3778
      %v3796 = vpack.c.b16 %v3779, %v3779
      %v3797 = vpack.c.b16 %v3780, %v3780
      %v3798 = vpack.c.b16 %v3781, %v3781
      %v3799 = vpack.c.b16 %v3782, %v3782
      %v3800 = vpack.c.b16 %v3783, %v3783
      %v3801 = vpack.c.b16 %v3784, %v3784
      %v3802 = vpack.c.b16 %v3785, %v3785
      %v3803 = vpack.c.b16 %v3786, %v3786
      %v3804 = vpack.c.b16 %v3787, %v3787
      %v3805 = vpack.c.b16 %v3788, %v3788
      %3823 = vst.msk [vmem:[#allocation4 + $0x8] sm:$0xf] %vm1691, %v3789
      %3824 = vst.msk [vmem:[#allocation4 + $0x18] sm:$0xf] %vm1691, %v3790
      %3825 = vst.msk [vmem:[#allocation4 + $0x28] sm:$0xf] %vm1691, %v3791
      %3826 = vst.msk [vmem:[#allocation4 + $0x38] sm:$0xf] %vm1691, %v3792
      %3827 = vst.msk [vmem:[#allocation4 + $0x48] sm:$0xf] %vm1691, %v3793
      %3828 = vst.msk [vmem:[#allocation4 + $0x58] sm:$0xf] %vm1691, %v3794
      %3829 = vst.msk [vmem:[#allocation4 + $0x68] sm:$0xf] %vm1691, %v3795
      %3830 = vst.msk [vmem:[#allocation4 + $0x78] sm:$0xf] %vm1691, %v3796
      %3831 = vst.msk [vmem:[#allocation4 + $0x88] sm:$0xf] %vm1691, %v3797
      %3832 = vst.msk [vmem:[#allocation4 + $0x98] sm:$0xf] %vm1691, %v3798
      %3833 = vst.msk [vmem:[#allocation4 + $0xa8] sm:$0xf] %vm1691, %v3799
      %3834 = vst.msk [vmem:[#allocation4 + $0xb8] sm:$0xf] %vm1691, %v3800
      %3835 = vst.msk [vmem:[#allocation4 + $0xc8] sm:$0xf] %vm1691, %v3801
      %3836 = vst.msk [vmem:[#allocation4 + $0xd8] sm:$0xf] %vm1691, %v3802
      %3837 = vst.msk [vmem:[#allocation4 + $0xe8] sm:$0xf] %vm1691, %v3803
      %3838 = vst.msk [vmem:[#allocation4 + $0xf8] sm:$0xf] %vm1691, %v3804
      %3839 = vst.msk [vmem:[#allocation4 + $0x108] sm:$0xf] %vm1691, %v3805
      %v3840 = vld [vmem:[#allocation3 + $0x2c] sm:$0xff]
      %v3841 = vld [vmem:[#allocation3 + $0x34] sm:$0xff]
      %v3842 = vld [vmem:[#allocation3 + $0x3c] sm:$0xff]
      %v3843 = vld [vmem:[#allocation3 + $0x44] sm:$0xff]
      %v3844 = vld [vmem:[#allocation3 + $0x4c] sm:$0xff]
      %v3845 = vld [vmem:[#allocation3 + $0x54] sm:$0xff]
      %v3846 = vld [vmem:[#allocation3 + $0x5c] sm:$0xff]
      %v3847 = vld [vmem:[#allocation3 + $0x64] sm:$0xff]
      %v3848 = vld [vmem:[#allocation3 + $0x6c] sm:$0xff]
      %v3849 = vld [vmem:[#allocation3 + $0x74] sm:$0xff]
      %v3850 = vld [vmem:[#allocation3 + $0x7c] sm:$0xff]
      %v3851 = vld [vmem:[#allocation3 + $0x84] sm:$0xff]
      %v3852 = vld [vmem:[#allocation3 + $0x8c] sm:$0xff]
      %v3853 = vld [vmem:[#allocation3 + $0x94] sm:$0xff]
      %v3854 = vld [vmem:[#allocation3 + $0x9c] sm:$0xff]
      %v3855 = vld [vmem:[#allocation3 + $0xa4] sm:$0xff]
      %v3856 = vld [vmem:[#allocation3 + $0xac] sm:$0xff]
      %v3857 = vpack.c.bf16 %v3841, %v3840
      %v3858 = vpack.c.bf16 %v3843, %v3842
      %v3859 = vpack.c.bf16 %v3845, %v3844
      %v3860 = vpack.c.bf16 %v3847, %v3846
      %v3861 = vpack.c.bf16 %v3849, %v3848
      %v3862 = vpack.c.bf16 %v3851, %v3850
      %v3863 = vpack.c.bf16 %v3853, %v3852
      %v3864 = vpack.c.bf16 %v3855, %v3854
      %v3865 = vpack.c.bf16 %v3856, %v3856
      %v3875 = vunpack.c.l.b16 %v3857
      %v3876 = vunpack.c.h.b16 %v3857
      %v3877 = vunpack.c.l.b16 %v3858
      %v3878 = vunpack.c.h.b16 %v3858
      %v3879 = vunpack.c.l.b16 %v3859
      %v3880 = vunpack.c.h.b16 %v3859
      %v3881 = vunpack.c.l.b16 %v3860
      %v3882 = vunpack.c.h.b16 %v3860
      %v3883 = vunpack.c.l.b16 %v3861
      %v3884 = vunpack.c.h.b16 %v3861
      %v3885 = vunpack.c.l.b16 %v3862
      %v3886 = vunpack.c.h.b16 %v3862
      %v3887 = vunpack.c.l.b16 %v3863
      %v3888 = vunpack.c.h.b16 %v3863
      %v3889 = vunpack.c.l.b16 %v3864
      %v3890 = vunpack.c.h.b16 %v3864
      %v3891 = vunpack.c.l.b16 %v3865
      %v3892 = vpack.c.b16 %v3875, %v3875
      %v3893 = vpack.c.b16 %v3876, %v3876
      %v3894 = vpack.c.b16 %v3877, %v3877
      %v3895 = vpack.c.b16 %v3878, %v3878
      %v3896 = vpack.c.b16 %v3879, %v3879
      %v3897 = vpack.c.b16 %v3880, %v3880
      %v3898 = vpack.c.b16 %v3881, %v3881
      %v3899 = vpack.c.b16 %v3882, %v3882
      %v3900 = vpack.c.b16 %v3883, %v3883
      %v3901 = vpack.c.b16 %v3884, %v3884
      %v3902 = vpack.c.b16 %v3885, %v3885
      %v3903 = vpack.c.b16 %v3886, %v3886
      %v3904 = vpack.c.b16 %v3887, %v3887
      %v3905 = vpack.c.b16 %v3888, %v3888
      %v3906 = vpack.c.b16 %v3889, %v3889
      %v3907 = vpack.c.b16 %v3890, %v3890
      %v3908 = vpack.c.b16 %v3891, %v3891
      %3909 = vrot.lane.b32.xlu0 %v3892, 16
      %v3910 = vpop.permute.xlu0 %3909
      %3911 = vrot.lane.b32.xlu0 %v3893, 16
      %v3912 = vpop.permute.xlu0 %3911
      %3913 = vrot.lane.b32.xlu0 %v3894, 16
      %v3914 = vpop.permute.xlu0 %3913
      %3915 = vrot.lane.b32.xlu0 %v3895, 16
      %v3916 = vpop.permute.xlu0 %3915
      %3917 = vrot.lane.b32.xlu0 %v3896, 16
      %v3918 = vpop.permute.xlu0 %3917
      %3919 = vrot.lane.b32.xlu0 %v3897, 16
      %v3920 = vpop.permute.xlu0 %3919
      %3921 = vrot.lane.b32.xlu0 %v3898, 16
      %v3922 = vpop.permute.xlu0 %3921
      %3923 = vrot.lane.b32.xlu0 %v3899, 16
      %v3924 = vpop.permute.xlu0 %3923
      %3925 = vrot.lane.b32.xlu0 %v3900, 16
      %v3926 = vpop.permute.xlu0 %3925
      %3927 = vrot.lane.b32.xlu0 %v3901, 16
      %v3928 = vpop.permute.xlu0 %3927
      %3929 = vrot.lane.b32.xlu0 %v3902, 16
      %v3930 = vpop.permute.xlu0 %3929
      %3931 = vrot.lane.b32.xlu0 %v3903, 16
      %v3932 = vpop.permute.xlu0 %3931
      %3933 = vrot.lane.b32.xlu0 %v3904, 16
      %v3934 = vpop.permute.xlu0 %3933
      %3935 = vrot.lane.b32.xlu0 %v3905, 16
      %v3936 = vpop.permute.xlu0 %3935
      %3937 = vrot.lane.b32.xlu0 %v3906, 16
      %v3938 = vpop.permute.xlu0 %3937
      %3939 = vrot.lane.b32.xlu0 %v3907, 16
      %v3940 = vpop.permute.xlu0 %3939
      %3941 = vrot.lane.b32.xlu0 %v3908, 16
      %v3942 = vpop.permute.xlu0 %3941
      %3960 = vst.msk [vmem:[#allocation4 + $0x8] sm:$0xf] %vm1829, %v3910
      %3961 = vst.msk [vmem:[#allocation4 + $0x18] sm:$0xf] %vm1829, %v3912
      %3962 = vst.msk [vmem:[#allocation4 + $0x28] sm:$0xf] %vm1829, %v3914
      %3963 = vst.msk [vmem:[#allocation4 + $0x38] sm:$0xf] %vm1829, %v3916
      %3964 = vst.msk [vmem:[#allocation4 + $0x48] sm:$0xf] %vm1829, %v3918
      %3965 = vst.msk [vmem:[#allocation4 + $0x58] sm:$0xf] %vm1829, %v3920
      %3966 = vst.msk [vmem:[#allocation4 + $0x68] sm:$0xf] %vm1829, %v3922
      %3967 = vst.msk [vmem:[#allocation4 + $0x78] sm:$0xf] %vm1829, %v3924
      %3968 = vst.msk [vmem:[#allocation4 + $0x88] sm:$0xf] %vm1829, %v3926
      %3969 = vst.msk [vmem:[#allocation4 + $0x98] sm:$0xf] %vm1829, %v3928
      %3970 = vst.msk [vmem:[#allocation4 + $0xa8] sm:$0xf] %vm1829, %v3930
      %3971 = vst.msk [vmem:[#allocation4 + $0xb8] sm:$0xf] %vm1829, %v3932
      %3972 = vst.msk [vmem:[#allocation4 + $0xc8] sm:$0xf] %vm1829, %v3934
      %3973 = vst.msk [vmem:[#allocation4 + $0xd8] sm:$0xf] %vm1829, %v3936
      %3974 = vst.msk [vmem:[#allocation4 + $0xe8] sm:$0xf] %vm1829, %v3938
      %3975 = vst.msk [vmem:[#allocation4 + $0xf8] sm:$0xf] %vm1829, %v3940
      %3976 = vst.msk [vmem:[#allocation4 + $0x108] sm:$0xf] %vm1829, %v3942
      %v3977 = vld [vmem:[#allocation3 + $0x2d] sm:$0xff]
      %v3978 = vld [vmem:[#allocation3 + $0x35] sm:$0xff]
      %v3979 = vld [vmem:[#allocation3 + $0x3d] sm:$0xff]
      %v3980 = vld [vmem:[#allocation3 + $0x45] sm:$0xff]
      %v3981 = vld [vmem:[#allocation3 + $0x4d] sm:$0xff]
      %v3982 = vld [vmem:[#allocation3 + $0x55] sm:$0xff]
      %v3983 = vld [vmem:[#allocation3 + $0x5d] sm:$0xff]
      %v3984 = vld [vmem:[#allocation3 + $0x65] sm:$0xff]
      %v3985 = vld [vmem:[#allocation3 + $0x6d] sm:$0xff]
      %v3986 = vld [vmem:[#allocation3 + $0x75] sm:$0xff]
      %v3987 = vld [vmem:[#allocation3 + $0x7d] sm:$0xff]
      %v3988 = vld [vmem:[#allocation3 + $0x85] sm:$0xff]
      %v3989 = vld [vmem:[#allocation3 + $0x8d] sm:$0xff]
      %v3990 = vld [vmem:[#allocation3 + $0x95] sm:$0xff]
      %v3991 = vld [vmem:[#allocation3 + $0x9d] sm:$0xff]
      %v3992 = vld [vmem:[#allocation3 + $0xa5] sm:$0xff]
      %v3993 = vld [vmem:[#allocation3 + $0xad] sm:$0xff]
      %v3994 = vpack.c.bf16 %v3978, %v3977
      %v3995 = vpack.c.bf16 %v3980, %v3979
      %v3996 = vpack.c.bf16 %v3982, %v3981
      %v3997 = vpack.c.bf16 %v3984, %v3983
      %v3998 = vpack.c.bf16 %v3986, %v3985
      %v3999 = vpack.c.bf16 %v3988, %v3987
      %v4000 = vpack.c.bf16 %v3990, %v3989
      %v4001 = vpack.c.bf16 %v3992, %v3991
      %v4002 = vpack.c.bf16 %v3993, %v3993
      %v4012 = vunpack.c.l.b16 %v3994
      %v4013 = vunpack.c.h.b16 %v3994
      %v4014 = vunpack.c.l.b16 %v3995
      %v4015 = vunpack.c.h.b16 %v3995
      %v4016 = vunpack.c.l.b16 %v3996
      %v4017 = vunpack.c.h.b16 %v3996
      %v4018 = vunpack.c.l.b16 %v3997
      %v4019 = vunpack.c.h.b16 %v3997
      %v4020 = vunpack.c.l.b16 %v3998
      %v4021 = vunpack.c.h.b16 %v3998
      %v4022 = vunpack.c.l.b16 %v3999
      %v4023 = vunpack.c.h.b16 %v3999
      %v4024 = vunpack.c.l.b16 %v4000
      %v4025 = vunpack.c.h.b16 %v4000
      %v4026 = vunpack.c.l.b16 %v4001
      %v4027 = vunpack.c.h.b16 %v4001
      %v4028 = vunpack.c.l.b16 %v4002
      %v4029 = vpack.c.b16 %v4012, %v4012
      %v4030 = vpack.c.b16 %v4013, %v4013
      %v4031 = vpack.c.b16 %v4014, %v4014
      %v4032 = vpack.c.b16 %v4015, %v4015
      %v4033 = vpack.c.b16 %v4016, %v4016
      %v4034 = vpack.c.b16 %v4017, %v4017
      %v4035 = vpack.c.b16 %v4018, %v4018
      %v4036 = vpack.c.b16 %v4019, %v4019
      %v4037 = vpack.c.b16 %v4020, %v4020
      %v4038 = vpack.c.b16 %v4021, %v4021
      %v4039 = vpack.c.b16 %v4022, %v4022
      %v4040 = vpack.c.b16 %v4023, %v4023
      %v4041 = vpack.c.b16 %v4024, %v4024
      %v4042 = vpack.c.b16 %v4025, %v4025
      %v4043 = vpack.c.b16 %v4026, %v4026
      %v4044 = vpack.c.b16 %v4027, %v4027
      %v4045 = vpack.c.b16 %v4028, %v4028
      %4046 = vrot.lane.b32.xlu0 %v4029, 32
      %v4047 = vpop.permute.xlu0 %4046
      %4048 = vrot.lane.b32.xlu0 %v4030, 32
      %v4049 = vpop.permute.xlu0 %4048
      %4050 = vrot.lane.b32.xlu0 %v4031, 32
      %v4051 = vpop.permute.xlu0 %4050
      %4052 = vrot.lane.b32.xlu0 %v4032, 32
      %v4053 = vpop.permute.xlu0 %4052
      %4054 = vrot.lane.b32.xlu0 %v4033, 32
      %v4055 = vpop.permute.xlu0 %4054
      %4056 = vrot.lane.b32.xlu0 %v4034, 32
      %v4057 = vpop.permute.xlu0 %4056
      %4058 = vrot.lane.b32.xlu0 %v4035, 32
      %v4059 = vpop.permute.xlu0 %4058
      %4060 = vrot.lane.b32.xlu0 %v4036, 32
      %v4061 = vpop.permute.xlu0 %4060
      %4062 = vrot.lane.b32.xlu0 %v4037, 32
      %v4063 = vpop.permute.xlu0 %4062
      %4064 = vrot.lane.b32.xlu0 %v4038, 32
      %v4065 = vpop.permute.xlu0 %4064
      %4066 = vrot.lane.b32.xlu0 %v4039, 32
      %v4067 = vpop.permute.xlu0 %4066
      %4068 = vrot.lane.b32.xlu0 %v4040, 32
      %v4069 = vpop.permute.xlu0 %4068
      %4070 = vrot.lane.b32.xlu0 %v4041, 32
      %v4071 = vpop.permute.xlu0 %4070
      %4072 = vrot.lane.b32.xlu0 %v4042, 32
      %v4073 = vpop.permute.xlu0 %4072
      %4074 = vrot.lane.b32.xlu0 %v4043, 32
      %v4075 = vpop.permute.xlu0 %4074
      %4076 = vrot.lane.b32.xlu0 %v4044, 32
      %v4077 = vpop.permute.xlu0 %4076
      %4078 = vrot.lane.b32.xlu0 %v4045, 32
      %v4079 = vpop.permute.xlu0 %4078
      %4097 = vst.msk [vmem:[#allocation4 + $0x8] sm:$0xf] %vm1967, %v4047
      %4098 = vst.msk [vmem:[#allocation4 + $0x18] sm:$0xf] %vm1967, %v4049
      %4099 = vst.msk [vmem:[#allocation4 + $0x28] sm:$0xf] %vm1967, %v4051
      %4100 = vst.msk [vmem:[#allocation4 + $0x38] sm:$0xf] %vm1967, %v4053
      %4101 = vst.msk [vmem:[#allocation4 + $0x48] sm:$0xf] %vm1967, %v4055
      %4102 = vst.msk [vmem:[#allocation4 + $0x58] sm:$0xf] %vm1967, %v4057
      %4103 = vst.msk [vmem:[#allocation4 + $0x68] sm:$0xf] %vm1967, %v4059
      %4104 = vst.msk [vmem:[#allocation4 + $0x78] sm:$0xf] %vm1967, %v4061
      %4105 = vst.msk [vmem:[#allocation4 + $0x88] sm:$0xf] %vm1967, %v4063
      %4106 = vst.msk [vmem:[#allocation4 + $0x98] sm:$0xf] %vm1967, %v4065
      %4107 = vst.msk [vmem:[#allocation4 + $0xa8] sm:$0xf] %vm1967, %v4067
      %4108 = vst.msk [vmem:[#allocation4 + $0xb8] sm:$0xf] %vm1967, %v4069
      %4109 = vst.msk [vmem:[#allocation4 + $0xc8] sm:$0xf] %vm1967, %v4071
      %4110 = vst.msk [vmem:[#allocation4 + $0xd8] sm:$0xf] %vm1967, %v4073
      %4111 = vst.msk [vmem:[#allocation4 + $0xe8] sm:$0xf] %vm1967, %v4075
      %4112 = vst.msk [vmem:[#allocation4 + $0xf8] sm:$0xf] %vm1967, %v4077
      %4113 = vst.msk [vmem:[#allocation4 + $0x108] sm:$0xf] %vm1967, %v4079
      %v4114 = vld [vmem:[#allocation3 + $0x2e] sm:$0xff]
      %v4115 = vld [vmem:[#allocation3 + $0x36] sm:$0xff]
      %v4116 = vld [vmem:[#allocation3 + $0x3e] sm:$0xff]
      %v4117 = vld [vmem:[#allocation3 + $0x46] sm:$0xff]
      %v4118 = vld [vmem:[#allocation3 + $0x4e] sm:$0xff]
      %v4119 = vld [vmem:[#allocation3 + $0x56] sm:$0xff]
      %v4120 = vld [vmem:[#allocation3 + $0x5e] sm:$0xff]
      %v4121 = vld [vmem:[#allocation3 + $0x66] sm:$0xff]
      %v4122 = vld [vmem:[#allocation3 + $0x6e] sm:$0xff]
      %v4123 = vld [vmem:[#allocation3 + $0x76] sm:$0xff]
      %v4124 = vld [vmem:[#allocation3 + $0x7e] sm:$0xff]
      %v4125 = vld [vmem:[#allocation3 + $0x86] sm:$0xff]
      %v4126 = vld [vmem:[#allocation3 + $0x8e] sm:$0xff]
      %v4127 = vld [vmem:[#allocation3 + $0x96] sm:$0xff]
      %v4128 = vld [vmem:[#allocation3 + $0x9e] sm:$0xff]
      %v4129 = vld [vmem:[#allocation3 + $0xa6] sm:$0xff]
      %v4130 = vld [vmem:[#allocation3 + $0xae] sm:$0xff]
      %v4131 = vpack.c.bf16 %v4115, %v4114
      %v4132 = vpack.c.bf16 %v4117, %v4116
      %v4133 = vpack.c.bf16 %v4119, %v4118
      %v4134 = vpack.c.bf16 %v4121, %v4120
      %v4135 = vpack.c.bf16 %v4123, %v4122
      %v4136 = vpack.c.bf16 %v4125, %v4124
      %v4137 = vpack.c.bf16 %v4127, %v4126
      %v4138 = vpack.c.bf16 %v4129, %v4128
      %v4139 = vpack.c.bf16 %v4130, %v4130
      %v4149 = vunpack.c.l.b16 %v4131
      %v4150 = vunpack.c.h.b16 %v4131
      %v4151 = vunpack.c.l.b16 %v4132
      %v4152 = vunpack.c.h.b16 %v4132
      %v4153 = vunpack.c.l.b16 %v4133
      %v4154 = vunpack.c.h.b16 %v4133
      %v4155 = vunpack.c.l.b16 %v4134
      %v4156 = vunpack.c.h.b16 %v4134
      %v4157 = vunpack.c.l.b16 %v4135
      %v4158 = vunpack.c.h.b16 %v4135
      %v4159 = vunpack.c.l.b16 %v4136
      %v4160 = vunpack.c.h.b16 %v4136
      %v4161 = vunpack.c.l.b16 %v4137
      %v4162 = vunpack.c.h.b16 %v4137
      %v4163 = vunpack.c.l.b16 %v4138
      %v4164 = vunpack.c.h.b16 %v4138
      %v4165 = vunpack.c.l.b16 %v4139
      %v4166 = vpack.c.b16 %v4149, %v4149
      %v4167 = vpack.c.b16 %v4150, %v4150
      %v4168 = vpack.c.b16 %v4151, %v4151
      %v4169 = vpack.c.b16 %v4152, %v4152
      %v4170 = vpack.c.b16 %v4153, %v4153
      %v4171 = vpack.c.b16 %v4154, %v4154
      %v4172 = vpack.c.b16 %v4155, %v4155
      %v4173 = vpack.c.b16 %v4156, %v4156
      %v4174 = vpack.c.b16 %v4157, %v4157
      %v4175 = vpack.c.b16 %v4158, %v4158
      %v4176 = vpack.c.b16 %v4159, %v4159
      %v4177 = vpack.c.b16 %v4160, %v4160
      %v4178 = vpack.c.b16 %v4161, %v4161
      %v4179 = vpack.c.b16 %v4162, %v4162
      %v4180 = vpack.c.b16 %v4163, %v4163
      %v4181 = vpack.c.b16 %v4164, %v4164
      %v4182 = vpack.c.b16 %v4165, %v4165
      %4183 = vrot.lane.b32.xlu0 %v4166, 48
      %v4184 = vpop.permute.xlu0 %4183
      %4185 = vrot.lane.b32.xlu0 %v4167, 48
      %v4186 = vpop.permute.xlu0 %4185
      %4187 = vrot.lane.b32.xlu0 %v4168, 48
      %v4188 = vpop.permute.xlu0 %4187
      %4189 = vrot.lane.b32.xlu0 %v4169, 48
      %v4190 = vpop.permute.xlu0 %4189
      %4191 = vrot.lane.b32.xlu0 %v4170, 48
      %v4192 = vpop.permute.xlu0 %4191
      %4193 = vrot.lane.b32.xlu0 %v4171, 48
      %v4194 = vpop.permute.xlu0 %4193
      %4195 = vrot.lane.b32.xlu0 %v4172, 48
      %v4196 = vpop.permute.xlu0 %4195
      %4197 = vrot.lane.b32.xlu0 %v4173, 48
      %v4198 = vpop.permute.xlu0 %4197
      %4199 = vrot.lane.b32.xlu0 %v4174, 48
      %v4200 = vpop.permute.xlu0 %4199
      %4201 = vrot.lane.b32.xlu0 %v4175, 48
      %v4202 = vpop.permute.xlu0 %4201
      %4203 = vrot.lane.b32.xlu0 %v4176, 48
      %v4204 = vpop.permute.xlu0 %4203
      %4205 = vrot.lane.b32.xlu0 %v4177, 48
      %v4206 = vpop.permute.xlu0 %4205
      %4207 = vrot.lane.b32.xlu0 %v4178, 48
      %v4208 = vpop.permute.xlu0 %4207
      %4209 = vrot.lane.b32.xlu0 %v4179, 48
      %v4210 = vpop.permute.xlu0 %4209
      %4211 = vrot.lane.b32.xlu0 %v4180, 48
      %v4212 = vpop.permute.xlu0 %4211
      %4213 = vrot.lane.b32.xlu0 %v4181, 48
      %v4214 = vpop.permute.xlu0 %4213
      %4215 = vrot.lane.b32.xlu0 %v4182, 48
      %v4216 = vpop.permute.xlu0 %4215
      %4234 = vst.msk [vmem:[#allocation4 + $0x8] sm:$0xf] %vm2105, %v4184
      %4235 = vst.msk [vmem:[#allocation4 + $0x18] sm:$0xf] %vm2105, %v4186
      %4236 = vst.msk [vmem:[#allocation4 + $0x28] sm:$0xf] %vm2105, %v4188
      %4237 = vst.msk [vmem:[#allocation4 + $0x38] sm:$0xf] %vm2105, %v4190
      %4238 = vst.msk [vmem:[#allocation4 + $0x48] sm:$0xf] %vm2105, %v4192
      %4239 = vst.msk [vmem:[#allocation4 + $0x58] sm:$0xf] %vm2105, %v4194
      %4240 = vst.msk [vmem:[#allocation4 + $0x68] sm:$0xf] %vm2105, %v4196
      %4241 = vst.msk [vmem:[#allocation4 + $0x78] sm:$0xf] %vm2105, %v4198
      %4242 = vst.msk [vmem:[#allocation4 + $0x88] sm:$0xf] %vm2105, %v4200
      %4243 = vst.msk [vmem:[#allocation4 + $0x98] sm:$0xf] %vm2105, %v4202
      %4244 = vst.msk [vmem:[#allocation4 + $0xa8] sm:$0xf] %vm2105, %v4204
      %4245 = vst.msk [vmem:[#allocation4 + $0xb8] sm:$0xf] %vm2105, %v4206
      %4246 = vst.msk [vmem:[#allocation4 + $0xc8] sm:$0xf] %vm2105, %v4208
      %4247 = vst.msk [vmem:[#allocation4 + $0xd8] sm:$0xf] %vm2105, %v4210
      %4248 = vst.msk [vmem:[#allocation4 + $0xe8] sm:$0xf] %vm2105, %v4212
      %4249 = vst.msk [vmem:[#allocation4 + $0xf8] sm:$0xf] %vm2105, %v4214
      %4250 = vst.msk [vmem:[#allocation4 + $0x108] sm:$0xf] %vm2105, %v4216
      %v4251 = vld [vmem:[#allocation3 + $0x38] sm:$0xff]
      %v4252 = vld [vmem:[#allocation3 + $0x40] sm:$0xff]
      %v4253 = vld [vmem:[#allocation3 + $0x48] sm:$0xff]
      %v4254 = vld [vmem:[#allocation3 + $0x50] sm:$0xff]
      %v4255 = vld [vmem:[#allocation3 + $0x58] sm:$0xff]
      %v4256 = vld [vmem:[#allocation3 + $0x60] sm:$0xff]
      %v4257 = vld [vmem:[#allocation3 + $0x68] sm:$0xff]
      %v4258 = vld [vmem:[#allocation3 + $0x70] sm:$0xff]
      %v4259 = vld [vmem:[#allocation3 + $0x78] sm:$0xff]
      %v4260 = vld [vmem:[#allocation3 + $0x80] sm:$0xff]
      %v4261 = vld [vmem:[#allocation3 + $0x88] sm:$0xff]
      %v4262 = vld [vmem:[#allocation3 + $0x90] sm:$0xff]
      %v4263 = vld [vmem:[#allocation3 + $0x98] sm:$0xff]
      %v4264 = vld [vmem:[#allocation3 + $0xa0] sm:$0xff]
      %v4265 = vld [vmem:[#allocation3 + $0xa8] sm:$0xff]
      %v4266 = vld [vmem:[#allocation3 + $0xb0] sm:$0xff]
      %v4267 = vld [vmem:[#allocation3 + $0xb8] sm:$0xff]
      %v4268 = vpack.c.bf16 %v4252, %v4251
      %v4269 = vpack.c.bf16 %v4254, %v4253
      %v4270 = vpack.c.bf16 %v4256, %v4255
      %v4271 = vpack.c.bf16 %v4258, %v4257
      %v4272 = vpack.c.bf16 %v4260, %v4259
      %v4273 = vpack.c.bf16 %v4262, %v4261
      %v4274 = vpack.c.bf16 %v4264, %v4263
      %v4275 = vpack.c.bf16 %v4266, %v4265
      %v4276 = vpack.c.bf16 %v4267, %v4267
      %v4286 = vunpack.c.l.b16 %v4268
      %v4287 = vunpack.c.h.b16 %v4268
      %v4288 = vunpack.c.l.b16 %v4269
      %v4289 = vunpack.c.h.b16 %v4269
      %v4290 = vunpack.c.l.b16 %v4270
      %v4291 = vunpack.c.h.b16 %v4270
      %v4292 = vunpack.c.l.b16 %v4271
      %v4293 = vunpack.c.h.b16 %v4271
      %v4294 = vunpack.c.l.b16 %v4272
      %v4295 = vunpack.c.h.b16 %v4272
      %v4296 = vunpack.c.l.b16 %v4273
      %v4297 = vunpack.c.h.b16 %v4273
      %v4298 = vunpack.c.l.b16 %v4274
      %v4299 = vunpack.c.h.b16 %v4274
      %v4300 = vunpack.c.l.b16 %v4275
      %v4301 = vunpack.c.h.b16 %v4275
      %v4302 = vunpack.c.l.b16 %v4276
      %v4303 = vpack.c.b16 %v4286, %v4286
      %v4304 = vpack.c.b16 %v4287, %v4287
      %v4305 = vpack.c.b16 %v4288, %v4288
      %v4306 = vpack.c.b16 %v4289, %v4289
      %v4307 = vpack.c.b16 %v4290, %v4290
      %v4308 = vpack.c.b16 %v4291, %v4291
      %v4309 = vpack.c.b16 %v4292, %v4292
      %v4310 = vpack.c.b16 %v4293, %v4293
      %v4311 = vpack.c.b16 %v4294, %v4294
      %v4312 = vpack.c.b16 %v4295, %v4295
      %v4313 = vpack.c.b16 %v4296, %v4296
      %v4314 = vpack.c.b16 %v4297, %v4297
      %v4315 = vpack.c.b16 %v4298, %v4298
      %v4316 = vpack.c.b16 %v4299, %v4299
      %v4317 = vpack.c.b16 %v4300, %v4300
      %v4318 = vpack.c.b16 %v4301, %v4301
      %v4319 = vpack.c.b16 %v4302, %v4302
      %4320 = vrot.lane.b32.xlu0 %v4303, 64
      %v4321 = vpop.permute.xlu0 %4320
      %4322 = vrot.lane.b32.xlu0 %v4304, 64
      %v4323 = vpop.permute.xlu0 %4322
      %4324 = vrot.lane.b32.xlu0 %v4305, 64
      %v4325 = vpop.permute.xlu0 %4324
      %4326 = vrot.lane.b32.xlu0 %v4306, 64
      %v4327 = vpop.permute.xlu0 %4326
      %4328 = vrot.lane.b32.xlu0 %v4307, 64
      %v4329 = vpop.permute.xlu0 %4328
      %4330 = vrot.lane.b32.xlu0 %v4308, 64
      %v4331 = vpop.permute.xlu0 %4330
      %4332 = vrot.lane.b32.xlu0 %v4309, 64
      %v4333 = vpop.permute.xlu0 %4332
      %4334 = vrot.lane.b32.xlu0 %v4310, 64
      %v4335 = vpop.permute.xlu0 %4334
      %4336 = vrot.lane.b32.xlu0 %v4311, 64
      %v4337 = vpop.permute.xlu0 %4336
      %4338 = vrot.lane.b32.xlu0 %v4312, 64
      %v4339 = vpop.permute.xlu0 %4338
      %4340 = vrot.lane.b32.xlu0 %v4313, 64
      %v4341 = vpop.permute.xlu0 %4340
      %4342 = vrot.lane.b32.xlu0 %v4314, 64
      %v4343 = vpop.permute.xlu0 %4342
      %4344 = vrot.lane.b32.xlu0 %v4315, 64
      %v4345 = vpop.permute.xlu0 %4344
      %4346 = vrot.lane.b32.xlu0 %v4316, 64
      %v4347 = vpop.permute.xlu0 %4346
      %4348 = vrot.lane.b32.xlu0 %v4317, 64
      %v4349 = vpop.permute.xlu0 %4348
      %4350 = vrot.lane.b32.xlu0 %v4318, 64
      %v4351 = vpop.permute.xlu0 %4350
      %4352 = vrot.lane.b32.xlu0 %v4319, 64
      %v4353 = vpop.permute.xlu0 %4352
      %4371 = vst.msk [vmem:[#allocation4 + $0x8] sm:$0xf] %vm2243, %v4321
      %4372 = vst.msk [vmem:[#allocation4 + $0x18] sm:$0xf] %vm2243, %v4323
      %4373 = vst.msk [vmem:[#allocation4 + $0x28] sm:$0xf] %vm2243, %v4325
      %4374 = vst.msk [vmem:[#allocation4 + $0x38] sm:$0xf] %vm2243, %v4327
      %4375 = vst.msk [vmem:[#allocation4 + $0x48] sm:$0xf] %vm2243, %v4329
      %4376 = vst.msk [vmem:[#allocation4 + $0x58] sm:$0xf] %vm2243, %v4331
      %4377 = vst.msk [vmem:[#allocation4 + $0x68] sm:$0xf] %vm2243, %v4333
      %4378 = vst.msk [vmem:[#allocation4 + $0x78] sm:$0xf] %vm2243, %v4335
      %4379 = vst.msk [vmem:[#allocation4 + $0x88] sm:$0xf] %vm2243, %v4337
      %4380 = vst.msk [vmem:[#allocation4 + $0x98] sm:$0xf] %vm2243, %v4339
      %4381 = vst.msk [vmem:[#allocation4 + $0xa8] sm:$0xf] %vm2243, %v4341
      %4382 = vst.msk [vmem:[#allocation4 + $0xb8] sm:$0xf] %vm2243, %v4343
      %4383 = vst.msk [vmem:[#allocation4 + $0xc8] sm:$0xf] %vm2243, %v4345
      %4384 = vst.msk [vmem:[#allocation4 + $0xd8] sm:$0xf] %vm2243, %v4347
      %4385 = vst.msk [vmem:[#allocation4 + $0xe8] sm:$0xf] %vm2243, %v4349
      %4386 = vst.msk [vmem:[#allocation4 + $0xf8] sm:$0xf] %vm2243, %v4351
      %4387 = vst.msk [vmem:[#allocation4 + $0x108] sm:$0xf] %vm2243, %v4353
      %v4388 = vld [vmem:[#allocation3 + $0x39] sm:$0xff]
      %v4389 = vld [vmem:[#allocation3 + $0x41] sm:$0xff]
      %v4390 = vld [vmem:[#allocation3 + $0x49] sm:$0xff]
      %v4391 = vld [vmem:[#allocation3 + $0x51] sm:$0xff]
      %v4392 = vld [vmem:[#allocation3 + $0x59] sm:$0xff]
      %v4393 = vld [vmem:[#allocation3 + $0x61] sm:$0xff]
      %v4394 = vld [vmem:[#allocation3 + $0x69] sm:$0xff]
      %v4395 = vld [vmem:[#allocation3 + $0x71] sm:$0xff]
      %v4396 = vld [vmem:[#allocation3 + $0x79] sm:$0xff]
      %v4397 = vld [vmem:[#allocation3 + $0x81] sm:$0xff]
      %v4398 = vld [vmem:[#allocation3 + $0x89] sm:$0xff]
      %v4399 = vld [vmem:[#allocation3 + $0x91] sm:$0xff]
      %v4400 = vld [vmem:[#allocation3 + $0x99] sm:$0xff]
      %v4401 = vld [vmem:[#allocation3 + $0xa1] sm:$0xff]
      %v4402 = vld [vmem:[#allocation3 + $0xa9] sm:$0xff]
      %v4403 = vld [vmem:[#allocation3 + $0xb1] sm:$0xff]
      %v4404 = vld [vmem:[#allocation3 + $0xb9] sm:$0xff]
      %v4405 = vpack.c.bf16 %v4389, %v4388
      %v4406 = vpack.c.bf16 %v4391, %v4390
      %v4407 = vpack.c.bf16 %v4393, %v4392
      %v4408 = vpack.c.bf16 %v4395, %v4394
      %v4409 = vpack.c.bf16 %v4397, %v4396
      %v4410 = vpack.c.bf16 %v4399, %v4398
      %v4411 = vpack.c.bf16 %v4401, %v4400
      %v4412 = vpack.c.bf16 %v4403, %v4402
      %v4413 = vpack.c.bf16 %v4404, %v4404
      %v4423 = vunpack.c.l.b16 %v4405
      %v4424 = vunpack.c.h.b16 %v4405
      %v4425 = vunpack.c.l.b16 %v4406
      %v4426 = vunpack.c.h.b16 %v4406
      %v4427 = vunpack.c.l.b16 %v4407
      %v4428 = vunpack.c.h.b16 %v4407
      %v4429 = vunpack.c.l.b16 %v4408
      %v4430 = vunpack.c.h.b16 %v4408
      %v4431 = vunpack.c.l.b16 %v4409
      %v4432 = vunpack.c.h.b16 %v4409
      %v4433 = vunpack.c.l.b16 %v4410
      %v4434 = vunpack.c.h.b16 %v4410
      %v4435 = vunpack.c.l.b16 %v4411
      %v4436 = vunpack.c.h.b16 %v4411
      %v4437 = vunpack.c.l.b16 %v4412
      %v4438 = vunpack.c.h.b16 %v4412
      %v4439 = vunpack.c.l.b16 %v4413
      %v4440 = vpack.c.b16 %v4423, %v4423
      %v4441 = vpack.c.b16 %v4424, %v4424
      %v4442 = vpack.c.b16 %v4425, %v4425
      %v4443 = vpack.c.b16 %v4426, %v4426
      %v4444 = vpack.c.b16 %v4427, %v4427
      %v4445 = vpack.c.b16 %v4428, %v4428
      %v4446 = vpack.c.b16 %v4429, %v4429
      %v4447 = vpack.c.b16 %v4430, %v4430
      %v4448 = vpack.c.b16 %v4431, %v4431
      %v4449 = vpack.c.b16 %v4432, %v4432
      %v4450 = vpack.c.b16 %v4433, %v4433
      %v4451 = vpack.c.b16 %v4434, %v4434
      %v4452 = vpack.c.b16 %v4435, %v4435
      %v4453 = vpack.c.b16 %v4436, %v4436
      %v4454 = vpack.c.b16 %v4437, %v4437
      %v4455 = vpack.c.b16 %v4438, %v4438
      %v4456 = vpack.c.b16 %v4439, %v4439
      %4457 = vrot.lane.b32.xlu0 %v4440, 80
      %v4458 = vpop.permute.xlu0 %4457
      %4459 = vrot.lane.b32.xlu0 %v4441, 80
      %v4460 = vpop.permute.xlu0 %4459
      %4461 = vrot.lane.b32.xlu0 %v4442, 80
      %v4462 = vpop.permute.xlu0 %4461
      %4463 = vrot.lane.b32.xlu0 %v4443, 80
      %v4464 = vpop.permute.xlu0 %4463
      %4465 = vrot.lane.b32.xlu0 %v4444, 80
      %v4466 = vpop.permute.xlu0 %4465
      %4467 = vrot.lane.b32.xlu0 %v4445, 80
      %v4468 = vpop.permute.xlu0 %4467
      %4469 = vrot.lane.b32.xlu0 %v4446, 80
      %v4470 = vpop.permute.xlu0 %4469
      %4471 = vrot.lane.b32.xlu0 %v4447, 80
      %v4472 = vpop.permute.xlu0 %4471
      %4473 = vrot.lane.b32.xlu0 %v4448, 80
      %v4474 = vpop.permute.xlu0 %4473
      %4475 = vrot.lane.b32.xlu0 %v4449, 80
      %v4476 = vpop.permute.xlu0 %4475
      %4477 = vrot.lane.b32.xlu0 %v4450, 80
      %v4478 = vpop.permute.xlu0 %4477
      %4479 = vrot.lane.b32.xlu0 %v4451, 80
      %v4480 = vpop.permute.xlu0 %4479
      %4481 = vrot.lane.b32.xlu0 %v4452, 80
      %v4482 = vpop.permute.xlu0 %4481
      %4483 = vrot.lane.b32.xlu0 %v4453, 80
      %v4484 = vpop.permute.xlu0 %4483
      %4485 = vrot.lane.b32.xlu0 %v4454, 80
      %v4486 = vpop.permute.xlu0 %4485
      %4487 = vrot.lane.b32.xlu0 %v4455, 80
      %v4488 = vpop.permute.xlu0 %4487
      %4489 = vrot.lane.b32.xlu0 %v4456, 80
      %v4490 = vpop.permute.xlu0 %4489
      %4508 = vst.msk [vmem:[#allocation4 + $0x8] sm:$0xf] %vm2381, %v4458
      %4509 = vst.msk [vmem:[#allocation4 + $0x18] sm:$0xf] %vm2381, %v4460
      %4510 = vst.msk [vmem:[#allocation4 + $0x28] sm:$0xf] %vm2381, %v4462
      %4511 = vst.msk [vmem:[#allocation4 + $0x38] sm:$0xf] %vm2381, %v4464
      %4512 = vst.msk [vmem:[#allocation4 + $0x48] sm:$0xf] %vm2381, %v4466
      %4513 = vst.msk [vmem:[#allocation4 + $0x58] sm:$0xf] %vm2381, %v4468
      %4514 = vst.msk [vmem:[#allocation4 + $0x68] sm:$0xf] %vm2381, %v4470
      %4515 = vst.msk [vmem:[#allocation4 + $0x78] sm:$0xf] %vm2381, %v4472
      %4516 = vst.msk [vmem:[#allocation4 + $0x88] sm:$0xf] %vm2381, %v4474
      %4517 = vst.msk [vmem:[#allocation4 + $0x98] sm:$0xf] %vm2381, %v4476
      %4518 = vst.msk [vmem:[#allocation4 + $0xa8] sm:$0xf] %vm2381, %v4478
      %4519 = vst.msk [vmem:[#allocation4 + $0xb8] sm:$0xf] %vm2381, %v4480
      %4520 = vst.msk [vmem:[#allocation4 + $0xc8] sm:$0xf] %vm2381, %v4482
      %4521 = vst.msk [vmem:[#allocation4 + $0xd8] sm:$0xf] %vm2381, %v4484
      %4522 = vst.msk [vmem:[#allocation4 + $0xe8] sm:$0xf] %vm2381, %v4486
      %4523 = vst.msk [vmem:[#allocation4 + $0xf8] sm:$0xf] %vm2381, %v4488
      %4524 = vst.msk [vmem:[#allocation4 + $0x108] sm:$0xf] %vm2381, %v4490
      %v4525 = vld [vmem:[#allocation3 + $0x3a] sm:$0xff]
      %v4526 = vld [vmem:[#allocation3 + $0x42] sm:$0xff]
      %v4527 = vld [vmem:[#allocation3 + $0x4a] sm:$0xff]
      %v4528 = vld [vmem:[#allocation3 + $0x52] sm:$0xff]
      %v4529 = vld [vmem:[#allocation3 + $0x5a] sm:$0xff]
      %v4530 = vld [vmem:[#allocation3 + $0x62] sm:$0xff]
      %v4531 = vld [vmem:[#allocation3 + $0x6a] sm:$0xff]
      %v4532 = vld [vmem:[#allocation3 + $0x72] sm:$0xff]
      %v4533 = vld [vmem:[#allocation3 + $0x7a] sm:$0xff]
      %v4534 = vld [vmem:[#allocation3 + $0x82] sm:$0xff]
      %v4535 = vld [vmem:[#allocation3 + $0x8a] sm:$0xff]
      %v4536 = vld [vmem:[#allocation3 + $0x92] sm:$0xff]
      %v4537 = vld [vmem:[#allocation3 + $0x9a] sm:$0xff]
      %v4538 = vld [vmem:[#allocation3 + $0xa2] sm:$0xff]
      %v4539 = vld [vmem:[#allocation3 + $0xaa] sm:$0xff]
      %v4540 = vld [vmem:[#allocation3 + $0xb2] sm:$0xff]
      %v4541 = vld [vmem:[#allocation3 + $0xba] sm:$0xff]
      %v4542 = vpack.c.bf16 %v4526, %v4525
      %v4543 = vpack.c.bf16 %v4528, %v4527
      %v4544 = vpack.c.bf16 %v4530, %v4529
      %v4545 = vpack.c.bf16 %v4532, %v4531
      %v4546 = vpack.c.bf16 %v4534, %v4533
      %v4547 = vpack.c.bf16 %v4536, %v4535
      %v4548 = vpack.c.bf16 %v4538, %v4537
      %v4549 = vpack.c.bf16 %v4540, %v4539
      %v4550 = vpack.c.bf16 %v4541, %v4541
      %v4560 = vunpack.c.l.b16 %v4542
      %v4561 = vunpack.c.h.b16 %v4542
      %v4562 = vunpack.c.l.b16 %v4543
      %v4563 = vunpack.c.h.b16 %v4543
      %v4564 = vunpack.c.l.b16 %v4544
      %v4565 = vunpack.c.h.b16 %v4544
      %v4566 = vunpack.c.l.b16 %v4545
      %v4567 = vunpack.c.h.b16 %v4545
      %v4568 = vunpack.c.l.b16 %v4546
      %v4569 = vunpack.c.h.b16 %v4546
      %v4570 = vunpack.c.l.b16 %v4547
      %v4571 = vunpack.c.h.b16 %v4547
      %v4572 = vunpack.c.l.b16 %v4548
      %v4573 = vunpack.c.h.b16 %v4548
      %v4574 = vunpack.c.l.b16 %v4549
      %v4575 = vunpack.c.h.b16 %v4549
      %v4576 = vunpack.c.l.b16 %v4550
      %v4577 = vpack.c.b16 %v4560, %v4560
      %v4578 = vpack.c.b16 %v4561, %v4561
      %v4579 = vpack.c.b16 %v4562, %v4562
      %v4580 = vpack.c.b16 %v4563, %v4563
      %v4581 = vpack.c.b16 %v4564, %v4564
      %v4582 = vpack.c.b16 %v4565, %v4565
      %v4583 = vpack.c.b16 %v4566, %v4566
      %v4584 = vpack.c.b16 %v4567, %v4567
      %v4585 = vpack.c.b16 %v4568, %v4568
      %v4586 = vpack.c.b16 %v4569, %v4569
      %v4587 = vpack.c.b16 %v4570, %v4570
      %v4588 = vpack.c.b16 %v4571, %v4571
      %v4589 = vpack.c.b16 %v4572, %v4572
      %v4590 = vpack.c.b16 %v4573, %v4573
      %v4591 = vpack.c.b16 %v4574, %v4574
      %v4592 = vpack.c.b16 %v4575, %v4575
      %v4593 = vpack.c.b16 %v4576, %v4576
      %4594 = vrot.lane.b32.xlu0 %v4577, 96
      %v4595 = vpop.permute.xlu0 %4594
      %4596 = vrot.lane.b32.xlu0 %v4578, 96
      %v4597 = vpop.permute.xlu0 %4596
      %4598 = vrot.lane.b32.xlu0 %v4579, 96
      %v4599 = vpop.permute.xlu0 %4598
      %4600 = vrot.lane.b32.xlu0 %v4580, 96
      %v4601 = vpop.permute.xlu0 %4600
      %4602 = vrot.lane.b32.xlu0 %v4581, 96
      %v4603 = vpop.permute.xlu0 %4602
      %4604 = vrot.lane.b32.xlu0 %v4582, 96
      %v4605 = vpop.permute.xlu0 %4604
      %4606 = vrot.lane.b32.xlu0 %v4583, 96
      %v4607 = vpop.permute.xlu0 %4606
      %4608 = vrot.lane.b32.xlu0 %v4584, 96
      %v4609 = vpop.permute.xlu0 %4608
      %4610 = vrot.lane.b32.xlu0 %v4585, 96
      %v4611 = vpop.permute.xlu0 %4610
      %4612 = vrot.lane.b32.xlu0 %v4586, 96
      %v4613 = vpop.permute.xlu0 %4612
      %4614 = vrot.lane.b32.xlu0 %v4587, 96
      %v4615 = vpop.permute.xlu0 %4614
      %4616 = vrot.lane.b32.xlu0 %v4588, 96
      %v4617 = vpop.permute.xlu0 %4616
      %4618 = vrot.lane.b32.xlu0 %v4589, 96
      %v4619 = vpop.permute.xlu0 %4618
      %4620 = vrot.lane.b32.xlu0 %v4590, 96
      %v4621 = vpop.permute.xlu0 %4620
      %4622 = vrot.lane.b32.xlu0 %v4591, 96
      %v4623 = vpop.permute.xlu0 %4622
      %4624 = vrot.lane.b32.xlu0 %v4592, 96
      %v4625 = vpop.permute.xlu0 %4624
      %4626 = vrot.lane.b32.xlu0 %v4593, 96
      %v4627 = vpop.permute.xlu0 %4626
      %4645 = vst.msk [vmem:[#allocation4 + $0x8] sm:$0xf] %vm2519, %v4595
      %4646 = vst.msk [vmem:[#allocation4 + $0x18] sm:$0xf] %vm2519, %v4597
      %4647 = vst.msk [vmem:[#allocation4 + $0x28] sm:$0xf] %vm2519, %v4599
      %4648 = vst.msk [vmem:[#allocation4 + $0x38] sm:$0xf] %vm2519, %v4601
      %4649 = vst.msk [vmem:[#allocation4 + $0x48] sm:$0xf] %vm2519, %v4603
      %4650 = vst.msk [vmem:[#allocation4 + $0x58] sm:$0xf] %vm2519, %v4605
      %4651 = vst.msk [vmem:[#allocation4 + $0x68] sm:$0xf] %vm2519, %v4607
      %4652 = vst.msk [vmem:[#allocation4 + $0x78] sm:$0xf] %vm2519, %v4609
      %4653 = vst.msk [vmem:[#allocation4 + $0x88] sm:$0xf] %vm2519, %v4611
      %4654 = vst.msk [vmem:[#allocation4 + $0x98] sm:$0xf] %vm2519, %v4613
      %4655 = vst.msk [vmem:[#allocation4 + $0xa8] sm:$0xf] %vm2519, %v4615
      %4656 = vst.msk [vmem:[#allocation4 + $0xb8] sm:$0xf] %vm2519, %v4617
      %4657 = vst.msk [vmem:[#allocation4 + $0xc8] sm:$0xf] %vm2519, %v4619
      %4658 = vst.msk [vmem:[#allocation4 + $0xd8] sm:$0xf] %vm2519, %v4621
      %4659 = vst.msk [vmem:[#allocation4 + $0xe8] sm:$0xf] %vm2519, %v4623
      %4660 = vst.msk [vmem:[#allocation4 + $0xf8] sm:$0xf] %vm2519, %v4625
      %4661 = vst.msk [vmem:[#allocation4 + $0x108] sm:$0xf] %vm2519, %v4627
      %v4662 = vld [vmem:[#allocation3 + $0x3b] sm:$0xff]
      %v4663 = vld [vmem:[#allocation3 + $0x43] sm:$0xff]
      %v4664 = vld [vmem:[#allocation3 + $0x4b] sm:$0xff]
      %v4665 = vld [vmem:[#allocation3 + $0x53] sm:$0xff]
      %v4666 = vld [vmem:[#allocation3 + $0x5b] sm:$0xff]
      %v4667 = vld [vmem:[#allocation3 + $0x63] sm:$0xff]
      %v4668 = vld [vmem:[#allocation3 + $0x6b] sm:$0xff]
      %v4669 = vld [vmem:[#allocation3 + $0x73] sm:$0xff]
      %v4670 = vld [vmem:[#allocation3 + $0x7b] sm:$0xff]
      %v4671 = vld [vmem:[#allocation3 + $0x83] sm:$0xff]
      %v4672 = vld [vmem:[#allocation3 + $0x8b] sm:$0xff]
      %v4673 = vld [vmem:[#allocation3 + $0x93] sm:$0xff]
      %v4674 = vld [vmem:[#allocation3 + $0x9b] sm:$0xff]
      %v4675 = vld [vmem:[#allocation3 + $0xa3] sm:$0xff]
      %v4676 = vld [vmem:[#allocation3 + $0xab] sm:$0xff]
      %v4677 = vld [vmem:[#allocation3 + $0xb3] sm:$0xff]
      %v4678 = vld [vmem:[#allocation3 + $0xbb] sm:$0xff]
      %v4679 = vpack.c.bf16 %v4663, %v4662
      %v4680 = vpack.c.bf16 %v4665, %v4664
      %v4681 = vpack.c.bf16 %v4667, %v4666
      %v4682 = vpack.c.bf16 %v4669, %v4668
      %v4683 = vpack.c.bf16 %v4671, %v4670
      %v4684 = vpack.c.bf16 %v4673, %v4672
      %v4685 = vpack.c.bf16 %v4675, %v4674
      %v4686 = vpack.c.bf16 %v4677, %v4676
      %v4687 = vpack.c.bf16 %v4678, %v4678
      %v4697 = vunpack.c.l.b16 %v4679
      %v4698 = vunpack.c.h.b16 %v4679
      %v4699 = vunpack.c.l.b16 %v4680
      %v4700 = vunpack.c.h.b16 %v4680
      %v4701 = vunpack.c.l.b16 %v4681
      %v4702 = vunpack.c.h.b16 %v4681
      %v4703 = vunpack.c.l.b16 %v4682
      %v4704 = vunpack.c.h.b16 %v4682
      %v4705 = vunpack.c.l.b16 %v4683
      %v4706 = vunpack.c.h.b16 %v4683
      %v4707 = vunpack.c.l.b16 %v4684
      %v4708 = vunpack.c.h.b16 %v4684
      %v4709 = vunpack.c.l.b16 %v4685
      %v4710 = vunpack.c.h.b16 %v4685
      %v4711 = vunpack.c.l.b16 %v4686
      %v4712 = vunpack.c.h.b16 %v4686
      %v4713 = vunpack.c.l.b16 %v4687
      %v4714 = vpack.c.b16 %v4697, %v4697
      %v4715 = vpack.c.b16 %v4698, %v4698
      %v4716 = vpack.c.b16 %v4699, %v4699
      %v4717 = vpack.c.b16 %v4700, %v4700
      %v4718 = vpack.c.b16 %v4701, %v4701
      %v4719 = vpack.c.b16 %v4702, %v4702
      %v4720 = vpack.c.b16 %v4703, %v4703
      %v4721 = vpack.c.b16 %v4704, %v4704
      %v4722 = vpack.c.b16 %v4705, %v4705
      %v4723 = vpack.c.b16 %v4706, %v4706
      %v4724 = vpack.c.b16 %v4707, %v4707
      %v4725 = vpack.c.b16 %v4708, %v4708
      %v4726 = vpack.c.b16 %v4709, %v4709
      %v4727 = vpack.c.b16 %v4710, %v4710
      %v4728 = vpack.c.b16 %v4711, %v4711
      %v4729 = vpack.c.b16 %v4712, %v4712
      %v4730 = vpack.c.b16 %v4713, %v4713
      %4731 = vrot.lane.b32.xlu0 %v4714, 112
      %v4732 = vpop.permute.xlu0 %4731
      %4733 = vrot.lane.b32.xlu0 %v4715, 112
      %v4734 = vpop.permute.xlu0 %4733
      %4735 = vrot.lane.b32.xlu0 %v4716, 112
      %v4736 = vpop.permute.xlu0 %4735
      %4737 = vrot.lane.b32.xlu0 %v4717, 112
      %v4738 = vpop.permute.xlu0 %4737
      %4739 = vrot.lane.b32.xlu0 %v4718, 112
      %v4740 = vpop.permute.xlu0 %4739
      %4741 = vrot.lane.b32.xlu0 %v4719, 112
      %v4742 = vpop.permute.xlu0 %4741
      %4743 = vrot.lane.b32.xlu0 %v4720, 112
      %v4744 = vpop.permute.xlu0 %4743
      %4745 = vrot.lane.b32.xlu0 %v4721, 112
      %v4746 = vpop.permute.xlu0 %4745
      %4747 = vrot.lane.b32.xlu0 %v4722, 112
      %v4748 = vpop.permute.xlu0 %4747
      %4749 = vrot.lane.b32.xlu0 %v4723, 112
      %v4750 = vpop.permute.xlu0 %4749
      %4751 = vrot.lane.b32.xlu0 %v4724, 112
      %v4752 = vpop.permute.xlu0 %4751
      %4753 = vrot.lane.b32.xlu0 %v4725, 112
      %v4754 = vpop.permute.xlu0 %4753
      %4755 = vrot.lane.b32.xlu0 %v4726, 112
      %v4756 = vpop.permute.xlu0 %4755
      %4757 = vrot.lane.b32.xlu0 %v4727, 112
      %v4758 = vpop.permute.xlu0 %4757
      %4759 = vrot.lane.b32.xlu0 %v4728, 112
      %v4760 = vpop.permute.xlu0 %4759
      %4761 = vrot.lane.b32.xlu0 %v4729, 112
      %v4762 = vpop.permute.xlu0 %4761
      %4763 = vrot.lane.b32.xlu0 %v4730, 112
      %v4764 = vpop.permute.xlu0 %4763
      %4782 = vst.msk [vmem:[#allocation4 + $0x8] sm:$0xf] %vm2657, %v4732
      %4783 = vst.msk [vmem:[#allocation4 + $0x18] sm:$0xf] %vm2657, %v4734
      %4784 = vst.msk [vmem:[#allocation4 + $0x28] sm:$0xf] %vm2657, %v4736
      %4785 = vst.msk [vmem:[#allocation4 + $0x38] sm:$0xf] %vm2657, %v4738
      %4786 = vst.msk [vmem:[#allocation4 + $0x48] sm:$0xf] %vm2657, %v4740
      %4787 = vst.msk [vmem:[#allocation4 + $0x58] sm:$0xf] %vm2657, %v4742
      %4788 = vst.msk [vmem:[#allocation4 + $0x68] sm:$0xf] %vm2657, %v4744
      %4789 = vst.msk [vmem:[#allocation4 + $0x78] sm:$0xf] %vm2657, %v4746
      %4790 = vst.msk [vmem:[#allocation4 + $0x88] sm:$0xf] %vm2657, %v4748
      %4791 = vst.msk [vmem:[#allocation4 + $0x98] sm:$0xf] %vm2657, %v4750
      %4792 = vst.msk [vmem:[#allocation4 + $0xa8] sm:$0xf] %vm2657, %v4752
      %4793 = vst.msk [vmem:[#allocation4 + $0xb8] sm:$0xf] %vm2657, %v4754
      %4794 = vst.msk [vmem:[#allocation4 + $0xc8] sm:$0xf] %vm2657, %v4756
      %4795 = vst.msk [vmem:[#allocation4 + $0xd8] sm:$0xf] %vm2657, %v4758
      %4796 = vst.msk [vmem:[#allocation4 + $0xe8] sm:$0xf] %vm2657, %v4760
      %4797 = vst.msk [vmem:[#allocation4 + $0xf8] sm:$0xf] %vm2657, %v4762
      %4798 = vst.msk [vmem:[#allocation4 + $0x108] sm:$0xf] %vm2657, %v4764
      %v4799 = vld [vmem:[#allocation3 + $0x3c] sm:$0xff]
      %v4800 = vld [vmem:[#allocation3 + $0x44] sm:$0xff]
      %v4801 = vld [vmem:[#allocation3 + $0x4c] sm:$0xff]
      %v4802 = vld [vmem:[#allocation3 + $0x54] sm:$0xff]
      %v4803 = vld [vmem:[#allocation3 + $0x5c] sm:$0xff]
      %v4804 = vld [vmem:[#allocation3 + $0x64] sm:$0xff]
      %v4805 = vld [vmem:[#allocation3 + $0x6c] sm:$0xff]
      %v4806 = vld [vmem:[#allocation3 + $0x74] sm:$0xff]
      %v4807 = vld [vmem:[#allocation3 + $0x7c] sm:$0xff]
      %v4808 = vld [vmem:[#allocation3 + $0x84] sm:$0xff]
      %v4809 = vld [vmem:[#allocation3 + $0x8c] sm:$0xff]
      %v4810 = vld [vmem:[#allocation3 + $0x94] sm:$0xff]
      %v4811 = vld [vmem:[#allocation3 + $0x9c] sm:$0xff]
      %v4812 = vld [vmem:[#allocation3 + $0xa4] sm:$0xff]
      %v4813 = vld [vmem:[#allocation3 + $0xac] sm:$0xff]
      %v4814 = vld [vmem:[#allocation3 + $0xb4] sm:$0xff]
      %v4815 = vld [vmem:[#allocation3 + $0xbc] sm:$0xff]
      %v4816 = vpack.c.bf16 %v4800, %v4799
      %v4817 = vpack.c.bf16 %v4802, %v4801
      %v4818 = vpack.c.bf16 %v4804, %v4803
      %v4819 = vpack.c.bf16 %v4806, %v4805
      %v4820 = vpack.c.bf16 %v4808, %v4807
      %v4821 = vpack.c.bf16 %v4810, %v4809
      %v4822 = vpack.c.bf16 %v4812, %v4811
      %v4823 = vpack.c.bf16 %v4814, %v4813
      %v4824 = vpack.c.bf16 %v4815, %v4815
      %v4834 = vunpack.c.l.b16 %v4816
      %v4835 = vunpack.c.h.b16 %v4816
      %v4836 = vunpack.c.l.b16 %v4817
      %v4837 = vunpack.c.h.b16 %v4817
      %v4838 = vunpack.c.l.b16 %v4818
      %v4839 = vunpack.c.h.b16 %v4818
      %v4840 = vunpack.c.l.b16 %v4819
      %v4841 = vunpack.c.h.b16 %v4819
      %v4842 = vunpack.c.l.b16 %v4820
      %v4843 = vunpack.c.h.b16 %v4820
      %v4844 = vunpack.c.l.b16 %v4821
      %v4845 = vunpack.c.h.b16 %v4821
      %v4846 = vunpack.c.l.b16 %v4822
      %v4847 = vunpack.c.h.b16 %v4822
      %v4848 = vunpack.c.l.b16 %v4823
      %v4849 = vunpack.c.h.b16 %v4823
      %v4850 = vunpack.c.l.b16 %v4824
      %v4851 = vpack.c.b16 %v4834, %v4834
      %v4852 = vpack.c.b16 %v4835, %v4835
      %v4853 = vpack.c.b16 %v4836, %v4836
      %v4854 = vpack.c.b16 %v4837, %v4837
      %v4855 = vpack.c.b16 %v4838, %v4838
      %v4856 = vpack.c.b16 %v4839, %v4839
      %v4857 = vpack.c.b16 %v4840, %v4840
      %v4858 = vpack.c.b16 %v4841, %v4841
      %v4859 = vpack.c.b16 %v4842, %v4842
      %v4860 = vpack.c.b16 %v4843, %v4843
      %v4861 = vpack.c.b16 %v4844, %v4844
      %v4862 = vpack.c.b16 %v4845, %v4845
      %v4863 = vpack.c.b16 %v4846, %v4846
      %v4864 = vpack.c.b16 %v4847, %v4847
      %v4865 = vpack.c.b16 %v4848, %v4848
      %v4866 = vpack.c.b16 %v4849, %v4849
      %v4867 = vpack.c.b16 %v4850, %v4850
      %4885 = vst.msk [vmem:[#allocation4 + $0xc] sm:$0xf] %vm1691, %v4851
      %4886 = vst.msk [vmem:[#allocation4 + $0x1c] sm:$0xf] %vm1691, %v4852
      %4887 = vst.msk [vmem:[#allocation4 + $0x2c] sm:$0xf] %vm1691, %v4853
      %4888 = vst.msk [vmem:[#allocation4 + $0x3c] sm:$0xf] %vm1691, %v4854
      %4889 = vst.msk [vmem:[#allocation4 + $0x4c] sm:$0xf] %vm1691, %v4855
      %4890 = vst.msk [vmem:[#allocation4 + $0x5c] sm:$0xf] %vm1691, %v4856
      %4891 = vst.msk [vmem:[#allocation4 + $0x6c] sm:$0xf] %vm1691, %v4857
      %4892 = vst.msk [vmem:[#allocation4 + $0x7c] sm:$0xf] %vm1691, %v4858
      %4893 = vst.msk [vmem:[#allocation4 + $0x8c] sm:$0xf] %vm1691, %v4859
      %4894 = vst.msk [vmem:[#allocation4 + $0x9c] sm:$0xf] %vm1691, %v4860
      %4895 = vst.msk [vmem:[#allocation4 + $0xac] sm:$0xf] %vm1691, %v4861
      %4896 = vst.msk [vmem:[#allocation4 + $0xbc] sm:$0xf] %vm1691, %v4862
      %4897 = vst.msk [vmem:[#allocation4 + $0xcc] sm:$0xf] %vm1691, %v4863
      %4898 = vst.msk [vmem:[#allocation4 + $0xdc] sm:$0xf] %vm1691, %v4864
      %4899 = vst.msk [vmem:[#allocation4 + $0xec] sm:$0xf] %vm1691, %v4865
      %4900 = vst.msk [vmem:[#allocation4 + $0xfc] sm:$0xf] %vm1691, %v4866
      %4901 = vst.msk [vmem:[#allocation4 + $0x10c] sm:$0xf] %vm1691, %v4867
      %v4902 = vld [vmem:[#allocation4] sm:$0xff]
      %v4903 = vld [vmem:[#allocation4 + $0x8] sm:$0xff]
      %v4904 = vld [vmem:[#allocation4 + $0x10] sm:$0xff]
      %v4905 = vld [vmem:[#allocation4 + $0x18] sm:$0xff]
      %v4906 = vld [vmem:[#allocation4 + $0x20] sm:$0xff]
      %v4907 = vld [vmem:[#allocation4 + $0x28] sm:$0xff]
      %v4908 = vld [vmem:[#allocation4 + $0x30] sm:$0xff]
      %v4909 = vld [vmem:[#allocation4 + $0x38] sm:$0xff]
      %v4910 = vld [vmem:[#allocation4 + $0x40] sm:$0xff]
      %v4911 = vld [vmem:[#allocation4 + $0x48] sm:$0xff]
      %v4912 = vld [vmem:[#allocation4 + $0x50] sm:$0xff]
      %v4913 = vld [vmem:[#allocation4 + $0x58] sm:$0xff]
      %v4914 = vld [vmem:[#allocation4 + $0x60] sm:$0xff]
      %v4915 = vld [vmem:[#allocation4 + $0x68] sm:$0xff]
      %v4916 = vld [vmem:[#allocation4 + $0x70] sm:$0xff]
      %v4917 = vld [vmem:[#allocation4 + $0x78] sm:$0xff]
      %v4918 = vld [vmem:[#allocation4 + $0x80] sm:$0xff]
      %v4919 = vld [vmem:[#allocation4 + $0x88] sm:$0xff]
      %v4920 = vld [vmem:[#allocation4 + $0x90] sm:$0xff]
      %v4921 = vld [vmem:[#allocation4 + $0x98] sm:$0xff]
      %v4922 = vld [vmem:[#allocation4 + $0xa0] sm:$0xff]
      %v4923 = vld [vmem:[#allocation4 + $0xa8] sm:$0xff]
      %v4924 = vld [vmem:[#allocation4 + $0xb0] sm:$0xff]
      %v4925 = vld [vmem:[#allocation4 + $0xb8] sm:$0xff]
      %v4926 = vld [vmem:[#allocation4 + $0xc0] sm:$0xff]
      %v4927 = vld [vmem:[#allocation4 + $0xc8] sm:$0xff]
      %v4928 = vld [vmem:[#allocation4 + $0xd0] sm:$0xff]
      %v4929 = vld [vmem:[#allocation4 + $0xd8] sm:$0xff]
      %v4930 = vld [vmem:[#allocation4 + $0xe0] sm:$0xff]
      %v4931 = vld [vmem:[#allocation4 + $0xe8] sm:$0xff]
      %v4932 = vld [vmem:[#allocation4 + $0xf0] sm:$0xff]
      %v4933 = vld [vmem:[#allocation4 + $0xf8] sm:$0xff]
      %v4934 = vld [vmem:[#allocation4 + $0x100] sm:$0xff]
      %v4935 = vld [vmem:[#allocation4 + $0x108] sm:$0xff]
      %v4936 = vld [vmem:[%s3] sm:$0xf]
      %v4937 = vld [vmem:[%s3 + $0x4] sm:$0xf]
      %v4938 = vld [vmem:[%s3 + $0x8] sm:$0xf]
      %v4939 = vld [vmem:[%s3 + $0xc] sm:$0xf]
      %v4940 = vld [vmem:[%s3 + $0x10] sm:$0xf]
      %v4941 = vld [vmem:[%s3 + $0x14] sm:$0xf]
      %v4942 = vld [vmem:[%s3 + $0x18] sm:$0xf]
      %v4943 = vld [vmem:[%s3 + $0x1c] sm:$0xf]
      %v4944 = vld [vmem:[%s3 + $0x20] sm:$0xf]
      %v4945 = vld [vmem:[%s3 + $0x24] sm:$0xf]
      %v4946 = vld [vmem:[%s3 + $0x28] sm:$0xf]
      %v4947 = vld [vmem:[%s3 + $0x2c] sm:$0xf]
      %v4948 = vld [vmem:[%s3 + $0x30] sm:$0xf]
      %v4949 = vld [vmem:[%s3 + $0x34] sm:$0xf]
      %v4950 = vld [vmem:[%s3 + $0x38] sm:$0xf]
      %v4951 = vld [vmem:[%s3 + $0x3c] sm:$0xf]
      %v4952 = vld [vmem:[%s3 + $0x40] sm:$0xf]
      %v4953 = vld [vmem:[%s3 + $0x44] sm:$0xf]
      %v4954 = vld [vmem:[%s3 + $0x48] sm:$0xf]
      %v4955 = vld [vmem:[%s3 + $0x4c] sm:$0xf]
      %v4956 = vld [vmem:[%s3 + $0x50] sm:$0xf]
      %v4957 = vld [vmem:[%s3 + $0x54] sm:$0xf]
      %v4958 = vld [vmem:[%s3 + $0x58] sm:$0xf]
      %v4959 = vld [vmem:[%s3 + $0x5c] sm:$0xf]
      %v4960 = vld [vmem:[%s3 + $0x60] sm:$0xf]
      %v4961 = vld [vmem:[%s3 + $0x64] sm:$0xf]
      %v4962 = vld [vmem:[%s3 + $0x68] sm:$0xf]
      %v4963 = vld [vmem:[%s3 + $0x6c] sm:$0xf]
      %v4964 = vld [vmem:[%s3 + $0x70] sm:$0xf]
      %v4965 = vld [vmem:[%s3 + $0x74] sm:$0xf]
      %v4966 = vld [vmem:[%s3 + $0x78] sm:$0xf]
      %v4967 = vld [vmem:[%s3 + $0x7c] sm:$0xf]
      %v4968 = vld [vmem:[%s3 + $0x80] sm:$0xf]
      %v4969 = vld [vmem:[%s3 + $0x84] sm:$0xf]
      %v4970 = vld [vmem:[%s3 + $0x88] sm:$0xf]
      %v4971 = vld [vmem:[%s3 + $0x8c] sm:$0xf]
      %v4972 = vld [vmem:[%s3 + $0x90] sm:$0xf]
      %v4973 = vld [vmem:[%s3 + $0x94] sm:$0xf]
      %v4974 = vld [vmem:[%s3 + $0x98] sm:$0xf]
      %v4975 = vld [vmem:[%s3 + $0x9c] sm:$0xf]
      %v4976 = vld [vmem:[%s3 + $0xa0] sm:$0xf]
      %v4977 = vld [vmem:[%s3 + $0xa4] sm:$0xf]
      %v4978 = vld [vmem:[%s3 + $0xa8] sm:$0xf]
      %v4979 = vld [vmem:[%s3 + $0xac] sm:$0xf]
      %v4980 = vld [vmem:[%s3 + $0xb0] sm:$0xf]
      %v4981 = vld [vmem:[%s3 + $0xb4] sm:$0xf]
      %v4982 = vld [vmem:[%s3 + $0xb8] sm:$0xf]
      %v4983 = vld [vmem:[%s3 + $0xbc] sm:$0xf]
      %v4984 = vld [vmem:[%s3 + $0xc0] sm:$0xf]
      %v4985 = vld [vmem:[%s3 + $0xc4] sm:$0xf]
      %v5020 = vunpack.c.l.b16 %v4902
      %v5021 = vunpack.c.h.b16 %v4902
      %v5022 = vunpack.c.l.b16 %v4903
      %v5023 = vunpack.c.h.b16 %v4903
      %v5024 = vunpack.c.l.b16 %v4904
      %v5025 = vunpack.c.h.b16 %v4904
      %v5026 = vunpack.c.l.b16 %v4905
      %v5027 = vunpack.c.h.b16 %v4905
      %v5028 = vunpack.c.l.b16 %v4906
      %v5029 = vunpack.c.h.b16 %v4906
      %v5030 = vunpack.c.l.b16 %v4907
      %v5031 = vunpack.c.h.b16 %v4907
      %v5032 = vunpack.c.l.b16 %v4908
      %v5033 = vunpack.c.h.b16 %v4908
      %v5034 = vunpack.c.l.b16 %v4909
      %v5035 = vunpack.c.h.b16 %v4909
      %v5036 = vunpack.c.l.b16 %v4910
      %v5037 = vunpack.c.h.b16 %v4910
      %v5038 = vunpack.c.l.b16 %v4911
      %v5039 = vunpack.c.h.b16 %v4911
      %v5040 = vunpack.c.l.b16 %v4912
      %v5041 = vunpack.c.h.b16 %v4912
      %v5042 = vunpack.c.l.b16 %v4913
      %v5043 = vunpack.c.h.b16 %v4913
      %v5044 = vunpack.c.l.b16 %v4914
      %v5045 = vunpack.c.h.b16 %v4914
      %v5046 = vunpack.c.l.b16 %v4915
      %v5047 = vunpack.c.h.b16 %v4915
      %v5048 = vunpack.c.l.b16 %v4916
      %v5049 = vunpack.c.h.b16 %v4916
      %v5050 = vunpack.c.l.b16 %v4917
      %v5051 = vunpack.c.h.b16 %v4917
      %v5052 = vunpack.c.l.b16 %v4918
      %v5053 = vunpack.c.h.b16 %v4918
      %v5054 = vunpack.c.l.b16 %v4919
      %v5055 = vunpack.c.h.b16 %v4919
      %v5056 = vunpack.c.l.b16 %v4920
      %v5057 = vunpack.c.h.b16 %v4920
      %v5058 = vunpack.c.l.b16 %v4921
      %v5059 = vunpack.c.h.b16 %v4921
      %v5060 = vunpack.c.l.b16 %v4922
      %v5061 = vunpack.c.h.b16 %v4922
      %v5062 = vunpack.c.l.b16 %v4923
      %v5063 = vunpack.c.h.b16 %v4923
      %v5064 = vunpack.c.l.b16 %v4924
      %v5065 = vunpack.c.h.b16 %v4924
      %v5066 = vunpack.c.l.b16 %v4925
      %v5067 = vunpack.c.h.b16 %v4925
      %v5068 = vunpack.c.l.b16 %v4926
      %v5069 = vunpack.c.h.b16 %v4926
      %v5070 = vunpack.c.l.b16 %v4927
      %v5071 = vunpack.c.h.b16 %v4927
      %v5072 = vunpack.c.l.b16 %v4928
      %v5073 = vunpack.c.h.b16 %v4928
      %v5074 = vunpack.c.l.b16 %v4929
      %v5075 = vunpack.c.h.b16 %v4929
      %v5076 = vunpack.c.l.b16 %v4930
      %v5077 = vunpack.c.h.b16 %v4930
      %v5078 = vunpack.c.l.b16 %v4931
      %v5079 = vunpack.c.h.b16 %v4931
      %v5080 = vunpack.c.l.b16 %v4932
      %v5081 = vunpack.c.h.b16 %v4932
      %v5082 = vunpack.c.l.b16 %v4933
      %v5083 = vunpack.c.h.b16 %v4933
      %v5084 = vunpack.c.l.b16 %v4934
      %v5085 = vunpack.c.h.b16 %v4934
      %v5086 = vunpack.c.l.b16 %v4935
      %v5087 = vunpack.c.h.b16 %v4935
      %v5088 = vpack.c.b16 %v5024, %v5020
      %v5089 = vpack.c.b16 %v5025, %v5021
      %v5090 = vpack.c.b16 %v5026, %v5022
      %v5091 = vpack.c.b16 %v5027, %v5023
      %v5092 = vpack.c.b16 %v5032, %v5028
      %v5093 = vpack.c.b16 %v5033, %v5029
      %v5094 = vpack.c.b16 %v5034, %v5030
      %v5095 = vpack.c.b16 %v5035, %v5031
      %v5096 = vpack.c.b16 %v5040, %v5036
      %v5097 = vpack.c.b16 %v5041, %v5037
      %v5098 = vpack.c.b16 %v5042, %v5038
      %v5099 = vpack.c.b16 %v5043, %v5039
      %v5100 = vpack.c.b16 %v5048, %v5044
      %v5101 = vpack.c.b16 %v5049, %v5045
      %v5102 = vpack.c.b16 %v5050, %v5046
      %v5103 = vpack.c.b16 %v5051, %v5047
      %v5104 = vpack.c.b16 %v5056, %v5052
      %v5105 = vpack.c.b16 %v5057, %v5053
      %v5106 = vpack.c.b16 %v5058, %v5054
      %v5107 = vpack.c.b16 %v5059, %v5055
      %v5108 = vpack.c.b16 %v5064, %v5060
      %v5109 = vpack.c.b16 %v5065, %v5061
      %v5110 = vpack.c.b16 %v5066, %v5062
      %v5111 = vpack.c.b16 %v5067, %v5063
      %v5112 = vpack.c.b16 %v5072, %v5068
      %v5113 = vpack.c.b16 %v5073, %v5069
      %v5114 = vpack.c.b16 %v5074, %v5070
      %v5115 = vpack.c.b16 %v5075, %v5071
      %v5116 = vpack.c.b16 %v5080, %v5076
      %v5117 = vpack.c.b16 %v5081, %v5077
      %v5118 = vpack.c.b16 %v5082, %v5078
      %v5119 = vpack.c.b16 %v5083, %v5079
      %v5120 = vpack.c.b16 %v5084, %v5084
      %v5121 = vpack.c.b16 %v5085, %v5085
      %v5122 = vpack.c.b16 %v5086, %v5086
      %v5123 = vpack.c.b16 %v5087, %v5087
      %v5201 = vunpack.c.l.b16 %v4936
      %v5202 = vunpack.c.l.b16 %v4937
      %v5203 = vunpack.c.l.b16 %v4938
      %v5204 = vunpack.c.l.b16 %v4939
      %v5205 = vunpack.c.l.b16 %v4940
      %v5206 = vunpack.c.l.b16 %v4941
      %v5207 = vunpack.c.l.b16 %v4942
      %v5208 = vunpack.c.l.b16 %v4943
      %v5209 = vunpack.c.l.b16 %v4944
      %v5210 = vunpack.c.l.b16 %v4945
      %v5211 = vunpack.c.l.b16 %v4946
      %v5212 = vunpack.c.l.b16 %v4947
      %v5213 = vunpack.c.l.b16 %v4948
      %v5214 = vunpack.c.l.b16 %v4949
      %v5215 = vunpack.c.l.b16 %v4950
      %v5216 = vunpack.c.l.b16 %v4951
      %v5217 = vunpack.c.l.b16 %v4952
      %v5218 = vunpack.c.l.b16 %v4953
      %v5219 = vunpack.c.l.b16 %v4954
      %v5220 = vunpack.c.l.b16 %v4955
      %v5221 = vunpack.c.l.b16 %v4956
      %v5222 = vunpack.c.l.b16 %v4957
      %v5223 = vunpack.c.l.b16 %v4958
      %v5224 = vunpack.c.l.b16 %v4959
      %v5225 = vunpack.c.l.b16 %v4960
      %v5226 = vunpack.c.l.b16 %v4961
      %v5227 = vunpack.c.l.b16 %v4962
      %v5228 = vunpack.c.l.b16 %v4963
      %v5229 = vunpack.c.l.b16 %v4964
      %v5230 = vunpack.c.l.b16 %v4965
      %v5231 = vunpack.c.l.b16 %v4966
      %v5232 = vunpack.c.l.b16 %v4967
      %v5233 = vunpack.c.l.b16 %v4968
      %v5234 = vunpack.c.l.b16 %v4969
      %v5235 = vunpack.c.l.b16 %v4970
      %v5236 = vunpack.c.l.b16 %v4971
      %v5237 = vunpack.c.l.b16 %v4972
      %v5238 = vunpack.c.l.b16 %v4973
      %v5239 = vunpack.c.l.b16 %v4974
      %v5240 = vunpack.c.l.b16 %v4975
      %v5241 = vunpack.c.l.b16 %v4976
      %v5242 = vunpack.c.l.b16 %v4977
      %v5243 = vunpack.c.l.b16 %v4978
      %v5244 = vunpack.c.l.b16 %v4979
      %v5245 = vunpack.c.l.b16 %v4980
      %v5246 = vunpack.c.l.b16 %v4981
      %v5247 = vunpack.c.l.b16 %v4982
      %v5248 = vunpack.c.l.b16 %v4983
      %v5249 = vunpack.c.l.b16 %v4984
      %v5250 = vunpack.c.l.b16 %v4985
      %v5251 = vpack.c.b16 %v5202, %v5201
      %v5252 = vpack.c.b16 %v5204, %v5203
      %v5253 = vpack.c.b16 %v5206, %v5205
      %v5254 = vpack.c.b16 %v5208, %v5207
      %v5255 = vpack.c.b16 %v5210, %v5209
      %v5256 = vpack.c.b16 %v5212, %v5211
      %v5257 = vpack.c.b16 %v5214, %v5213
      %v5258 = vpack.c.b16 %v5216, %v5215
      %v5259 = vpack.c.b16 %v5218, %v5217
      %v5260 = vpack.c.b16 %v5220, %v5219
      %v5261 = vpack.c.b16 %v5222, %v5221
      %v5262 = vpack.c.b16 %v5224, %v5223
      %v5263 = vpack.c.b16 %v5226, %v5225
      %v5264 = vpack.c.b16 %v5228, %v5227
      %v5265 = vpack.c.b16 %v5230, %v5229
      %v5266 = vpack.c.b16 %v5232, %v5231
      %v5267 = vpack.c.b16 %v5234, %v5233
      %v5268 = vpack.c.b16 %v5236, %v5235
      %v5269 = vpack.c.b16 %v5238, %v5237
      %v5270 = vpack.c.b16 %v5240, %v5239
      %v5271 = vpack.c.b16 %v5242, %v5241
      %v5272 = vpack.c.b16 %v5244, %v5243
      %v5273 = vpack.c.b16 %v5246, %v5245
      %v5274 = vpack.c.b16 %v5248, %v5247
      %v5275 = vpack.c.b16 %v5250, %v5249
      %v5302 = vsel %vm1107, %v5091, 0
      %v5305 = vsel %vm1107, %v5095, 0
      %v5308 = vsel %vm1107, %v5099, 0
      %v5311 = vsel %vm1107, %v5103, 0
      %v5314 = vsel %vm1107, %v5107, 0
      %v5317 = vsel %vm1107, %v5111, 0
      %v5320 = vsel %vm1107, %v5115, 0
      %v5323 = vsel %vm1107, %v5119, 0
      %v5326 = vsel %vm1107, %v5123, 0
      %5328 = vmatprep.subr.bf16.mxu0 0
      %5329 = vmatpush1.bf16.msra.mxu0 %v5251
      %5330 = vmatprep.subr.bf16.mxu0 0
      %5331 = vmatpush1.bf16.msra.mxu0 %v5252
      %5332 = vmatprep.subr.bf16.mxu0 0
      %5333 = vmatpush1.bf16.msra.mxu0 %v5253
      %5334 = vmatprep.subr.bf16.mxu0 0
      %5335 = vmatpush1.bf16.msra.mxu0 %v5254
      %5336 = vmatprep.subr.bf16.mxu0 0
      %5337 = vmatpush1.bf16.msra.mxu0 %v5255
      %5338 = vmatprep.subr.bf16.mxu0 0
      %5339 = vmatpush1.bf16.msra.mxu0 %v5256
      %5340 = vmatprep.subr.bf16.mxu0 0
      %5341 = vmatpush1.bf16.msra.mxu0 %v5257
      %5342 = vmatprep.subr.bf16.mxu0 0
      %5343 = vmatpush1.bf16.msra.mxu0 %v5258
      %5344 = vmatprep.subr.bf16.mxu0 0
      %5345 = vmatpush1.bf16.msra.mxu0 %v5259
      %5346 = vmatprep.subr.bf16.mxu0 0
      %5347 = vmatpush1.bf16.msra.mxu0 %v5260
      %5348 = vmatprep.subr.bf16.mxu0 0
      %5349 = vmatpush1.bf16.msra.mxu0 %v5261
      %5350 = vmatprep.subr.bf16.mxu0 0
      %5351 = vmatpush1.bf16.msra.mxu0 %v5262
      %5352 = vmatprep.subr.bf16.mxu0 0
      %5353 = vmatpush1.bf16.msra.mxu0 %v5263
      %5354 = vmatprep.subr.bf16.mxu0 0
      %5355 = vmatpush1.bf16.msra.mxu0 %v5264
      %5356 = vmatprep.subr.bf16.mxu0 0
      %5357 = vmatpush1.bf16.msra.mxu0 %v5265
      %5358 = vmatprep.subr.bf16.mxu0 0
      %5359 = vmatpush1.bf16.msra.mxu0 %v5266
      %5360 = vmatprep.mubr.bf16.mxu0 %v5089
      %5361 = vmatmul.mubr.bf16.gmra.mrb[0].mxu0 %v5088
      %v5362 = vpop.f32.mrb[0].mxu0
      %v5363 = vadd.f32 0.0, %v5362
      %v5364 = vpop.f32.mrb[0].mxu0
      %v5365 = vpop.f32.mrb[0].mxu0
      %v5366 = vadd.f32 0.0, %v5365
      %v5367 = vpop.f32.mrb[0].mxu0
      %5368 = vmatprep.mubr.bf16.mxu0 %v5093
      %5369 = vmatmul.mubr.bf16.gmra.mrb[0].mxu0 %v5092
      %v5370 = vpop.f32.mrb[0].mxu0
      %v5371 = vadd.f32 0.0, %v5370
      %v5372 = vpop.f32.mrb[0].mxu0
      %v5373 = vpop.f32.mrb[0].mxu0
      %v5374 = vadd.f32 0.0, %v5373
      %v5375 = vpop.f32.mrb[0].mxu0
      %5376 = vmatprep.mubr.bf16.mxu0 %v5097
      %5377 = vmatmul.mubr.bf16.gmra.mrb[0].mxu0 %v5096
      %v5378 = vpop.f32.mrb[0].mxu0
      %v5379 = vadd.f32 0.0, %v5378
      %v5380 = vpop.f32.mrb[0].mxu0
      %v5381 = vpop.f32.mrb[0].mxu0
      %v5382 = vadd.f32 0.0, %v5381
      %v5383 = vpop.f32.mrb[0].mxu0
      %5384 = vmatprep.mubr.bf16.mxu0 %v5101
      %5385 = vmatmul.mubr.bf16.gmra.mrb[0].mxu0 %v5100
      %v5386 = vpop.f32.mrb[0].mxu0
      %v5387 = vadd.f32 0.0, %v5386
      %v5388 = vpop.f32.mrb[0].mxu0
      %v5389 = vpop.f32.mrb[0].mxu0
      %v5390 = vadd.f32 0.0, %v5389
      %v5391 = vpop.f32.mrb[0].mxu0
      %5392 = vmatprep.mubr.bf16.mxu0 %v5105
      %5393 = vmatmul.mubr.bf16.gmra.mrb[0].mxu0 %v5104
      %v5394 = vpop.f32.mrb[0].mxu0
      %v5395 = vadd.f32 0.0, %v5394
      %v5396 = vpop.f32.mrb[0].mxu0
      %v5397 = vpop.f32.mrb[0].mxu0
      %v5398 = vadd.f32 0.0, %v5397
      %v5399 = vpop.f32.mrb[0].mxu0
      %5400 = vmatprep.mubr.bf16.mxu0 %v5109
      %5401 = vmatmul.mubr.bf16.gmra.mrb[0].mxu0 %v5108
      %v5402 = vpop.f32.mrb[0].mxu0
      %v5403 = vadd.f32 0.0, %v5402
      %v5404 = vpop.f32.mrb[0].mxu0
      %v5405 = vpop.f32.mrb[0].mxu0
      %v5406 = vadd.f32 0.0, %v5405
      %v5407 = vpop.f32.mrb[0].mxu0
      %5408 = vmatprep.mubr.bf16.mxu0 %v5113
      %5409 = vmatmul.mubr.bf16.gmra.mrb[0].mxu0 %v5112
      %v5410 = vpop.f32.mrb[0].mxu0
      %v5411 = vadd.f32 0.0, %v5410
      %v5412 = vpop.f32.mrb[0].mxu0
      %v5413 = vpop.f32.mrb[0].mxu0
      %v5414 = vadd.f32 0.0, %v5413
      %v5415 = vpop.f32.mrb[0].mxu0
      %5416 = vmatprep.mubr.bf16.mxu0 %v5117
      %5417 = vmatmul.mubr.bf16.gmra.mrb[0].mxu0 %v5116
      %v5418 = vpop.f32.mrb[0].mxu0
      %v5419 = vadd.f32 0.0, %v5418
      %v5420 = vpop.f32.mrb[0].mxu0
      %v5421 = vpop.f32.mrb[0].mxu0
      %v5422 = vadd.f32 0.0, %v5421
      %v5423 = vpop.f32.mrb[0].mxu0
      %5424 = vmatprep.mubr.bf16.mxu0 %v5121
      %5425 = vmatmul.mubr.bf16.gmra.mrb[0].mxu0 %v5120
      %v5426 = vpop.f32.mrb[0].mxu0
      %v5427 = vadd.f32 0.0, %v5426
      %v5428 = vpop.f32.mrb[0].mxu0
      %v5429 = vpop.f32.mrb[0].mxu0
      %v5430 = vpop.f32.mrb[0].mxu0
      %5431 = vdwg.mxu0
      %5432 = vmatprep.subr.bf16.mxu0 0
      %5433 = vmatpush1.bf16.msra.mxu0 %v5267
      %5434 = vmatprep.subr.bf16.mxu0 0
      %5435 = vmatpush1.bf16.msra.mxu0 %v5268
      %5436 = vmatprep.subr.bf16.mxu0 0
      %5437 = vmatpush1.bf16.msra.mxu0 %v5269
      %5438 = vmatprep.subr.bf16.mxu0 0
      %5439 = vmatpush1.bf16.msra.mxu0 %v5270
      %5440 = vmatprep.subr.bf16.mxu0 0
      %5441 = vmatpush1.bf16.msra.mxu0 %v5271
      %5442 = vmatprep.subr.bf16.mxu0 0
      %5443 = vmatpush1.bf16.msra.mxu0 %v5272
      %5444 = vmatprep.subr.bf16.mxu0 0
      %5445 = vmatpush1.bf16.msra.mxu0 %v5273
      %5446 = vmatprep.subr.bf16.mxu0 0
      %5447 = vmatpush1.bf16.msra.mxu0 %v5274
      %5448 = vmatprep.subr.bf16.mxu0 0
      %5449 = vmatpush1.bf16.msra.mxu0 %v5275
      %5450 = vmatprep.subr.bf16.mxu0 0
      %5451 = vmatpush1.bf16.msra.mxu0 0
      %5452 = vmatprep.subr.bf16.mxu0 0
      %5453 = vmatpush1.bf16.msra.mxu0 0
      %5454 = vmatprep.subr.bf16.mxu0 0
      %5455 = vmatpush1.bf16.msra.mxu0 0
      %5456 = vmatprep.subr.bf16.mxu0 0
      %5457 = vmatpush1.bf16.msra.mxu0 0
      %5458 = vmatprep.subr.bf16.mxu0 0
      %5459 = vmatpush1.bf16.msra.mxu0 0
      %5460 = vmatprep.subr.bf16.mxu0 0
      %5461 = vmatpush1.bf16.msra.mxu0 0
      %5462 = vmatprep.subr.bf16.mxu0 0
      %5463 = vmatpush1.bf16.msra.mxu0 0
      %5464 = vmatprep.mubr.bf16.mxu0 %v5302
      %5465 = vmatmul.mubr.bf16.gmra.mrb[0].mxu0 %v5090
      %v5466 = vpop.f32.mrb[0].mxu0
      %v5467 = vadd.f32 %v5363, %v5466
      %v5468 = vpop.f32.mrb[0].mxu0
      %v5469 = vpop.f32.mrb[0].mxu0
      %v5470 = vadd.f32 %v5366, %v5469
      %v5471 = vpop.f32.mrb[0].mxu0
      %5472 = vmatprep.mubr.bf16.mxu0 %v5305
      %5473 = vmatmul.mubr.bf16.gmra.mrb[0].mxu0 %v5094
      %v5474 = vpop.f32.mrb[0].mxu0
      %v5475 = vadd.f32 %v5371, %v5474
      %v5476 = vpop.f32.mrb[0].mxu0
      %v5477 = vpop.f32.mrb[0].mxu0
      %v5478 = vadd.f32 %v5374, %v5477
      %v5479 = vpop.f32.mrb[0].mxu0
      %5480 = vmatprep.mubr.bf16.mxu0 %v5308
      %5481 = vmatmul.mubr.bf16.gmra.mrb[0].mxu0 %v5098
      %v5482 = vpop.f32.mrb[0].mxu0
      %v5483 = vadd.f32 %v5379, %v5482
      %v5484 = vpop.f32.mrb[0].mxu0
      %v5485 = vpop.f32.mrb[0].mxu0
      %v5486 = vadd.f32 %v5382, %v5485
      %v5487 = vpop.f32.mrb[0].mxu0
      %5488 = vmatprep.mubr.bf16.mxu0 %v5311
      %5489 = vmatmul.mubr.bf16.gmra.mrb[0].mxu0 %v5102
      %v5490 = vpop.f32.mrb[0].mxu0
      %v5491 = vadd.f32 %v5387, %v5490
      %v5492 = vpop.f32.mrb[0].mxu0
      %v5493 = vpop.f32.mrb[0].mxu0
      %v5494 = vadd.f32 %v5390, %v5493
      %v5495 = vpop.f32.mrb[0].mxu0
      %5496 = vmatprep.mubr.bf16.mxu0 %v5314
      %5497 = vmatmul.mubr.bf16.gmra.mrb[0].mxu0 %v5106
      %v5498 = vpop.f32.mrb[0].mxu0
      %v5499 = vadd.f32 %v5395, %v5498
      %v5500 = vpop.f32.mrb[0].mxu0
      %v5501 = vpop.f32.mrb[0].mxu0
      %v5502 = vadd.f32 %v5398, %v5501
      %v5503 = vpop.f32.mrb[0].mxu0
      %5504 = vmatprep.mubr.bf16.mxu0 %v5317
      %5505 = vmatmul.mubr.bf16.gmra.mrb[0].mxu0 %v5110
      %v5506 = vpop.f32.mrb[0].mxu0
      %v5507 = vadd.f32 %v5403, %v5506
      %v5508 = vpop.f32.mrb[0].mxu0
      %v5509 = vpop.f32.mrb[0].mxu0
      %v5510 = vadd.f32 %v5406, %v5509
      %v5511 = vpop.f32.mrb[0].mxu0
      %5512 = vmatprep.mubr.bf16.mxu0 %v5320
      %5513 = vmatmul.mubr.bf16.gmra.mrb[0].mxu0 %v5114
      %v5514 = vpop.f32.mrb[0].mxu0
      %v5515 = vadd.f32 %v5411, %v5514
      %v5516 = vpop.f32.mrb[0].mxu0
      %v5517 = vpop.f32.mrb[0].mxu0
      %v5518 = vadd.f32 %v5414, %v5517
      %v5519 = vpop.f32.mrb[0].mxu0
      %5520 = vmatprep.mubr.bf16.mxu0 %v5323
      %5521 = vmatmul.mubr.bf16.gmra.mrb[0].mxu0 %v5118
      %v5522 = vpop.f32.mrb[0].mxu0
      %v5523 = vadd.f32 %v5419, %v5522
      %v5524 = vpop.f32.mrb[0].mxu0
      %v5525 = vpop.f32.mrb[0].mxu0
      %v5526 = vadd.f32 %v5422, %v5525
      %v5527 = vpop.f32.mrb[0].mxu0
      %5528 = vmatprep.mubr.bf16.mxu0 %v5326
      %5529 = vmatmul.mubr.bf16.gmra.mrb[0].mxu0 %v5122
      %v5530 = vpop.f32.mrb[0].mxu0
      %v5531 = vadd.f32 %v5427, %v5530
      %v5532 = vpop.f32.mrb[0].mxu0
      %v5533 = vpop.f32.mrb[0].mxu0
      %v5534 = vpop.f32.mrb[0].mxu0
      %5535 = vdwg.mxu0
      %vm5536 = vcmask 261120
      %5537 = vst.msk [vmem:[#allocation5] sm:$0xff] %vm5536, %v5467
      %5538 = vst.msk [vmem:[#allocation5 + $0x8] sm:$0xff] %vm5536, %v5470
      %5539 = vst.msk [vmem:[#allocation5 + $0x10] sm:$0xff] %vm5536, %v5475
      %5540 = vst.msk [vmem:[#allocation5 + $0x18] sm:$0xff] %vm5536, %v5478
      %5541 = vst.msk [vmem:[#allocation5 + $0x20] sm:$0xff] %vm5536, %v5483
      %5542 = vst.msk [vmem:[#allocation5 + $0x28] sm:$0xff] %vm5536, %v5486
      %5543 = vst.msk [vmem:[#allocation5 + $0x30] sm:$0xff] %vm5536, %v5491
      %5544 = vst.msk [vmem:[#allocation5 + $0x38] sm:$0xff] %vm5536, %v5494
      %5545 = vst.msk [vmem:[#allocation5 + $0x40] sm:$0xff] %vm5536, %v5499
      %5546 = vst.msk [vmem:[#allocation5 + $0x48] sm:$0xff] %vm5536, %v5502
      %5547 = vst.msk [vmem:[#allocation5 + $0x50] sm:$0xff] %vm5536, %v5507
      %5548 = vst.msk [vmem:[#allocation5 + $0x58] sm:$0xff] %vm5536, %v5510
      %5549 = vst.msk [vmem:[#allocation5 + $0x60] sm:$0xff] %vm5536, %v5515
      %5550 = vst.msk [vmem:[#allocation5 + $0x68] sm:$0xff] %vm5536, %v5518
      %5551 = vst.msk [vmem:[#allocation5 + $0x70] sm:$0xff] %vm5536, %v5523
      %5552 = vst.msk [vmem:[#allocation5 + $0x78] sm:$0xff] %vm5536, %v5526
      %5553 = vst.msk [vmem:[#allocation5 + $0x80] sm:$0xff] %vm5536, %v5531
      %v5554 = vld [vmem:[%s4] sm:$0x1]
      %v5555 = vld [vmem:[#allocation5] ss:$2 sm:$0x1f]
      %s5556 = scalar_lea.vmem [#allocation5], 1
      %v5557 = vld [vmem:[%s5556] ss:$2 sm:$0x1f]
      %s5558 = scalar_lea.vmem [#allocation5], 14
      %v5559 = vld [vmem:[%s5558] ss:$2 sm:$0x1f]
      %s5560 = scalar_lea.vmem [#allocation5], 15
      %v5561 = vld [vmem:[%s5560] ss:$2 sm:$0x1f]
      %v5562 = vmax.f32 %v5555, %v5557
      %v5563 = vmax.f32 %v5559, %v5561
      %v5564 = vmax.f32 %v5562, %v5563
      %s5565 = scalar_lea.vmem [#allocation5], 28
      %v5566 = vld [vmem:[%s5565] ss:$2 sm:$0x1f]
      %s5567 = scalar_lea.vmem [#allocation5], 29
      %v5568 = vld [vmem:[%s5567] ss:$2 sm:$0x1f]
      %s5569 = scalar_lea.vmem [#allocation5], 42
      %v5570 = vld [vmem:[%s5569] ss:$2 sm:$0x1f]
      %s5571 = scalar_lea.vmem [#allocation5], 43
      %v5572 = vld [vmem:[%s5571] ss:$2 sm:$0x1f]
      %v5573 = vmax.f32 %v5566, %v5568
      %v5574 = vmax.f32 %v5570, %v5572
      %v5575 = vmax.f32 %v5573, %v5574
      %s5576 = scalar_lea.vmem [#allocation5], 56
      %v5577 = vld [vmem:[%s5576] ss:$2 sm:$0x1f]
      %s5578 = scalar_lea.vmem [#allocation5], 57
      %v5579 = vld [vmem:[%s5578] ss:$2 sm:$0x1f]
      %s5580 = scalar_lea.vmem [#allocation5], 70
      %v5581 = vld [vmem:[%s5580] ss:$2 sm:$0x1f]
      %s5582 = scalar_lea.vmem [#allocation5], 71
      %v5583 = vld [vmem:[%s5582] ss:$2 sm:$0x1f]
      %v5584 = vmax.f32 %v5577, %v5579
      %v5585 = vmax.f32 %v5581, %v5583
      %v5586 = vmax.f32 %v5584, %v5585
      %s5587 = scalar_lea.vmem [#allocation5], 84
      %v5588 = vld [vmem:[%s5587] ss:$2 sm:$0x1f]
      %s5589 = scalar_lea.vmem [#allocation5], 85
      %v5590 = vld [vmem:[%s5589] ss:$2 sm:$0x1f]
      %s5591 = scalar_lea.vmem [#allocation5], 98
      %v5592 = vld [vmem:[%s5591] ss:$2 sm:$0x1f]
      %s5593 = scalar_lea.vmem [#allocation5], 99
      %v5594 = vld [vmem:[%s5593] ss:$2 sm:$0x1f]
      %v5595 = vmax.f32 %v5588, %v5590
      %v5596 = vmax.f32 %v5592, %v5594
      %v5597 = vmax.f32 %v5595, %v5596
      %s5598 = scalar_lea.vmem [#allocation5], 112
      %v5599 = vld [vmem:[%s5598] ss:$2 sm:$0x1f]
      %s5600 = scalar_lea.vmem [#allocation5], 113
      %v5601 = vld [vmem:[%s5600] ss:$2 sm:$0x1f]
      %s5602 = scalar_lea.vmem [#allocation5], 126
      %v5603 = vld [vmem:[%s5602] ss:$2 sm:$0x1f]
      %s5604 = scalar_lea.vmem [#allocation5], 127
      %v5605 = vld [vmem:[%s5604] ss:$2 sm:$0x1f]
      %v5606 = vmax.f32 %v5599, %v5601
      %v5607 = vmax.f32 %v5603, %v5605
      %v5608 = vmax.f32 %v5606, %v5607
      %v5610 = vrot.slane %v5575, 3
      %v5613 = vrot.slane %v5586, 6
      %v5616 = vrot.slane %v5597, 1
      %v5619 = vrot.slane %v5608, 4
      %vm5621 = vcmask 1044480
      %v5622 = vsel %vm5621, %v5564, %v5610
      %vm5623 = vcmask 1041408
      %v5624 = vsel %vm5623, %v5610, %v5613
      %vm5625 = vcmask 1046528
      %v5626 = vsel %vm5625, %v5624, %v5616
      %vm5627 = vcmask 1043456
      %v5628 = vsel %vm5627, %v5616, %v5619
      %v5630 = vlaneseq
      %v5631 = vshrl.u32 %v5630, 7
      %v5632 = vsub.s32 0, %v5631
      %v5633 = vrot.slane %v5554, %v5632
      %v5635 = vadd.f32 %v5622, %v5633
      %v5636 = vadd.f32 %v5626, %v5633
      %v5637 = vadd.f32 %v5628, %v5633
      %v5638 = vadd.f32 %v5619, %v5633
      %v5639 = vmax.f32 %v5635, 0.0
      %v5640 = vmax.f32 %v5636, 0.0
      %v5641 = vmax.f32 %v5637, 0.0
      %v5642 = vmax.f32 %v5638, 0.0
      %v5643 = vpack.c.bf16 %v5640, %v5639
      %v5644 = vpack.c.bf16 %v5642, %v5641
      %v5647 = vunpack.c.l.b16 %v5643
      %v5648 = vunpack.c.h.b16 %v5643
      %v5649 = vunpack.c.l.b16 %v5644
      %v5650 = vunpack.c.h.b16 %v5644
      %v5651 = vpack.c.b16 %v5647, %v5647
      %v5652 = vpack.c.b16 %v5648, %v5648
      %v5653 = vpack.c.b16 %v5649, %v5649
      %v5654 = vpack.c.b16 %v5650, %v5650
      %vm5659 = vcmask 257024
      %5660 = vst.msk [vmem:[%s224] sm:$0xf] %vm5659, %v5651
      %5661 = vst.msk [vmem:[%s224 + $0x4] sm:$0xf] %vm5659, %v5652
      %5662 = vst.msk [vmem:[%s224 + $0x8] sm:$0xf] %vm5659, %v5653
      %vm5663 = vcmask 253952
      %vm5664 = vsmask.f32 256
      %vm5665 = vmand %vm5663, %vm5664
      %v5666 = vld [vmem:[%s224 + $0xc] sm:$0x1]
      %v5667 = vsel %vm5665, %v5654, %v5666
      %5668 = vst [vmem:[%s224 + $0xc] sm:$0x1] %v5667
      %p5669 = scmp.lt.s32.totalorder %s16, 1
      %s5670 = scalar_select %p5669, %s16, 1
      %s5671 = smul.addr %s5670, 4
      %s5672 = smul.addr %s5671, 4
      %s5673 = scalar_lea.vmem %s5, %s5672
      // Predicated region
      $region41: #{simple_cnn_forward.2} parent=39 // pred_check
        %p5674 = pneg %p144
      $region42: #{simple_cnn_forward.2} parent=39 // pred_check_branch
        %5676 = sbr.rel (%p5674) target = $region44
      $region43: #{simple_cnn_forward.2} parent=39 // pred_region
        _
      $region44: #{simple_cnn_forward.2} parent=39 // pred_fallthru
        _
    $region40: #{simple_cnn_forward.2} parent=5 // pred_fallthru
      _
    %p5677 = scmp.le.s32.totalorder 2, %s11
    // Predicated region
    $region45: #{simple_cnn_forward.2} parent=5 // pred_check
      %p5678 = pneg %p5677
    $region46: #{simple_cnn_forward.2} parent=5 // pred_check_branch
      %5680 = sbr.rel (%p5678) target = $region48
    $region47: #{simple_cnn_forward.2} parent=5 // pred_region
      %s5681 = ssub.s32 %s11, 2
      // Predicated region
      $region49: #{simple_cnn_forward.2} parent=47 // pred_check
        %p5682 = pneg %p150
      $region50: #{simple_cnn_forward.2} parent=47 // pred_check_branch
        %5684 = sbr.rel (%p5682) target = $region52
      $region51: #{simple_cnn_forward.2} parent=47 // pred_region
        %p5685 = scmp.lt.s32.totalorder %s17, 1
        %s5686 = scalar_select %p5685, %s17, 1
        %s5687 = smul.addr %s5686, 4
        %s5688 = smul.addr %s5687, 4
        %s5689 = scalar_lea.vmem %s5, %s5688
      $region52: #{simple_cnn_forward.2} parent=47 // pred_fallthru
        _
    $region48: #{simple_cnn_forward.2} parent=5 // pred_fallthru
      _
  $region6: #{simple_cnn_forward.2} parent=0 // loop_footer
    %s15 = sadd.s32 1, %s11
  $region7: #{simple_cnn_forward.2} parent=0 // loop_footer_branch
    %10 = sbr.rel target = $region3
  $region8: #{simple_cnn_forward.2} parent=0 // loop_exit
    _

</llo_original>
